<compile_context>
chip_gen: v5e
topology: v5e:2x2
jax: 0.10.0
libtpu: 0.0.40
codegen_flags: <defaults>
</compile_context>

<pallas_src>
import functools

import jax
import jax.numpy as jnp
from jax.experimental import pallas as pl
from jax.experimental.pallas import tpu as pltpu

INPUT_DIM = 784
H1 = 512
H2 = 256
OUT = 1


def _leaky_relu(x, slope=0.2):
    return jnp.where(x > 0, x, slope * x)


def _discriminator_kernel(x_ref, w1_ref, b1_ref, w2t_ref, b2_ref, w3_ref,
                          b3_ref, o_ref, *, batch, block_b):
    # x tile arrives as f32 straight from HBM (no wrapper pad / convert).
    # Mask the ragged tail rows (only traced when B % block_b != 0) and cast
    # to bf16 in one fused VPU pass.
    x = x_ref[...]
    if batch % block_b != 0:
        row = (pl.program_id(0) * block_b
               + jax.lax.broadcasted_iota(jnp.int32, (block_b, 1), 0))
        x = jnp.where(row < batch, x, 0.0)
    x = x.astype(jnp.bfloat16)

    # Layer 1: (TB, 784)bf16 @ (784, 512)bf16 -> f32, + b1, LeakyReLU(0.2)
    h1 = jnp.dot(x, w1_ref[...], preferred_element_type=jnp.float32)
    h1 = _leaky_relu(h1 + b1_ref[...])                         # (TB, 512) f32

    # Layer 2 in NT form (contraction on the last dim of BOTH operands, the
    # q@k^T pattern): h2t = LeakyReLU(w2 @ h1^T + b2) -> (256, TB).  The
    # static weight is the lhs; no XLU transpose of the dynamic h1 is needed.
    s = jax.lax.dot_general(
        w2t_ref[...], h1.astype(jnp.bfloat16),
        dimension_numbers=(((1,), (1,)), ((), ())),
        preferred_element_type=jnp.float32)                     # (256, TB) f32
    h2t = _leaky_relu(s + b2_ref[...])

    # Layer 3: the (TB,256)@(256,1) matmul becomes a VPU multiply + sublane
    # reduction -> lane-dense (1, TB) logits row (unmasked vst, except the
    # ragged tail block which Pallas lane-masks on write).
    logits = jnp.sum(h2t * w3_ref[...], axis=0, keepdims=True) + b3_ref[...]
    o_ref[...] = jax.nn.sigmoid(logits).astype(o_ref.dtype)     # (1, TB)


def _default_block_b(batch):
    # Amortize the ~0.35 us grid-step overhead with large tiles on v6e/v7x,
    # but keep >= 2 tiles whenever B > 256 so both v7x TensorCores get work.
    # v5e is MXU-bound already at 256, so never shrink below that.
    if batch <= 512:
        return 256
    if batch <= 2048:
        return 512
    return 1024


@functools.partial(jax.jit, static_argnames=("block_b",))
def discriminator_forward(x, params, block_b=None):
    w1, b1, w2t, b2, w3, b3 = params
    B, D = x.shape
    assert D == INPUT_DIM
    if block_b is None:
        block_b = _default_block_b(B)
    num_tiles = pl.cdiv(B, block_b)

    # Weights/biases: full arrays, constant (0, 0) block index every grid step
    # (pipeline skips re-DMA).  Footprint is tiny (<3 MiB double-buffered); if
    # block_b is ever pushed past 1024 on v7x, add pipeline_mode=pl.Buffered(1)
    # here to drop the second weight buffer.
    full = lambda shape: pl.BlockSpec(shape, lambda i: (0, 0))

    flops = 2 * B * (INPUT_DIM * H1 + H1 * H2 + H2 * OUT)
    bytes_accessed = (B * INPUT_DIM * 4                  # x tile reads (f32)
                      + (INPUT_DIM * H1 + H2 * H1) * 2   # bf16 weights
                      + (H1 + 2 * H2 + 1) * 4            # biases + w3
                      + B * 4)                           # output row

    kernel = functools.partial(_discriminator_kernel, batch=B, block_b=block_b)

    out_row = pl.pallas_call(
        kernel,
        out_shape=jax.ShapeDtypeStruct((1, B), jnp.float32),
        grid_spec=pltpu.PrefetchScalarGridSpec(
            num_scalar_prefetch=0,
            grid=(num_tiles,),
            in_specs=[
                pl.BlockSpec((block_b, INPUT_DIM), lambda i: (i, 0)),  # x (f32)
                full((INPUT_DIM, H1)),  # w1  (in, out)  bf16
                full((1, H1)),          # b1
                full((H2, H1)),         # w2t (out, in)  bf16
                full((H2, 1)),          # b2 column
                full((H2, 1)),          # w3 column
                full((1, 1)),           # b3
            ],
            # Lane-dense output: each grid step writes a (1, block_b) row slab.
            out_specs=pl.BlockSpec((1, block_b), lambda i: (0, i)),
        ),
        compiler_params=pltpu.CompilerParams(
            dimension_semantics=("parallel",)),
        cost_estimate=pl.CostEstimate(
            flops=flops, transcendentals=B, bytes_accessed=bytes_accessed),
    )(x, w1, b1, w2t, b2, w3, b3)

    # (1, B) lane-dense kernel output -> (B, 1) to match nn.Module semantics.
    # Tiny relayout (4*B bytes); return out_row directly if downstream can
    # consume a (1, B) / (B,) shape.
    return out_row.reshape(B, OUT)


def init_params(key):
    """PyTorch-style uniform(+/- 1/sqrt(fan_in)) init.

    The two MXU weight matrices (w1, w2t) are stored in bf16 here, ONCE, so
    the per-call forward path never emits weight-convert HLOs.
    """
    ks = jax.random.split(key, 6)

    def unif(k, shape, fan_in):
        bound = 1.0 / (fan_in ** 0.5)
        return jax.random.uniform(k, shape, jnp.float32, -bound, bound)

    w1 = unif(ks[0], (INPUT_DIM, H1), INPUT_DIM).astype(jnp.bfloat16)
    b1 = unif(ks[1], (1, H1), INPUT_DIM)
    w2t = unif(ks[2], (H2, H1), H1).astype(jnp.bfloat16)
    b2 = unif(ks[3], (H2, 1), H1)
    w3 = unif(ks[4], (H2, 1), H2)
    b3 = unif(ks[5], (1, 1), H2)
    return (w1, b1, w2t, b2, w3, b3)


def reference_forward(x, params):
    """Pure-JAX f32 reference with identical semantics to the PyTorch module."""
    w1, b1, w2t, b2, w3, b3 = params
    w1 = w1.astype(jnp.float32)
    w2t = w2t.astype(jnp.float32)
    h = _leaky_relu(x @ w1 + b1)
    h = _leaky_relu(h @ w2t.T + b2.T)
    return jax.nn.sigmoid(h @ w3 + b3)


if __name__ == "__main__":
    key = jax.random.PRNGKey(0)
    kp, kx = jax.random.split(key)

    params = init_params(kp)
    # B intentionally NOT a multiple of block_b: exercises the in-kernel
    # ragged-tail masking and gives a 2-step grid (both v7x TCs get work).
    B = 300
    x = jax.random.normal(kx, (B, INPUT_DIM), jnp.float32)

    out = discriminator_forward(x, params)
    out = jax.block_until_ready(out)

    ref = reference_forward(x, params)
    assert out.shape == (B, OUT)
    max_err = float(jnp.max(jnp.abs(out - ref)))
    # bf16 matmul inputs with f32 accumulation: loosened tolerance vs f32 ref.
    assert max_err < 2e-2, f"mismatch vs reference: max abs err {max_err}"

    print("KERNEL_OK")
</pallas_src>

<mosaic_0001>
module attributes {stable_mosaic.version = 11 : i64} {
  func.func @_discriminator_kernel(%arg0: i32, %arg1: memref<256x784xf32, #tpu.memory_space<vmem>>, %arg2: memref<784x512xbf16, #tpu.memory_space<vmem>>, %arg3: memref<1x512xf32, #tpu.memory_space<vmem>>, %arg4: memref<256x512xbf16, #tpu.memory_space<vmem>>, %arg5: memref<256x1xf32, #tpu.memory_space<vmem>>, %arg6: memref<256x1xf32, #tpu.memory_space<vmem>>, %arg7: memref<1x1xf32, #tpu.memory_space<vmem>>, %arg8: memref<1x256xf32, #tpu.memory_space<vmem>>) attributes {dimension_semantics = [#tpu.dimension_semantics<parallel>], iteration_bounds = array<i64: 2>, scalar_prefetch = 0 : i64, scratch_operands = 0 : i64, tpu.core_type = #tpu.core_type<tc>, window_params = [{transform_indices = @transform_0, window_bounds = array<i64: 256, 784>}, {pipeline_mode = #tpu.pipeline_mode<synchronous>, transform_indices = @transform_1, window_bounds = array<i64: 784, 512>}, {pipeline_mode = #tpu.pipeline_mode<synchronous>, transform_indices = @transform_2, window_bounds = array<i64: 1, 512>}, {pipeline_mode = #tpu.pipeline_mode<synchronous>, transform_indices = @transform_3, window_bounds = array<i64: 256, 512>}, {pipeline_mode = #tpu.pipeline_mode<synchronous>, transform_indices = @transform_4, window_bounds = array<i64: 256, 1>}, {pipeline_mode = #tpu.pipeline_mode<synchronous>, transform_indices = @transform_5, window_bounds = array<i64: 256, 1>}, {pipeline_mode = #tpu.pipeline_mode<synchronous>, transform_indices = @transform_6, window_bounds = array<i64: 1, 1>}, {transform_indices = @transform_7, window_bounds = array<i64: 1, 256>}]} {
    %c0 = arith.constant 0 : index
    %c0_0 = arith.constant 0 : index
    %0 = vector.load %arg1[%c0, %c0_0] : memref<256x784xf32, #tpu.memory_space<vmem>>, vector<256x784xf32>
    %c256_i32 = arith.constant 256 : i32
    %1 = arith.muli %arg0, %c256_i32 : i32
    %2 = tpu.iota {dimensions = array<i32: 0>} : vector<256x1xi32>
    %3 = vector.broadcast %1 : i32 to vector<256x1xi32>
    %4 = arith.addi %3, %2 : vector<256x1xi32>
    %c300_i32 = arith.constant 300 : i32
    %5 = vector.broadcast %c300_i32 : i32 to vector<256x1xi32>
    %6 = arith.cmpi slt, %4, %5 : vector<256x1xi32>
    %cst = arith.constant 0.000000e+00 : f32
    %7 = vector.shape_cast %6 : vector<256x1xi1> to vector<256x1xi1>
    %8 = vector.broadcast %7 : vector<256x1xi1> to vector<256x784xi1>
    %9 = vector.broadcast %cst : f32 to vector<256x784xf32>
    %10 = arith.select %8, %0, %9 : vector<256x784xi1>, vector<256x784xf32>
    %11 = arith.truncf %10 : vector<256x784xf32> to vector<256x784xbf16>
    %c0_1 = arith.constant 0 : index
    %c0_2 = arith.constant 0 : index
    %12 = vector.load %arg2[%c0_1, %c0_2] : memref<784x512xbf16, #tpu.memory_space<vmem>>, vector<784x512xbf16>
    %cst_3 = arith.constant dense<0.000000e+00> : vector<256x512xf32>
    %13 = tpu.matmul %11, %12, %cst_3 {dimension_numbers = #tpu.dot_dimension_numbers<[1], [0], [0], [1], [0, 0, 1, 1], [], []>} : vector<256x784xbf16>, vector<784x512xbf16>, vector<256x512xf32> -> vector<256x512xf32>
    %c0_4 = arith.constant 0 : index
    %c0_5 = arith.constant 0 : index
    %14 = vector.load %arg3[%c0_4, %c0_5] : memref<1x512xf32, #tpu.memory_space<vmem>>, vector<1x512xf32>
    %15 = vector.broadcast %14 : vector<1x512xf32> to vector<256x512xf32>
    %16 = arith.addf %13, %15 : vector<256x512xf32>
    %cst_6 = arith.constant 0.000000e+00 : f32
    %17 = vector.broadcast %cst_6 : f32 to vector<256x512xf32>
    %18 = arith.cmpf ogt, %16, %17 : vector<256x512xf32>
    %cst_7 = arith.constant 2.000000e-01 : f32
    %19 = vector.broadcast %cst_7 : f32 to vector<256x512xf32>
    %20 = arith.mulf %19, %16 : vector<256x512xf32>
    %21 = arith.select %18, %16, %20 : vector<256x512xi1>, vector<256x512xf32>
    %c0_8 = arith.constant 0 : index
    %c0_9 = arith.constant 0 : index
    %22 = vector.load %arg4[%c0_8, %c0_9] : memref<256x512xbf16, #tpu.memory_space<vmem>>, vector<256x512xbf16>
    %23 = arith.truncf %21 : vector<256x512xf32> to vector<256x512xbf16>
    %cst_10 = arith.constant dense<0.000000e+00> : vector<256x256xf32>
    %24 = tpu.matmul %22, %23, %cst_10 {dimension_numbers = #tpu.dot_dimension_numbers<[1], [1], [0], [0], [0, 0, 1, 0], [], []>} : vector<256x512xbf16>, vector<256x512xbf16>, vector<256x256xf32> -> vector<256x256xf32>
    %c0_11 = arith.constant 0 : index
    %c0_12 = arith.constant 0 : index
    %25 = vector.load %arg5[%c0_11, %c0_12] : memref<256x1xf32, #tpu.memory_space<vmem>>, vector<256x1xf32>
    %26 = vector.broadcast %25 : vector<256x1xf32> to vector<256x256xf32>
    %27 = arith.addf %24, %26 : vector<256x256xf32>
    %cst_13 = arith.constant 0.000000e+00 : f32
    %28 = vector.broadcast %cst_13 : f32 to vector<256x256xf32>
    %29 = arith.cmpf ogt, %27, %28 : vector<256x256xf32>
    %cst_14 = arith.constant 2.000000e-01 : f32
    %30 = vector.broadcast %cst_14 : f32 to vector<256x256xf32>
    %31 = arith.mulf %30, %27 : vector<256x256xf32>
    %32 = arith.select %29, %27, %31 : vector<256x256xi1>, vector<256x256xf32>
    %c0_15 = arith.constant 0 : index
    %c0_16 = arith.constant 0 : index
    %33 = vector.load %arg6[%c0_15, %c0_16] : memref<256x1xf32, #tpu.memory_space<vmem>>, vector<256x1xf32>
    %34 = vector.broadcast %33 : vector<256x1xf32> to vector<256x256xf32>
    %35 = arith.mulf %32, %34 : vector<256x256xf32>
    %cst_17 = arith.constant dense<0.000000e+00> : vector<256xf32>
    %36 = vector.multi_reduction <add>, %35, %cst_17 [0] : vector<256x256xf32> to vector<256xf32>
    %37 = vector.shape_cast %36 : vector<256xf32> to vector<1x256xf32>
    %c0_18 = arith.constant 0 : index
    %c0_19 = arith.constant 0 : index
    %38 = vector.load %arg7[%c0_18, %c0_19] : memref<1x1xf32, #tpu.memory_space<vmem>>, vector<1x1xf32>
    %39 = vector.broadcast %38 : vector<1x1xf32> to vector<1x256xf32>
    %40 = arith.addf %37, %39 : vector<1x256xf32>
    %41 = arith.negf %40 : vector<1x256xf32>
    %42 = math.exp %41 : vector<1x256xf32>
    %cst_20 = arith.constant 1.000000e+00 : f32
    %43 = vector.broadcast %cst_20 : f32 to vector<1x256xf32>
    %44 = arith.addf %43, %42 : vector<1x256xf32>
    %45 = arith.divf %43, %44 : vector<1x256xf32>
    %c0_21 = arith.constant 0 : index
    %c0_22 = arith.constant 0 : index
    %46 = vector.load %arg8[%c0_21, %c0_22] : memref<1x256xf32, #tpu.memory_space<vmem>>, vector<1x256xf32>
    tpu.vector_store %arg8[%c0_21, %c0_22], %45 {strides = array<i32>} : memref<1x256xf32, #tpu.memory_space<vmem>>, vector<1x256xf32>,
    return
  }
  func.func @transform_0(%arg0: i32) -> (i32, i32) {
    %c0_i32 = arith.constant 0 : i32
    %c0_i32_0 = arith.constant 0 : i32
    return %arg0, %c0_i32 : i32, i32
  }
  func.func @transform_1(%arg0: i32) -> (i32, i32) {
    %c0_i32 = arith.constant 0 : i32
    %c0_i32_0 = arith.constant 0 : i32
    %c0_i32_1 = arith.constant 0 : i32
    return %c0_i32, %c0_i32_0 : i32, i32
  }
  func.func @transform_2(%arg0: i32) -> (i32, i32) {
    %c0_i32 = arith.constant 0 : i32
    %c0_i32_0 = arith.constant 0 : i32
    %c0_i32_1 = arith.constant 0 : i32
    return %c0_i32, %c0_i32_0 : i32, i32
  }
  func.func @transform_3(%arg0: i32) -> (i32, i32) {
    %c0_i32 = arith.constant 0 : i32
    %c0_i32_0 = arith.constant 0 : i32
    %c0_i32_1 = arith.constant 0 : i32
    return %c0_i32, %c0_i32_0 : i32, i32
  }
  func.func @transform_4(%arg0: i32) -> (i32, i32) {
    %c0_i32 = arith.constant 0 : i32
    %c0_i32_0 = arith.constant 0 : i32
    %c0_i32_1 = arith.constant 0 : i32
    return %c0_i32, %c0_i32_0 : i32, i32
  }
  func.func @transform_5(%arg0: i32) -> (i32, i32) {
    %c0_i32 = arith.constant 0 : i32
    %c0_i32_0 = arith.constant 0 : i32
    %c0_i32_1 = arith.constant 0 : i32
    return %c0_i32, %c0_i32_0 : i32, i32
  }
  func.func @transform_6(%arg0: i32) -> (i32, i32) {
    %c0_i32 = arith.constant 0 : i32
    %c0_i32_0 = arith.constant 0 : i32
    %c0_i32_1 = arith.constant 0 : i32
    return %c0_i32, %c0_i32_0 : i32, i32
  }
  func.func @transform_7(%arg0: i32) -> (i32, i32) {
    %c0_i32 = arith.constant 0 : i32
    %c0_i32_0 = arith.constant 0 : i32
    return %c0_i32, %arg0 : i32, i32
  }
}

</mosaic_0001>

<llo_original>
// kernel: discriminator_forward.1
$region0: #{discriminator_forward.1}
  #allocation0 [shape = 'u32[]', space=smem, size = 0x4, offset = 0x4, fixed_abs, tag = 'smem constant byte address 0x4 - core index']
  #allocation1 [shape = 'u32[72,128]{1,0:T(1,128)}', space=vmem, size = 0x9000, scoped, tag = 'internal scratch']
  #allocation2 [shape = 'f32[1,1]{1,0:T(1,128)S(1)}', space=vmem, size = 0x200, scoped, tag = 'scoped memory for discriminator_forward.1']
  %s0 = inlined_call_operand.hbm [shape: f32[300,784], index: 0, kind: input, shape index: {}]
  %s1 = inlined_call_operand.hbm [shape: bf16[784,512], index: 1, kind: input, shape index: {}]
  %s2 = inlined_call_operand.hbm [shape: f32[1,512], index: 2, kind: input, shape index: {}]
  %s3 = inlined_call_operand.hbm [shape: bf16[256,512], index: 3, kind: input, shape index: {}]
  %s4 = inlined_call_operand.vmem [shape: f32[256,1], index: 4, kind: input, shape index: {}]
  %s5 = inlined_call_operand.vmem [shape: f32[256,1], index: 5, kind: input, shape index: {}]
  %s6 = inlined_call_operand.<no memory space> [shape: f32[1,1], index: 6, kind: input, shape index: {}]
  %s7 = inlined_call_operand.hbm [shape: f32[1,300], index: 7, kind: output, shape index: {}]
  %s8 = sld [smem:[#allocation0]]
  $region77: #{discriminator_forward.1} parent=0
    _
  %s10 = ssub.s32 1, %s8
  %s11 = scalar_select 0, %s10, %s8
  %v12 = vstv %s6
  %13 = vst [vmem:[#allocation2] sm:$0x1] %v12
  $region1: #{discriminator_forward.1} parent=0
    #allocation3 [shape = 'u8[1835008]{0}', space=vmem, size = 0x1c0000, scoped, tag = 'input window, operand 0']
    #allocation4 [shape = 's32[2]{0}', space=sflag, size = 0x8, scoped, tag = 'scoped memory for discriminator_forward.1']
    #allocation5 [shape = 's32[2]{0}', space=sflag, size = 0x8, scoped, tag = 'scoped memory for discriminator_forward.1']
    #allocation6 [shape = 'u8[802816]{0}', space=vmem, size = 0xc4000, scoped, tag = 'input window, operand 1, single buffered']
    #allocation7 [shape = 's32[1]{0}', space=sflag, size = 0x4, scoped, tag = 'scoped memory for discriminator_forward.1']
    #allocation8 [shape = 'u8[2048]{0}', space=vmem, size = 0x800, scoped, tag = 'input window, operand 2, single buffered']
    #allocation9 [shape = 'u8[262144]{0}', space=vmem, size = 0x40000, scoped, tag = 'input window, operand 3, single buffered']
    #allocation10 [shape = 's32[1]{0}', space=sflag, size = 0x4, scoped, tag = 'scoped memory for discriminator_forward.1']
    #allocation11 [shape = 'u8[2048]{0}', space=vmem, size = 0x800, scoped, tag = 'output window, operand 0']
    %14 = vsyncpa [#allocation4], 0
    %s15 = scalar_lea.sflag [#allocation4], 1
    %16 = vsyncpa %s15, 0
    %17 = vsyncpa [#allocation7], 0
    %18 = vsyncpa [#allocation10], 0
    %19 = vsyncpa [#allocation5], 0
    %s20 = scalar_lea.sflag [#allocation5], 1
    %21 = vsyncpa %s20, 0
    loop: start=0, step=1, limit=4
    $region2: #{discriminator_forward.1} parent=1 // loop_pre_header
      _
    $region3: #{discriminator_forward.1} parent=1 // loop_header
      %s23 = sphi 0, %s27
      %p24 = scmp.ge.s32.totalorder %s23, 4
      %s33 = sphi 0, %s35
      %s36 = sphi 0, %s33
      %s37 = sphi 0, %s36
      %s53 = sphi 0, %s37
      %s57 = sphi 0, %s57
      %s59 = sphi 0, %s57
      %s60 = sphi 0, %s59
      %s74 = sphi 0, %s60
      %s78 = sphi 0, %s78
      %s80 = sphi 0, %s78
      %s81 = sphi 0, %s80
      %s95 = sphi 0, %s81
      %s99 = sphi 0, %s99
      %s101 = sphi 0, %s99
      %s102 = sphi 0, %s101
      %s116 = sphi 0, %s102
      %s120 = sphi 0, %s120
      %s122 = sphi 0, %s120
      %s123 = sphi 0, %s122
      %s137 = sphi 0, %s123
      %s141 = sphi 0, %s141
      %s143 = sphi 0, %s141
      %s144 = sphi 0, %s143
      %s158 = sphi 0, %s144
      %s162 = sphi 0, %s162
      %s164 = sphi 0, %s162
      %s165 = sphi 0, %s164
      %s179 = sphi 0, %s165
      %s185 = sphi 0, %s187
      %s188 = sphi 0, %s185
      %s189 = sphi 0, %s188
      %s205 = sphi 0, %s189
    $region4: #{discriminator_forward.1} parent=1 // loop_header_branch
      %26 = sbr.rel (%p24) target = $region8
    $region5: #{discriminator_forward.1} parent=1 // loop_body
      %s28 = ssub.s32 %s23, 1
      %s29 = ssub.s32 %s23, 2
      %s30 = sadd.s32 %s23, 1
      %s31 = ssub.s32 %s23, %s30
      %p32 = scmp.eq.s32.totalorder %s31, 0
      %s34 = sadd.s32 %s33, 1
      %s35 = scalar_select %p32, %s33, %s34
      %p38 = pneg %p32
      %p39 = scmp.eq.s32.totalorder %s23, 1
      %p40 = por %p38, %p39
      %p41 = scmp.ne.s32.totalorder %s33, %s36
      %p42 = scmp.eq.s32.totalorder %s23, 0
      %p43 = por %p41, %p42
      %p44 = scmp.ne.s32.totalorder %s33, %s36
      %p45 = scmp.eq.s32.totalorder %s28, 1
      %p46 = por %p44, %p45
      %p47 = scmp.ne.s32.totalorder %s36, %s37
      %p48 = scmp.eq.s32.totalorder %s28, 0
      %p49 = por %p47, %p48
      %p50 = scmp.ne.s32.totalorder %s36, %s37
      %p51 = scmp.eq.s32.totalorder %s29, 1
      %p52 = por %p50, %p51
      %p54 = scmp.ne.s32.totalorder %s37, %s53
      %p55 = scmp.eq.s32.totalorder %s29, 0
      %p56 = por %p54, %p55
      %s58 = sadd.s32 %s57, 1
      %p61 = scmp.eq.s32.totalorder %s23, 1
      %p62 = scmp.ne.s32.totalorder %s57, %s59
      %p63 = scmp.eq.s32.totalorder %s23, 0
      %p64 = por %p62, %p63
      %p65 = scmp.ne.s32.totalorder %s57, %s59
      %p66 = scmp.eq.s32.totalorder %s28, 1
      %p67 = por %p65, %p66
      %p68 = scmp.ne.s32.totalorder %s59, %s60
      %p69 = scmp.eq.s32.totalorder %s28, 0
      %p70 = por %p68, %p69
      %p71 = scmp.ne.s32.totalorder %s59, %s60
      %p72 = scmp.eq.s32.totalorder %s29, 1
      %p73 = por %p71, %p72
      %p75 = scmp.ne.s32.totalorder %s60, %s74
      %p76 = scmp.eq.s32.totalorder %s29, 0
      %p77 = por %p75, %p76
      %s79 = sadd.s32 %s78, 1
      %p82 = scmp.eq.s32.totalorder %s23, 1
      %p83 = scmp.ne.s32.totalorder %s78, %s80
      %p84 = scmp.eq.s32.totalorder %s23, 0
      %p85 = por %p83, %p84
      %p86 = scmp.ne.s32.totalorder %s78, %s80
      %p87 = scmp.eq.s32.totalorder %s28, 1
      %p88 = por %p86, %p87
      %p89 = scmp.ne.s32.totalorder %s80, %s81
      %p90 = scmp.eq.s32.totalorder %s28, 0
      %p91 = por %p89, %p90
      %p92 = scmp.ne.s32.totalorder %s80, %s81
      %p93 = scmp.eq.s32.totalorder %s29, 1
      %p94 = por %p92, %p93
      %p96 = scmp.ne.s32.totalorder %s81, %s95
      %p97 = scmp.eq.s32.totalorder %s29, 0
      %p98 = por %p96, %p97
      %s100 = sadd.s32 %s99, 1
      %p103 = scmp.eq.s32.totalorder %s23, 1
      %p104 = scmp.ne.s32.totalorder %s99, %s101
      %p105 = scmp.eq.s32.totalorder %s23, 0
      %p106 = por %p104, %p105
      %p107 = scmp.ne.s32.totalorder %s99, %s101
      %p108 = scmp.eq.s32.totalorder %s28, 1
      %p109 = por %p107, %p108
      %p110 = scmp.ne.s32.totalorder %s101, %s102
      %p111 = scmp.eq.s32.totalorder %s28, 0
      %p112 = por %p110, %p111
      %p113 = scmp.ne.s32.totalorder %s101, %s102
      %p114 = scmp.eq.s32.totalorder %s29, 1
      %p115 = por %p113, %p114
      %p117 = scmp.ne.s32.totalorder %s102, %s116
      %p118 = scmp.eq.s32.totalorder %s29, 0
      %p119 = por %p117, %p118
      %s121 = sadd.s32 %s120, 1
      %p124 = scmp.eq.s32.totalorder %s23, 1
      %p125 = scmp.ne.s32.totalorder %s120, %s122
      %p126 = scmp.eq.s32.totalorder %s23, 0
      %p127 = por %p125, %p126
      %p128 = scmp.ne.s32.totalorder %s120, %s122
      %p129 = scmp.eq.s32.totalorder %s28, 1
      %p130 = por %p128, %p129
      %p131 = scmp.ne.s32.totalorder %s122, %s123
      %p132 = scmp.eq.s32.totalorder %s28, 0
      %p133 = por %p131, %p132
      %p134 = scmp.ne.s32.totalorder %s122, %s123
      %p135 = scmp.eq.s32.totalorder %s29, 1
      %p136 = por %p134, %p135
      %p138 = scmp.ne.s32.totalorder %s123, %s137
      %p139 = scmp.eq.s32.totalorder %s29, 0
      %p140 = por %p138, %p139
      %s142 = sadd.s32 %s141, 1
      %p145 = scmp.eq.s32.totalorder %s23, 1
      %p146 = scmp.ne.s32.totalorder %s141, %s143
      %p147 = scmp.eq.s32.totalorder %s23, 0
      %p148 = por %p146, %p147
      %p149 = scmp.ne.s32.totalorder %s141, %s143
      %p150 = scmp.eq.s32.totalorder %s28, 1
      %p151 = por %p149, %p150
      %p152 = scmp.ne.s32.totalorder %s143, %s144
      %p153 = scmp.eq.s32.totalorder %s28, 0
      %p154 = por %p152, %p153
      %p155 = scmp.ne.s32.totalorder %s143, %s144
      %p156 = scmp.eq.s32.totalorder %s29, 1
      %p157 = por %p155, %p156
      %p159 = scmp.ne.s32.totalorder %s144, %s158
      %p160 = scmp.eq.s32.totalorder %s29, 0
      %p161 = por %p159, %p160
      %s163 = sadd.s32 %s162, 1
      %p166 = scmp.eq.s32.totalorder %s23, 1
      %p167 = scmp.ne.s32.totalorder %s162, %s164
      %p168 = scmp.eq.s32.totalorder %s23, 0
      %p169 = por %p167, %p168
      %p170 = scmp.ne.s32.totalorder %s162, %s164
      %p171 = scmp.eq.s32.totalorder %s28, 1
      %p172 = por %p170, %p171
      %p173 = scmp.ne.s32.totalorder %s164, %s165
      %p174 = scmp.eq.s32.totalorder %s28, 0
      %p175 = por %p173, %p174
      %p176 = scmp.ne.s32.totalorder %s164, %s165
      %p177 = scmp.eq.s32.totalorder %s29, 1
      %p178 = por %p176, %p177
      %p180 = scmp.ne.s32.totalorder %s165, %s179
      %p181 = scmp.eq.s32.totalorder %s29, 0
      %p182 = por %p180, %p181
      %s183 = ssub.s32 %s23, %s30
      %p184 = scmp.eq.s32.totalorder %s183, 0
      %s186 = sadd.s32 %s185, 1
      %s187 = scalar_select %p184, %s185, %s186
      %p190 = pneg %p184
      %p191 = scmp.eq.s32.totalorder %s23, 1
      %p192 = por %p190, %p191
      %p193 = scmp.ne.s32.totalorder %s185, %s188
      %p194 = scmp.eq.s32.totalorder %s23, 0
      %p195 = por %p193, %p194
      %p196 = scmp.ne.s32.totalorder %s185, %s188
      %p197 = scmp.eq.s32.totalorder %s28, 1
      %p198 = por %p196, %p197
      %p199 = scmp.ne.s32.totalorder %s188, %s189
      %p200 = scmp.eq.s32.totalorder %s28, 0
      %p201 = por %p199, %p200
      %p202 = scmp.ne.s32.totalorder %s188, %s189
      %p203 = scmp.eq.s32.totalorder %s29, 1
      %p204 = por %p202, %p203
      %p206 = scmp.ne.s32.totalorder %s189, %s205
      %p207 = scmp.eq.s32.totalorder %s29, 0
      %p208 = por %p206, %p207
      %p209 = scmp.le.s32.totalorder 1, %s23
      %p210 = scmp.lt.s32.totalorder %s23, 3
      %p211 = pnand %p209, %p210
      %p212 = pneg %p211
      // Predicated region
      $region9: #{discriminator_forward.1} parent=5 // pred_check
        _
      $region10: #{discriminator_forward.1} parent=5 // pred_check_branch
        %214 = sbr.rel (%p211) target = $region12
      $region11: #{discriminator_forward.1} parent=5 // pred_region
        %s215 = ssub.s32 %s23, 1
        // Predicated region
        $region13: #{discriminator_forward.1} parent=11 // pred_check
          %p216 = pneg %p70
        $region14: #{discriminator_forward.1} parent=11 // pred_check_branch
          %218 = sbr.rel (%p216) target = $region16
        $region15: #{discriminator_forward.1} parent=11 // pred_region
          %220 = vsyncadd [#allocation7], 0
          %s221 = sshll.u32 %s1, 4
          %s222 = int_to_ptr.hbm [resolvable:$true] %s221
          %s223 = sshll.u32 [#allocation6], 4
          %s224 = int_to_ptr.vmem [resolvable:$true] %s223
          %229 = dma.hbm_to_vmem [thread:$0]  %s222, 25088, %s224, [#allocation7], 256, 256, 16
        $region16: #{discriminator_forward.1} parent=11 // pred_fallthru
          _
        // Predicated region
        $region17: #{discriminator_forward.1} parent=11 // pred_check
          %p230 = pneg %p91
        $region18: #{discriminator_forward.1} parent=11 // pred_check_branch
          %232 = sbr.rel (%p230) target = $region20
        $region19: #{discriminator_forward.1} parent=11 // pred_region
          %234 = vsyncadd [#allocation7], 0
          %s236 = sshll.u32 %s2, 4
          %s237 = int_to_ptr.hbm [resolvable:$true] %s236
          %s238 = sshll.u32 [#allocation8], 4
          %s239 = int_to_ptr.vmem [resolvable:$true] %s238
          %241 = dma.hbm_to_vmem [thread:$0]  %s237, 64, %s239, [#allocation7]
        $region20: #{discriminator_forward.1} parent=11 // pred_fallthru
          _
        // Predicated region
        $region21: #{discriminator_forward.1} parent=11 // pred_check
          %p242 = pneg %p112
        $region22: #{discriminator_forward.1} parent=11 // pred_check_branch
          %244 = sbr.rel (%p242) target = $region24
        $region23: #{discriminator_forward.1} parent=11 // pred_region
          %246 = vsyncadd [#allocation10], 0
          %s247 = sshll.u32 %s3, 4
          %s248 = int_to_ptr.hbm [resolvable:$true] %s247
          %s249 = sshll.u32 [#allocation9], 4
          %s250 = int_to_ptr.vmem [resolvable:$true] %s249
          %255 = dma.hbm_to_vmem [thread:$0]  %s248, 8192, %s250, [#allocation10], 256, 256, 16
        $region24: #{discriminator_forward.1} parent=11 // pred_fallthru
          _
        // Predicated region
        $region25: #{discriminator_forward.1} parent=11 // pred_check
          %p256 = pneg %p133
        $region26: #{discriminator_forward.1} parent=11 // pred_check_branch
          %258 = sbr.rel (%p256) target = $region28
        $region27: #{discriminator_forward.1} parent=11 // pred_region
          _
        $region28: #{discriminator_forward.1} parent=11 // pred_fallthru
          _
        // Predicated region
        $region29: #{discriminator_forward.1} parent=11 // pred_check
          %p259 = pneg %p154
        $region30: #{discriminator_forward.1} parent=11 // pred_check_branch
          %261 = sbr.rel (%p259) target = $region32
        $region31: #{discriminator_forward.1} parent=11 // pred_region
          _
        $region32: #{discriminator_forward.1} parent=11 // pred_fallthru
          _
        // Predicated region
        $region33: #{discriminator_forward.1} parent=11 // pred_check
          %p262 = pneg %p175
        $region34: #{discriminator_forward.1} parent=11 // pred_check_branch
          %264 = sbr.rel (%p262) target = $region36
        $region35: #{discriminator_forward.1} parent=11 // pred_region
          _
        $region36: #{discriminator_forward.1} parent=11 // pred_fallthru
          _
      $region12: #{discriminator_forward.1} parent=5 // pred_fallthru
        _
      %p265 = scmp.lt.s32.totalorder %s23, 2
      // Predicated region
      $region37: #{discriminator_forward.1} parent=5 // pred_check
        %p266 = pneg %p265
      $region38: #{discriminator_forward.1} parent=5 // pred_check_branch
        %268 = sbr.rel (%p266) target = $region40
      $region39: #{discriminator_forward.1} parent=5 // pred_region
        // Predicated region
        $region41: #{discriminator_forward.1} parent=39 // pred_check
          %p269 = pneg %p43
        $region42: #{discriminator_forward.1} parent=39 // pred_check_branch
          %271 = sbr.rel (%p269) target = $region44
        $region43: #{discriminator_forward.1} parent=39 // pred_region
          %s272 = sand.u32 %s33, 1
          %s273 = scalar_lea.sflag [#allocation4], %s272
          %s274 = sand.u32 %s33, 1
          %s275 = smul.addr %s274, 1792
          %s276 = scalar_lea.vmem [#allocation3], %s275
          %s277 = smul.u32 32, %s23
          %s278 = ssub.s32 38, %s277
          %p279 = scmp.lt.s32.totalorder %s278, 32
          %s280 = scalar_select %p279, %s278, 32
          %s281 = smul.u32 8, %s280
          %s282 = smul.u32 %s281, 7
          %s283 = ssub.s32 1792, %s282
          %s284 = sshll.u32 %s283, 4
          %285 = vsyncadd %s273, %s284
          %p286 = scmp.ne.s32.totalorder 0, %s282
          %s287 = smul.addr %s277, 7
          %s288 = smul.addr %s287, 8
          %s289 = scalar_lea.hbm %s0, %s288
          %s290 = smul.u32 56, %s280
          %s291 = sshll.u32 %s289, 4
          %s292 = int_to_ptr.hbm [resolvable:$true] %s291
          %s293 = sshll.u32 %s276, 4
          %s294 = int_to_ptr.vmem [resolvable:$true] %s293
          %s295 = sshll.u32 %s290, 4
          %299 = dma.hbm_to_vmem [thread:$0]  (%p286), %s292, %s295, %s294, %s273, 896, 896, 56
        $region44: #{discriminator_forward.1} parent=39 // pred_fallthru
          _
      $region40: #{discriminator_forward.1} parent=5 // pred_fallthru
        _
      %p300 = scmp.le.s32.totalorder 1, %s23
      %p301 = scmp.lt.s32.totalorder %s23, 3
      %p302 = pnand %p300, %p301
      %p303 = pneg %p302
      // Predicated region
      $region45: #{discriminator_forward.1} parent=5 // pred_check
        _
      $region46: #{discriminator_forward.1} parent=5 // pred_check_branch
        %305 = sbr.rel (%p302) target = $region48
      $region47: #{discriminator_forward.1} parent=5 // pred_region
        %s306 = ssub.s32 %s23, 1
        %s307 = sand.u32 %s36, 1
        %s308 = scalar_lea.sflag [#allocation4], %s307
        %s309 = sand.u32 %s36, 1
        %s310 = smul.addr %s309, 1792
        %s311 = scalar_lea.vmem [#allocation3], %s310
        // Predicated region
        $region49: #{discriminator_forward.1} parent=47 // pred_check
          %p312 = pneg %p49
        $region50: #{discriminator_forward.1} parent=47 // pred_check_branch
          %314 = sbr.rel (%p312) target = $region52
        $region51: #{discriminator_forward.1} parent=47 // pred_region
          %316 = dma.done %s308, 28672
        $region52: #{discriminator_forward.1} parent=47 // pred_fallthru
          _
        // Predicated region
        $region53: #{discriminator_forward.1} parent=47 // pred_check
          %p317 = pneg %p70
        $region54: #{discriminator_forward.1} parent=47 // pred_check_branch
          %319 = sbr.rel (%p317) target = $region56
        $region55: #{discriminator_forward.1} parent=47 // pred_region
          %321 = dma.done [#allocation7], 25088
        $region56: #{discriminator_forward.1} parent=47 // pred_fallthru
          _
        // Predicated region
        $region57: #{discriminator_forward.1} parent=47 // pred_check
          %p322 = pneg %p91
        $region58: #{discriminator_forward.1} parent=47 // pred_check_branch
          %324 = sbr.rel (%p322) target = $region60
        $region59: #{discriminator_forward.1} parent=47 // pred_region
          %326 = dma.done [#allocation7], 64
        $region60: #{discriminator_forward.1} parent=47 // pred_fallthru
          _
        // Predicated region
        $region61: #{discriminator_forward.1} parent=47 // pred_check
          %p327 = pneg %p112
        $region62: #{discriminator_forward.1} parent=47 // pred_check_branch
          %329 = sbr.rel (%p327) target = $region64
        $region63: #{discriminator_forward.1} parent=47 // pred_region
          %331 = dma.done [#allocation10], 8192
        $region64: #{discriminator_forward.1} parent=47 // pred_fallthru
          _
        %s332 = sand.u32 %s36, 1
        %s333 = scalar_lea.sflag [#allocation4], %s332
        %s334 = sand.u32 %s36, 1
        %s335 = smul.addr %s334, 1792
        %s336 = scalar_lea.vmem [#allocation3], %s335
        %p337 = pneg %p49
        %p338 = pneg %p46
        %p339 = pneg %p70
        %p340 = pneg %p67
        %p341 = pneg %p91
        %p342 = pneg %p88
        %p343 = pneg %p112
        %p344 = pneg %p109
        %p345 = pneg %p133
        %p346 = pneg %p130
        %p347 = pneg %p154
        %p348 = pneg %p151
        %p349 = pneg %p175
        %p350 = pneg %p172
        %p351 = pneg %p201
        %p352 = pneg %p198
        %s353 = sand.u32 %s188, 1
        %s354 = scalar_lea.sflag [#allocation5], %s353
        %s355 = sand.u32 %s188, 1
        %s356 = smul.addr %s355, 2
        %s357 = scalar_lea.vmem [#allocation11], %s356
        %s358 = smul.u32 32, %s28
        %s359 = ssub.s32 38, %s358
        %p360 = scmp.lt.s32.totalorder %s359, 32
        %s361 = scalar_select %p360, %s359, 32
        %s362 = smul.u32 8, %s361
        %s363 = smul.u32 %s362, 7
        %s364 = smul.u32 2, %s28
        %s365 = ssub.s32 3, %s364
        %p366 = scmp.lt.s32.totalorder %s365, 2
        %s367 = scalar_select %p366, %s365, 2
        %v369 = vld [vmem:[%s311] sm:$0xff]
        %v370 = vld [vmem:[%s311 + $0x8] sm:$0xff]
        %v371 = vld [vmem:[%s311 + $0x10] sm:$0xff]
        %v372 = vld [vmem:[%s311 + $0x18] sm:$0xff]
        %v373 = vld [vmem:[%s311 + $0x20] sm:$0xff]
        %v374 = vld [vmem:[%s311 + $0x28] sm:$0xff]
        %v375 = vld [vmem:[%s311 + $0x30] sm:$0xff]
        %v376 = vld [vmem:[%s311 + $0x38] sm:$0xff]
        %v377 = vld [vmem:[%s311 + $0x40] sm:$0xff]
        %v378 = vld [vmem:[%s311 + $0x48] sm:$0xff]
        %v379 = vld [vmem:[%s311 + $0x50] sm:$0xff]
        %v380 = vld [vmem:[%s311 + $0x58] sm:$0xff]
        %v381 = vld [vmem:[%s311 + $0x60] sm:$0xff]
        %v382 = vld [vmem:[%s311 + $0x68] sm:$0xff]
        %v383 = vld [vmem:[%s311 + $0x70] sm:$0xff]
        %v384 = vld [vmem:[%s311 + $0x78] sm:$0xff]
        %v385 = vld [vmem:[%s311 + $0x80] sm:$0xff]
        %v386 = vld [vmem:[%s311 + $0x88] sm:$0xff]
        %v387 = vld [vmem:[%s311 + $0x90] sm:$0xff]
        %v388 = vld [vmem:[%s311 + $0x98] sm:$0xff]
        %v389 = vld [vmem:[%s311 + $0xa0] sm:$0xff]
        %v390 = vld [vmem:[%s311 + $0xa8] sm:$0xff]
        %v391 = vld [vmem:[%s311 + $0xb0] sm:$0xff]
        %v392 = vld [vmem:[%s311 + $0xb8] sm:$0xff]
        %v393 = vld [vmem:[%s311 + $0xc0] sm:$0xff]
        %v394 = vld [vmem:[%s311 + $0xc8] sm:$0xff]
        %v395 = vld [vmem:[%s311 + $0xd0] sm:$0xff]
        %v396 = vld [vmem:[%s311 + $0xd8] sm:$0xff]
        %v397 = vld [vmem:[%s311 + $0xe0] sm:$0xff]
        %v398 = vld [vmem:[%s311 + $0xe8] sm:$0xff]
        %v399 = vld [vmem:[%s311 + $0xf0] sm:$0xff]
        %v400 = vld [vmem:[%s311 + $0xf8] sm:$0xff]
        %v401 = vld [vmem:[%s311 + $0x100] sm:$0xff]
        %v402 = vld [vmem:[%s311 + $0x108] sm:$0xff]
        %v403 = vld [vmem:[%s311 + $0x110] sm:$0xff]
        %v404 = vld [vmem:[%s311 + $0x118] sm:$0xff]
        %v405 = vld [vmem:[%s311 + $0x120] sm:$0xff]
        %v406 = vld [vmem:[%s311 + $0x128] sm:$0xff]
        %v407 = vld [vmem:[%s311 + $0x130] sm:$0xff]
        %v408 = vld [vmem:[%s311 + $0x138] sm:$0xff]
        %v409 = vld [vmem:[%s311 + $0x140] sm:$0xff]
        %v410 = vld [vmem:[%s311 + $0x148] sm:$0xff]
        %v411 = vld [vmem:[%s311 + $0x150] sm:$0xff]
        %v412 = vld [vmem:[%s311 + $0x158] sm:$0xff]
        %v413 = vld [vmem:[%s311 + $0x160] sm:$0xff]
        %v414 = vld [vmem:[%s311 + $0x168] sm:$0xff]
        %v415 = vld [vmem:[%s311 + $0x170] sm:$0xff]
        %v416 = vld [vmem:[%s311 + $0x178] sm:$0xff]
        %v417 = vld [vmem:[%s311 + $0x180] sm:$0xff]
        %v418 = vld [vmem:[%s311 + $0x188] sm:$0xff]
        %v419 = vld [vmem:[%s311 + $0x190] sm:$0xff]
        %v420 = vld [vmem:[%s311 + $0x198] sm:$0xff]
        %v421 = vld [vmem:[%s311 + $0x1a0] sm:$0xff]
        %v422 = vld [vmem:[%s311 + $0x1a8] sm:$0xff]
        %v423 = vld [vmem:[%s311 + $0x1b0] sm:$0xff]
        %v424 = vld [vmem:[%s311 + $0x1b8] sm:$0xff]
        %v425 = vld [vmem:[%s311 + $0x1c0] sm:$0xff]
        %v426 = vld [vmem:[%s311 + $0x1c8] sm:$0xff]
        %v427 = vld [vmem:[%s311 + $0x1d0] sm:$0xff]
        %v428 = vld [vmem:[%s311 + $0x1d8] sm:$0xff]
        %v429 = vld [vmem:[%s311 + $0x1e0] sm:$0xff]
        %v430 = vld [vmem:[%s311 + $0x1e8] sm:$0xff]
        %v431 = vld [vmem:[%s311 + $0x1f0] sm:$0xff]
        %v432 = vld [vmem:[%s311 + $0x1f8] sm:$0xff]
        %v433 = vld [vmem:[%s311 + $0x200] sm:$0xff]
        %v434 = vld [vmem:[%s311 + $0x208] sm:$0xff]
        %v435 = vld [vmem:[%s311 + $0x210] sm:$0xff]
        %v436 = vld [vmem:[%s311 + $0x218] sm:$0xff]
        %v437 = vld [vmem:[%s311 + $0x220] sm:$0xff]
        %v438 = vld [vmem:[%s311 + $0x228] sm:$0xff]
        %v439 = vld [vmem:[%s311 + $0x230] sm:$0xff]
        %v440 = vld [vmem:[%s311 + $0x238] sm:$0xff]
        %v441 = vld [vmem:[%s311 + $0x240] sm:$0xff]
        %v442 = vld [vmem:[%s311 + $0x248] sm:$0xff]
        %v443 = vld [vmem:[%s311 + $0x250] sm:$0xff]
        %v444 = vld [vmem:[%s311 + $0x258] sm:$0xff]
        %v445 = vld [vmem:[%s311 + $0x260] sm:$0xff]
        %v446 = vld [vmem:[%s311 + $0x268] sm:$0xff]
        %v447 = vld [vmem:[%s311 + $0x270] sm:$0xff]
        %v448 = vld [vmem:[%s311 + $0x278] sm:$0xff]
        %v449 = vld [vmem:[%s311 + $0x280] sm:$0xff]
        %v450 = vld [vmem:[%s311 + $0x288] sm:$0xff]
        %v451 = vld [vmem:[%s311 + $0x290] sm:$0xff]
        %v452 = vld [vmem:[%s311 + $0x298] sm:$0xff]
        %v453 = vld [vmem:[%s311 + $0x2a0] sm:$0xff]
        %v454 = vld [vmem:[%s311 + $0x2a8] sm:$0xff]
        %v455 = vld [vmem:[%s311 + $0x2b0] sm:$0xff]
        %v456 = vld [vmem:[%s311 + $0x2b8] sm:$0xff]
        %v457 = vld [vmem:[%s311 + $0x2c0] sm:$0xff]
        %v458 = vld [vmem:[%s311 + $0x2c8] sm:$0xff]
        %v459 = vld [vmem:[%s311 + $0x2d0] sm:$0xff]
        %v460 = vld [vmem:[%s311 + $0x2d8] sm:$0xff]
        %v461 = vld [vmem:[%s311 + $0x2e0] sm:$0xff]
        %v462 = vld [vmem:[%s311 + $0x2e8] sm:$0xff]
        %v463 = vld [vmem:[%s311 + $0x2f0] sm:$0xff]
        %v464 = vld [vmem:[%s311 + $0x2f8] sm:$0xff]
        %v465 = vld [vmem:[%s311 + $0x300] sm:$0xff]
        %v466 = vld [vmem:[%s311 + $0x308] sm:$0xff]
        %v467 = vld [vmem:[%s311 + $0x310] sm:$0xff]
        %v468 = vld [vmem:[%s311 + $0x318] sm:$0xff]
        %v469 = vld [vmem:[%s311 + $0x320] sm:$0xff]
        %v470 = vld [vmem:[%s311 + $0x328] sm:$0xff]
        %v471 = vld [vmem:[%s311 + $0x330] sm:$0xff]
        %v472 = vld [vmem:[%s311 + $0x338] sm:$0xff]
        %v473 = vld [vmem:[%s311 + $0x340] sm:$0xff]
        %v474 = vld [vmem:[%s311 + $0x348] sm:$0xff]
        %v475 = vld [vmem:[%s311 + $0x350] sm:$0xff]
        %v476 = vld [vmem:[%s311 + $0x358] sm:$0xff]
        %v477 = vld [vmem:[%s311 + $0x360] sm:$0xff]
        %v478 = vld [vmem:[%s311 + $0x368] sm:$0xff]
        %v479 = vld [vmem:[%s311 + $0x370] sm:$0xff]
        %v480 = vld [vmem:[%s311 + $0x378] sm:$0xff]
        %v481 = vld [vmem:[%s311 + $0x380] sm:$0xff]
        %v482 = vld [vmem:[%s311 + $0x388] sm:$0xff]
        %v483 = vld [vmem:[%s311 + $0x390] sm:$0xff]
        %v484 = vld [vmem:[%s311 + $0x398] sm:$0xff]
        %v485 = vld [vmem:[%s311 + $0x3a0] sm:$0xff]
        %v486 = vld [vmem:[%s311 + $0x3a8] sm:$0xff]
        %v487 = vld [vmem:[%s311 + $0x3b0] sm:$0xff]
        %v488 = vld [vmem:[%s311 + $0x3b8] sm:$0xff]
        %v489 = vld [vmem:[%s311 + $0x3c0] sm:$0xff]
        %v490 = vld [vmem:[%s311 + $0x3c8] sm:$0xff]
        %v491 = vld [vmem:[%s311 + $0x3d0] sm:$0xff]
        %v492 = vld [vmem:[%s311 + $0x3d8] sm:$0xff]
        %v493 = vld [vmem:[%s311 + $0x3e0] sm:$0xff]
        %v494 = vld [vmem:[%s311 + $0x3e8] sm:$0xff]
        %v495 = vld [vmem:[%s311 + $0x3f0] sm:$0xff]
        %v496 = vld [vmem:[%s311 + $0x3f8] sm:$0xff]
        %v497 = vld [vmem:[%s311 + $0x400] sm:$0xff]
        %v498 = vld [vmem:[%s311 + $0x408] sm:$0xff]
        %v499 = vld [vmem:[%s311 + $0x410] sm:$0xff]
        %v500 = vld [vmem:[%s311 + $0x418] sm:$0xff]
        %v501 = vld [vmem:[%s311 + $0x420] sm:$0xff]
        %v502 = vld [vmem:[%s311 + $0x428] sm:$0xff]
        %v503 = vld [vmem:[%s311 + $0x430] sm:$0xff]
        %v504 = vld [vmem:[%s311 + $0x438] sm:$0xff]
        %v505 = vld [vmem:[%s311 + $0x440] sm:$0xff]
        %v506 = vld [vmem:[%s311 + $0x448] sm:$0xff]
        %v507 = vld [vmem:[%s311 + $0x450] sm:$0xff]
        %v508 = vld [vmem:[%s311 + $0x458] sm:$0xff]
        %v509 = vld [vmem:[%s311 + $0x460] sm:$0xff]
        %v510 = vld [vmem:[%s311 + $0x468] sm:$0xff]
        %v511 = vld [vmem:[%s311 + $0x470] sm:$0xff]
        %v512 = vld [vmem:[%s311 + $0x478] sm:$0xff]
        %v513 = vld [vmem:[%s311 + $0x480] sm:$0xff]
        %v514 = vld [vmem:[%s311 + $0x488] sm:$0xff]
        %v515 = vld [vmem:[%s311 + $0x490] sm:$0xff]
        %v516 = vld [vmem:[%s311 + $0x498] sm:$0xff]
        %v517 = vld [vmem:[%s311 + $0x4a0] sm:$0xff]
        %v518 = vld [vmem:[%s311 + $0x4a8] sm:$0xff]
        %v519 = vld [vmem:[%s311 + $0x4b0] sm:$0xff]
        %v520 = vld [vmem:[%s311 + $0x4b8] sm:$0xff]
        %v521 = vld [vmem:[%s311 + $0x4c0] sm:$0xff]
        %v522 = vld [vmem:[%s311 + $0x4c8] sm:$0xff]
        %v523 = vld [vmem:[%s311 + $0x4d0] sm:$0xff]
        %v524 = vld [vmem:[%s311 + $0x4d8] sm:$0xff]
        %v525 = vld [vmem:[%s311 + $0x4e0] sm:$0xff]
        %v526 = vld [vmem:[%s311 + $0x4e8] sm:$0xff]
        %v527 = vld [vmem:[%s311 + $0x4f0] sm:$0xff]
        %v528 = vld [vmem:[%s311 + $0x4f8] sm:$0xff]
        %v529 = vld [vmem:[%s311 + $0x500] sm:$0xff]
        %v530 = vld [vmem:[%s311 + $0x508] sm:$0xff]
        %v531 = vld [vmem:[%s311 + $0x510] sm:$0xff]
        %v532 = vld [vmem:[%s311 + $0x518] sm:$0xff]
        %v533 = vld [vmem:[%s311 + $0x520] sm:$0xff]
        %v534 = vld [vmem:[%s311 + $0x528] sm:$0xff]
        %v535 = vld [vmem:[%s311 + $0x530] sm:$0xff]
        %v536 = vld [vmem:[%s311 + $0x538] sm:$0xff]
        %v537 = vld [vmem:[%s311 + $0x540] sm:$0xff]
        %v538 = vld [vmem:[%s311 + $0x548] sm:$0xff]
        %v539 = vld [vmem:[%s311 + $0x550] sm:$0xff]
        %v540 = vld [vmem:[%s311 + $0x558] sm:$0xff]
        %v541 = vld [vmem:[%s311 + $0x560] sm:$0xff]
        %v542 = vld [vmem:[%s311 + $0x568] sm:$0xff]
        %v543 = vld [vmem:[%s311 + $0x570] sm:$0xff]
        %v544 = vld [vmem:[%s311 + $0x578] sm:$0xff]
        %v545 = vld [vmem:[%s311 + $0x580] sm:$0xff]
        %v546 = vld [vmem:[%s311 + $0x588] sm:$0xff]
        %v547 = vld [vmem:[%s311 + $0x590] sm:$0xff]
        %v548 = vld [vmem:[%s311 + $0x598] sm:$0xff]
        %v549 = vld [vmem:[%s311 + $0x5a0] sm:$0xff]
        %v550 = vld [vmem:[%s311 + $0x5a8] sm:$0xff]
        %v551 = vld [vmem:[%s311 + $0x5b0] sm:$0xff]
        %v552 = vld [vmem:[%s311 + $0x5b8] sm:$0xff]
        %v553 = vld [vmem:[%s311 + $0x5c0] sm:$0xff]
        %v554 = vld [vmem:[%s311 + $0x5c8] sm:$0xff]
        %v555 = vld [vmem:[%s311 + $0x5d0] sm:$0xff]
        %v556 = vld [vmem:[%s311 + $0x5d8] sm:$0xff]
        %v557 = vld [vmem:[%s311 + $0x5e0] sm:$0xff]
        %v558 = vld [vmem:[%s311 + $0x5e8] sm:$0xff]
        %v559 = vld [vmem:[%s311 + $0x5f0] sm:$0xff]
        %v560 = vld [vmem:[%s311 + $0x5f8] sm:$0xff]
        %v561 = vld [vmem:[%s311 + $0x600] sm:$0xff]
        %v562 = vld [vmem:[%s311 + $0x608] sm:$0xff]
        %v563 = vld [vmem:[%s311 + $0x610] sm:$0xff]
        %v564 = vld [vmem:[%s311 + $0x618] sm:$0xff]
        %v565 = vld [vmem:[%s311 + $0x620] sm:$0xff]
        %v566 = vld [vmem:[%s311 + $0x628] sm:$0xff]
        %v567 = vld [vmem:[%s311 + $0x630] sm:$0xff]
        %v568 = vld [vmem:[%s311 + $0x638] sm:$0xff]
        %v569 = vld [vmem:[%s311 + $0x640] sm:$0xff]
        %v570 = vld [vmem:[%s311 + $0x648] sm:$0xff]
        %v571 = vld [vmem:[%s311 + $0x650] sm:$0xff]
        %v572 = vld [vmem:[%s311 + $0x658] sm:$0xff]
        %v573 = vld [vmem:[%s311 + $0x660] sm:$0xff]
        %v574 = vld [vmem:[%s311 + $0x668] sm:$0xff]
        %v575 = vld [vmem:[%s311 + $0x670] sm:$0xff]
        %v576 = vld [vmem:[%s311 + $0x678] sm:$0xff]
        %v577 = vld [vmem:[%s311 + $0x680] sm:$0xff]
        %v578 = vld [vmem:[%s311 + $0x688] sm:$0xff]
        %v579 = vld [vmem:[%s311 + $0x690] sm:$0xff]
        %v580 = vld [vmem:[%s311 + $0x698] sm:$0xff]
        %v581 = vld [vmem:[%s311 + $0x6a0] sm:$0xff]
        %v582 = vld [vmem:[%s311 + $0x6a8] sm:$0xff]
        %v583 = vld [vmem:[%s311 + $0x6b0] sm:$0xff]
        %v584 = vld [vmem:[%s311 + $0x6b8] sm:$0xff]
        %v585 = vld [vmem:[%s311 + $0x6c0] sm:$0xff]
        %v586 = vld [vmem:[%s311 + $0x6c8] sm:$0xff]
        %v587 = vld [vmem:[%s311 + $0x6d0] sm:$0xff]
        %v588 = vld [vmem:[%s311 + $0x6d8] sm:$0xff]
        %v589 = vld [vmem:[%s311 + $0x6e0] sm:$0xff]
        %v590 = vld [vmem:[%s311 + $0x6e8] sm:$0xff]
        %v591 = vld [vmem:[%s311 + $0x6f0] sm:$0xff]
        %v592 = vld [vmem:[%s311 + $0x6f8] sm:$0xff]
        %s593 = smul.u32 %s28, 256
        %v594 = vlaneseq
        %v595 = vshrl.u32 %v594, 7
        %v596 = vadd.s32 %v595, 8
        %v597 = vadd.s32 %v595, 16
        %v598 = vadd.s32 %v595, 24
        %v599 = vadd.s32 %v595, 32
        %v600 = vadd.s32 %v595, 40
        %v601 = vadd.s32 %v595, 48
        %v602 = vadd.s32 %v595, 56
        %v603 = vadd.s32 %v595, 64
        %v604 = vadd.s32 %v595, 72
        %v605 = vadd.s32 %v595, 80
        %v606 = vadd.s32 %v595, 88
        %v607 = vadd.s32 %v595, 96
        %v608 = vadd.s32 %v595, 104
        %v609 = vadd.s32 %v595, 112
        %v610 = vadd.s32 %v595, 120
        %v611 = vadd.s32 %v595, 128
        %v612 = vadd.s32 %v595, 136
        %v613 = vadd.s32 %v595, 144
        %v614 = vadd.s32 %v595, 152
        %v615 = vadd.s32 %v595, 160
        %v616 = vadd.s32 %v595, 168
        %v617 = vadd.s32 %v595, 176
        %v618 = vadd.s32 %v595, 184
        %v619 = vadd.s32 %v595, 192
        %v620 = vadd.s32 %v595, 200
        %v621 = vadd.s32 %v595, 208
        %v622 = vadd.s32 %v595, 216
        %v623 = vadd.s32 %v595, 224
        %v624 = vadd.s32 %v595, 232
        %v625 = vadd.s32 %v595, 240
        %v626 = vadd.s32 %v595, 248
        %v627 = vstv %s593
        %v628 = vadd.s32 %v627, %v595
        %v629 = vadd.s32 %v627, %v596
        %v630 = vadd.s32 %v627, %v597
        %v631 = vadd.s32 %v627, %v598
        %v632 = vadd.s32 %v627, %v599
        %v633 = vadd.s32 %v627, %v600
        %v634 = vadd.s32 %v627, %v601
        %v635 = vadd.s32 %v627, %v602
        %v636 = vadd.s32 %v627, %v603
        %v637 = vadd.s32 %v627, %v604
        %v638 = vadd.s32 %v627, %v605
        %v639 = vadd.s32 %v627, %v606
        %v640 = vadd.s32 %v627, %v607
        %v641 = vadd.s32 %v627, %v608
        %v642 = vadd.s32 %v627, %v609
        %v643 = vadd.s32 %v627, %v610
        %v644 = vadd.s32 %v627, %v611
        %v645 = vadd.s32 %v627, %v612
        %v646 = vadd.s32 %v627, %v613
        %v647 = vadd.s32 %v627, %v614
        %v648 = vadd.s32 %v627, %v615
        %v649 = vadd.s32 %v627, %v616
        %v650 = vadd.s32 %v627, %v617
        %v651 = vadd.s32 %v627, %v618
        %v652 = vadd.s32 %v627, %v619
        %v653 = vadd.s32 %v627, %v620
        %v654 = vadd.s32 %v627, %v621
        %v655 = vadd.s32 %v627, %v622
        %v656 = vadd.s32 %v627, %v623
        %v657 = vadd.s32 %v627, %v624
        %v658 = vadd.s32 %v627, %v625
        %v659 = vadd.s32 %v627, %v626
        %vm660 = vcmp.lt.s32.totalorder %v628, 300
        %vm661 = vcmp.lt.s32.totalorder %v629, 300
        %vm662 = vcmp.lt.s32.totalorder %v630, 300
        %vm663 = vcmp.lt.s32.totalorder %v631, 300
        %vm664 = vcmp.lt.s32.totalorder %v632, 300
        %vm665 = vcmp.lt.s32.totalorder %v633, 300
        %vm666 = vcmp.lt.s32.totalorder %v634, 300
        %vm667 = vcmp.lt.s32.totalorder %v635, 300
        %vm668 = vcmp.lt.s32.totalorder %v636, 300
        %vm669 = vcmp.lt.s32.totalorder %v637, 300
        %vm670 = vcmp.lt.s32.totalorder %v638, 300
        %vm671 = vcmp.lt.s32.totalorder %v639, 300
        %vm672 = vcmp.lt.s32.totalorder %v640, 300
        %vm673 = vcmp.lt.s32.totalorder %v641, 300
        %vm674 = vcmp.lt.s32.totalorder %v642, 300
        %vm675 = vcmp.lt.s32.totalorder %v643, 300
        %vm676 = vcmp.lt.s32.totalorder %v644, 300
        %vm677 = vcmp.lt.s32.totalorder %v645, 300
        %vm678 = vcmp.lt.s32.totalorder %v646, 300
        %vm679 = vcmp.lt.s32.totalorder %v647, 300
        %vm680 = vcmp.lt.s32.totalorder %v648, 300
        %vm681 = vcmp.lt.s32.totalorder %v649, 300
        %vm682 = vcmp.lt.s32.totalorder %v650, 300
        %vm683 = vcmp.lt.s32.totalorder %v651, 300
        %vm684 = vcmp.lt.s32.totalorder %v652, 300
        %vm685 = vcmp.lt.s32.totalorder %v653, 300
        %vm686 = vcmp.lt.s32.totalorder %v654, 300
        %vm687 = vcmp.lt.s32.totalorder %v655, 300
        %vm688 = vcmp.lt.s32.totalorder %v656, 300
        %vm689 = vcmp.lt.s32.totalorder %v657, 300
        %vm690 = vcmp.lt.s32.totalorder %v658, 300
        %vm691 = vcmp.lt.s32.totalorder %v659, 300
        %v692 = vsel %vm660, 1, 0
        %v693 = vsel %vm661, 1, 0
        %v694 = vsel %vm662, 1, 0
        %v695 = vsel %vm663, 1, 0
        %v696 = vsel %vm664, 1, 0
        %v697 = vsel %vm665, 1, 0
        %v698 = vsel %vm666, 1, 0
        %v699 = vsel %vm667, 1, 0
        %v700 = vsel %vm668, 1, 0
        %v701 = vsel %vm669, 1, 0
        %v702 = vsel %vm670, 1, 0
        %v703 = vsel %vm671, 1, 0
        %v704 = vsel %vm672, 1, 0
        %v705 = vsel %vm673, 1, 0
        %v706 = vsel %vm674, 1, 0
        %v707 = vsel %vm675, 1, 0
        %v708 = vsel %vm676, 1, 0
        %v709 = vsel %vm677, 1, 0
        %v710 = vsel %vm678, 1, 0
        %v711 = vsel %vm679, 1, 0
        %v712 = vsel %vm680, 1, 0
        %v713 = vsel %vm681, 1, 0
        %v714 = vsel %vm682, 1, 0
        %v715 = vsel %vm683, 1, 0
        %v716 = vsel %vm684, 1, 0
        %v717 = vsel %vm685, 1, 0
        %v718 = vsel %vm686, 1, 0
        %v719 = vsel %vm687, 1, 0
        %v720 = vsel %vm688, 1, 0
        %v721 = vsel %vm689, 1, 0
        %v722 = vsel %vm690, 1, 0
        %v723 = vsel %vm691, 1, 0
        %vm724 = vcmp.eq.s32.totalorder %v692, 1
        %vm725 = vcmp.eq.s32.totalorder %v693, 1
        %vm726 = vcmp.eq.s32.totalorder %v694, 1
        %vm727 = vcmp.eq.s32.totalorder %v695, 1
        %vm728 = vcmp.eq.s32.totalorder %v696, 1
        %vm729 = vcmp.eq.s32.totalorder %v697, 1
        %vm730 = vcmp.eq.s32.totalorder %v698, 1
        %vm731 = vcmp.eq.s32.totalorder %v699, 1
        %vm732 = vcmp.eq.s32.totalorder %v700, 1
        %vm733 = vcmp.eq.s32.totalorder %v701, 1
        %vm734 = vcmp.eq.s32.totalorder %v702, 1
        %vm735 = vcmp.eq.s32.totalorder %v703, 1
        %vm736 = vcmp.eq.s32.totalorder %v704, 1
        %vm737 = vcmp.eq.s32.totalorder %v705, 1
        %vm738 = vcmp.eq.s32.totalorder %v706, 1
        %vm739 = vcmp.eq.s32.totalorder %v707, 1
        %vm740 = vcmp.eq.s32.totalorder %v708, 1
        %vm741 = vcmp.eq.s32.totalorder %v709, 1
        %vm742 = vcmp.eq.s32.totalorder %v710, 1
        %vm743 = vcmp.eq.s32.totalorder %v711, 1
        %vm744 = vcmp.eq.s32.totalorder %v712, 1
        %vm745 = vcmp.eq.s32.totalorder %v713, 1
        %vm746 = vcmp.eq.s32.totalorder %v714, 1
        %vm747 = vcmp.eq.s32.totalorder %v715, 1
        %vm748 = vcmp.eq.s32.totalorder %v716, 1
        %vm749 = vcmp.eq.s32.totalorder %v717, 1
        %vm750 = vcmp.eq.s32.totalorder %v718, 1
        %vm751 = vcmp.eq.s32.totalorder %v719, 1
        %vm752 = vcmp.eq.s32.totalorder %v720, 1
        %vm753 = vcmp.eq.s32.totalorder %v721, 1
        %vm754 = vcmp.eq.s32.totalorder %v722, 1
        %vm755 = vcmp.eq.s32.totalorder %v723, 1
        %v756 = vsel %vm724, %v369, 0.0
        %v757 = vsel %vm724, %v370, 0.0
        %v758 = vsel %vm724, %v371, 0.0
        %v759 = vsel %vm724, %v372, 0.0
        %v760 = vsel %vm724, %v373, 0.0
        %v761 = vsel %vm724, %v374, 0.0
        %v762 = vsel %vm724, %v375, 0.0
        %v763 = vsel %vm725, %v376, 0.0
        %v764 = vsel %vm725, %v377, 0.0
        %v765 = vsel %vm725, %v378, 0.0
        %v766 = vsel %vm725, %v379, 0.0
        %v767 = vsel %vm725, %v380, 0.0
        %v768 = vsel %vm725, %v381, 0.0
        %v769 = vsel %vm725, %v382, 0.0
        %v770 = vsel %vm726, %v383, 0.0
        %v771 = vsel %vm726, %v384, 0.0
        %v772 = vsel %vm726, %v385, 0.0
        %v773 = vsel %vm726, %v386, 0.0
        %v774 = vsel %vm726, %v387, 0.0
        %v775 = vsel %vm726, %v388, 0.0
        %v776 = vsel %vm726, %v389, 0.0
        %v777 = vsel %vm727, %v390, 0.0
        %v778 = vsel %vm727, %v391, 0.0
        %v779 = vsel %vm727, %v392, 0.0
        %v780 = vsel %vm727, %v393, 0.0
        %v781 = vsel %vm727, %v394, 0.0
        %v782 = vsel %vm727, %v395, 0.0
        %v783 = vsel %vm727, %v396, 0.0
        %v784 = vsel %vm728, %v397, 0.0
        %v785 = vsel %vm728, %v398, 0.0
        %v786 = vsel %vm728, %v399, 0.0
        %v787 = vsel %vm728, %v400, 0.0
        %v788 = vsel %vm728, %v401, 0.0
        %v789 = vsel %vm728, %v402, 0.0
        %v790 = vsel %vm728, %v403, 0.0
        %v791 = vsel %vm729, %v404, 0.0
        %v792 = vsel %vm729, %v405, 0.0
        %v793 = vsel %vm729, %v406, 0.0
        %v794 = vsel %vm729, %v407, 0.0
        %v795 = vsel %vm729, %v408, 0.0
        %v796 = vsel %vm729, %v409, 0.0
        %v797 = vsel %vm729, %v410, 0.0
        %v798 = vsel %vm730, %v411, 0.0
        %v799 = vsel %vm730, %v412, 0.0
        %v800 = vsel %vm730, %v413, 0.0
        %v801 = vsel %vm730, %v414, 0.0
        %v802 = vsel %vm730, %v415, 0.0
        %v803 = vsel %vm730, %v416, 0.0
        %v804 = vsel %vm730, %v417, 0.0
        %v805 = vsel %vm731, %v418, 0.0
        %v806 = vsel %vm731, %v419, 0.0
        %v807 = vsel %vm731, %v420, 0.0
        %v808 = vsel %vm731, %v421, 0.0
        %v809 = vsel %vm731, %v422, 0.0
        %v810 = vsel %vm731, %v423, 0.0
        %v811 = vsel %vm731, %v424, 0.0
        %v812 = vsel %vm732, %v425, 0.0
        %v813 = vsel %vm732, %v426, 0.0
        %v814 = vsel %vm732, %v427, 0.0
        %v815 = vsel %vm732, %v428, 0.0
        %v816 = vsel %vm732, %v429, 0.0
        %v817 = vsel %vm732, %v430, 0.0
        %v818 = vsel %vm732, %v431, 0.0
        %v819 = vsel %vm733, %v432, 0.0
        %v820 = vsel %vm733, %v433, 0.0
        %v821 = vsel %vm733, %v434, 0.0
        %v822 = vsel %vm733, %v435, 0.0
        %v823 = vsel %vm733, %v436, 0.0
        %v824 = vsel %vm733, %v437, 0.0
        %v825 = vsel %vm733, %v438, 0.0
        %v826 = vsel %vm734, %v439, 0.0
        %v827 = vsel %vm734, %v440, 0.0
        %v828 = vsel %vm734, %v441, 0.0
        %v829 = vsel %vm734, %v442, 0.0
        %v830 = vsel %vm734, %v443, 0.0
        %v831 = vsel %vm734, %v444, 0.0
        %v832 = vsel %vm734, %v445, 0.0
        %v833 = vsel %vm735, %v446, 0.0
        %v834 = vsel %vm735, %v447, 0.0
        %v835 = vsel %vm735, %v448, 0.0
        %v836 = vsel %vm735, %v449, 0.0
        %v837 = vsel %vm735, %v450, 0.0
        %v838 = vsel %vm735, %v451, 0.0
        %v839 = vsel %vm735, %v452, 0.0
        %v840 = vsel %vm736, %v453, 0.0
        %v841 = vsel %vm736, %v454, 0.0
        %v842 = vsel %vm736, %v455, 0.0
        %v843 = vsel %vm736, %v456, 0.0
        %v844 = vsel %vm736, %v457, 0.0
        %v845 = vsel %vm736, %v458, 0.0
        %v846 = vsel %vm736, %v459, 0.0
        %v847 = vsel %vm737, %v460, 0.0
        %v848 = vsel %vm737, %v461, 0.0
        %v849 = vsel %vm737, %v462, 0.0
        %v850 = vsel %vm737, %v463, 0.0
        %v851 = vsel %vm737, %v464, 0.0
        %v852 = vsel %vm737, %v465, 0.0
        %v853 = vsel %vm737, %v466, 0.0
        %v854 = vsel %vm738, %v467, 0.0
        %v855 = vsel %vm738, %v468, 0.0
        %v856 = vsel %vm738, %v469, 0.0
        %v857 = vsel %vm738, %v470, 0.0
        %v858 = vsel %vm738, %v471, 0.0
        %v859 = vsel %vm738, %v472, 0.0
        %v860 = vsel %vm738, %v473, 0.0
        %v861 = vsel %vm739, %v474, 0.0
        %v862 = vsel %vm739, %v475, 0.0
        %v863 = vsel %vm739, %v476, 0.0
        %v864 = vsel %vm739, %v477, 0.0
        %v865 = vsel %vm739, %v478, 0.0
        %v866 = vsel %vm739, %v479, 0.0
        %v867 = vsel %vm739, %v480, 0.0
        %v868 = vsel %vm740, %v481, 0.0
        %v869 = vsel %vm740, %v482, 0.0
        %v870 = vsel %vm740, %v483, 0.0
        %v871 = vsel %vm740, %v484, 0.0
        %v872 = vsel %vm740, %v485, 0.0
        %v873 = vsel %vm740, %v486, 0.0
        %v874 = vsel %vm740, %v487, 0.0
        %v875 = vsel %vm741, %v488, 0.0
        %v876 = vsel %vm741, %v489, 0.0
        %v877 = vsel %vm741, %v490, 0.0
        %v878 = vsel %vm741, %v491, 0.0
        %v879 = vsel %vm741, %v492, 0.0
        %v880 = vsel %vm741, %v493, 0.0
        %v881 = vsel %vm741, %v494, 0.0
        %v882 = vsel %vm742, %v495, 0.0
        %v883 = vsel %vm742, %v496, 0.0
        %v884 = vsel %vm742, %v497, 0.0
        %v885 = vsel %vm742, %v498, 0.0
        %v886 = vsel %vm742, %v499, 0.0
        %v887 = vsel %vm742, %v500, 0.0
        %v888 = vsel %vm742, %v501, 0.0
        %v889 = vsel %vm743, %v502, 0.0
        %v890 = vsel %vm743, %v503, 0.0
        %v891 = vsel %vm743, %v504, 0.0
        %v892 = vsel %vm743, %v505, 0.0
        %v893 = vsel %vm743, %v506, 0.0
        %v894 = vsel %vm743, %v507, 0.0
        %v895 = vsel %vm743, %v508, 0.0
        %v896 = vsel %vm744, %v509, 0.0
        %v897 = vsel %vm744, %v510, 0.0
        %v898 = vsel %vm744, %v511, 0.0
        %v899 = vsel %vm744, %v512, 0.0
        %v900 = vsel %vm744, %v513, 0.0
        %v901 = vsel %vm744, %v514, 0.0
        %v902 = vsel %vm744, %v515, 0.0
        %v903 = vsel %vm745, %v516, 0.0
        %v904 = vsel %vm745, %v517, 0.0
        %v905 = vsel %vm745, %v518, 0.0
        %v906 = vsel %vm745, %v519, 0.0
        %v907 = vsel %vm745, %v520, 0.0
        %v908 = vsel %vm745, %v521, 0.0
        %v909 = vsel %vm745, %v522, 0.0
        %v910 = vsel %vm746, %v523, 0.0
        %v911 = vsel %vm746, %v524, 0.0
        %v912 = vsel %vm746, %v525, 0.0
        %v913 = vsel %vm746, %v526, 0.0
        %v914 = vsel %vm746, %v527, 0.0
        %v915 = vsel %vm746, %v528, 0.0
        %v916 = vsel %vm746, %v529, 0.0
        %v917 = vsel %vm747, %v530, 0.0
        %v918 = vsel %vm747, %v531, 0.0
        %v919 = vsel %vm747, %v532, 0.0
        %v920 = vsel %vm747, %v533, 0.0
        %v921 = vsel %vm747, %v534, 0.0
        %v922 = vsel %vm747, %v535, 0.0
        %v923 = vsel %vm747, %v536, 0.0
        %v924 = vsel %vm748, %v537, 0.0
        %v925 = vsel %vm748, %v538, 0.0
        %v926 = vsel %vm748, %v539, 0.0
        %v927 = vsel %vm748, %v540, 0.0
        %v928 = vsel %vm748, %v541, 0.0
        %v929 = vsel %vm748, %v542, 0.0
        %v930 = vsel %vm748, %v543, 0.0
        %v931 = vsel %vm749, %v544, 0.0
        %v932 = vsel %vm749, %v545, 0.0
        %v933 = vsel %vm749, %v546, 0.0
        %v934 = vsel %vm749, %v547, 0.0
        %v935 = vsel %vm749, %v548, 0.0
        %v936 = vsel %vm749, %v549, 0.0
        %v937 = vsel %vm749, %v550, 0.0
        %v938 = vsel %vm750, %v551, 0.0
        %v939 = vsel %vm750, %v552, 0.0
        %v940 = vsel %vm750, %v553, 0.0
        %v941 = vsel %vm750, %v554, 0.0
        %v942 = vsel %vm750, %v555, 0.0
        %v943 = vsel %vm750, %v556, 0.0
        %v944 = vsel %vm750, %v557, 0.0
        %v945 = vsel %vm751, %v558, 0.0
        %v946 = vsel %vm751, %v559, 0.0
        %v947 = vsel %vm751, %v560, 0.0
        %v948 = vsel %vm751, %v561, 0.0
        %v949 = vsel %vm751, %v562, 0.0
        %v950 = vsel %vm751, %v563, 0.0
        %v951 = vsel %vm751, %v564, 0.0
        %v952 = vsel %vm752, %v565, 0.0
        %v953 = vsel %vm752, %v566, 0.0
        %v954 = vsel %vm752, %v567, 0.0
        %v955 = vsel %vm752, %v568, 0.0
        %v956 = vsel %vm752, %v569, 0.0
        %v957 = vsel %vm752, %v570, 0.0
        %v958 = vsel %vm752, %v571, 0.0
        %v959 = vsel %vm753, %v572, 0.0
        %v960 = vsel %vm753, %v573, 0.0
        %v961 = vsel %vm753, %v574, 0.0
        %v962 = vsel %vm753, %v575, 0.0
        %v963 = vsel %vm753, %v576, 0.0
        %v964 = vsel %vm753, %v577, 0.0
        %v965 = vsel %vm753, %v578, 0.0
        %v966 = vsel %vm754, %v579, 0.0
        %v967 = vsel %vm754, %v580, 0.0
        %v968 = vsel %vm754, %v581, 0.0
        %v969 = vsel %vm754, %v582, 0.0
        %v970 = vsel %vm754, %v583, 0.0
        %v971 = vsel %vm754, %v584, 0.0
        %v972 = vsel %vm754, %v585, 0.0
        %v973 = vsel %vm755, %v586, 0.0
        %v974 = vsel %vm755, %v587, 0.0
        %v975 = vsel %vm755, %v588, 0.0
        %v976 = vsel %vm755, %v589, 0.0
        %v977 = vsel %vm755, %v590, 0.0
        %v978 = vsel %vm755, %v591, 0.0
        %v979 = vsel %vm755, %v592, 0.0
        %v980 = vpack.c.bf16 %v763, %v756
        %v981 = vpack.c.bf16 %v764, %v757
        %v982 = vpack.c.bf16 %v765, %v758
        %v983 = vpack.c.bf16 %v766, %v759
        %v984 = vpack.c.bf16 %v767, %v760
        %v985 = vpack.c.bf16 %v768, %v761
        %v986 = vpack.c.bf16 %v769, %v762
        %v987 = vpack.c.bf16 %v777, %v770
        %v988 = vpack.c.bf16 %v778, %v771
        %v989 = vpack.c.bf16 %v779, %v772
        %v990 = vpack.c.bf16 %v780, %v773
        %v991 = vpack.c.bf16 %v781, %v774
        %v992 = vpack.c.bf16 %v782, %v775
        %v993 = vpack.c.bf16 %v783, %v776
        %v994 = vpack.c.bf16 %v791, %v784
        %v995 = vpack.c.bf16 %v792, %v785
        %v996 = vpack.c.bf16 %v793, %v786
        %v997 = vpack.c.bf16 %v794, %v787
        %v998 = vpack.c.bf16 %v795, %v788
        %v999 = vpack.c.bf16 %v796, %v789
        %v1000 = vpack.c.bf16 %v797, %v790
        %v1001 = vpack.c.bf16 %v805, %v798
        %v1002 = vpack.c.bf16 %v806, %v799
        %v1003 = vpack.c.bf16 %v807, %v800
        %v1004 = vpack.c.bf16 %v808, %v801
        %v1005 = vpack.c.bf16 %v809, %v802
        %v1006 = vpack.c.bf16 %v810, %v803
        %v1007 = vpack.c.bf16 %v811, %v804
        %v1008 = vpack.c.bf16 %v819, %v812
        %v1009 = vpack.c.bf16 %v820, %v813
        %v1010 = vpack.c.bf16 %v821, %v814
        %v1011 = vpack.c.bf16 %v822, %v815
        %v1012 = vpack.c.bf16 %v823, %v816
        %v1013 = vpack.c.bf16 %v824, %v817
        %v1014 = vpack.c.bf16 %v825, %v818
        %v1015 = vpack.c.bf16 %v833, %v826
        %v1016 = vpack.c.bf16 %v834, %v827
        %v1017 = vpack.c.bf16 %v835, %v828
        %v1018 = vpack.c.bf16 %v836, %v829
        %v1019 = vpack.c.bf16 %v837, %v830
        %v1020 = vpack.c.bf16 %v838, %v831
        %v1021 = vpack.c.bf16 %v839, %v832
        %v1022 = vpack.c.bf16 %v847, %v840
        %v1023 = vpack.c.bf16 %v848, %v841
        %v1024 = vpack.c.bf16 %v849, %v842
        %v1025 = vpack.c.bf16 %v850, %v843
        %v1026 = vpack.c.bf16 %v851, %v844
        %v1027 = vpack.c.bf16 %v852, %v845
        %v1028 = vpack.c.bf16 %v853, %v846
        %v1029 = vpack.c.bf16 %v861, %v854
        %v1030 = vpack.c.bf16 %v862, %v855
        %v1031 = vpack.c.bf16 %v863, %v856
        %v1032 = vpack.c.bf16 %v864, %v857
        %v1033 = vpack.c.bf16 %v865, %v858
        %v1034 = vpack.c.bf16 %v866, %v859
        %v1035 = vpack.c.bf16 %v867, %v860
        %v1036 = vpack.c.bf16 %v875, %v868
        %v1037 = vpack.c.bf16 %v876, %v869
        %v1038 = vpack.c.bf16 %v877, %v870
        %v1039 = vpack.c.bf16 %v878, %v871
        %v1040 = vpack.c.bf16 %v879, %v872
        %v1041 = vpack.c.bf16 %v880, %v873
        %v1042 = vpack.c.bf16 %v881, %v874
        %v1043 = vpack.c.bf16 %v889, %v882
        %v1044 = vpack.c.bf16 %v890, %v883
        %v1045 = vpack.c.bf16 %v891, %v884
        %v1046 = vpack.c.bf16 %v892, %v885
        %v1047 = vpack.c.bf16 %v893, %v886
        %v1048 = vpack.c.bf16 %v894, %v887
        %v1049 = vpack.c.bf16 %v895, %v888
        %v1050 = vpack.c.bf16 %v903, %v896
        %v1051 = vpack.c.bf16 %v904, %v897
        %v1052 = vpack.c.bf16 %v905, %v898
        %v1053 = vpack.c.bf16 %v906, %v899
        %v1054 = vpack.c.bf16 %v907, %v900
        %v1055 = vpack.c.bf16 %v908, %v901
        %v1056 = vpack.c.bf16 %v909, %v902
        %v1057 = vpack.c.bf16 %v917, %v910
        %v1058 = vpack.c.bf16 %v918, %v911
        %v1059 = vpack.c.bf16 %v919, %v912
        %v1060 = vpack.c.bf16 %v920, %v913
        %v1061 = vpack.c.bf16 %v921, %v914
        %v1062 = vpack.c.bf16 %v922, %v915
        %v1063 = vpack.c.bf16 %v923, %v916
        %v1064 = vpack.c.bf16 %v931, %v924
        %v1065 = vpack.c.bf16 %v932, %v925
        %v1066 = vpack.c.bf16 %v933, %v926
        %v1067 = vpack.c.bf16 %v934, %v927
        %v1068 = vpack.c.bf16 %v935, %v928
        %v1069 = vpack.c.bf16 %v936, %v929
        %v1070 = vpack.c.bf16 %v937, %v930
        %v1071 = vpack.c.bf16 %v945, %v938
        %v1072 = vpack.c.bf16 %v946, %v939
        %v1073 = vpack.c.bf16 %v947, %v940
        %v1074 = vpack.c.bf16 %v948, %v941
        %v1075 = vpack.c.bf16 %v949, %v942
        %v1076 = vpack.c.bf16 %v950, %v943
        %v1077 = vpack.c.bf16 %v951, %v944
        %v1078 = vpack.c.bf16 %v959, %v952
        %v1079 = vpack.c.bf16 %v960, %v953
        %v1080 = vpack.c.bf16 %v961, %v954
        %v1081 = vpack.c.bf16 %v962, %v955
        %v1082 = vpack.c.bf16 %v963, %v956
        %v1083 = vpack.c.bf16 %v964, %v957
        %v1084 = vpack.c.bf16 %v965, %v958
        %v1085 = vpack.c.bf16 %v973, %v966
        %v1086 = vpack.c.bf16 %v974, %v967
        %v1087 = vpack.c.bf16 %v975, %v968
        %v1088 = vpack.c.bf16 %v976, %v969
        %v1089 = vpack.c.bf16 %v977, %v970
        %v1090 = vpack.c.bf16 %v978, %v971
        %v1091 = vpack.c.bf16 %v979, %v972
        %v1092 = vld [vmem:[#allocation6] sm:$0xff]
        %v1093 = vld [vmem:[#allocation6 + $0x8] sm:$0xff]
        %v1094 = vld [vmem:[#allocation6 + $0x10] sm:$0xff]
        %v1095 = vld [vmem:[#allocation6 + $0x18] sm:$0xff]
        %v1096 = vld [vmem:[#allocation6 + $0x20] sm:$0xff]
        %v1097 = vld [vmem:[#allocation6 + $0x28] sm:$0xff]
        %v1098 = vld [vmem:[#allocation6 + $0x30] sm:$0xff]
        %v1099 = vld [vmem:[#allocation6 + $0x38] sm:$0xff]
        %v1100 = vld [vmem:[#allocation6 + $0x40] sm:$0xff]
        %v1101 = vld [vmem:[#allocation6 + $0x48] sm:$0xff]
        %v1102 = vld [vmem:[#allocation6 + $0x50] sm:$0xff]
        %v1103 = vld [vmem:[#allocation6 + $0x58] sm:$0xff]
        %v1104 = vld [vmem:[#allocation6 + $0x60] sm:$0xff]
        %v1105 = vld [vmem:[#allocation6 + $0x68] sm:$0xff]
        %v1106 = vld [vmem:[#allocation6 + $0x70] sm:$0xff]
        %v1107 = vld [vmem:[#allocation6 + $0x78] sm:$0xff]
        %v1108 = vld [vmem:[#allocation6 + $0x80] sm:$0xff]
        %v1109 = vld [vmem:[#allocation6 + $0x88] sm:$0xff]
        %v1110 = vld [vmem:[#allocation6 + $0x90] sm:$0xff]
        %v1111 = vld [vmem:[#allocation6 + $0x98] sm:$0xff]
        %v1112 = vld [vmem:[#allocation6 + $0xa0] sm:$0xff]
        %v1113 = vld [vmem:[#allocation6 + $0xa8] sm:$0xff]
        %v1114 = vld [vmem:[#allocation6 + $0xb0] sm:$0xff]
        %v1115 = vld [vmem:[#allocation6 + $0xb8] sm:$0xff]
        %v1116 = vld [vmem:[#allocation6 + $0xc0] sm:$0xff]
        %v1117 = vld [vmem:[#allocation6 + $0xc8] sm:$0xff]
        %v1118 = vld [vmem:[#allocation6 + $0xd0] sm:$0xff]
        %v1119 = vld [vmem:[#allocation6 + $0xd8] sm:$0xff]
        %v1120 = vld [vmem:[#allocation6 + $0xe0] sm:$0xff]
        %v1121 = vld [vmem:[#allocation6 + $0xe8] sm:$0xff]
        %v1122 = vld [vmem:[#allocation6 + $0xf0] sm:$0xff]
        %v1123 = vld [vmem:[#allocation6 + $0xf8] sm:$0xff]
        %v1124 = vld [vmem:[#allocation6 + $0x100] sm:$0xff]
        %v1125 = vld [vmem:[#allocation6 + $0x108] sm:$0xff]
        %v1126 = vld [vmem:[#allocation6 + $0x110] sm:$0xff]
        %v1127 = vld [vmem:[#allocation6 + $0x118] sm:$0xff]
        %v1128 = vld [vmem:[#allocation6 + $0x120] sm:$0xff]
        %v1129 = vld [vmem:[#allocation6 + $0x128] sm:$0xff]
        %v1130 = vld [vmem:[#allocation6 + $0x130] sm:$0xff]
        %v1131 = vld [vmem:[#allocation6 + $0x138] sm:$0xff]
        %v1132 = vld [vmem:[#allocation6 + $0x140] sm:$0xff]
        %v1133 = vld [vmem:[#allocation6 + $0x148] sm:$0xff]
        %v1134 = vld [vmem:[#allocation6 + $0x150] sm:$0xff]
        %v1135 = vld [vmem:[#allocation6 + $0x158] sm:$0xff]
        %v1136 = vld [vmem:[#allocation6 + $0x160] sm:$0xff]
        %v1137 = vld [vmem:[#allocation6 + $0x168] sm:$0xff]
        %v1138 = vld [vmem:[#allocation6 + $0x170] sm:$0xff]
        %v1139 = vld [vmem:[#allocation6 + $0x178] sm:$0xff]
        %v1140 = vld [vmem:[#allocation6 + $0x180] sm:$0xff]
        %v1141 = vld [vmem:[#allocation6 + $0x188] sm:$0xff]
        %v1142 = vld [vmem:[#allocation6 + $0x190] sm:$0xff]
        %v1143 = vld [vmem:[#allocation6 + $0x198] sm:$0xff]
        %v1144 = vld [vmem:[#allocation6 + $0x1a0] sm:$0xff]
        %v1145 = vld [vmem:[#allocation6 + $0x1a8] sm:$0xff]
        %v1146 = vld [vmem:[#allocation6 + $0x1b0] sm:$0xff]
        %v1147 = vld [vmem:[#allocation6 + $0x1b8] sm:$0xff]
        %v1148 = vld [vmem:[#allocation6 + $0x1c0] sm:$0xff]
        %v1149 = vld [vmem:[#allocation6 + $0x1c8] sm:$0xff]
        %v1150 = vld [vmem:[#allocation6 + $0x1d0] sm:$0xff]
        %v1151 = vld [vmem:[#allocation6 + $0x1d8] sm:$0xff]
        %v1152 = vld [vmem:[#allocation6 + $0x1e0] sm:$0xff]
        %v1153 = vld [vmem:[#allocation6 + $0x1e8] sm:$0xff]
        %v1154 = vld [vmem:[#allocation6 + $0x1f0] sm:$0xff]
        %v1155 = vld [vmem:[#allocation6 + $0x1f8] sm:$0xff]
        %v1156 = vld [vmem:[#allocation6 + $0x200] sm:$0xff]
        %v1157 = vld [vmem:[#allocation6 + $0x208] sm:$0xff]
        %v1158 = vld [vmem:[#allocation6 + $0x210] sm:$0xff]
        %v1159 = vld [vmem:[#allocation6 + $0x218] sm:$0xff]
        %v1160 = vld [vmem:[#allocation6 + $0x220] sm:$0xff]
        %v1161 = vld [vmem:[#allocation6 + $0x228] sm:$0xff]
        %v1162 = vld [vmem:[#allocation6 + $0x230] sm:$0xff]
        %v1163 = vld [vmem:[#allocation6 + $0x238] sm:$0xff]
        %v1164 = vld [vmem:[#allocation6 + $0x240] sm:$0xff]
        %v1165 = vld [vmem:[#allocation6 + $0x248] sm:$0xff]
        %v1166 = vld [vmem:[#allocation6 + $0x250] sm:$0xff]
        %v1167 = vld [vmem:[#allocation6 + $0x258] sm:$0xff]
        %v1168 = vld [vmem:[#allocation6 + $0x260] sm:$0xff]
        %v1169 = vld [vmem:[#allocation6 + $0x268] sm:$0xff]
        %v1170 = vld [vmem:[#allocation6 + $0x270] sm:$0xff]
        %v1171 = vld [vmem:[#allocation6 + $0x278] sm:$0xff]
        %v1172 = vld [vmem:[#allocation6 + $0x280] sm:$0xff]
        %v1173 = vld [vmem:[#allocation6 + $0x288] sm:$0xff]
        %v1174 = vld [vmem:[#allocation6 + $0x290] sm:$0xff]
        %v1175 = vld [vmem:[#allocation6 + $0x298] sm:$0xff]
        %v1176 = vld [vmem:[#allocation6 + $0x2a0] sm:$0xff]
        %v1177 = vld [vmem:[#allocation6 + $0x2a8] sm:$0xff]
        %v1178 = vld [vmem:[#allocation6 + $0x2b0] sm:$0xff]
        %v1179 = vld [vmem:[#allocation6 + $0x2b8] sm:$0xff]
        %v1180 = vld [vmem:[#allocation6 + $0x2c0] sm:$0xff]
        %v1181 = vld [vmem:[#allocation6 + $0x2c8] sm:$0xff]
        %v1182 = vld [vmem:[#allocation6 + $0x2d0] sm:$0xff]
        %v1183 = vld [vmem:[#allocation6 + $0x2d8] sm:$0xff]
        %v1184 = vld [vmem:[#allocation6 + $0x2e0] sm:$0xff]
        %v1185 = vld [vmem:[#allocation6 + $0x2e8] sm:$0xff]
        %v1186 = vld [vmem:[#allocation6 + $0x2f0] sm:$0xff]
        %v1187 = vld [vmem:[#allocation6 + $0x2f8] sm:$0xff]
        %v1188 = vld [vmem:[#allocation6 + $0x300] sm:$0xff]
        %v1189 = vld [vmem:[#allocation6 + $0x308] sm:$0xff]
        %v1190 = vld [vmem:[#allocation6 + $0x310] sm:$0xff]
        %v1191 = vld [vmem:[#allocation6 + $0x318] sm:$0xff]
        %v1192 = vld [vmem:[#allocation6 + $0x320] sm:$0xff]
        %v1193 = vld [vmem:[#allocation6 + $0x328] sm:$0xff]
        %v1194 = vld [vmem:[#allocation6 + $0x330] sm:$0xff]
        %v1195 = vld [vmem:[#allocation6 + $0x338] sm:$0xff]
        %v1196 = vld [vmem:[#allocation6 + $0x340] sm:$0xff]
        %v1197 = vld [vmem:[#allocation6 + $0x348] sm:$0xff]
        %v1198 = vld [vmem:[#allocation6 + $0x350] sm:$0xff]
        %v1199 = vld [vmem:[#allocation6 + $0x358] sm:$0xff]
        %v1200 = vld [vmem:[#allocation6 + $0x360] sm:$0xff]
        %v1201 = vld [vmem:[#allocation6 + $0x368] sm:$0xff]
        %v1202 = vld [vmem:[#allocation6 + $0x370] sm:$0xff]
        %v1203 = vld [vmem:[#allocation6 + $0x378] sm:$0xff]
        %v1204 = vld [vmem:[#allocation6 + $0x380] sm:$0xff]
        %v1205 = vld [vmem:[#allocation6 + $0x388] sm:$0xff]
        %v1206 = vld [vmem:[#allocation6 + $0x390] sm:$0xff]
        %v1207 = vld [vmem:[#allocation6 + $0x398] sm:$0xff]
        %v1208 = vld [vmem:[#allocation6 + $0x3a0] sm:$0xff]
        %v1209 = vld [vmem:[#allocation6 + $0x3a8] sm:$0xff]
        %v1210 = vld [vmem:[#allocation6 + $0x3b0] sm:$0xff]
        %v1211 = vld [vmem:[#allocation6 + $0x3b8] sm:$0xff]
        %v1212 = vld [vmem:[#allocation6 + $0x3c0] sm:$0xff]
        %v1213 = vld [vmem:[#allocation6 + $0x3c8] sm:$0xff]
        %v1214 = vld [vmem:[#allocation6 + $0x3d0] sm:$0xff]
        %v1215 = vld [vmem:[#allocation6 + $0x3d8] sm:$0xff]
        %v1216 = vld [vmem:[#allocation6 + $0x3e0] sm:$0xff]
        %v1217 = vld [vmem:[#allocation6 + $0x3e8] sm:$0xff]
        %v1218 = vld [vmem:[#allocation6 + $0x3f0] sm:$0xff]
        %v1219 = vld [vmem:[#allocation6 + $0x3f8] sm:$0xff]
        %v1220 = vld [vmem:[#allocation6 + $0x400] sm:$0xff]
        %v1221 = vld [vmem:[#allocation6 + $0x408] sm:$0xff]
        %v1222 = vld [vmem:[#allocation6 + $0x410] sm:$0xff]
        %v1223 = vld [vmem:[#allocation6 + $0x418] sm:$0xff]
        %v1224 = vld [vmem:[#allocation6 + $0x420] sm:$0xff]
        %v1225 = vld [vmem:[#allocation6 + $0x428] sm:$0xff]
        %v1226 = vld [vmem:[#allocation6 + $0x430] sm:$0xff]
        %v1227 = vld [vmem:[#allocation6 + $0x438] sm:$0xff]
        %v1228 = vld [vmem:[#allocation6 + $0x440] sm:$0xff]
        %v1229 = vld [vmem:[#allocation6 + $0x448] sm:$0xff]
        %v1230 = vld [vmem:[#allocation6 + $0x450] sm:$0xff]
        %v1231 = vld [vmem:[#allocation6 + $0x458] sm:$0xff]
        %v1232 = vld [vmem:[#allocation6 + $0x460] sm:$0xff]
        %v1233 = vld [vmem:[#allocation6 + $0x468] sm:$0xff]
        %v1234 = vld [vmem:[#allocation6 + $0x470] sm:$0xff]
        %v1235 = vld [vmem:[#allocation6 + $0x478] sm:$0xff]
        %v1236 = vld [vmem:[#allocation6 + $0x480] sm:$0xff]
        %v1237 = vld [vmem:[#allocation6 + $0x488] sm:$0xff]
        %v1238 = vld [vmem:[#allocation6 + $0x490] sm:$0xff]
        %v1239 = vld [vmem:[#allocation6 + $0x498] sm:$0xff]
        %v1240 = vld [vmem:[#allocation6 + $0x4a0] sm:$0xff]
        %v1241 = vld [vmem:[#allocation6 + $0x4a8] sm:$0xff]
        %v1242 = vld [vmem:[#allocation6 + $0x4b0] sm:$0xff]
        %v1243 = vld [vmem:[#allocation6 + $0x4b8] sm:$0xff]
        %v1244 = vld [vmem:[#allocation6 + $0x4c0] sm:$0xff]
        %v1245 = vld [vmem:[#allocation6 + $0x4c8] sm:$0xff]
        %v1246 = vld [vmem:[#allocation6 + $0x4d0] sm:$0xff]
        %v1247 = vld [vmem:[#allocation6 + $0x4d8] sm:$0xff]
        %v1248 = vld [vmem:[#allocation6 + $0x4e0] sm:$0xff]
        %v1249 = vld [vmem:[#allocation6 + $0x4e8] sm:$0xff]
        %v1250 = vld [vmem:[#allocation6 + $0x4f0] sm:$0xff]
        %v1251 = vld [vmem:[#allocation6 + $0x4f8] sm:$0xff]
        %v1252 = vld [vmem:[#allocation6 + $0x500] sm:$0xff]
        %v1253 = vld [vmem:[#allocation6 + $0x508] sm:$0xff]
        %v1254 = vld [vmem:[#allocation6 + $0x510] sm:$0xff]
        %v1255 = vld [vmem:[#allocation6 + $0x518] sm:$0xff]
        %v1256 = vld [vmem:[#allocation6 + $0x520] sm:$0xff]
        %v1257 = vld [vmem:[#allocation6 + $0x528] sm:$0xff]
        %v1258 = vld [vmem:[#allocation6 + $0x530] sm:$0xff]
        %v1259 = vld [vmem:[#allocation6 + $0x538] sm:$0xff]
        %v1260 = vld [vmem:[#allocation6 + $0x540] sm:$0xff]
        %v1261 = vld [vmem:[#allocation6 + $0x548] sm:$0xff]
        %v1262 = vld [vmem:[#allocation6 + $0x550] sm:$0xff]
        %v1263 = vld [vmem:[#allocation6 + $0x558] sm:$0xff]
        %v1264 = vld [vmem:[#allocation6 + $0x560] sm:$0xff]
        %v1265 = vld [vmem:[#allocation6 + $0x568] sm:$0xff]
        %v1266 = vld [vmem:[#allocation6 + $0x570] sm:$0xff]
        %v1267 = vld [vmem:[#allocation6 + $0x578] sm:$0xff]
        %v1268 = vld [vmem:[#allocation6 + $0x580] sm:$0xff]
        %v1269 = vld [vmem:[#allocation6 + $0x588] sm:$0xff]
        %v1270 = vld [vmem:[#allocation6 + $0x590] sm:$0xff]
        %v1271 = vld [vmem:[#allocation6 + $0x598] sm:$0xff]
        %v1272 = vld [vmem:[#allocation6 + $0x5a0] sm:$0xff]
        %v1273 = vld [vmem:[#allocation6 + $0x5a8] sm:$0xff]
        %v1274 = vld [vmem:[#allocation6 + $0x5b0] sm:$0xff]
        %v1275 = vld [vmem:[#allocation6 + $0x5b8] sm:$0xff]
        %v1276 = vld [vmem:[#allocation6 + $0x5c0] sm:$0xff]
        %v1277 = vld [vmem:[#allocation6 + $0x5c8] sm:$0xff]
        %v1278 = vld [vmem:[#allocation6 + $0x5d0] sm:$0xff]
        %v1279 = vld [vmem:[#allocation6 + $0x5d8] sm:$0xff]
        %v1280 = vld [vmem:[#allocation6 + $0x5e0] sm:$0xff]
        %v1281 = vld [vmem:[#allocation6 + $0x5e8] sm:$0xff]
        %v1282 = vld [vmem:[#allocation6 + $0x5f0] sm:$0xff]
        %v1283 = vld [vmem:[#allocation6 + $0x5f8] sm:$0xff]
        %v1284 = vld [vmem:[#allocation6 + $0x600] sm:$0xff]
        %v1285 = vld [vmem:[#allocation6 + $0x608] sm:$0xff]
        %v1286 = vld [vmem:[#allocation6 + $0x610] sm:$0xff]
        %v1287 = vld [vmem:[#allocation6 + $0x618] sm:$0xff]
        %v1288 = vld [vmem:[#allocation8] sm:$0xf]
        %v1290 = vperm.slane %v1288, 0
        %v1291 = vperm.slane %v1288, 1
        %v1292 = vperm.slane %v1288, 2
        %v1293 = vperm.slane %v1288, 3
        %v1494 = vunpack.c.l.b16 %v1092
        %v1495 = vunpack.c.h.b16 %v1092
        %v1496 = vunpack.c.l.b16 %v1093
        %v1497 = vunpack.c.h.b16 %v1093
        %v1498 = vunpack.c.l.b16 %v1094
        %v1499 = vunpack.c.h.b16 %v1094
        %v1500 = vunpack.c.l.b16 %v1095
        %v1501 = vunpack.c.h.b16 %v1095
        %v1502 = vunpack.c.l.b16 %v1096
        %v1503 = vunpack.c.h.b16 %v1096
        %v1504 = vunpack.c.l.b16 %v1097
        %v1505 = vunpack.c.h.b16 %v1097
        %v1506 = vunpack.c.l.b16 %v1098
        %v1507 = vunpack.c.h.b16 %v1098
        %v1508 = vunpack.c.l.b16 %v1099
        %v1509 = vunpack.c.h.b16 %v1099
        %v1510 = vunpack.c.l.b16 %v1100
        %v1511 = vunpack.c.h.b16 %v1100
        %v1512 = vunpack.c.l.b16 %v1101
        %v1513 = vunpack.c.h.b16 %v1101
        %v1514 = vunpack.c.l.b16 %v1102
        %v1515 = vunpack.c.h.b16 %v1102
        %v1516 = vunpack.c.l.b16 %v1103
        %v1517 = vunpack.c.h.b16 %v1103
        %v1518 = vunpack.c.l.b16 %v1104
        %v1519 = vunpack.c.h.b16 %v1104
        %v1520 = vunpack.c.l.b16 %v1105
        %v1521 = vunpack.c.h.b16 %v1105
        %v1522 = vunpack.c.l.b16 %v1106
        %v1523 = vunpack.c.h.b16 %v1106
        %v1524 = vunpack.c.l.b16 %v1107
        %v1525 = vunpack.c.h.b16 %v1107
        %v1526 = vunpack.c.l.b16 %v1108
        %v1527 = vunpack.c.h.b16 %v1108
        %v1528 = vunpack.c.l.b16 %v1109
        %v1529 = vunpack.c.h.b16 %v1109
        %v1530 = vunpack.c.l.b16 %v1110
        %v1531 = vunpack.c.h.b16 %v1110
        %v1532 = vunpack.c.l.b16 %v1111
        %v1533 = vunpack.c.h.b16 %v1111
        %v1534 = vunpack.c.l.b16 %v1112
        %v1535 = vunpack.c.h.b16 %v1112
        %v1536 = vunpack.c.l.b16 %v1113
        %v1537 = vunpack.c.h.b16 %v1113
        %v1538 = vunpack.c.l.b16 %v1114
        %v1539 = vunpack.c.h.b16 %v1114
        %v1540 = vunpack.c.l.b16 %v1115
        %v1541 = vunpack.c.h.b16 %v1115
        %v1542 = vunpack.c.l.b16 %v1116
        %v1543 = vunpack.c.h.b16 %v1116
        %v1544 = vunpack.c.l.b16 %v1117
        %v1545 = vunpack.c.h.b16 %v1117
        %v1546 = vunpack.c.l.b16 %v1118
        %v1547 = vunpack.c.h.b16 %v1118
        %v1548 = vunpack.c.l.b16 %v1119
        %v1549 = vunpack.c.h.b16 %v1119
        %v1550 = vunpack.c.l.b16 %v1120
        %v1551 = vunpack.c.h.b16 %v1120
        %v1552 = vunpack.c.l.b16 %v1121
        %v1553 = vunpack.c.h.b16 %v1121
        %v1554 = vunpack.c.l.b16 %v1122
        %v1555 = vunpack.c.h.b16 %v1122
        %v1556 = vunpack.c.l.b16 %v1123
        %v1557 = vunpack.c.h.b16 %v1123
        %v1558 = vunpack.c.l.b16 %v1124
        %v1559 = vunpack.c.h.b16 %v1124
        %v1560 = vunpack.c.l.b16 %v1125
        %v1561 = vunpack.c.h.b16 %v1125
        %v1562 = vunpack.c.l.b16 %v1126
        %v1563 = vunpack.c.h.b16 %v1126
        %v1564 = vunpack.c.l.b16 %v1127
        %v1565 = vunpack.c.h.b16 %v1127
        %v1566 = vunpack.c.l.b16 %v1128
        %v1567 = vunpack.c.h.b16 %v1128
        %v1568 = vunpack.c.l.b16 %v1129
        %v1569 = vunpack.c.h.b16 %v1129
        %v1570 = vunpack.c.l.b16 %v1130
        %v1571 = vunpack.c.h.b16 %v1130
        %v1572 = vunpack.c.l.b16 %v1131
        %v1573 = vunpack.c.h.b16 %v1131
        %v1574 = vunpack.c.l.b16 %v1132
        %v1575 = vunpack.c.h.b16 %v1132
        %v1576 = vunpack.c.l.b16 %v1133
        %v1577 = vunpack.c.h.b16 %v1133
        %v1578 = vunpack.c.l.b16 %v1134
        %v1579 = vunpack.c.h.b16 %v1134
        %v1580 = vunpack.c.l.b16 %v1135
        %v1581 = vunpack.c.h.b16 %v1135
        %v1582 = vunpack.c.l.b16 %v1136
        %v1583 = vunpack.c.h.b16 %v1136
        %v1584 = vunpack.c.l.b16 %v1137
        %v1585 = vunpack.c.h.b16 %v1137
        %v1586 = vunpack.c.l.b16 %v1138
        %v1587 = vunpack.c.h.b16 %v1138
        %v1588 = vunpack.c.l.b16 %v1139
        %v1589 = vunpack.c.h.b16 %v1139
        %v1590 = vunpack.c.l.b16 %v1140
        %v1591 = vunpack.c.h.b16 %v1140
        %v1592 = vunpack.c.l.b16 %v1141
        %v1593 = vunpack.c.h.b16 %v1141
        %v1594 = vunpack.c.l.b16 %v1142
        %v1595 = vunpack.c.h.b16 %v1142
        %v1596 = vunpack.c.l.b16 %v1143
        %v1597 = vunpack.c.h.b16 %v1143
        %v1598 = vunpack.c.l.b16 %v1144
        %v1599 = vunpack.c.h.b16 %v1144
        %v1600 = vunpack.c.l.b16 %v1145
        %v1601 = vunpack.c.h.b16 %v1145
        %v1602 = vunpack.c.l.b16 %v1146
        %v1603 = vunpack.c.h.b16 %v1146
        %v1604 = vunpack.c.l.b16 %v1147
        %v1605 = vunpack.c.h.b16 %v1147
        %v1606 = vunpack.c.l.b16 %v1148
        %v1607 = vunpack.c.h.b16 %v1148
        %v1608 = vunpack.c.l.b16 %v1149
        %v1609 = vunpack.c.h.b16 %v1149
        %v1610 = vunpack.c.l.b16 %v1150
        %v1611 = vunpack.c.h.b16 %v1150
        %v1612 = vunpack.c.l.b16 %v1151
        %v1613 = vunpack.c.h.b16 %v1151
        %v1614 = vunpack.c.l.b16 %v1152
        %v1615 = vunpack.c.h.b16 %v1152
        %v1616 = vunpack.c.l.b16 %v1153
        %v1617 = vunpack.c.h.b16 %v1153
        %v1618 = vunpack.c.l.b16 %v1154
        %v1619 = vunpack.c.h.b16 %v1154
        %v1620 = vunpack.c.l.b16 %v1155
        %v1621 = vunpack.c.h.b16 %v1155
        %v1622 = vunpack.c.l.b16 %v1156
        %v1623 = vunpack.c.h.b16 %v1156
        %v1624 = vunpack.c.l.b16 %v1157
        %v1625 = vunpack.c.h.b16 %v1157
        %v1626 = vunpack.c.l.b16 %v1158
        %v1627 = vunpack.c.h.b16 %v1158
        %v1628 = vunpack.c.l.b16 %v1159
        %v1629 = vunpack.c.h.b16 %v1159
        %v1630 = vunpack.c.l.b16 %v1160
        %v1631 = vunpack.c.h.b16 %v1160
        %v1632 = vunpack.c.l.b16 %v1161
        %v1633 = vunpack.c.h.b16 %v1161
        %v1634 = vunpack.c.l.b16 %v1162
        %v1635 = vunpack.c.h.b16 %v1162
        %v1636 = vunpack.c.l.b16 %v1163
        %v1637 = vunpack.c.h.b16 %v1163
        %v1638 = vunpack.c.l.b16 %v1164
        %v1639 = vunpack.c.h.b16 %v1164
        %v1640 = vunpack.c.l.b16 %v1165
        %v1641 = vunpack.c.h.b16 %v1165
        %v1642 = vunpack.c.l.b16 %v1166
        %v1643 = vunpack.c.h.b16 %v1166
        %v1644 = vunpack.c.l.b16 %v1167
        %v1645 = vunpack.c.h.b16 %v1167
        %v1646 = vunpack.c.l.b16 %v1168
        %v1647 = vunpack.c.h.b16 %v1168
        %v1648 = vunpack.c.l.b16 %v1169
        %v1649 = vunpack.c.h.b16 %v1169
        %v1650 = vunpack.c.l.b16 %v1170
        %v1651 = vunpack.c.h.b16 %v1170
        %v1652 = vunpack.c.l.b16 %v1171
        %v1653 = vunpack.c.h.b16 %v1171
        %v1654 = vunpack.c.l.b16 %v1172
        %v1655 = vunpack.c.h.b16 %v1172
        %v1656 = vunpack.c.l.b16 %v1173
        %v1657 = vunpack.c.h.b16 %v1173
        %v1658 = vunpack.c.l.b16 %v1174
        %v1659 = vunpack.c.h.b16 %v1174
        %v1660 = vunpack.c.l.b16 %v1175
        %v1661 = vunpack.c.h.b16 %v1175
        %v1662 = vunpack.c.l.b16 %v1176
        %v1663 = vunpack.c.h.b16 %v1176
        %v1664 = vunpack.c.l.b16 %v1177
        %v1665 = vunpack.c.h.b16 %v1177
        %v1666 = vunpack.c.l.b16 %v1178
        %v1667 = vunpack.c.h.b16 %v1178
        %v1668 = vunpack.c.l.b16 %v1179
        %v1669 = vunpack.c.h.b16 %v1179
        %v1670 = vunpack.c.l.b16 %v1180
        %v1671 = vunpack.c.h.b16 %v1180
        %v1672 = vunpack.c.l.b16 %v1181
        %v1673 = vunpack.c.h.b16 %v1181
        %v1674 = vunpack.c.l.b16 %v1182
        %v1675 = vunpack.c.h.b16 %v1182
        %v1676 = vunpack.c.l.b16 %v1183
        %v1677 = vunpack.c.h.b16 %v1183
        %v1678 = vunpack.c.l.b16 %v1184
        %v1679 = vunpack.c.h.b16 %v1184
        %v1680 = vunpack.c.l.b16 %v1185
        %v1681 = vunpack.c.h.b16 %v1185
        %v1682 = vunpack.c.l.b16 %v1186
        %v1683 = vunpack.c.h.b16 %v1186
        %v1684 = vunpack.c.l.b16 %v1187
        %v1685 = vunpack.c.h.b16 %v1187
        %v1686 = vunpack.c.l.b16 %v1188
        %v1687 = vunpack.c.h.b16 %v1188
        %v1688 = vunpack.c.l.b16 %v1189
        %v1689 = vunpack.c.h.b16 %v1189
        %v1690 = vunpack.c.l.b16 %v1190
        %v1691 = vunpack.c.h.b16 %v1190
        %v1692 = vunpack.c.l.b16 %v1191
        %v1693 = vunpack.c.h.b16 %v1191
        %v1694 = vunpack.c.l.b16 %v1192
        %v1695 = vunpack.c.h.b16 %v1192
        %v1696 = vunpack.c.l.b16 %v1193
        %v1697 = vunpack.c.h.b16 %v1193
        %v1698 = vunpack.c.l.b16 %v1194
        %v1699 = vunpack.c.h.b16 %v1194
        %v1700 = vunpack.c.l.b16 %v1195
        %v1701 = vunpack.c.h.b16 %v1195
        %v1702 = vunpack.c.l.b16 %v1196
        %v1703 = vunpack.c.h.b16 %v1196
        %v1704 = vunpack.c.l.b16 %v1197
        %v1705 = vunpack.c.h.b16 %v1197
        %v1706 = vunpack.c.l.b16 %v1198
        %v1707 = vunpack.c.h.b16 %v1198
        %v1708 = vunpack.c.l.b16 %v1199
        %v1709 = vunpack.c.h.b16 %v1199
        %v1710 = vunpack.c.l.b16 %v1200
        %v1711 = vunpack.c.h.b16 %v1200
        %v1712 = vunpack.c.l.b16 %v1201
        %v1713 = vunpack.c.h.b16 %v1201
        %v1714 = vunpack.c.l.b16 %v1202
        %v1715 = vunpack.c.h.b16 %v1202
        %v1716 = vunpack.c.l.b16 %v1203
        %v1717 = vunpack.c.h.b16 %v1203
        %v1718 = vunpack.c.l.b16 %v1204
        %v1719 = vunpack.c.h.b16 %v1204
        %v1720 = vunpack.c.l.b16 %v1205
        %v1721 = vunpack.c.h.b16 %v1205
        %v1722 = vunpack.c.l.b16 %v1206
        %v1723 = vunpack.c.h.b16 %v1206
        %v1724 = vunpack.c.l.b16 %v1207
        %v1725 = vunpack.c.h.b16 %v1207
        %v1726 = vunpack.c.l.b16 %v1208
        %v1727 = vunpack.c.h.b16 %v1208
        %v1728 = vunpack.c.l.b16 %v1209
        %v1729 = vunpack.c.h.b16 %v1209
        %v1730 = vunpack.c.l.b16 %v1210
        %v1731 = vunpack.c.h.b16 %v1210
        %v1732 = vunpack.c.l.b16 %v1211
        %v1733 = vunpack.c.h.b16 %v1211
        %v1734 = vunpack.c.l.b16 %v1212
        %v1735 = vunpack.c.h.b16 %v1212
        %v1736 = vunpack.c.l.b16 %v1213
        %v1737 = vunpack.c.h.b16 %v1213
        %v1738 = vunpack.c.l.b16 %v1214
        %v1739 = vunpack.c.h.b16 %v1214
        %v1740 = vunpack.c.l.b16 %v1215
        %v1741 = vunpack.c.h.b16 %v1215
        %v1742 = vunpack.c.l.b16 %v1216
        %v1743 = vunpack.c.h.b16 %v1216
        %v1744 = vunpack.c.l.b16 %v1217
        %v1745 = vunpack.c.h.b16 %v1217
        %v1746 = vunpack.c.l.b16 %v1218
        %v1747 = vunpack.c.h.b16 %v1218
        %v1748 = vunpack.c.l.b16 %v1219
        %v1749 = vunpack.c.h.b16 %v1219
        %v1750 = vunpack.c.l.b16 %v1220
        %v1751 = vunpack.c.h.b16 %v1220
        %v1752 = vunpack.c.l.b16 %v1221
        %v1753 = vunpack.c.h.b16 %v1221
        %v1754 = vunpack.c.l.b16 %v1222
        %v1755 = vunpack.c.h.b16 %v1222
        %v1756 = vunpack.c.l.b16 %v1223
        %v1757 = vunpack.c.h.b16 %v1223
        %v1758 = vunpack.c.l.b16 %v1224
        %v1759 = vunpack.c.h.b16 %v1224
        %v1760 = vunpack.c.l.b16 %v1225
        %v1761 = vunpack.c.h.b16 %v1225
        %v1762 = vunpack.c.l.b16 %v1226
        %v1763 = vunpack.c.h.b16 %v1226
        %v1764 = vunpack.c.l.b16 %v1227
        %v1765 = vunpack.c.h.b16 %v1227
        %v1766 = vunpack.c.l.b16 %v1228
        %v1767 = vunpack.c.h.b16 %v1228
        %v1768 = vunpack.c.l.b16 %v1229
        %v1769 = vunpack.c.h.b16 %v1229
        %v1770 = vunpack.c.l.b16 %v1230
        %v1771 = vunpack.c.h.b16 %v1230
        %v1772 = vunpack.c.l.b16 %v1231
        %v1773 = vunpack.c.h.b16 %v1231
        %v1774 = vunpack.c.l.b16 %v1232
        %v1775 = vunpack.c.h.b16 %v1232
        %v1776 = vunpack.c.l.b16 %v1233
        %v1777 = vunpack.c.h.b16 %v1233
        %v1778 = vunpack.c.l.b16 %v1234
        %v1779 = vunpack.c.h.b16 %v1234
        %v1780 = vunpack.c.l.b16 %v1235
        %v1781 = vunpack.c.h.b16 %v1235
        %v1782 = vunpack.c.l.b16 %v1236
        %v1783 = vunpack.c.h.b16 %v1236
        %v1784 = vunpack.c.l.b16 %v1237
        %v1785 = vunpack.c.h.b16 %v1237
        %v1786 = vunpack.c.l.b16 %v1238
        %v1787 = vunpack.c.h.b16 %v1238
        %v1788 = vunpack.c.l.b16 %v1239
        %v1789 = vunpack.c.h.b16 %v1239
        %v1790 = vunpack.c.l.b16 %v1240
        %v1791 = vunpack.c.h.b16 %v1240
        %v1792 = vunpack.c.l.b16 %v1241
        %v1793 = vunpack.c.h.b16 %v1241
        %v1794 = vunpack.c.l.b16 %v1242
        %v1795 = vunpack.c.h.b16 %v1242
        %v1796 = vunpack.c.l.b16 %v1243
        %v1797 = vunpack.c.h.b16 %v1243
        %v1798 = vunpack.c.l.b16 %v1244
        %v1799 = vunpack.c.h.b16 %v1244
        %v1800 = vunpack.c.l.b16 %v1245
        %v1801 = vunpack.c.h.b16 %v1245
        %v1802 = vunpack.c.l.b16 %v1246
        %v1803 = vunpack.c.h.b16 %v1246
        %v1804 = vunpack.c.l.b16 %v1247
        %v1805 = vunpack.c.h.b16 %v1247
        %v1806 = vunpack.c.l.b16 %v1248
        %v1807 = vunpack.c.h.b16 %v1248
        %v1808 = vunpack.c.l.b16 %v1249
        %v1809 = vunpack.c.h.b16 %v1249
        %v1810 = vunpack.c.l.b16 %v1250
        %v1811 = vunpack.c.h.b16 %v1250
        %v1812 = vunpack.c.l.b16 %v1251
        %v1813 = vunpack.c.h.b16 %v1251
        %v1814 = vunpack.c.l.b16 %v1252
        %v1815 = vunpack.c.h.b16 %v1252
        %v1816 = vunpack.c.l.b16 %v1253
        %v1817 = vunpack.c.h.b16 %v1253
        %v1818 = vunpack.c.l.b16 %v1254
        %v1819 = vunpack.c.h.b16 %v1254
        %v1820 = vunpack.c.l.b16 %v1255
        %v1821 = vunpack.c.h.b16 %v1255
        %v1822 = vunpack.c.l.b16 %v1256
        %v1823 = vunpack.c.h.b16 %v1256
        %v1824 = vunpack.c.l.b16 %v1257
        %v1825 = vunpack.c.h.b16 %v1257
        %v1826 = vunpack.c.l.b16 %v1258
        %v1827 = vunpack.c.h.b16 %v1258
        %v1828 = vunpack.c.l.b16 %v1259
        %v1829 = vunpack.c.h.b16 %v1259
        %v1830 = vunpack.c.l.b16 %v1260
        %v1831 = vunpack.c.h.b16 %v1260
        %v1832 = vunpack.c.l.b16 %v1261
        %v1833 = vunpack.c.h.b16 %v1261
        %v1834 = vunpack.c.l.b16 %v1262
        %v1835 = vunpack.c.h.b16 %v1262
        %v1836 = vunpack.c.l.b16 %v1263
        %v1837 = vunpack.c.h.b16 %v1263
        %v1838 = vunpack.c.l.b16 %v1264
        %v1839 = vunpack.c.h.b16 %v1264
        %v1840 = vunpack.c.l.b16 %v1265
        %v1841 = vunpack.c.h.b16 %v1265
        %v1842 = vunpack.c.l.b16 %v1266
        %v1843 = vunpack.c.h.b16 %v1266
        %v1844 = vunpack.c.l.b16 %v1267
        %v1845 = vunpack.c.h.b16 %v1267
        %v1846 = vunpack.c.l.b16 %v1268
        %v1847 = vunpack.c.h.b16 %v1268
        %v1848 = vunpack.c.l.b16 %v1269
        %v1849 = vunpack.c.h.b16 %v1269
        %v1850 = vunpack.c.l.b16 %v1270
        %v1851 = vunpack.c.h.b16 %v1270
        %v1852 = vunpack.c.l.b16 %v1271
        %v1853 = vunpack.c.h.b16 %v1271
        %v1854 = vunpack.c.l.b16 %v1272
        %v1855 = vunpack.c.h.b16 %v1272
        %v1856 = vunpack.c.l.b16 %v1273
        %v1857 = vunpack.c.h.b16 %v1273
        %v1858 = vunpack.c.l.b16 %v1274
        %v1859 = vunpack.c.h.b16 %v1274
        %v1860 = vunpack.c.l.b16 %v1275
        %v1861 = vunpack.c.h.b16 %v1275
        %v1862 = vunpack.c.l.b16 %v1276
        %v1863 = vunpack.c.h.b16 %v1276
        %v1864 = vunpack.c.l.b16 %v1277
        %v1865 = vunpack.c.h.b16 %v1277
        %v1866 = vunpack.c.l.b16 %v1278
        %v1867 = vunpack.c.h.b16 %v1278
        %v1868 = vunpack.c.l.b16 %v1279
        %v1869 = vunpack.c.h.b16 %v1279
        %v1870 = vunpack.c.l.b16 %v1280
        %v1871 = vunpack.c.h.b16 %v1280
        %v1872 = vunpack.c.l.b16 %v1281
        %v1873 = vunpack.c.h.b16 %v1281
        %v1874 = vunpack.c.l.b16 %v1282
        %v1875 = vunpack.c.h.b16 %v1282
        %v1876 = vunpack.c.l.b16 %v1283
        %v1877 = vunpack.c.h.b16 %v1283
        %v1878 = vunpack.c.l.b16 %v1284
        %v1879 = vunpack.c.h.b16 %v1284
        %v1880 = vunpack.c.l.b16 %v1285
        %v1881 = vunpack.c.h.b16 %v1285
        %v1882 = vunpack.c.l.b16 %v1286
        %v1883 = vunpack.c.h.b16 %v1286
        %v1884 = vunpack.c.l.b16 %v1287
        %v1885 = vunpack.c.h.b16 %v1287
        %v1886 = vpack.c.b16 %v1498, %v1494
        %v1887 = vpack.c.b16 %v1499, %v1495
        %v1888 = vpack.c.b16 %v1500, %v1496
        %v1889 = vpack.c.b16 %v1501, %v1497
        %v1890 = vpack.c.b16 %v1506, %v1502
        %v1891 = vpack.c.b16 %v1507, %v1503
        %v1892 = vpack.c.b16 %v1508, %v1504
        %v1893 = vpack.c.b16 %v1509, %v1505
        %v1894 = vpack.c.b16 %v1514, %v1510
        %v1895 = vpack.c.b16 %v1515, %v1511
        %v1896 = vpack.c.b16 %v1516, %v1512
        %v1897 = vpack.c.b16 %v1517, %v1513
        %v1898 = vpack.c.b16 %v1522, %v1518
        %v1899 = vpack.c.b16 %v1523, %v1519
        %v1900 = vpack.c.b16 %v1524, %v1520
        %v1901 = vpack.c.b16 %v1525, %v1521
        %v1902 = vpack.c.b16 %v1530, %v1526
        %v1903 = vpack.c.b16 %v1531, %v1527
        %v1904 = vpack.c.b16 %v1532, %v1528
        %v1905 = vpack.c.b16 %v1533, %v1529
        %v1906 = vpack.c.b16 %v1538, %v1534
        %v1907 = vpack.c.b16 %v1539, %v1535
        %v1908 = vpack.c.b16 %v1540, %v1536
        %v1909 = vpack.c.b16 %v1541, %v1537
        %v1910 = vpack.c.b16 %v1546, %v1542
        %v1911 = vpack.c.b16 %v1547, %v1543
        %v1912 = vpack.c.b16 %v1548, %v1544
        %v1913 = vpack.c.b16 %v1549, %v1545
        %v1914 = vpack.c.b16 %v1554, %v1550
        %v1915 = vpack.c.b16 %v1555, %v1551
        %v1916 = vpack.c.b16 %v1556, %v1552
        %v1917 = vpack.c.b16 %v1557, %v1553
        %v1918 = vpack.c.b16 %v1562, %v1558
        %v1919 = vpack.c.b16 %v1563, %v1559
        %v1920 = vpack.c.b16 %v1564, %v1560
        %v1921 = vpack.c.b16 %v1565, %v1561
        %v1922 = vpack.c.b16 %v1570, %v1566
        %v1923 = vpack.c.b16 %v1571, %v1567
        %v1924 = vpack.c.b16 %v1572, %v1568
        %v1925 = vpack.c.b16 %v1573, %v1569
        %v1926 = vpack.c.b16 %v1578, %v1574
        %v1927 = vpack.c.b16 %v1579, %v1575
        %v1928 = vpack.c.b16 %v1580, %v1576
        %v1929 = vpack.c.b16 %v1581, %v1577
        %v1930 = vpack.c.b16 %v1586, %v1582
        %v1931 = vpack.c.b16 %v1587, %v1583
        %v1932 = vpack.c.b16 %v1588, %v1584
        %v1933 = vpack.c.b16 %v1589, %v1585
        %v1934 = vpack.c.b16 %v1594, %v1590
        %v1935 = vpack.c.b16 %v1595, %v1591
        %v1936 = vpack.c.b16 %v1596, %v1592
        %v1937 = vpack.c.b16 %v1597, %v1593
        %v1938 = vpack.c.b16 %v1602, %v1598
        %v1939 = vpack.c.b16 %v1603, %v1599
        %v1940 = vpack.c.b16 %v1604, %v1600
        %v1941 = vpack.c.b16 %v1605, %v1601
        %v1942 = vpack.c.b16 %v1610, %v1606
        %v1943 = vpack.c.b16 %v1611, %v1607
        %v1944 = vpack.c.b16 %v1612, %v1608
        %v1945 = vpack.c.b16 %v1613, %v1609
        %v1946 = vpack.c.b16 %v1618, %v1614
        %v1947 = vpack.c.b16 %v1619, %v1615
        %v1948 = vpack.c.b16 %v1620, %v1616
        %v1949 = vpack.c.b16 %v1621, %v1617
        %v1950 = vpack.c.b16 %v1626, %v1622
        %v1951 = vpack.c.b16 %v1627, %v1623
        %v1952 = vpack.c.b16 %v1628, %v1624
        %v1953 = vpack.c.b16 %v1629, %v1625
        %v1954 = vpack.c.b16 %v1634, %v1630
        %v1955 = vpack.c.b16 %v1635, %v1631
        %v1956 = vpack.c.b16 %v1636, %v1632
        %v1957 = vpack.c.b16 %v1637, %v1633
        %v1958 = vpack.c.b16 %v1642, %v1638
        %v1959 = vpack.c.b16 %v1643, %v1639
        %v1960 = vpack.c.b16 %v1644, %v1640
        %v1961 = vpack.c.b16 %v1645, %v1641
        %v1962 = vpack.c.b16 %v1650, %v1646
        %v1963 = vpack.c.b16 %v1651, %v1647
        %v1964 = vpack.c.b16 %v1652, %v1648
        %v1965 = vpack.c.b16 %v1653, %v1649
        %v1966 = vpack.c.b16 %v1658, %v1654
        %v1967 = vpack.c.b16 %v1659, %v1655
        %v1968 = vpack.c.b16 %v1660, %v1656
        %v1969 = vpack.c.b16 %v1661, %v1657
        %v1970 = vpack.c.b16 %v1666, %v1662
        %v1971 = vpack.c.b16 %v1667, %v1663
        %v1972 = vpack.c.b16 %v1668, %v1664
        %v1973 = vpack.c.b16 %v1669, %v1665
        %v1974 = vpack.c.b16 %v1674, %v1670
        %v1975 = vpack.c.b16 %v1675, %v1671
        %v1976 = vpack.c.b16 %v1676, %v1672
        %v1977 = vpack.c.b16 %v1677, %v1673
        %v1978 = vpack.c.b16 %v1682, %v1678
        %v1979 = vpack.c.b16 %v1683, %v1679
        %v1980 = vpack.c.b16 %v1684, %v1680
        %v1981 = vpack.c.b16 %v1685, %v1681
        %v1982 = vpack.c.b16 %v1690, %v1686
        %v1983 = vpack.c.b16 %v1691, %v1687
        %v1984 = vpack.c.b16 %v1692, %v1688
        %v1985 = vpack.c.b16 %v1693, %v1689
        %v1986 = vpack.c.b16 %v1698, %v1694
        %v1987 = vpack.c.b16 %v1699, %v1695
        %v1988 = vpack.c.b16 %v1700, %v1696
        %v1989 = vpack.c.b16 %v1701, %v1697
        %v1990 = vpack.c.b16 %v1706, %v1702
        %v1991 = vpack.c.b16 %v1707, %v1703
        %v1992 = vpack.c.b16 %v1708, %v1704
        %v1993 = vpack.c.b16 %v1709, %v1705
        %v1994 = vpack.c.b16 %v1714, %v1710
        %v1995 = vpack.c.b16 %v1715, %v1711
        %v1996 = vpack.c.b16 %v1716, %v1712
        %v1997 = vpack.c.b16 %v1717, %v1713
        %v1998 = vpack.c.b16 %v1722, %v1718
        %v1999 = vpack.c.b16 %v1723, %v1719
        %v2000 = vpack.c.b16 %v1724, %v1720
        %v2001 = vpack.c.b16 %v1725, %v1721
        %v2002 = vpack.c.b16 %v1730, %v1726
        %v2003 = vpack.c.b16 %v1731, %v1727
        %v2004 = vpack.c.b16 %v1732, %v1728
        %v2005 = vpack.c.b16 %v1733, %v1729
        %v2006 = vpack.c.b16 %v1738, %v1734
        %v2007 = vpack.c.b16 %v1739, %v1735
        %v2008 = vpack.c.b16 %v1740, %v1736
        %v2009 = vpack.c.b16 %v1741, %v1737
        %v2010 = vpack.c.b16 %v1746, %v1742
        %v2011 = vpack.c.b16 %v1747, %v1743
        %v2012 = vpack.c.b16 %v1748, %v1744
        %v2013 = vpack.c.b16 %v1749, %v1745
        %v2014 = vpack.c.b16 %v1754, %v1750
        %v2015 = vpack.c.b16 %v1755, %v1751
        %v2016 = vpack.c.b16 %v1756, %v1752
        %v2017 = vpack.c.b16 %v1757, %v1753
        %v2018 = vpack.c.b16 %v1762, %v1758
        %v2019 = vpack.c.b16 %v1763, %v1759
        %v2020 = vpack.c.b16 %v1764, %v1760
        %v2021 = vpack.c.b16 %v1765, %v1761
        %v2022 = vpack.c.b16 %v1770, %v1766
        %v2023 = vpack.c.b16 %v1771, %v1767
        %v2024 = vpack.c.b16 %v1772, %v1768
        %v2025 = vpack.c.b16 %v1773, %v1769
        %v2026 = vpack.c.b16 %v1778, %v1774
        %v2027 = vpack.c.b16 %v1779, %v1775
        %v2028 = vpack.c.b16 %v1780, %v1776
        %v2029 = vpack.c.b16 %v1781, %v1777
        %v2030 = vpack.c.b16 %v1786, %v1782
        %v2031 = vpack.c.b16 %v1787, %v1783
        %v2032 = vpack.c.b16 %v1788, %v1784
        %v2033 = vpack.c.b16 %v1789, %v1785
        %v2034 = vpack.c.b16 %v1794, %v1790
        %v2035 = vpack.c.b16 %v1795, %v1791
        %v2036 = vpack.c.b16 %v1796, %v1792
        %v2037 = vpack.c.b16 %v1797, %v1793
        %v2038 = vpack.c.b16 %v1802, %v1798
        %v2039 = vpack.c.b16 %v1803, %v1799
        %v2040 = vpack.c.b16 %v1804, %v1800
        %v2041 = vpack.c.b16 %v1805, %v1801
        %v2042 = vpack.c.b16 %v1810, %v1806
        %v2043 = vpack.c.b16 %v1811, %v1807
        %v2044 = vpack.c.b16 %v1812, %v1808
        %v2045 = vpack.c.b16 %v1813, %v1809
        %v2046 = vpack.c.b16 %v1818, %v1814
        %v2047 = vpack.c.b16 %v1819, %v1815
        %v2048 = vpack.c.b16 %v1820, %v1816
        %v2049 = vpack.c.b16 %v1821, %v1817
        %v2050 = vpack.c.b16 %v1826, %v1822
        %v2051 = vpack.c.b16 %v1827, %v1823
        %v2052 = vpack.c.b16 %v1828, %v1824
        %v2053 = vpack.c.b16 %v1829, %v1825
        %v2054 = vpack.c.b16 %v1834, %v1830
        %v2055 = vpack.c.b16 %v1835, %v1831
        %v2056 = vpack.c.b16 %v1836, %v1832
        %v2057 = vpack.c.b16 %v1837, %v1833
        %v2058 = vpack.c.b16 %v1842, %v1838
        %v2059 = vpack.c.b16 %v1843, %v1839
        %v2060 = vpack.c.b16 %v1844, %v1840
        %v2061 = vpack.c.b16 %v1845, %v1841
        %v2062 = vpack.c.b16 %v1850, %v1846
        %v2063 = vpack.c.b16 %v1851, %v1847
        %v2064 = vpack.c.b16 %v1852, %v1848
        %v2065 = vpack.c.b16 %v1853, %v1849
        %v2066 = vpack.c.b16 %v1858, %v1854
        %v2067 = vpack.c.b16 %v1859, %v1855
        %v2068 = vpack.c.b16 %v1860, %v1856
        %v2069 = vpack.c.b16 %v1861, %v1857
        %v2070 = vpack.c.b16 %v1866, %v1862
        %v2071 = vpack.c.b16 %v1867, %v1863
        %v2072 = vpack.c.b16 %v1868, %v1864
        %v2073 = vpack.c.b16 %v1869, %v1865
        %v2074 = vpack.c.b16 %v1874, %v1870
        %v2075 = vpack.c.b16 %v1875, %v1871
        %v2076 = vpack.c.b16 %v1876, %v1872
        %v2077 = vpack.c.b16 %v1877, %v1873
        %v2078 = vpack.c.b16 %v1882, %v1878
        %v2079 = vpack.c.b16 %v1883, %v1879
        %v2080 = vpack.c.b16 %v1884, %v1880
        %v2081 = vpack.c.b16 %v1885, %v1881
        %vm2278 = vcmask 130048
        %v2280 = vsel %vm2278, %v986, 0
        %v2283 = vsel %vm2278, %v993, 0
        %v2286 = vsel %vm2278, %v1000, 0
        %v2289 = vsel %vm2278, %v1007, 0
        %v2292 = vsel %vm2278, %v1014, 0
        %v2295 = vsel %vm2278, %v1021, 0
        %v2298 = vsel %vm2278, %v1028, 0
        %v2301 = vsel %vm2278, %v1035, 0
        %v2304 = vsel %vm2278, %v1042, 0
        %v2307 = vsel %vm2278, %v1049, 0
        %v2310 = vsel %vm2278, %v1056, 0
        %v2313 = vsel %vm2278, %v1063, 0
        %v2316 = vsel %vm2278, %v1070, 0
        %v2319 = vsel %vm2278, %v1077, 0
        %v2322 = vsel %vm2278, %v1084, 0
        %v2325 = vsel %vm2278, %v1091, 0
        %2327 = vmatpush.bf16.msra.mxu0 %v1914
        %2328 = vmatpush.bf16.msra.mxu0 %v1910
        %2329 = vmatpush.bf16.msra.mxu0 %v1906
        %2330 = vmatpush.bf16.msra.mxu0 %v1902
        %2331 = vmatpush.bf16.msra.mxu0 %v1898
        %2332 = vmatpush.bf16.msra.mxu0 %v1894
        %2333 = vmatpush.bf16.msra.mxu0 %v1890
        %2334 = vmatpush.bf16.msra.mxu0 %v1886
        %2335 = vmatmul.bf16.gmra.mxu0 %v980
        %v2336 = vpop.f32.mrf.mxu0
        %v2337 = vadd.f32 %v1290, %v2336
        %v2338 = vpop.f32.mrf.mxu0
        %v2339 = vadd.f32 %v1290, %v2338
        %2340 = vmatmul.bf16.gmra.mxu0 %v987
        %v2341 = vpop.f32.mrf.mxu0
        %v2342 = vadd.f32 %v1290, %v2341
        %v2343 = vpop.f32.mrf.mxu0
        %v2344 = vadd.f32 %v1290, %v2343
        %2345 = vmatmul.bf16.gmra.mxu0 %v994
        %v2346 = vpop.f32.mrf.mxu0
        %v2347 = vadd.f32 %v1290, %v2346
        %v2348 = vpop.f32.mrf.mxu0
        %v2349 = vadd.f32 %v1290, %v2348
        %2350 = vmatmul.bf16.gmra.mxu0 %v1001
        %v2351 = vpop.f32.mrf.mxu0
        %v2352 = vadd.f32 %v1290, %v2351
        %v2353 = vpop.f32.mrf.mxu0
        %v2354 = vadd.f32 %v1290, %v2353
        %2355 = vmatmul.bf16.gmra.mxu0 %v1008
        %v2356 = vpop.f32.mrf.mxu0
        %v2357 = vadd.f32 %v1290, %v2356
        %v2358 = vpop.f32.mrf.mxu0
        %v2359 = vadd.f32 %v1290, %v2358
        %2360 = vmatmul.bf16.gmra.mxu0 %v1015
        %v2361 = vpop.f32.mrf.mxu0
        %v2362 = vadd.f32 %v1290, %v2361
        %v2363 = vpop.f32.mrf.mxu0
        %v2364 = vadd.f32 %v1290, %v2363
        %2365 = vmatmul.bf16.gmra.mxu0 %v1022
        %v2366 = vpop.f32.mrf.mxu0
        %v2367 = vadd.f32 %v1290, %v2366
        %v2368 = vpop.f32.mrf.mxu0
        %v2369 = vadd.f32 %v1290, %v2368
        %2370 = vmatmul.bf16.gmra.mxu0 %v1029
        %v2371 = vpop.f32.mrf.mxu0
        %v2372 = vadd.f32 %v1290, %v2371
        %v2373 = vpop.f32.mrf.mxu0
        %v2374 = vadd.f32 %v1290, %v2373
        %2375 = vmatmul.bf16.gmra.mxu0 %v1036
        %v2376 = vpop.f32.mrf.mxu0
        %v2377 = vadd.f32 %v1290, %v2376
        %v2378 = vpop.f32.mrf.mxu0
        %v2379 = vadd.f32 %v1290, %v2378
        %2380 = vmatmul.bf16.gmra.mxu0 %v1043
        %v2381 = vpop.f32.mrf.mxu0
        %v2382 = vadd.f32 %v1290, %v2381
        %v2383 = vpop.f32.mrf.mxu0
        %v2384 = vadd.f32 %v1290, %v2383
        %2385 = vmatmul.bf16.gmra.mxu0 %v1050
        %v2386 = vpop.f32.mrf.mxu0
        %v2387 = vadd.f32 %v1290, %v2386
        %v2388 = vpop.f32.mrf.mxu0
        %v2389 = vadd.f32 %v1290, %v2388
        %2390 = vmatmul.bf16.gmra.mxu0 %v1057
        %v2391 = vpop.f32.mrf.mxu0
        %v2392 = vadd.f32 %v1290, %v2391
        %v2393 = vpop.f32.mrf.mxu0
        %v2394 = vadd.f32 %v1290, %v2393
        %2395 = vmatmul.bf16.gmra.mxu0 %v1064
        %v2396 = vpop.f32.mrf.mxu0
        %v2397 = vadd.f32 %v1290, %v2396
        %v2398 = vpop.f32.mrf.mxu0
        %v2399 = vadd.f32 %v1290, %v2398
        %2400 = vmatmul.bf16.gmra.mxu0 %v1071
        %v2401 = vpop.f32.mrf.mxu0
        %v2402 = vadd.f32 %v1290, %v2401
        %v2403 = vpop.f32.mrf.mxu0
        %v2404 = vadd.f32 %v1290, %v2403
        %2405 = vmatmul.bf16.gmra.mxu0 %v1078
        %v2406 = vpop.f32.mrf.mxu0
        %v2407 = vadd.f32 %v1290, %v2406
        %v2408 = vpop.f32.mrf.mxu0
        %v2409 = vadd.f32 %v1290, %v2408
        %2410 = vmatmul.bf16.gmra.mxu0 %v1085
        %v2411 = vpop.f32.mrf.mxu0
        %v2412 = vadd.f32 %v1290, %v2411
        %v2413 = vpop.f32.mrf.mxu0
        %v2414 = vadd.f32 %v1290, %v2413
        %2415 = vdwg.mxu0
        %2416 = vmatpush.bf16.msra.mxu0 %v1946
        %2417 = vmatpush.bf16.msra.mxu0 %v1942
        %2418 = vmatpush.bf16.msra.mxu0 %v1938
        %2419 = vmatpush.bf16.msra.mxu0 %v1934
        %2420 = vmatpush.bf16.msra.mxu0 %v1930
        %2421 = vmatpush.bf16.msra.mxu0 %v1926
        %2422 = vmatpush.bf16.msra.mxu0 %v1922
        %2423 = vmatpush.bf16.msra.mxu0 %v1918
        %2424 = vmatmul.bf16.gmra.mxu0 %v981
        %v2425 = vpop.f32.mrf.mxu0
        %v2426 = vadd.f32 %v2337, %v2425
        %v2427 = vpop.f32.mrf.mxu0
        %v2428 = vadd.f32 %v2339, %v2427
        %2429 = vmatmul.bf16.gmra.mxu0 %v988
        %v2430 = vpop.f32.mrf.mxu0
        %v2431 = vadd.f32 %v2342, %v2430
        %v2432 = vpop.f32.mrf.mxu0
        %v2433 = vadd.f32 %v2344, %v2432
        %2434 = vmatmul.bf16.gmra.mxu0 %v995
        %v2435 = vpop.f32.mrf.mxu0
        %v2436 = vadd.f32 %v2347, %v2435
        %v2437 = vpop.f32.mrf.mxu0
        %v2438 = vadd.f32 %v2349, %v2437
        %2439 = vmatmul.bf16.gmra.mxu0 %v1002
        %v2440 = vpop.f32.mrf.mxu0
        %v2441 = vadd.f32 %v2352, %v2440
        %v2442 = vpop.f32.mrf.mxu0
        %v2443 = vadd.f32 %v2354, %v2442
        %2444 = vmatmul.bf16.gmra.mxu0 %v1009
        %v2445 = vpop.f32.mrf.mxu0
        %v2446 = vadd.f32 %v2357, %v2445
        %v2447 = vpop.f32.mrf.mxu0
        %v2448 = vadd.f32 %v2359, %v2447
        %2449 = vmatmul.bf16.gmra.mxu0 %v1016
        %v2450 = vpop.f32.mrf.mxu0
        %v2451 = vadd.f32 %v2362, %v2450
        %v2452 = vpop.f32.mrf.mxu0
        %v2453 = vadd.f32 %v2364, %v2452
        %2454 = vmatmul.bf16.gmra.mxu0 %v1023
        %v2455 = vpop.f32.mrf.mxu0
        %v2456 = vadd.f32 %v2367, %v2455
        %v2457 = vpop.f32.mrf.mxu0
        %v2458 = vadd.f32 %v2369, %v2457
        %2459 = vmatmul.bf16.gmra.mxu0 %v1030
        %v2460 = vpop.f32.mrf.mxu0
        %v2461 = vadd.f32 %v2372, %v2460
        %v2462 = vpop.f32.mrf.mxu0
        %v2463 = vadd.f32 %v2374, %v2462
        %2464 = vmatmul.bf16.gmra.mxu0 %v1037
        %v2465 = vpop.f32.mrf.mxu0
        %v2466 = vadd.f32 %v2377, %v2465
        %v2467 = vpop.f32.mrf.mxu0
        %v2468 = vadd.f32 %v2379, %v2467
        %2469 = vmatmul.bf16.gmra.mxu0 %v1044
        %v2470 = vpop.f32.mrf.mxu0
        %v2471 = vadd.f32 %v2382, %v2470
        %v2472 = vpop.f32.mrf.mxu0
        %v2473 = vadd.f32 %v2384, %v2472
        %2474 = vmatmul.bf16.gmra.mxu0 %v1051
        %v2475 = vpop.f32.mrf.mxu0
        %v2476 = vadd.f32 %v2387, %v2475
        %v2477 = vpop.f32.mrf.mxu0
        %v2478 = vadd.f32 %v2389, %v2477
        %2479 = vmatmul.bf16.gmra.mxu0 %v1058
        %v2480 = vpop.f32.mrf.mxu0
        %v2481 = vadd.f32 %v2392, %v2480
        %v2482 = vpop.f32.mrf.mxu0
        %v2483 = vadd.f32 %v2394, %v2482
        %2484 = vmatmul.bf16.gmra.mxu0 %v1065
        %v2485 = vpop.f32.mrf.mxu0
        %v2486 = vadd.f32 %v2397, %v2485
        %v2487 = vpop.f32.mrf.mxu0
        %v2488 = vadd.f32 %v2399, %v2487
        %2489 = vmatmul.bf16.gmra.mxu0 %v1072
        %v2490 = vpop.f32.mrf.mxu0
        %v2491 = vadd.f32 %v2402, %v2490
        %v2492 = vpop.f32.mrf.mxu0
        %v2493 = vadd.f32 %v2404, %v2492
        %2494 = vmatmul.bf16.gmra.mxu0 %v1079
        %v2495 = vpop.f32.mrf.mxu0
        %v2496 = vadd.f32 %v2407, %v2495
        %v2497 = vpop.f32.mrf.mxu0
        %v2498 = vadd.f32 %v2409, %v2497
        %2499 = vmatmul.bf16.gmra.mxu0 %v1086
        %v2500 = vpop.f32.mrf.mxu0
        %v2501 = vadd.f32 %v2412, %v2500
        %v2502 = vpop.f32.mrf.mxu0
        %v2503 = vadd.f32 %v2414, %v2502
        %2504 = vdwg.mxu0
        %2505 = vmatpush.bf16.msra.mxu0 %v1978
        %2506 = vmatpush.bf16.msra.mxu0 %v1974
        %2507 = vmatpush.bf16.msra.mxu0 %v1970
        %2508 = vmatpush.bf16.msra.mxu0 %v1966
        %2509 = vmatpush.bf16.msra.mxu0 %v1962
        %2510 = vmatpush.bf16.msra.mxu0 %v1958
        %2511 = vmatpush.bf16.msra.mxu0 %v1954
        %2512 = vmatpush.bf16.msra.mxu0 %v1950
        %2513 = vmatmul.bf16.gmra.mxu0 %v982
        %v2514 = vpop.f32.mrf.mxu0
        %v2515 = vadd.f32 %v2426, %v2514
        %v2516 = vpop.f32.mrf.mxu0
        %v2517 = vadd.f32 %v2428, %v2516
        %2518 = vmatmul.bf16.gmra.mxu0 %v989
        %v2519 = vpop.f32.mrf.mxu0
        %v2520 = vadd.f32 %v2431, %v2519
        %v2521 = vpop.f32.mrf.mxu0
        %v2522 = vadd.f32 %v2433, %v2521
        %2523 = vmatmul.bf16.gmra.mxu0 %v996
        %v2524 = vpop.f32.mrf.mxu0
        %v2525 = vadd.f32 %v2436, %v2524
        %v2526 = vpop.f32.mrf.mxu0
        %v2527 = vadd.f32 %v2438, %v2526
        %2528 = vmatmul.bf16.gmra.mxu0 %v1003
        %v2529 = vpop.f32.mrf.mxu0
        %v2530 = vadd.f32 %v2441, %v2529
        %v2531 = vpop.f32.mrf.mxu0
        %v2532 = vadd.f32 %v2443, %v2531
        %2533 = vmatmul.bf16.gmra.mxu0 %v1010
        %v2534 = vpop.f32.mrf.mxu0
        %v2535 = vadd.f32 %v2446, %v2534
        %v2536 = vpop.f32.mrf.mxu0
        %v2537 = vadd.f32 %v2448, %v2536
        %2538 = vmatmul.bf16.gmra.mxu0 %v1017
        %v2539 = vpop.f32.mrf.mxu0
        %v2540 = vadd.f32 %v2451, %v2539
        %v2541 = vpop.f32.mrf.mxu0
        %v2542 = vadd.f32 %v2453, %v2541
        %2543 = vmatmul.bf16.gmra.mxu0 %v1024
        %v2544 = vpop.f32.mrf.mxu0
        %v2545 = vadd.f32 %v2456, %v2544
        %v2546 = vpop.f32.mrf.mxu0
        %v2547 = vadd.f32 %v2458, %v2546
        %2548 = vmatmul.bf16.gmra.mxu0 %v1031
        %v2549 = vpop.f32.mrf.mxu0
        %v2550 = vadd.f32 %v2461, %v2549
        %v2551 = vpop.f32.mrf.mxu0
        %v2552 = vadd.f32 %v2463, %v2551
        %2553 = vmatmul.bf16.gmra.mxu0 %v1038
        %v2554 = vpop.f32.mrf.mxu0
        %v2555 = vadd.f32 %v2466, %v2554
        %v2556 = vpop.f32.mrf.mxu0
        %v2557 = vadd.f32 %v2468, %v2556
        %2558 = vmatmul.bf16.gmra.mxu0 %v1045
        %v2559 = vpop.f32.mrf.mxu0
        %v2560 = vadd.f32 %v2471, %v2559
        %v2561 = vpop.f32.mrf.mxu0
        %v2562 = vadd.f32 %v2473, %v2561
        %2563 = vmatmul.bf16.gmra.mxu0 %v1052
        %v2564 = vpop.f32.mrf.mxu0
        %v2565 = vadd.f32 %v2476, %v2564
        %v2566 = vpop.f32.mrf.mxu0
        %v2567 = vadd.f32 %v2478, %v2566
        %2568 = vmatmul.bf16.gmra.mxu0 %v1059
        %v2569 = vpop.f32.mrf.mxu0
        %v2570 = vadd.f32 %v2481, %v2569
        %v2571 = vpop.f32.mrf.mxu0
        %v2572 = vadd.f32 %v2483, %v2571
        %2573 = vmatmul.bf16.gmra.mxu0 %v1066
        %v2574 = vpop.f32.mrf.mxu0
        %v2575 = vadd.f32 %v2486, %v2574
        %v2576 = vpop.f32.mrf.mxu0
        %v2577 = vadd.f32 %v2488, %v2576
        %2578 = vmatmul.bf16.gmra.mxu0 %v1073
        %v2579 = vpop.f32.mrf.mxu0
        %v2580 = vadd.f32 %v2491, %v2579
        %v2581 = vpop.f32.mrf.mxu0
        %v2582 = vadd.f32 %v2493, %v2581
        %2583 = vmatmul.bf16.gmra.mxu0 %v1080
        %v2584 = vpop.f32.mrf.mxu0
        %v2585 = vadd.f32 %v2496, %v2584
        %v2586 = vpop.f32.mrf.mxu0
        %v2587 = vadd.f32 %v2498, %v2586
        %2588 = vmatmul.bf16.gmra.mxu0 %v1087
        %v2589 = vpop.f32.mrf.mxu0
        %v2590 = vadd.f32 %v2501, %v2589
        %v2591 = vpop.f32.mrf.mxu0
        %v2592 = vadd.f32 %v2503, %v2591
        %2593 = vdwg.mxu0
        %2594 = vmatpush.bf16.msra.mxu0 %v2010
        %2595 = vmatpush.bf16.msra.mxu0 %v2006
        %2596 = vmatpush.bf16.msra.mxu0 %v2002
        %2597 = vmatpush.bf16.msra.mxu0 %v1998
        %2598 = vmatpush.bf16.msra.mxu0 %v1994
        %2599 = vmatpush.bf16.msra.mxu0 %v1990
        %2600 = vmatpush.bf16.msra.mxu0 %v1986
        %2601 = vmatpush.bf16.msra.mxu0 %v1982
        %2602 = vmatmul.bf16.gmra.mxu0 %v983
        %v2603 = vpop.f32.mrf.mxu0
        %v2604 = vadd.f32 %v2515, %v2603
        %v2605 = vpop.f32.mrf.mxu0
        %v2606 = vadd.f32 %v2517, %v2605
        %2607 = vmatmul.bf16.gmra.mxu0 %v990
        %v2608 = vpop.f32.mrf.mxu0
        %v2609 = vadd.f32 %v2520, %v2608
        %v2610 = vpop.f32.mrf.mxu0
        %v2611 = vadd.f32 %v2522, %v2610
        %2612 = vmatmul.bf16.gmra.mxu0 %v997
        %v2613 = vpop.f32.mrf.mxu0
        %v2614 = vadd.f32 %v2525, %v2613
        %v2615 = vpop.f32.mrf.mxu0
        %v2616 = vadd.f32 %v2527, %v2615
        %2617 = vmatmul.bf16.gmra.mxu0 %v1004
        %v2618 = vpop.f32.mrf.mxu0
        %v2619 = vadd.f32 %v2530, %v2618
        %v2620 = vpop.f32.mrf.mxu0
        %v2621 = vadd.f32 %v2532, %v2620
        %2622 = vmatmul.bf16.gmra.mxu0 %v1011
        %v2623 = vpop.f32.mrf.mxu0
        %v2624 = vadd.f32 %v2535, %v2623
        %v2625 = vpop.f32.mrf.mxu0
        %v2626 = vadd.f32 %v2537, %v2625
        %2627 = vmatmul.bf16.gmra.mxu0 %v1018
        %v2628 = vpop.f32.mrf.mxu0
        %v2629 = vadd.f32 %v2540, %v2628
        %v2630 = vpop.f32.mrf.mxu0
        %v2631 = vadd.f32 %v2542, %v2630
        %2632 = vmatmul.bf16.gmra.mxu0 %v1025
        %v2633 = vpop.f32.mrf.mxu0
        %v2634 = vadd.f32 %v2545, %v2633
        %v2635 = vpop.f32.mrf.mxu0
        %v2636 = vadd.f32 %v2547, %v2635
        %2637 = vmatmul.bf16.gmra.mxu0 %v1032
        %v2638 = vpop.f32.mrf.mxu0
        %v2639 = vadd.f32 %v2550, %v2638
        %v2640 = vpop.f32.mrf.mxu0
        %v2641 = vadd.f32 %v2552, %v2640
        %2642 = vmatmul.bf16.gmra.mxu0 %v1039
        %v2643 = vpop.f32.mrf.mxu0
        %v2644 = vadd.f32 %v2555, %v2643
        %v2645 = vpop.f32.mrf.mxu0
        %v2646 = vadd.f32 %v2557, %v2645
        %2647 = vmatmul.bf16.gmra.mxu0 %v1046
        %v2648 = vpop.f32.mrf.mxu0
        %v2649 = vadd.f32 %v2560, %v2648
        %v2650 = vpop.f32.mrf.mxu0
        %v2651 = vadd.f32 %v2562, %v2650
        %2652 = vmatmul.bf16.gmra.mxu0 %v1053
        %v2653 = vpop.f32.mrf.mxu0
        %v2654 = vadd.f32 %v2565, %v2653
        %v2655 = vpop.f32.mrf.mxu0
        %v2656 = vadd.f32 %v2567, %v2655
        %2657 = vmatmul.bf16.gmra.mxu0 %v1060
        %v2658 = vpop.f32.mrf.mxu0
        %v2659 = vadd.f32 %v2570, %v2658
        %v2660 = vpop.f32.mrf.mxu0
        %v2661 = vadd.f32 %v2572, %v2660
        %2662 = vmatmul.bf16.gmra.mxu0 %v1067
        %v2663 = vpop.f32.mrf.mxu0
        %v2664 = vadd.f32 %v2575, %v2663
        %v2665 = vpop.f32.mrf.mxu0
        %v2666 = vadd.f32 %v2577, %v2665
        %2667 = vmatmul.bf16.gmra.mxu0 %v1074
        %v2668 = vpop.f32.mrf.mxu0
        %v2669 = vadd.f32 %v2580, %v2668
        %v2670 = vpop.f32.mrf.mxu0
        %v2671 = vadd.f32 %v2582, %v2670
        %2672 = vmatmul.bf16.gmra.mxu0 %v1081
        %v2673 = vpop.f32.mrf.mxu0
        %v2674 = vadd.f32 %v2585, %v2673
        %v2675 = vpop.f32.mrf.mxu0
        %v2676 = vadd.f32 %v2587, %v2675
        %2677 = vmatmul.bf16.gmra.mxu0 %v1088
        %v2678 = vpop.f32.mrf.mxu0
        %v2679 = vadd.f32 %v2590, %v2678
        %v2680 = vpop.f32.mrf.mxu0
        %v2681 = vadd.f32 %v2592, %v2680
        %2682 = vdwg.mxu0
        %2683 = vmatpush.bf16.msra.mxu0 %v2042
        %2684 = vmatpush.bf16.msra.mxu0 %v2038
        %2685 = vmatpush.bf16.msra.mxu0 %v2034
        %2686 = vmatpush.bf16.msra.mxu0 %v2030
        %2687 = vmatpush.bf16.msra.mxu0 %v2026
        %2688 = vmatpush.bf16.msra.mxu0 %v2022
        %2689 = vmatpush.bf16.msra.mxu0 %v2018
        %2690 = vmatpush.bf16.msra.mxu0 %v2014
        %2691 = vmatmul.bf16.gmra.mxu0 %v984
        %v2692 = vpop.f32.mrf.mxu0
        %v2693 = vadd.f32 %v2604, %v2692
        %v2694 = vpop.f32.mrf.mxu0
        %v2695 = vadd.f32 %v2606, %v2694
        %2696 = vmatmul.bf16.gmra.mxu0 %v991
        %v2697 = vpop.f32.mrf.mxu0
        %v2698 = vadd.f32 %v2609, %v2697
        %v2699 = vpop.f32.mrf.mxu0
        %v2700 = vadd.f32 %v2611, %v2699
        %2701 = vmatmul.bf16.gmra.mxu0 %v998
        %v2702 = vpop.f32.mrf.mxu0
        %v2703 = vadd.f32 %v2614, %v2702
        %v2704 = vpop.f32.mrf.mxu0
        %v2705 = vadd.f32 %v2616, %v2704
        %2706 = vmatmul.bf16.gmra.mxu0 %v1005
        %v2707 = vpop.f32.mrf.mxu0
        %v2708 = vadd.f32 %v2619, %v2707
        %v2709 = vpop.f32.mrf.mxu0
        %v2710 = vadd.f32 %v2621, %v2709
        %2711 = vmatmul.bf16.gmra.mxu0 %v1012
        %v2712 = vpop.f32.mrf.mxu0
        %v2713 = vadd.f32 %v2624, %v2712
        %v2714 = vpop.f32.mrf.mxu0
        %v2715 = vadd.f32 %v2626, %v2714
        %2716 = vmatmul.bf16.gmra.mxu0 %v1019
        %v2717 = vpop.f32.mrf.mxu0
        %v2718 = vadd.f32 %v2629, %v2717
        %v2719 = vpop.f32.mrf.mxu0
        %v2720 = vadd.f32 %v2631, %v2719
        %2721 = vmatmul.bf16.gmra.mxu0 %v1026
        %v2722 = vpop.f32.mrf.mxu0
        %v2723 = vadd.f32 %v2634, %v2722
        %v2724 = vpop.f32.mrf.mxu0
        %v2725 = vadd.f32 %v2636, %v2724
        %2726 = vmatmul.bf16.gmra.mxu0 %v1033
        %v2727 = vpop.f32.mrf.mxu0
        %v2728 = vadd.f32 %v2639, %v2727
        %v2729 = vpop.f32.mrf.mxu0
        %v2730 = vadd.f32 %v2641, %v2729
        %2731 = vmatmul.bf16.gmra.mxu0 %v1040
        %v2732 = vpop.f32.mrf.mxu0
        %v2733 = vadd.f32 %v2644, %v2732
        %v2734 = vpop.f32.mrf.mxu0
        %v2735 = vadd.f32 %v2646, %v2734
        %2736 = vmatmul.bf16.gmra.mxu0 %v1047
        %v2737 = vpop.f32.mrf.mxu0
        %v2738 = vadd.f32 %v2649, %v2737
        %v2739 = vpop.f32.mrf.mxu0
        %v2740 = vadd.f32 %v2651, %v2739
        %2741 = vmatmul.bf16.gmra.mxu0 %v1054
        %v2742 = vpop.f32.mrf.mxu0
        %v2743 = vadd.f32 %v2654, %v2742
        %v2744 = vpop.f32.mrf.mxu0
        %v2745 = vadd.f32 %v2656, %v2744
        %2746 = vmatmul.bf16.gmra.mxu0 %v1061
        %v2747 = vpop.f32.mrf.mxu0
        %v2748 = vadd.f32 %v2659, %v2747
        %v2749 = vpop.f32.mrf.mxu0
        %v2750 = vadd.f32 %v2661, %v2749
        %2751 = vmatmul.bf16.gmra.mxu0 %v1068
        %v2752 = vpop.f32.mrf.mxu0
        %v2753 = vadd.f32 %v2664, %v2752
        %v2754 = vpop.f32.mrf.mxu0
        %v2755 = vadd.f32 %v2666, %v2754
        %2756 = vmatmul.bf16.gmra.mxu0 %v1075
        %v2757 = vpop.f32.mrf.mxu0
        %v2758 = vadd.f32 %v2669, %v2757
        %v2759 = vpop.f32.mrf.mxu0
        %v2760 = vadd.f32 %v2671, %v2759
        %2761 = vmatmul.bf16.gmra.mxu0 %v1082
        %v2762 = vpop.f32.mrf.mxu0
        %v2763 = vadd.f32 %v2674, %v2762
        %v2764 = vpop.f32.mrf.mxu0
        %v2765 = vadd.f32 %v2676, %v2764
        %2766 = vmatmul.bf16.gmra.mxu0 %v1089
        %v2767 = vpop.f32.mrf.mxu0
        %v2768 = vadd.f32 %v2679, %v2767
        %v2769 = vpop.f32.mrf.mxu0
        %v2770 = vadd.f32 %v2681, %v2769
        %2771 = vdwg.mxu0
        %2772 = vmatpush.bf16.msra.mxu0 %v2074
        %2773 = vmatpush.bf16.msra.mxu0 %v2070
        %2774 = vmatpush.bf16.msra.mxu0 %v2066
        %2775 = vmatpush.bf16.msra.mxu0 %v2062
        %2776 = vmatpush.bf16.msra.mxu0 %v2058
        %2777 = vmatpush.bf16.msra.mxu0 %v2054
        %2778 = vmatpush.bf16.msra.mxu0 %v2050
        %2779 = vmatpush.bf16.msra.mxu0 %v2046
        %2780 = vmatmul.bf16.gmra.mxu0 %v985
        %v2781 = vpop.f32.mrf.mxu0
        %v2782 = vadd.f32 %v2693, %v2781
        %v2783 = vpop.f32.mrf.mxu0
        %v2784 = vadd.f32 %v2695, %v2783
        %2785 = vmatmul.bf16.gmra.mxu0 %v992
        %v2786 = vpop.f32.mrf.mxu0
        %v2787 = vadd.f32 %v2698, %v2786
        %v2788 = vpop.f32.mrf.mxu0
        %v2789 = vadd.f32 %v2700, %v2788
        %2790 = vmatmul.bf16.gmra.mxu0 %v999
        %v2791 = vpop.f32.mrf.mxu0
        %v2792 = vadd.f32 %v2703, %v2791
        %v2793 = vpop.f32.mrf.mxu0
        %v2794 = vadd.f32 %v2705, %v2793
        %2795 = vmatmul.bf16.gmra.mxu0 %v1006
        %v2796 = vpop.f32.mrf.mxu0
        %v2797 = vadd.f32 %v2708, %v2796
        %v2798 = vpop.f32.mrf.mxu0
        %v2799 = vadd.f32 %v2710, %v2798
        %2800 = vmatmul.bf16.gmra.mxu0 %v1013
        %v2801 = vpop.f32.mrf.mxu0
        %v2802 = vadd.f32 %v2713, %v2801
        %v2803 = vpop.f32.mrf.mxu0
        %v2804 = vadd.f32 %v2715, %v2803
        %2805 = vmatmul.bf16.gmra.mxu0 %v1020
        %v2806 = vpop.f32.mrf.mxu0
        %v2807 = vadd.f32 %v2718, %v2806
        %v2808 = vpop.f32.mrf.mxu0
        %v2809 = vadd.f32 %v2720, %v2808
        %2810 = vmatmul.bf16.gmra.mxu0 %v1027
        %v2811 = vpop.f32.mrf.mxu0
        %v2812 = vadd.f32 %v2723, %v2811
        %v2813 = vpop.f32.mrf.mxu0
        %v2814 = vadd.f32 %v2725, %v2813
        %2815 = vmatmul.bf16.gmra.mxu0 %v1034
        %v2816 = vpop.f32.mrf.mxu0
        %v2817 = vadd.f32 %v2728, %v2816
        %v2818 = vpop.f32.mrf.mxu0
        %v2819 = vadd.f32 %v2730, %v2818
        %2820 = vmatmul.bf16.gmra.mxu0 %v1041
        %v2821 = vpop.f32.mrf.mxu0
        %v2822 = vadd.f32 %v2733, %v2821
        %v2823 = vpop.f32.mrf.mxu0
        %v2824 = vadd.f32 %v2735, %v2823
        %2825 = vmatmul.bf16.gmra.mxu0 %v1048
        %v2826 = vpop.f32.mrf.mxu0
        %v2827 = vadd.f32 %v2738, %v2826
        %v2828 = vpop.f32.mrf.mxu0
        %v2829 = vadd.f32 %v2740, %v2828
        %2830 = vmatmul.bf16.gmra.mxu0 %v1055
        %v2831 = vpop.f32.mrf.mxu0
        %v2832 = vadd.f32 %v2743, %v2831
        %v2833 = vpop.f32.mrf.mxu0
        %v2834 = vadd.f32 %v2745, %v2833
        %2835 = vmatmul.bf16.gmra.mxu0 %v1062
        %v2836 = vpop.f32.mrf.mxu0
        %v2837 = vadd.f32 %v2748, %v2836
        %v2838 = vpop.f32.mrf.mxu0
        %v2839 = vadd.f32 %v2750, %v2838
        %2840 = vmatmul.bf16.gmra.mxu0 %v1069
        %v2841 = vpop.f32.mrf.mxu0
        %v2842 = vadd.f32 %v2753, %v2841
        %v2843 = vpop.f32.mrf.mxu0
        %v2844 = vadd.f32 %v2755, %v2843
        %2845 = vmatmul.bf16.gmra.mxu0 %v1076
        %v2846 = vpop.f32.mrf.mxu0
        %v2847 = vadd.f32 %v2758, %v2846
        %v2848 = vpop.f32.mrf.mxu0
        %v2849 = vadd.f32 %v2760, %v2848
        %2850 = vmatmul.bf16.gmra.mxu0 %v1083
        %v2851 = vpop.f32.mrf.mxu0
        %v2852 = vadd.f32 %v2763, %v2851
        %v2853 = vpop.f32.mrf.mxu0
        %v2854 = vadd.f32 %v2765, %v2853
        %2855 = vmatmul.bf16.gmra.mxu0 %v1090
        %v2856 = vpop.f32.mrf.mxu0
        %v2857 = vadd.f32 %v2768, %v2856
        %v2858 = vpop.f32.mrf.mxu0
        %v2859 = vadd.f32 %v2770, %v2858
        %2860 = vdwg.mxu0
        %2861 = vmatpush.bf16.msra.mxu0 0
        %2862 = vmatpush.bf16.msra.mxu0 0
        %2863 = vmatpush.bf16.msra.mxu0 0
        %2864 = vmatpush.bf16.msra.mxu0 0
        %2865 = vmatpush.bf16.msra.mxu0 0
        %2866 = vmatpush.bf16.msra.mxu0 0
        %2867 = vmatpush.bf16.msra.mxu0 0
        %2868 = vmatpush.bf16.msra.mxu0 %v2078
        %2869 = vmatmul.bf16.gmra.mxu0 %v2280
        %v2870 = vpop.f32.mrf.mxu0
        %v2871 = vadd.f32 %v2782, %v2870
        %v2872 = vpop.f32.mrf.mxu0
        %v2873 = vadd.f32 %v2784, %v2872
        %2874 = vmatmul.bf16.gmra.mxu0 %v2283
        %v2875 = vpop.f32.mrf.mxu0
        %v2876 = vadd.f32 %v2787, %v2875
        %v2877 = vpop.f32.mrf.mxu0
        %v2878 = vadd.f32 %v2789, %v2877
        %2879 = vmatmul.bf16.gmra.mxu0 %v2286
        %v2880 = vpop.f32.mrf.mxu0
        %v2881 = vadd.f32 %v2792, %v2880
        %v2882 = vpop.f32.mrf.mxu0
        %v2883 = vadd.f32 %v2794, %v2882
        %2884 = vmatmul.bf16.gmra.mxu0 %v2289
        %v2885 = vpop.f32.mrf.mxu0
        %v2886 = vadd.f32 %v2797, %v2885
        %v2887 = vpop.f32.mrf.mxu0
        %v2888 = vadd.f32 %v2799, %v2887
        %2889 = vmatmul.bf16.gmra.mxu0 %v2292
        %v2890 = vpop.f32.mrf.mxu0
        %v2891 = vadd.f32 %v2802, %v2890
        %v2892 = vpop.f32.mrf.mxu0
        %v2893 = vadd.f32 %v2804, %v2892
        %2894 = vmatmul.bf16.gmra.mxu0 %v2295
        %v2895 = vpop.f32.mrf.mxu0
        %v2896 = vadd.f32 %v2807, %v2895
        %v2897 = vpop.f32.mrf.mxu0
        %v2898 = vadd.f32 %v2809, %v2897
        %2899 = vmatmul.bf16.gmra.mxu0 %v2298
        %v2900 = vpop.f32.mrf.mxu0
        %v2901 = vadd.f32 %v2812, %v2900
        %v2902 = vpop.f32.mrf.mxu0
        %v2903 = vadd.f32 %v2814, %v2902
        %2904 = vmatmul.bf16.gmra.mxu0 %v2301
        %v2905 = vpop.f32.mrf.mxu0
        %v2906 = vadd.f32 %v2817, %v2905
        %v2907 = vpop.f32.mrf.mxu0
        %v2908 = vadd.f32 %v2819, %v2907
        %2909 = vmatmul.bf16.gmra.mxu0 %v2304
        %v2910 = vpop.f32.mrf.mxu0
        %v2911 = vadd.f32 %v2822, %v2910
        %v2912 = vpop.f32.mrf.mxu0
        %v2913 = vadd.f32 %v2824, %v2912
        %2914 = vmatmul.bf16.gmra.mxu0 %v2307
        %v2915 = vpop.f32.mrf.mxu0
        %v2916 = vadd.f32 %v2827, %v2915
        %v2917 = vpop.f32.mrf.mxu0
        %v2918 = vadd.f32 %v2829, %v2917
        %2919 = vmatmul.bf16.gmra.mxu0 %v2310
        %v2920 = vpop.f32.mrf.mxu0
        %v2921 = vadd.f32 %v2832, %v2920
        %v2922 = vpop.f32.mrf.mxu0
        %v2923 = vadd.f32 %v2834, %v2922
        %2924 = vmatmul.bf16.gmra.mxu0 %v2313
        %v2925 = vpop.f32.mrf.mxu0
        %v2926 = vadd.f32 %v2837, %v2925
        %v2927 = vpop.f32.mrf.mxu0
        %v2928 = vadd.f32 %v2839, %v2927
        %2929 = vmatmul.bf16.gmra.mxu0 %v2316
        %v2930 = vpop.f32.mrf.mxu0
        %v2931 = vadd.f32 %v2842, %v2930
        %v2932 = vpop.f32.mrf.mxu0
        %v2933 = vadd.f32 %v2844, %v2932
        %2934 = vmatmul.bf16.gmra.mxu0 %v2319
        %v2935 = vpop.f32.mrf.mxu0
        %v2936 = vadd.f32 %v2847, %v2935
        %v2937 = vpop.f32.mrf.mxu0
        %v2938 = vadd.f32 %v2849, %v2937
        %2939 = vmatmul.bf16.gmra.mxu0 %v2322
        %v2940 = vpop.f32.mrf.mxu0
        %v2941 = vadd.f32 %v2852, %v2940
        %v2942 = vpop.f32.mrf.mxu0
        %v2943 = vadd.f32 %v2854, %v2942
        %2944 = vmatmul.bf16.gmra.mxu0 %v2325
        %v2945 = vpop.f32.mrf.mxu0
        %v2946 = vadd.f32 %v2857, %v2945
        %v2947 = vpop.f32.mrf.mxu0
        %v2948 = vadd.f32 %v2859, %v2947
        %2949 = vdwg.mxu0
        %2950 = vmatpush.bf16.msra.mxu0 %v1915
        %2951 = vmatpush.bf16.msra.mxu0 %v1911
        %2952 = vmatpush.bf16.msra.mxu0 %v1907
        %2953 = vmatpush.bf16.msra.mxu0 %v1903
        %2954 = vmatpush.bf16.msra.mxu0 %v1899
        %2955 = vmatpush.bf16.msra.mxu0 %v1895
        %2956 = vmatpush.bf16.msra.mxu0 %v1891
        %2957 = vmatpush.bf16.msra.mxu0 %v1887
        %2958 = vmatmul.bf16.gmra.mxu0 %v980
        %v2959 = vpop.f32.mrf.mxu0
        %v2960 = vadd.f32 %v1291, %v2959
        %v2961 = vpop.f32.mrf.mxu0
        %v2962 = vadd.f32 %v1291, %v2961
        %2963 = vmatmul.bf16.gmra.mxu0 %v987
        %v2964 = vpop.f32.mrf.mxu0
        %v2965 = vadd.f32 %v1291, %v2964
        %v2966 = vpop.f32.mrf.mxu0
        %v2967 = vadd.f32 %v1291, %v2966
        %2968 = vmatmul.bf16.gmra.mxu0 %v994
        %v2969 = vpop.f32.mrf.mxu0
        %v2970 = vadd.f32 %v1291, %v2969
        %v2971 = vpop.f32.mrf.mxu0
        %v2972 = vadd.f32 %v1291, %v2971
        %2973 = vmatmul.bf16.gmra.mxu0 %v1001
        %v2974 = vpop.f32.mrf.mxu0
        %v2975 = vadd.f32 %v1291, %v2974
        %v2976 = vpop.f32.mrf.mxu0
        %v2977 = vadd.f32 %v1291, %v2976
        %2978 = vmatmul.bf16.gmra.mxu0 %v1008
        %v2979 = vpop.f32.mrf.mxu0
        %v2980 = vadd.f32 %v1291, %v2979
        %v2981 = vpop.f32.mrf.mxu0
        %v2982 = vadd.f32 %v1291, %v2981
        %2983 = vmatmul.bf16.gmra.mxu0 %v1015
        %v2984 = vpop.f32.mrf.mxu0
        %v2985 = vadd.f32 %v1291, %v2984
        %v2986 = vpop.f32.mrf.mxu0
        %v2987 = vadd.f32 %v1291, %v2986
        %2988 = vmatmul.bf16.gmra.mxu0 %v1022
        %v2989 = vpop.f32.mrf.mxu0
        %v2990 = vadd.f32 %v1291, %v2989
        %v2991 = vpop.f32.mrf.mxu0
        %v2992 = vadd.f32 %v1291, %v2991
        %2993 = vmatmul.bf16.gmra.mxu0 %v1029
        %v2994 = vpop.f32.mrf.mxu0
        %v2995 = vadd.f32 %v1291, %v2994
        %v2996 = vpop.f32.mrf.mxu0
        %v2997 = vadd.f32 %v1291, %v2996
        %2998 = vmatmul.bf16.gmra.mxu0 %v1036
        %v2999 = vpop.f32.mrf.mxu0
        %v3000 = vadd.f32 %v1291, %v2999
        %v3001 = vpop.f32.mrf.mxu0
        %v3002 = vadd.f32 %v1291, %v3001
        %3003 = vmatmul.bf16.gmra.mxu0 %v1043
        %v3004 = vpop.f32.mrf.mxu0
        %v3005 = vadd.f32 %v1291, %v3004
        %v3006 = vpop.f32.mrf.mxu0
        %v3007 = vadd.f32 %v1291, %v3006
        %3008 = vmatmul.bf16.gmra.mxu0 %v1050
        %v3009 = vpop.f32.mrf.mxu0
        %v3010 = vadd.f32 %v1291, %v3009
        %v3011 = vpop.f32.mrf.mxu0
        %v3012 = vadd.f32 %v1291, %v3011
        %3013 = vmatmul.bf16.gmra.mxu0 %v1057
        %v3014 = vpop.f32.mrf.mxu0
        %v3015 = vadd.f32 %v1291, %v3014
        %v3016 = vpop.f32.mrf.mxu0
        %v3017 = vadd.f32 %v1291, %v3016
        %3018 = vmatmul.bf16.gmra.mxu0 %v1064
        %v3019 = vpop.f32.mrf.mxu0
        %v3020 = vadd.f32 %v1291, %v3019
        %v3021 = vpop.f32.mrf.mxu0
        %v3022 = vadd.f32 %v1291, %v3021
        %3023 = vmatmul.bf16.gmra.mxu0 %v1071
        %v3024 = vpop.f32.mrf.mxu0
        %v3025 = vadd.f32 %v1291, %v3024
        %v3026 = vpop.f32.mrf.mxu0
        %v3027 = vadd.f32 %v1291, %v3026
        %3028 = vmatmul.bf16.gmra.mxu0 %v1078
        %v3029 = vpop.f32.mrf.mxu0
        %v3030 = vadd.f32 %v1291, %v3029
        %v3031 = vpop.f32.mrf.mxu0
        %v3032 = vadd.f32 %v1291, %v3031
        %3033 = vmatmul.bf16.gmra.mxu0 %v1085
        %v3034 = vpop.f32.mrf.mxu0
        %v3035 = vadd.f32 %v1291, %v3034
        %v3036 = vpop.f32.mrf.mxu0
        %v3037 = vadd.f32 %v1291, %v3036
        %3038 = vdwg.mxu0
        %3039 = vmatpush.bf16.msra.mxu0 %v1947
        %3040 = vmatpush.bf16.msra.mxu0 %v1943
        %3041 = vmatpush.bf16.msra.mxu0 %v1939
        %3042 = vmatpush.bf16.msra.mxu0 %v1935
        %3043 = vmatpush.bf16.msra.mxu0 %v1931
        %3044 = vmatpush.bf16.msra.mxu0 %v1927
        %3045 = vmatpush.bf16.msra.mxu0 %v1923
        %3046 = vmatpush.bf16.msra.mxu0 %v1919
        %3047 = vmatmul.bf16.gmra.mxu0 %v981
        %v3048 = vpop.f32.mrf.mxu0
        %v3049 = vadd.f32 %v2960, %v3048
        %v3050 = vpop.f32.mrf.mxu0
        %v3051 = vadd.f32 %v2962, %v3050
        %3052 = vmatmul.bf16.gmra.mxu0 %v988
        %v3053 = vpop.f32.mrf.mxu0
        %v3054 = vadd.f32 %v2965, %v3053
        %v3055 = vpop.f32.mrf.mxu0
        %v3056 = vadd.f32 %v2967, %v3055
        %3057 = vmatmul.bf16.gmra.mxu0 %v995
        %v3058 = vpop.f32.mrf.mxu0
        %v3059 = vadd.f32 %v2970, %v3058
        %v3060 = vpop.f32.mrf.mxu0
        %v3061 = vadd.f32 %v2972, %v3060
        %3062 = vmatmul.bf16.gmra.mxu0 %v1002
        %v3063 = vpop.f32.mrf.mxu0
        %v3064 = vadd.f32 %v2975, %v3063
        %v3065 = vpop.f32.mrf.mxu0
        %v3066 = vadd.f32 %v2977, %v3065
        %3067 = vmatmul.bf16.gmra.mxu0 %v1009
        %v3068 = vpop.f32.mrf.mxu0
        %v3069 = vadd.f32 %v2980, %v3068
        %v3070 = vpop.f32.mrf.mxu0
        %v3071 = vadd.f32 %v2982, %v3070
        %3072 = vmatmul.bf16.gmra.mxu0 %v1016
        %v3073 = vpop.f32.mrf.mxu0
        %v3074 = vadd.f32 %v2985, %v3073
        %v3075 = vpop.f32.mrf.mxu0
        %v3076 = vadd.f32 %v2987, %v3075
        %3077 = vmatmul.bf16.gmra.mxu0 %v1023
        %v3078 = vpop.f32.mrf.mxu0
        %v3079 = vadd.f32 %v2990, %v3078
        %v3080 = vpop.f32.mrf.mxu0
        %v3081 = vadd.f32 %v2992, %v3080
        %3082 = vmatmul.bf16.gmra.mxu0 %v1030
        %v3083 = vpop.f32.mrf.mxu0
        %v3084 = vadd.f32 %v2995, %v3083
        %v3085 = vpop.f32.mrf.mxu0
        %v3086 = vadd.f32 %v2997, %v3085
        %3087 = vmatmul.bf16.gmra.mxu0 %v1037
        %v3088 = vpop.f32.mrf.mxu0
        %v3089 = vadd.f32 %v3000, %v3088
        %v3090 = vpop.f32.mrf.mxu0
        %v3091 = vadd.f32 %v3002, %v3090
        %3092 = vmatmul.bf16.gmra.mxu0 %v1044
        %v3093 = vpop.f32.mrf.mxu0
        %v3094 = vadd.f32 %v3005, %v3093
        %v3095 = vpop.f32.mrf.mxu0
        %v3096 = vadd.f32 %v3007, %v3095
        %3097 = vmatmul.bf16.gmra.mxu0 %v1051
        %v3098 = vpop.f32.mrf.mxu0
        %v3099 = vadd.f32 %v3010, %v3098
        %v3100 = vpop.f32.mrf.mxu0
        %v3101 = vadd.f32 %v3012, %v3100
        %3102 = vmatmul.bf16.gmra.mxu0 %v1058
        %v3103 = vpop.f32.mrf.mxu0
        %v3104 = vadd.f32 %v3015, %v3103
        %v3105 = vpop.f32.mrf.mxu0
        %v3106 = vadd.f32 %v3017, %v3105
        %3107 = vmatmul.bf16.gmra.mxu0 %v1065
        %v3108 = vpop.f32.mrf.mxu0
        %v3109 = vadd.f32 %v3020, %v3108
        %v3110 = vpop.f32.mrf.mxu0
        %v3111 = vadd.f32 %v3022, %v3110
        %3112 = vmatmul.bf16.gmra.mxu0 %v1072
        %v3113 = vpop.f32.mrf.mxu0
        %v3114 = vadd.f32 %v3025, %v3113
        %v3115 = vpop.f32.mrf.mxu0
        %v3116 = vadd.f32 %v3027, %v3115
        %3117 = vmatmul.bf16.gmra.mxu0 %v1079
        %v3118 = vpop.f32.mrf.mxu0
        %v3119 = vadd.f32 %v3030, %v3118
        %v3120 = vpop.f32.mrf.mxu0
        %v3121 = vadd.f32 %v3032, %v3120
        %3122 = vmatmul.bf16.gmra.mxu0 %v1086
        %v3123 = vpop.f32.mrf.mxu0
        %v3124 = vadd.f32 %v3035, %v3123
        %v3125 = vpop.f32.mrf.mxu0
        %v3126 = vadd.f32 %v3037, %v3125
        %3127 = vdwg.mxu0
        %3128 = vmatpush.bf16.msra.mxu0 %v1979
        %3129 = vmatpush.bf16.msra.mxu0 %v1975
        %3130 = vmatpush.bf16.msra.mxu0 %v1971
        %3131 = vmatpush.bf16.msra.mxu0 %v1967
        %3132 = vmatpush.bf16.msra.mxu0 %v1963
        %3133 = vmatpush.bf16.msra.mxu0 %v1959
        %3134 = vmatpush.bf16.msra.mxu0 %v1955
        %3135 = vmatpush.bf16.msra.mxu0 %v1951
        %3136 = vmatmul.bf16.gmra.mxu0 %v982
        %v3137 = vpop.f32.mrf.mxu0
        %v3138 = vadd.f32 %v3049, %v3137
        %v3139 = vpop.f32.mrf.mxu0
        %v3140 = vadd.f32 %v3051, %v3139
        %3141 = vmatmul.bf16.gmra.mxu0 %v989
        %v3142 = vpop.f32.mrf.mxu0
        %v3143 = vadd.f32 %v3054, %v3142
        %v3144 = vpop.f32.mrf.mxu0
        %v3145 = vadd.f32 %v3056, %v3144
        %3146 = vmatmul.bf16.gmra.mxu0 %v996
        %v3147 = vpop.f32.mrf.mxu0
        %v3148 = vadd.f32 %v3059, %v3147
        %v3149 = vpop.f32.mrf.mxu0
        %v3150 = vadd.f32 %v3061, %v3149
        %3151 = vmatmul.bf16.gmra.mxu0 %v1003
        %v3152 = vpop.f32.mrf.mxu0
        %v3153 = vadd.f32 %v3064, %v3152
        %v3154 = vpop.f32.mrf.mxu0
        %v3155 = vadd.f32 %v3066, %v3154
        %3156 = vmatmul.bf16.gmra.mxu0 %v1010
        %v3157 = vpop.f32.mrf.mxu0
        %v3158 = vadd.f32 %v3069, %v3157
        %v3159 = vpop.f32.mrf.mxu0
        %v3160 = vadd.f32 %v3071, %v3159
        %3161 = vmatmul.bf16.gmra.mxu0 %v1017
        %v3162 = vpop.f32.mrf.mxu0
        %v3163 = vadd.f32 %v3074, %v3162
        %v3164 = vpop.f32.mrf.mxu0
        %v3165 = vadd.f32 %v3076, %v3164
        %3166 = vmatmul.bf16.gmra.mxu0 %v1024
        %v3167 = vpop.f32.mrf.mxu0
        %v3168 = vadd.f32 %v3079, %v3167
        %v3169 = vpop.f32.mrf.mxu0
        %v3170 = vadd.f32 %v3081, %v3169
        %3171 = vmatmul.bf16.gmra.mxu0 %v1031
        %v3172 = vpop.f32.mrf.mxu0
        %v3173 = vadd.f32 %v3084, %v3172
        %v3174 = vpop.f32.mrf.mxu0
        %v3175 = vadd.f32 %v3086, %v3174
        %3176 = vmatmul.bf16.gmra.mxu0 %v1038
        %v3177 = vpop.f32.mrf.mxu0
        %v3178 = vadd.f32 %v3089, %v3177
        %v3179 = vpop.f32.mrf.mxu0
        %v3180 = vadd.f32 %v3091, %v3179
        %3181 = vmatmul.bf16.gmra.mxu0 %v1045
        %v3182 = vpop.f32.mrf.mxu0
        %v3183 = vadd.f32 %v3094, %v3182
        %v3184 = vpop.f32.mrf.mxu0
        %v3185 = vadd.f32 %v3096, %v3184
        %3186 = vmatmul.bf16.gmra.mxu0 %v1052
        %v3187 = vpop.f32.mrf.mxu0
        %v3188 = vadd.f32 %v3099, %v3187
        %v3189 = vpop.f32.mrf.mxu0
        %v3190 = vadd.f32 %v3101, %v3189
        %3191 = vmatmul.bf16.gmra.mxu0 %v1059
        %v3192 = vpop.f32.mrf.mxu0
        %v3193 = vadd.f32 %v3104, %v3192
        %v3194 = vpop.f32.mrf.mxu0
        %v3195 = vadd.f32 %v3106, %v3194
        %3196 = vmatmul.bf16.gmra.mxu0 %v1066
        %v3197 = vpop.f32.mrf.mxu0
        %v3198 = vadd.f32 %v3109, %v3197
        %v3199 = vpop.f32.mrf.mxu0
        %v3200 = vadd.f32 %v3111, %v3199
        %3201 = vmatmul.bf16.gmra.mxu0 %v1073
        %v3202 = vpop.f32.mrf.mxu0
        %v3203 = vadd.f32 %v3114, %v3202
        %v3204 = vpop.f32.mrf.mxu0
        %v3205 = vadd.f32 %v3116, %v3204
        %3206 = vmatmul.bf16.gmra.mxu0 %v1080
        %v3207 = vpop.f32.mrf.mxu0
        %v3208 = vadd.f32 %v3119, %v3207
        %v3209 = vpop.f32.mrf.mxu0
        %v3210 = vadd.f32 %v3121, %v3209
        %3211 = vmatmul.bf16.gmra.mxu0 %v1087
        %v3212 = vpop.f32.mrf.mxu0
        %v3213 = vadd.f32 %v3124, %v3212
        %v3214 = vpop.f32.mrf.mxu0
        %v3215 = vadd.f32 %v3126, %v3214
        %3216 = vdwg.mxu0
        %3217 = vmatpush.bf16.msra.mxu0 %v2011
        %3218 = vmatpush.bf16.msra.mxu0 %v2007
        %3219 = vmatpush.bf16.msra.mxu0 %v2003
        %3220 = vmatpush.bf16.msra.mxu0 %v1999
        %3221 = vmatpush.bf16.msra.mxu0 %v1995
        %3222 = vmatpush.bf16.msra.mxu0 %v1991
        %3223 = vmatpush.bf16.msra.mxu0 %v1987
        %3224 = vmatpush.bf16.msra.mxu0 %v1983
        %3225 = vmatmul.bf16.gmra.mxu0 %v983
        %v3226 = vpop.f32.mrf.mxu0
        %v3227 = vadd.f32 %v3138, %v3226
        %v3228 = vpop.f32.mrf.mxu0
        %v3229 = vadd.f32 %v3140, %v3228
        %3230 = vmatmul.bf16.gmra.mxu0 %v990
        %v3231 = vpop.f32.mrf.mxu0
        %v3232 = vadd.f32 %v3143, %v3231
        %v3233 = vpop.f32.mrf.mxu0
        %v3234 = vadd.f32 %v3145, %v3233
        %3235 = vmatmul.bf16.gmra.mxu0 %v997
        %v3236 = vpop.f32.mrf.mxu0
        %v3237 = vadd.f32 %v3148, %v3236
        %v3238 = vpop.f32.mrf.mxu0
        %v3239 = vadd.f32 %v3150, %v3238
        %3240 = vmatmul.bf16.gmra.mxu0 %v1004
        %v3241 = vpop.f32.mrf.mxu0
        %v3242 = vadd.f32 %v3153, %v3241
        %v3243 = vpop.f32.mrf.mxu0
        %v3244 = vadd.f32 %v3155, %v3243
        %3245 = vmatmul.bf16.gmra.mxu0 %v1011
        %v3246 = vpop.f32.mrf.mxu0
        %v3247 = vadd.f32 %v3158, %v3246
        %v3248 = vpop.f32.mrf.mxu0
        %v3249 = vadd.f32 %v3160, %v3248
        %3250 = vmatmul.bf16.gmra.mxu0 %v1018
        %v3251 = vpop.f32.mrf.mxu0
        %v3252 = vadd.f32 %v3163, %v3251
        %v3253 = vpop.f32.mrf.mxu0
        %v3254 = vadd.f32 %v3165, %v3253
        %3255 = vmatmul.bf16.gmra.mxu0 %v1025
        %v3256 = vpop.f32.mrf.mxu0
        %v3257 = vadd.f32 %v3168, %v3256
        %v3258 = vpop.f32.mrf.mxu0
        %v3259 = vadd.f32 %v3170, %v3258
        %3260 = vmatmul.bf16.gmra.mxu0 %v1032
        %v3261 = vpop.f32.mrf.mxu0
        %v3262 = vadd.f32 %v3173, %v3261
        %v3263 = vpop.f32.mrf.mxu0
        %v3264 = vadd.f32 %v3175, %v3263
        %3265 = vmatmul.bf16.gmra.mxu0 %v1039
        %v3266 = vpop.f32.mrf.mxu0
        %v3267 = vadd.f32 %v3178, %v3266
        %v3268 = vpop.f32.mrf.mxu0
        %v3269 = vadd.f32 %v3180, %v3268
        %3270 = vmatmul.bf16.gmra.mxu0 %v1046
        %v3271 = vpop.f32.mrf.mxu0
        %v3272 = vadd.f32 %v3183, %v3271
        %v3273 = vpop.f32.mrf.mxu0
        %v3274 = vadd.f32 %v3185, %v3273
        %3275 = vmatmul.bf16.gmra.mxu0 %v1053
        %v3276 = vpop.f32.mrf.mxu0
        %v3277 = vadd.f32 %v3188, %v3276
        %v3278 = vpop.f32.mrf.mxu0
        %v3279 = vadd.f32 %v3190, %v3278
        %3280 = vmatmul.bf16.gmra.mxu0 %v1060
        %v3281 = vpop.f32.mrf.mxu0
        %v3282 = vadd.f32 %v3193, %v3281
        %v3283 = vpop.f32.mrf.mxu0
        %v3284 = vadd.f32 %v3195, %v3283
        %3285 = vmatmul.bf16.gmra.mxu0 %v1067
        %v3286 = vpop.f32.mrf.mxu0
        %v3287 = vadd.f32 %v3198, %v3286
        %v3288 = vpop.f32.mrf.mxu0
        %v3289 = vadd.f32 %v3200, %v3288
        %3290 = vmatmul.bf16.gmra.mxu0 %v1074
        %v3291 = vpop.f32.mrf.mxu0
        %v3292 = vadd.f32 %v3203, %v3291
        %v3293 = vpop.f32.mrf.mxu0
        %v3294 = vadd.f32 %v3205, %v3293
        %3295 = vmatmul.bf16.gmra.mxu0 %v1081
        %v3296 = vpop.f32.mrf.mxu0
        %v3297 = vadd.f32 %v3208, %v3296
        %v3298 = vpop.f32.mrf.mxu0
        %v3299 = vadd.f32 %v3210, %v3298
        %3300 = vmatmul.bf16.gmra.mxu0 %v1088
        %v3301 = vpop.f32.mrf.mxu0
        %v3302 = vadd.f32 %v3213, %v3301
        %v3303 = vpop.f32.mrf.mxu0
        %v3304 = vadd.f32 %v3215, %v3303
        %3305 = vdwg.mxu0
        %3306 = vmatpush.bf16.msra.mxu0 %v2043
        %3307 = vmatpush.bf16.msra.mxu0 %v2039
        %3308 = vmatpush.bf16.msra.mxu0 %v2035
        %3309 = vmatpush.bf16.msra.mxu0 %v2031
        %3310 = vmatpush.bf16.msra.mxu0 %v2027
        %3311 = vmatpush.bf16.msra.mxu0 %v2023
        %3312 = vmatpush.bf16.msra.mxu0 %v2019
        %3313 = vmatpush.bf16.msra.mxu0 %v2015
        %3314 = vmatmul.bf16.gmra.mxu0 %v984
        %v3315 = vpop.f32.mrf.mxu0
        %v3316 = vadd.f32 %v3227, %v3315
        %v3317 = vpop.f32.mrf.mxu0
        %v3318 = vadd.f32 %v3229, %v3317
        %3319 = vmatmul.bf16.gmra.mxu0 %v991
        %v3320 = vpop.f32.mrf.mxu0
        %v3321 = vadd.f32 %v3232, %v3320
        %v3322 = vpop.f32.mrf.mxu0
        %v3323 = vadd.f32 %v3234, %v3322
        %3324 = vmatmul.bf16.gmra.mxu0 %v998
        %v3325 = vpop.f32.mrf.mxu0
        %v3326 = vadd.f32 %v3237, %v3325
        %v3327 = vpop.f32.mrf.mxu0
        %v3328 = vadd.f32 %v3239, %v3327
        %3329 = vmatmul.bf16.gmra.mxu0 %v1005
        %v3330 = vpop.f32.mrf.mxu0
        %v3331 = vadd.f32 %v3242, %v3330
        %v3332 = vpop.f32.mrf.mxu0
        %v3333 = vadd.f32 %v3244, %v3332
        %3334 = vmatmul.bf16.gmra.mxu0 %v1012
        %v3335 = vpop.f32.mrf.mxu0
        %v3336 = vadd.f32 %v3247, %v3335
        %v3337 = vpop.f32.mrf.mxu0
        %v3338 = vadd.f32 %v3249, %v3337
        %3339 = vmatmul.bf16.gmra.mxu0 %v1019
        %v3340 = vpop.f32.mrf.mxu0
        %v3341 = vadd.f32 %v3252, %v3340
        %v3342 = vpop.f32.mrf.mxu0
        %v3343 = vadd.f32 %v3254, %v3342
        %3344 = vmatmul.bf16.gmra.mxu0 %v1026
        %v3345 = vpop.f32.mrf.mxu0
        %v3346 = vadd.f32 %v3257, %v3345
        %v3347 = vpop.f32.mrf.mxu0
        %v3348 = vadd.f32 %v3259, %v3347
        %3349 = vmatmul.bf16.gmra.mxu0 %v1033
        %v3350 = vpop.f32.mrf.mxu0
        %v3351 = vadd.f32 %v3262, %v3350
        %v3352 = vpop.f32.mrf.mxu0
        %v3353 = vadd.f32 %v3264, %v3352
        %3354 = vmatmul.bf16.gmra.mxu0 %v1040
        %v3355 = vpop.f32.mrf.mxu0
        %v3356 = vadd.f32 %v3267, %v3355
        %v3357 = vpop.f32.mrf.mxu0
        %v3358 = vadd.f32 %v3269, %v3357
        %3359 = vmatmul.bf16.gmra.mxu0 %v1047
        %v3360 = vpop.f32.mrf.mxu0
        %v3361 = vadd.f32 %v3272, %v3360
        %v3362 = vpop.f32.mrf.mxu0
        %v3363 = vadd.f32 %v3274, %v3362
        %3364 = vmatmul.bf16.gmra.mxu0 %v1054
        %v3365 = vpop.f32.mrf.mxu0
        %v3366 = vadd.f32 %v3277, %v3365
        %v3367 = vpop.f32.mrf.mxu0
        %v3368 = vadd.f32 %v3279, %v3367
        %3369 = vmatmul.bf16.gmra.mxu0 %v1061
        %v3370 = vpop.f32.mrf.mxu0
        %v3371 = vadd.f32 %v3282, %v3370
        %v3372 = vpop.f32.mrf.mxu0
        %v3373 = vadd.f32 %v3284, %v3372
        %3374 = vmatmul.bf16.gmra.mxu0 %v1068
        %v3375 = vpop.f32.mrf.mxu0
        %v3376 = vadd.f32 %v3287, %v3375
        %v3377 = vpop.f32.mrf.mxu0
        %v3378 = vadd.f32 %v3289, %v3377
        %3379 = vmatmul.bf16.gmra.mxu0 %v1075
        %v3380 = vpop.f32.mrf.mxu0
        %v3381 = vadd.f32 %v3292, %v3380
        %v3382 = vpop.f32.mrf.mxu0
        %v3383 = vadd.f32 %v3294, %v3382
        %3384 = vmatmul.bf16.gmra.mxu0 %v1082
        %v3385 = vpop.f32.mrf.mxu0
        %v3386 = vadd.f32 %v3297, %v3385
        %v3387 = vpop.f32.mrf.mxu0
        %v3388 = vadd.f32 %v3299, %v3387
        %3389 = vmatmul.bf16.gmra.mxu0 %v1089
        %v3390 = vpop.f32.mrf.mxu0
        %v3391 = vadd.f32 %v3302, %v3390
        %v3392 = vpop.f32.mrf.mxu0
        %v3393 = vadd.f32 %v3304, %v3392
        %3394 = vdwg.mxu0
        %3395 = vmatpush.bf16.msra.mxu0 %v2075
        %3396 = vmatpush.bf16.msra.mxu0 %v2071
        %3397 = vmatpush.bf16.msra.mxu0 %v2067
        %3398 = vmatpush.bf16.msra.mxu0 %v2063
        %3399 = vmatpush.bf16.msra.mxu0 %v2059
        %3400 = vmatpush.bf16.msra.mxu0 %v2055
        %3401 = vmatpush.bf16.msra.mxu0 %v2051
        %3402 = vmatpush.bf16.msra.mxu0 %v2047
        %3403 = vmatmul.bf16.gmra.mxu0 %v985
        %v3404 = vpop.f32.mrf.mxu0
        %v3405 = vadd.f32 %v3316, %v3404
        %v3406 = vpop.f32.mrf.mxu0
        %v3407 = vadd.f32 %v3318, %v3406
        %3408 = vmatmul.bf16.gmra.mxu0 %v992
        %v3409 = vpop.f32.mrf.mxu0
        %v3410 = vadd.f32 %v3321, %v3409
        %v3411 = vpop.f32.mrf.mxu0
        %v3412 = vadd.f32 %v3323, %v3411
        %3413 = vmatmul.bf16.gmra.mxu0 %v999
        %v3414 = vpop.f32.mrf.mxu0
        %v3415 = vadd.f32 %v3326, %v3414
        %v3416 = vpop.f32.mrf.mxu0
        %v3417 = vadd.f32 %v3328, %v3416
        %3418 = vmatmul.bf16.gmra.mxu0 %v1006
        %v3419 = vpop.f32.mrf.mxu0
        %v3420 = vadd.f32 %v3331, %v3419
        %v3421 = vpop.f32.mrf.mxu0
        %v3422 = vadd.f32 %v3333, %v3421
        %3423 = vmatmul.bf16.gmra.mxu0 %v1013
        %v3424 = vpop.f32.mrf.mxu0
        %v3425 = vadd.f32 %v3336, %v3424
        %v3426 = vpop.f32.mrf.mxu0
        %v3427 = vadd.f32 %v3338, %v3426
        %3428 = vmatmul.bf16.gmra.mxu0 %v1020
        %v3429 = vpop.f32.mrf.mxu0
        %v3430 = vadd.f32 %v3341, %v3429
        %v3431 = vpop.f32.mrf.mxu0
        %v3432 = vadd.f32 %v3343, %v3431
        %3433 = vmatmul.bf16.gmra.mxu0 %v1027
        %v3434 = vpop.f32.mrf.mxu0
        %v3435 = vadd.f32 %v3346, %v3434
        %v3436 = vpop.f32.mrf.mxu0
        %v3437 = vadd.f32 %v3348, %v3436
        %3438 = vmatmul.bf16.gmra.mxu0 %v1034
        %v3439 = vpop.f32.mrf.mxu0
        %v3440 = vadd.f32 %v3351, %v3439
        %v3441 = vpop.f32.mrf.mxu0
        %v3442 = vadd.f32 %v3353, %v3441
        %3443 = vmatmul.bf16.gmra.mxu0 %v1041
        %v3444 = vpop.f32.mrf.mxu0
        %v3445 = vadd.f32 %v3356, %v3444
        %v3446 = vpop.f32.mrf.mxu0
        %v3447 = vadd.f32 %v3358, %v3446
        %3448 = vmatmul.bf16.gmra.mxu0 %v1048
        %v3449 = vpop.f32.mrf.mxu0
        %v3450 = vadd.f32 %v3361, %v3449
        %v3451 = vpop.f32.mrf.mxu0
        %v3452 = vadd.f32 %v3363, %v3451
        %3453 = vmatmul.bf16.gmra.mxu0 %v1055
        %v3454 = vpop.f32.mrf.mxu0
        %v3455 = vadd.f32 %v3366, %v3454
        %v3456 = vpop.f32.mrf.mxu0
        %v3457 = vadd.f32 %v3368, %v3456
        %3458 = vmatmul.bf16.gmra.mxu0 %v1062
        %v3459 = vpop.f32.mrf.mxu0
        %v3460 = vadd.f32 %v3371, %v3459
        %v3461 = vpop.f32.mrf.mxu0
        %v3462 = vadd.f32 %v3373, %v3461
        %3463 = vmatmul.bf16.gmra.mxu0 %v1069
        %v3464 = vpop.f32.mrf.mxu0
        %v3465 = vadd.f32 %v3376, %v3464
        %v3466 = vpop.f32.mrf.mxu0
        %v3467 = vadd.f32 %v3378, %v3466
        %3468 = vmatmul.bf16.gmra.mxu0 %v1076
        %v3469 = vpop.f32.mrf.mxu0
        %v3470 = vadd.f32 %v3381, %v3469
        %v3471 = vpop.f32.mrf.mxu0
        %v3472 = vadd.f32 %v3383, %v3471
        %3473 = vmatmul.bf16.gmra.mxu0 %v1083
        %v3474 = vpop.f32.mrf.mxu0
        %v3475 = vadd.f32 %v3386, %v3474
        %v3476 = vpop.f32.mrf.mxu0
        %v3477 = vadd.f32 %v3388, %v3476
        %3478 = vmatmul.bf16.gmra.mxu0 %v1090
        %v3479 = vpop.f32.mrf.mxu0
        %v3480 = vadd.f32 %v3391, %v3479
        %v3481 = vpop.f32.mrf.mxu0
        %v3482 = vadd.f32 %v3393, %v3481
        %3483 = vdwg.mxu0
        %3484 = vmatpush.bf16.msra.mxu0 0
        %3485 = vmatpush.bf16.msra.mxu0 0
        %3486 = vmatpush.bf16.msra.mxu0 0
        %3487 = vmatpush.bf16.msra.mxu0 0
        %3488 = vmatpush.bf16.msra.mxu0 0
        %3489 = vmatpush.bf16.msra.mxu0 0
        %3490 = vmatpush.bf16.msra.mxu0 0
        %3491 = vmatpush.bf16.msra.mxu0 %v2079
        %3492 = vmatmul.bf16.gmra.mxu0 %v2280
        %v3493 = vpop.f32.mrf.mxu0
        %v3494 = vadd.f32 %v3405, %v3493
        %v3495 = vpop.f32.mrf.mxu0
        %v3496 = vadd.f32 %v3407, %v3495
        %3497 = vmatmul.bf16.gmra.mxu0 %v2283
        %v3498 = vpop.f32.mrf.mxu0
        %v3499 = vadd.f32 %v3410, %v3498
        %v3500 = vpop.f32.mrf.mxu0
        %v3501 = vadd.f32 %v3412, %v3500
        %3502 = vmatmul.bf16.gmra.mxu0 %v2286
        %v3503 = vpop.f32.mrf.mxu0
        %v3504 = vadd.f32 %v3415, %v3503
        %v3505 = vpop.f32.mrf.mxu0
        %v3506 = vadd.f32 %v3417, %v3505
        %3507 = vmatmul.bf16.gmra.mxu0 %v2289
        %v3508 = vpop.f32.mrf.mxu0
        %v3509 = vadd.f32 %v3420, %v3508
        %v3510 = vpop.f32.mrf.mxu0
        %v3511 = vadd.f32 %v3422, %v3510
        %3512 = vmatmul.bf16.gmra.mxu0 %v2292
        %v3513 = vpop.f32.mrf.mxu0
        %v3514 = vadd.f32 %v3425, %v3513
        %v3515 = vpop.f32.mrf.mxu0
        %v3516 = vadd.f32 %v3427, %v3515
        %3517 = vmatmul.bf16.gmra.mxu0 %v2295
        %v3518 = vpop.f32.mrf.mxu0
        %v3519 = vadd.f32 %v3430, %v3518
        %v3520 = vpop.f32.mrf.mxu0
        %v3521 = vadd.f32 %v3432, %v3520
        %3522 = vmatmul.bf16.gmra.mxu0 %v2298
        %v3523 = vpop.f32.mrf.mxu0
        %v3524 = vadd.f32 %v3435, %v3523
        %v3525 = vpop.f32.mrf.mxu0
        %v3526 = vadd.f32 %v3437, %v3525
        %3527 = vmatmul.bf16.gmra.mxu0 %v2301
        %v3528 = vpop.f32.mrf.mxu0
        %v3529 = vadd.f32 %v3440, %v3528
        %v3530 = vpop.f32.mrf.mxu0
        %v3531 = vadd.f32 %v3442, %v3530
        %3532 = vmatmul.bf16.gmra.mxu0 %v2304
        %v3533 = vpop.f32.mrf.mxu0
        %v3534 = vadd.f32 %v3445, %v3533
        %v3535 = vpop.f32.mrf.mxu0
        %v3536 = vadd.f32 %v3447, %v3535
        %3537 = vmatmul.bf16.gmra.mxu0 %v2307
        %v3538 = vpop.f32.mrf.mxu0
        %v3539 = vadd.f32 %v3450, %v3538
        %v3540 = vpop.f32.mrf.mxu0
        %v3541 = vadd.f32 %v3452, %v3540
        %3542 = vmatmul.bf16.gmra.mxu0 %v2310
        %v3543 = vpop.f32.mrf.mxu0
        %v3544 = vadd.f32 %v3455, %v3543
        %v3545 = vpop.f32.mrf.mxu0
        %v3546 = vadd.f32 %v3457, %v3545
        %3547 = vmatmul.bf16.gmra.mxu0 %v2313
        %v3548 = vpop.f32.mrf.mxu0
        %v3549 = vadd.f32 %v3460, %v3548
        %v3550 = vpop.f32.mrf.mxu0
        %v3551 = vadd.f32 %v3462, %v3550
        %3552 = vmatmul.bf16.gmra.mxu0 %v2316
        %v3553 = vpop.f32.mrf.mxu0
        %v3554 = vadd.f32 %v3465, %v3553
        %v3555 = vpop.f32.mrf.mxu0
        %v3556 = vadd.f32 %v3467, %v3555
        %3557 = vmatmul.bf16.gmra.mxu0 %v2319
        %v3558 = vpop.f32.mrf.mxu0
        %v3559 = vadd.f32 %v3470, %v3558
        %v3560 = vpop.f32.mrf.mxu0
        %v3561 = vadd.f32 %v3472, %v3560
        %3562 = vmatmul.bf16.gmra.mxu0 %v2322
        %v3563 = vpop.f32.mrf.mxu0
        %v3564 = vadd.f32 %v3475, %v3563
        %v3565 = vpop.f32.mrf.mxu0
        %v3566 = vadd.f32 %v3477, %v3565
        %3567 = vmatmul.bf16.gmra.mxu0 %v2325
        %v3568 = vpop.f32.mrf.mxu0
        %v3569 = vadd.f32 %v3480, %v3568
        %v3570 = vpop.f32.mrf.mxu0
        %v3571 = vadd.f32 %v3482, %v3570
        %3572 = vdwg.mxu0
        %3573 = vmatpush.bf16.msra.mxu0 %v1916
        %3574 = vmatpush.bf16.msra.mxu0 %v1912
        %3575 = vmatpush.bf16.msra.mxu0 %v1908
        %3576 = vmatpush.bf16.msra.mxu0 %v1904
        %3577 = vmatpush.bf16.msra.mxu0 %v1900
        %3578 = vmatpush.bf16.msra.mxu0 %v1896
        %3579 = vmatpush.bf16.msra.mxu0 %v1892
        %3580 = vmatpush.bf16.msra.mxu0 %v1888
        %3581 = vmatmul.bf16.gmra.mxu0 %v980
        %v3582 = vpop.f32.mrf.mxu0
        %v3583 = vadd.f32 %v1292, %v3582
        %v3584 = vpop.f32.mrf.mxu0
        %v3585 = vadd.f32 %v1292, %v3584
        %3586 = vmatmul.bf16.gmra.mxu0 %v987
        %v3587 = vpop.f32.mrf.mxu0
        %v3588 = vadd.f32 %v1292, %v3587
        %v3589 = vpop.f32.mrf.mxu0
        %v3590 = vadd.f32 %v1292, %v3589
        %3591 = vmatmul.bf16.gmra.mxu0 %v994
        %v3592 = vpop.f32.mrf.mxu0
        %v3593 = vadd.f32 %v1292, %v3592
        %v3594 = vpop.f32.mrf.mxu0
        %v3595 = vadd.f32 %v1292, %v3594
        %3596 = vmatmul.bf16.gmra.mxu0 %v1001
        %v3597 = vpop.f32.mrf.mxu0
        %v3598 = vadd.f32 %v1292, %v3597
        %v3599 = vpop.f32.mrf.mxu0
        %v3600 = vadd.f32 %v1292, %v3599
        %3601 = vmatmul.bf16.gmra.mxu0 %v1008
        %v3602 = vpop.f32.mrf.mxu0
        %v3603 = vadd.f32 %v1292, %v3602
        %v3604 = vpop.f32.mrf.mxu0
        %v3605 = vadd.f32 %v1292, %v3604
        %3606 = vmatmul.bf16.gmra.mxu0 %v1015
        %v3607 = vpop.f32.mrf.mxu0
        %v3608 = vadd.f32 %v1292, %v3607
        %v3609 = vpop.f32.mrf.mxu0
        %v3610 = vadd.f32 %v1292, %v3609
        %3611 = vmatmul.bf16.gmra.mxu0 %v1022
        %v3612 = vpop.f32.mrf.mxu0
        %v3613 = vadd.f32 %v1292, %v3612
        %v3614 = vpop.f32.mrf.mxu0
        %v3615 = vadd.f32 %v1292, %v3614
        %3616 = vmatmul.bf16.gmra.mxu0 %v1029
        %v3617 = vpop.f32.mrf.mxu0
        %v3618 = vadd.f32 %v1292, %v3617
        %v3619 = vpop.f32.mrf.mxu0
        %v3620 = vadd.f32 %v1292, %v3619
        %3621 = vmatmul.bf16.gmra.mxu0 %v1036
        %v3622 = vpop.f32.mrf.mxu0
        %v3623 = vadd.f32 %v1292, %v3622
        %v3624 = vpop.f32.mrf.mxu0
        %v3625 = vadd.f32 %v1292, %v3624
        %3626 = vmatmul.bf16.gmra.mxu0 %v1043
        %v3627 = vpop.f32.mrf.mxu0
        %v3628 = vadd.f32 %v1292, %v3627
        %v3629 = vpop.f32.mrf.mxu0
        %v3630 = vadd.f32 %v1292, %v3629
        %3631 = vmatmul.bf16.gmra.mxu0 %v1050
        %v3632 = vpop.f32.mrf.mxu0
        %v3633 = vadd.f32 %v1292, %v3632
        %v3634 = vpop.f32.mrf.mxu0
        %v3635 = vadd.f32 %v1292, %v3634
        %3636 = vmatmul.bf16.gmra.mxu0 %v1057
        %v3637 = vpop.f32.mrf.mxu0
        %v3638 = vadd.f32 %v1292, %v3637
        %v3639 = vpop.f32.mrf.mxu0
        %v3640 = vadd.f32 %v1292, %v3639
        %3641 = vmatmul.bf16.gmra.mxu0 %v1064
        %v3642 = vpop.f32.mrf.mxu0
        %v3643 = vadd.f32 %v1292, %v3642
        %v3644 = vpop.f32.mrf.mxu0
        %v3645 = vadd.f32 %v1292, %v3644
        %3646 = vmatmul.bf16.gmra.mxu0 %v1071
        %v3647 = vpop.f32.mrf.mxu0
        %v3648 = vadd.f32 %v1292, %v3647
        %v3649 = vpop.f32.mrf.mxu0
        %v3650 = vadd.f32 %v1292, %v3649
        %3651 = vmatmul.bf16.gmra.mxu0 %v1078
        %v3652 = vpop.f32.mrf.mxu0
        %v3653 = vadd.f32 %v1292, %v3652
        %v3654 = vpop.f32.mrf.mxu0
        %v3655 = vadd.f32 %v1292, %v3654
        %3656 = vmatmul.bf16.gmra.mxu0 %v1085
        %v3657 = vpop.f32.mrf.mxu0
        %v3658 = vadd.f32 %v1292, %v3657
        %v3659 = vpop.f32.mrf.mxu0
        %v3660 = vadd.f32 %v1292, %v3659
        %3661 = vdwg.mxu0
        %3662 = vmatpush.bf16.msra.mxu0 %v1948
        %3663 = vmatpush.bf16.msra.mxu0 %v1944
        %3664 = vmatpush.bf16.msra.mxu0 %v1940
        %3665 = vmatpush.bf16.msra.mxu0 %v1936
        %3666 = vmatpush.bf16.msra.mxu0 %v1932
        %3667 = vmatpush.bf16.msra.mxu0 %v1928
        %3668 = vmatpush.bf16.msra.mxu0 %v1924
        %3669 = vmatpush.bf16.msra.mxu0 %v1920
        %3670 = vmatmul.bf16.gmra.mxu0 %v981
        %v3671 = vpop.f32.mrf.mxu0
        %v3672 = vadd.f32 %v3583, %v3671
        %v3673 = vpop.f32.mrf.mxu0
        %v3674 = vadd.f32 %v3585, %v3673
        %3675 = vmatmul.bf16.gmra.mxu0 %v988
        %v3676 = vpop.f32.mrf.mxu0
        %v3677 = vadd.f32 %v3588, %v3676
        %v3678 = vpop.f32.mrf.mxu0
        %v3679 = vadd.f32 %v3590, %v3678
        %3680 = vmatmul.bf16.gmra.mxu0 %v995
        %v3681 = vpop.f32.mrf.mxu0
        %v3682 = vadd.f32 %v3593, %v3681
        %v3683 = vpop.f32.mrf.mxu0
        %v3684 = vadd.f32 %v3595, %v3683
        %3685 = vmatmul.bf16.gmra.mxu0 %v1002
        %v3686 = vpop.f32.mrf.mxu0
        %v3687 = vadd.f32 %v3598, %v3686
        %v3688 = vpop.f32.mrf.mxu0
        %v3689 = vadd.f32 %v3600, %v3688
        %3690 = vmatmul.bf16.gmra.mxu0 %v1009
        %v3691 = vpop.f32.mrf.mxu0
        %v3692 = vadd.f32 %v3603, %v3691
        %v3693 = vpop.f32.mrf.mxu0
        %v3694 = vadd.f32 %v3605, %v3693
        %3695 = vmatmul.bf16.gmra.mxu0 %v1016
        %v3696 = vpop.f32.mrf.mxu0
        %v3697 = vadd.f32 %v3608, %v3696
        %v3698 = vpop.f32.mrf.mxu0
        %v3699 = vadd.f32 %v3610, %v3698
        %3700 = vmatmul.bf16.gmra.mxu0 %v1023
        %v3701 = vpop.f32.mrf.mxu0
        %v3702 = vadd.f32 %v3613, %v3701
        %v3703 = vpop.f32.mrf.mxu0
        %v3704 = vadd.f32 %v3615, %v3703
        %3705 = vmatmul.bf16.gmra.mxu0 %v1030
        %v3706 = vpop.f32.mrf.mxu0
        %v3707 = vadd.f32 %v3618, %v3706
        %v3708 = vpop.f32.mrf.mxu0
        %v3709 = vadd.f32 %v3620, %v3708
        %3710 = vmatmul.bf16.gmra.mxu0 %v1037
        %v3711 = vpop.f32.mrf.mxu0
        %v3712 = vadd.f32 %v3623, %v3711
        %v3713 = vpop.f32.mrf.mxu0
        %v3714 = vadd.f32 %v3625, %v3713
        %3715 = vmatmul.bf16.gmra.mxu0 %v1044
        %v3716 = vpop.f32.mrf.mxu0
        %v3717 = vadd.f32 %v3628, %v3716
        %v3718 = vpop.f32.mrf.mxu0
        %v3719 = vadd.f32 %v3630, %v3718
        %3720 = vmatmul.bf16.gmra.mxu0 %v1051
        %v3721 = vpop.f32.mrf.mxu0
        %v3722 = vadd.f32 %v3633, %v3721
        %v3723 = vpop.f32.mrf.mxu0
        %v3724 = vadd.f32 %v3635, %v3723
        %3725 = vmatmul.bf16.gmra.mxu0 %v1058
        %v3726 = vpop.f32.mrf.mxu0
        %v3727 = vadd.f32 %v3638, %v3726
        %v3728 = vpop.f32.mrf.mxu0
        %v3729 = vadd.f32 %v3640, %v3728
        %3730 = vmatmul.bf16.gmra.mxu0 %v1065
        %v3731 = vpop.f32.mrf.mxu0
        %v3732 = vadd.f32 %v3643, %v3731
        %v3733 = vpop.f32.mrf.mxu0
        %v3734 = vadd.f32 %v3645, %v3733
        %3735 = vmatmul.bf16.gmra.mxu0 %v1072
        %v3736 = vpop.f32.mrf.mxu0
        %v3737 = vadd.f32 %v3648, %v3736
        %v3738 = vpop.f32.mrf.mxu0
        %v3739 = vadd.f32 %v3650, %v3738
        %3740 = vmatmul.bf16.gmra.mxu0 %v1079
        %v3741 = vpop.f32.mrf.mxu0
        %v3742 = vadd.f32 %v3653, %v3741
        %v3743 = vpop.f32.mrf.mxu0
        %v3744 = vadd.f32 %v3655, %v3743
        %3745 = vmatmul.bf16.gmra.mxu0 %v1086
        %v3746 = vpop.f32.mrf.mxu0
        %v3747 = vadd.f32 %v3658, %v3746
        %v3748 = vpop.f32.mrf.mxu0
        %v3749 = vadd.f32 %v3660, %v3748
        %3750 = vdwg.mxu0
        %3751 = vmatpush.bf16.msra.mxu0 %v1980
        %3752 = vmatpush.bf16.msra.mxu0 %v1976
        %3753 = vmatpush.bf16.msra.mxu0 %v1972
        %3754 = vmatpush.bf16.msra.mxu0 %v1968
        %3755 = vmatpush.bf16.msra.mxu0 %v1964
        %3756 = vmatpush.bf16.msra.mxu0 %v1960
        %3757 = vmatpush.bf16.msra.mxu0 %v1956
        %3758 = vmatpush.bf16.msra.mxu0 %v1952
        %3759 = vmatmul.bf16.gmra.mxu0 %v982
        %v3760 = vpop.f32.mrf.mxu0
        %v3761 = vadd.f32 %v3672, %v3760
        %v3762 = vpop.f32.mrf.mxu0
        %v3763 = vadd.f32 %v3674, %v3762
        %3764 = vmatmul.bf16.gmra.mxu0 %v989
        %v3765 = vpop.f32.mrf.mxu0
        %v3766 = vadd.f32 %v3677, %v3765
        %v3767 = vpop.f32.mrf.mxu0
        %v3768 = vadd.f32 %v3679, %v3767
        %3769 = vmatmul.bf16.gmra.mxu0 %v996
        %v3770 = vpop.f32.mrf.mxu0
        %v3771 = vadd.f32 %v3682, %v3770
        %v3772 = vpop.f32.mrf.mxu0
        %v3773 = vadd.f32 %v3684, %v3772
        %3774 = vmatmul.bf16.gmra.mxu0 %v1003
        %v3775 = vpop.f32.mrf.mxu0
        %v3776 = vadd.f32 %v3687, %v3775
        %v3777 = vpop.f32.mrf.mxu0
        %v3778 = vadd.f32 %v3689, %v3777
        %3779 = vmatmul.bf16.gmra.mxu0 %v1010
        %v3780 = vpop.f32.mrf.mxu0
        %v3781 = vadd.f32 %v3692, %v3780
        %v3782 = vpop.f32.mrf.mxu0
        %v3783 = vadd.f32 %v3694, %v3782
        %3784 = vmatmul.bf16.gmra.mxu0 %v1017
        %v3785 = vpop.f32.mrf.mxu0
        %v3786 = vadd.f32 %v3697, %v3785
        %v3787 = vpop.f32.mrf.mxu0
        %v3788 = vadd.f32 %v3699, %v3787
        %3789 = vmatmul.bf16.gmra.mxu0 %v1024
        %v3790 = vpop.f32.mrf.mxu0
        %v3791 = vadd.f32 %v3702, %v3790
        %v3792 = vpop.f32.mrf.mxu0
        %v3793 = vadd.f32 %v3704, %v3792
        %3794 = vmatmul.bf16.gmra.mxu0 %v1031
        %v3795 = vpop.f32.mrf.mxu0
        %v3796 = vadd.f32 %v3707, %v3795
        %v3797 = vpop.f32.mrf.mxu0
        %v3798 = vadd.f32 %v3709, %v3797
        %3799 = vmatmul.bf16.gmra.mxu0 %v1038
        %v3800 = vpop.f32.mrf.mxu0
        %v3801 = vadd.f32 %v3712, %v3800
        %v3802 = vpop.f32.mrf.mxu0
        %v3803 = vadd.f32 %v3714, %v3802
        %3804 = vmatmul.bf16.gmra.mxu0 %v1045
        %v3805 = vpop.f32.mrf.mxu0
        %v3806 = vadd.f32 %v3717, %v3805
        %v3807 = vpop.f32.mrf.mxu0
        %v3808 = vadd.f32 %v3719, %v3807
        %3809 = vmatmul.bf16.gmra.mxu0 %v1052
        %v3810 = vpop.f32.mrf.mxu0
        %v3811 = vadd.f32 %v3722, %v3810
        %v3812 = vpop.f32.mrf.mxu0
        %v3813 = vadd.f32 %v3724, %v3812
        %3814 = vmatmul.bf16.gmra.mxu0 %v1059
        %v3815 = vpop.f32.mrf.mxu0
        %v3816 = vadd.f32 %v3727, %v3815
        %v3817 = vpop.f32.mrf.mxu0
        %v3818 = vadd.f32 %v3729, %v3817
        %3819 = vmatmul.bf16.gmra.mxu0 %v1066
        %v3820 = vpop.f32.mrf.mxu0
        %v3821 = vadd.f32 %v3732, %v3820
        %v3822 = vpop.f32.mrf.mxu0
        %v3823 = vadd.f32 %v3734, %v3822
        %3824 = vmatmul.bf16.gmra.mxu0 %v1073
        %v3825 = vpop.f32.mrf.mxu0
        %v3826 = vadd.f32 %v3737, %v3825
        %v3827 = vpop.f32.mrf.mxu0
        %v3828 = vadd.f32 %v3739, %v3827
        %3829 = vmatmul.bf16.gmra.mxu0 %v1080
        %v3830 = vpop.f32.mrf.mxu0
        %v3831 = vadd.f32 %v3742, %v3830
        %v3832 = vpop.f32.mrf.mxu0
        %v3833 = vadd.f32 %v3744, %v3832
        %3834 = vmatmul.bf16.gmra.mxu0 %v1087
        %v3835 = vpop.f32.mrf.mxu0
        %v3836 = vadd.f32 %v3747, %v3835
        %v3837 = vpop.f32.mrf.mxu0
        %v3838 = vadd.f32 %v3749, %v3837
        %3839 = vdwg.mxu0
        %3840 = vmatpush.bf16.msra.mxu0 %v2012
        %3841 = vmatpush.bf16.msra.mxu0 %v2008
        %3842 = vmatpush.bf16.msra.mxu0 %v2004
        %3843 = vmatpush.bf16.msra.mxu0 %v2000
        %3844 = vmatpush.bf16.msra.mxu0 %v1996
        %3845 = vmatpush.bf16.msra.mxu0 %v1992
        %3846 = vmatpush.bf16.msra.mxu0 %v1988
        %3847 = vmatpush.bf16.msra.mxu0 %v1984
        %3848 = vmatmul.bf16.gmra.mxu0 %v983
        %v3849 = vpop.f32.mrf.mxu0
        %v3850 = vadd.f32 %v3761, %v3849
        %v3851 = vpop.f32.mrf.mxu0
        %v3852 = vadd.f32 %v3763, %v3851
        %3853 = vmatmul.bf16.gmra.mxu0 %v990
        %v3854 = vpop.f32.mrf.mxu0
        %v3855 = vadd.f32 %v3766, %v3854
        %v3856 = vpop.f32.mrf.mxu0
        %v3857 = vadd.f32 %v3768, %v3856
        %3858 = vmatmul.bf16.gmra.mxu0 %v997
        %v3859 = vpop.f32.mrf.mxu0
        %v3860 = vadd.f32 %v3771, %v3859
        %v3861 = vpop.f32.mrf.mxu0
        %v3862 = vadd.f32 %v3773, %v3861
        %3863 = vmatmul.bf16.gmra.mxu0 %v1004
        %v3864 = vpop.f32.mrf.mxu0
        %v3865 = vadd.f32 %v3776, %v3864
        %v3866 = vpop.f32.mrf.mxu0
        %v3867 = vadd.f32 %v3778, %v3866
        %3868 = vmatmul.bf16.gmra.mxu0 %v1011
        %v3869 = vpop.f32.mrf.mxu0
        %v3870 = vadd.f32 %v3781, %v3869
        %v3871 = vpop.f32.mrf.mxu0
        %v3872 = vadd.f32 %v3783, %v3871
        %3873 = vmatmul.bf16.gmra.mxu0 %v1018
        %v3874 = vpop.f32.mrf.mxu0
        %v3875 = vadd.f32 %v3786, %v3874
        %v3876 = vpop.f32.mrf.mxu0
        %v3877 = vadd.f32 %v3788, %v3876
        %3878 = vmatmul.bf16.gmra.mxu0 %v1025
        %v3879 = vpop.f32.mrf.mxu0
        %v3880 = vadd.f32 %v3791, %v3879
        %v3881 = vpop.f32.mrf.mxu0
        %v3882 = vadd.f32 %v3793, %v3881
        %3883 = vmatmul.bf16.gmra.mxu0 %v1032
        %v3884 = vpop.f32.mrf.mxu0
        %v3885 = vadd.f32 %v3796, %v3884
        %v3886 = vpop.f32.mrf.mxu0
        %v3887 = vadd.f32 %v3798, %v3886
        %3888 = vmatmul.bf16.gmra.mxu0 %v1039
        %v3889 = vpop.f32.mrf.mxu0
        %v3890 = vadd.f32 %v3801, %v3889
        %v3891 = vpop.f32.mrf.mxu0
        %v3892 = vadd.f32 %v3803, %v3891
        %3893 = vmatmul.bf16.gmra.mxu0 %v1046
        %v3894 = vpop.f32.mrf.mxu0
        %v3895 = vadd.f32 %v3806, %v3894
        %v3896 = vpop.f32.mrf.mxu0
        %v3897 = vadd.f32 %v3808, %v3896
        %3898 = vmatmul.bf16.gmra.mxu0 %v1053
        %v3899 = vpop.f32.mrf.mxu0
        %v3900 = vadd.f32 %v3811, %v3899
        %v3901 = vpop.f32.mrf.mxu0
        %v3902 = vadd.f32 %v3813, %v3901
        %3903 = vmatmul.bf16.gmra.mxu0 %v1060
        %v3904 = vpop.f32.mrf.mxu0
        %v3905 = vadd.f32 %v3816, %v3904
        %v3906 = vpop.f32.mrf.mxu0
        %v3907 = vadd.f32 %v3818, %v3906
        %3908 = vmatmul.bf16.gmra.mxu0 %v1067
        %v3909 = vpop.f32.mrf.mxu0
        %v3910 = vadd.f32 %v3821, %v3909
        %v3911 = vpop.f32.mrf.mxu0
        %v3912 = vadd.f32 %v3823, %v3911
        %3913 = vmatmul.bf16.gmra.mxu0 %v1074
        %v3914 = vpop.f32.mrf.mxu0
        %v3915 = vadd.f32 %v3826, %v3914
        %v3916 = vpop.f32.mrf.mxu0
        %v3917 = vadd.f32 %v3828, %v3916
        %3918 = vmatmul.bf16.gmra.mxu0 %v1081
        %v3919 = vpop.f32.mrf.mxu0
        %v3920 = vadd.f32 %v3831, %v3919
        %v3921 = vpop.f32.mrf.mxu0
        %v3922 = vadd.f32 %v3833, %v3921
        %3923 = vmatmul.bf16.gmra.mxu0 %v1088
        %v3924 = vpop.f32.mrf.mxu0
        %v3925 = vadd.f32 %v3836, %v3924
        %v3926 = vpop.f32.mrf.mxu0
        %v3927 = vadd.f32 %v3838, %v3926
        %3928 = vdwg.mxu0
        %3929 = vmatpush.bf16.msra.mxu0 %v2044
        %3930 = vmatpush.bf16.msra.mxu0 %v2040
        %3931 = vmatpush.bf16.msra.mxu0 %v2036
        %3932 = vmatpush.bf16.msra.mxu0 %v2032
        %3933 = vmatpush.bf16.msra.mxu0 %v2028
        %3934 = vmatpush.bf16.msra.mxu0 %v2024
        %3935 = vmatpush.bf16.msra.mxu0 %v2020
        %3936 = vmatpush.bf16.msra.mxu0 %v2016
        %3937 = vmatmul.bf16.gmra.mxu0 %v984
        %v3938 = vpop.f32.mrf.mxu0
        %v3939 = vadd.f32 %v3850, %v3938
        %v3940 = vpop.f32.mrf.mxu0
        %v3941 = vadd.f32 %v3852, %v3940
        %3942 = vmatmul.bf16.gmra.mxu0 %v991
        %v3943 = vpop.f32.mrf.mxu0
        %v3944 = vadd.f32 %v3855, %v3943
        %v3945 = vpop.f32.mrf.mxu0
        %v3946 = vadd.f32 %v3857, %v3945
        %3947 = vmatmul.bf16.gmra.mxu0 %v998
        %v3948 = vpop.f32.mrf.mxu0
        %v3949 = vadd.f32 %v3860, %v3948
        %v3950 = vpop.f32.mrf.mxu0
        %v3951 = vadd.f32 %v3862, %v3950
        %3952 = vmatmul.bf16.gmra.mxu0 %v1005
        %v3953 = vpop.f32.mrf.mxu0
        %v3954 = vadd.f32 %v3865, %v3953
        %v3955 = vpop.f32.mrf.mxu0
        %v3956 = vadd.f32 %v3867, %v3955
        %3957 = vmatmul.bf16.gmra.mxu0 %v1012
        %v3958 = vpop.f32.mrf.mxu0
        %v3959 = vadd.f32 %v3870, %v3958
        %v3960 = vpop.f32.mrf.mxu0
        %v3961 = vadd.f32 %v3872, %v3960
        %3962 = vmatmul.bf16.gmra.mxu0 %v1019
        %v3963 = vpop.f32.mrf.mxu0
        %v3964 = vadd.f32 %v3875, %v3963
        %v3965 = vpop.f32.mrf.mxu0
        %v3966 = vadd.f32 %v3877, %v3965
        %3967 = vmatmul.bf16.gmra.mxu0 %v1026
        %v3968 = vpop.f32.mrf.mxu0
        %v3969 = vadd.f32 %v3880, %v3968
        %v3970 = vpop.f32.mrf.mxu0
        %v3971 = vadd.f32 %v3882, %v3970
        %3972 = vmatmul.bf16.gmra.mxu0 %v1033
        %v3973 = vpop.f32.mrf.mxu0
        %v3974 = vadd.f32 %v3885, %v3973
        %v3975 = vpop.f32.mrf.mxu0
        %v3976 = vadd.f32 %v3887, %v3975
        %3977 = vmatmul.bf16.gmra.mxu0 %v1040
        %v3978 = vpop.f32.mrf.mxu0
        %v3979 = vadd.f32 %v3890, %v3978
        %v3980 = vpop.f32.mrf.mxu0
        %v3981 = vadd.f32 %v3892, %v3980
        %3982 = vmatmul.bf16.gmra.mxu0 %v1047
        %v3983 = vpop.f32.mrf.mxu0
        %v3984 = vadd.f32 %v3895, %v3983
        %v3985 = vpop.f32.mrf.mxu0
        %v3986 = vadd.f32 %v3897, %v3985
        %3987 = vmatmul.bf16.gmra.mxu0 %v1054
        %v3988 = vpop.f32.mrf.mxu0
        %v3989 = vadd.f32 %v3900, %v3988
        %v3990 = vpop.f32.mrf.mxu0
        %v3991 = vadd.f32 %v3902, %v3990
        %3992 = vmatmul.bf16.gmra.mxu0 %v1061
        %v3993 = vpop.f32.mrf.mxu0
        %v3994 = vadd.f32 %v3905, %v3993
        %v3995 = vpop.f32.mrf.mxu0
        %v3996 = vadd.f32 %v3907, %v3995
        %3997 = vmatmul.bf16.gmra.mxu0 %v1068
        %v3998 = vpop.f32.mrf.mxu0
        %v3999 = vadd.f32 %v3910, %v3998
        %v4000 = vpop.f32.mrf.mxu0
        %v4001 = vadd.f32 %v3912, %v4000
        %4002 = vmatmul.bf16.gmra.mxu0 %v1075
        %v4003 = vpop.f32.mrf.mxu0
        %v4004 = vadd.f32 %v3915, %v4003
        %v4005 = vpop.f32.mrf.mxu0
        %v4006 = vadd.f32 %v3917, %v4005
        %4007 = vmatmul.bf16.gmra.mxu0 %v1082
        %v4008 = vpop.f32.mrf.mxu0
        %v4009 = vadd.f32 %v3920, %v4008
        %v4010 = vpop.f32.mrf.mxu0
        %v4011 = vadd.f32 %v3922, %v4010
        %4012 = vmatmul.bf16.gmra.mxu0 %v1089
        %v4013 = vpop.f32.mrf.mxu0
        %v4014 = vadd.f32 %v3925, %v4013
        %v4015 = vpop.f32.mrf.mxu0
        %v4016 = vadd.f32 %v3927, %v4015
        %4017 = vdwg.mxu0
        %4018 = vmatpush.bf16.msra.mxu0 %v2076
        %4019 = vmatpush.bf16.msra.mxu0 %v2072
        %4020 = vmatpush.bf16.msra.mxu0 %v2068
        %4021 = vmatpush.bf16.msra.mxu0 %v2064
        %4022 = vmatpush.bf16.msra.mxu0 %v2060
        %4023 = vmatpush.bf16.msra.mxu0 %v2056
        %4024 = vmatpush.bf16.msra.mxu0 %v2052
        %4025 = vmatpush.bf16.msra.mxu0 %v2048
        %4026 = vmatmul.bf16.gmra.mxu0 %v985
        %v4027 = vpop.f32.mrf.mxu0
        %v4028 = vadd.f32 %v3939, %v4027
        %v4029 = vpop.f32.mrf.mxu0
        %v4030 = vadd.f32 %v3941, %v4029
        %4031 = vmatmul.bf16.gmra.mxu0 %v992
        %v4032 = vpop.f32.mrf.mxu0
        %v4033 = vadd.f32 %v3944, %v4032
        %v4034 = vpop.f32.mrf.mxu0
        %v4035 = vadd.f32 %v3946, %v4034
        %4036 = vmatmul.bf16.gmra.mxu0 %v999
        %v4037 = vpop.f32.mrf.mxu0
        %v4038 = vadd.f32 %v3949, %v4037
        %v4039 = vpop.f32.mrf.mxu0
        %v4040 = vadd.f32 %v3951, %v4039
        %4041 = vmatmul.bf16.gmra.mxu0 %v1006
        %v4042 = vpop.f32.mrf.mxu0
        %v4043 = vadd.f32 %v3954, %v4042
        %v4044 = vpop.f32.mrf.mxu0
        %v4045 = vadd.f32 %v3956, %v4044
        %4046 = vmatmul.bf16.gmra.mxu0 %v1013
        %v4047 = vpop.f32.mrf.mxu0
        %v4048 = vadd.f32 %v3959, %v4047
        %v4049 = vpop.f32.mrf.mxu0
        %v4050 = vadd.f32 %v3961, %v4049
        %4051 = vmatmul.bf16.gmra.mxu0 %v1020
        %v4052 = vpop.f32.mrf.mxu0
        %v4053 = vadd.f32 %v3964, %v4052
        %v4054 = vpop.f32.mrf.mxu0
        %v4055 = vadd.f32 %v3966, %v4054
        %4056 = vmatmul.bf16.gmra.mxu0 %v1027
        %v4057 = vpop.f32.mrf.mxu0
        %v4058 = vadd.f32 %v3969, %v4057
        %v4059 = vpop.f32.mrf.mxu0
        %v4060 = vadd.f32 %v3971, %v4059
        %4061 = vmatmul.bf16.gmra.mxu0 %v1034
        %v4062 = vpop.f32.mrf.mxu0
        %v4063 = vadd.f32 %v3974, %v4062
        %v4064 = vpop.f32.mrf.mxu0
        %v4065 = vadd.f32 %v3976, %v4064
        %4066 = vmatmul.bf16.gmra.mxu0 %v1041
        %v4067 = vpop.f32.mrf.mxu0
        %v4068 = vadd.f32 %v3979, %v4067
        %v4069 = vpop.f32.mrf.mxu0
        %v4070 = vadd.f32 %v3981, %v4069
        %4071 = vmatmul.bf16.gmra.mxu0 %v1048
        %v4072 = vpop.f32.mrf.mxu0
        %v4073 = vadd.f32 %v3984, %v4072
        %v4074 = vpop.f32.mrf.mxu0
        %v4075 = vadd.f32 %v3986, %v4074
        %4076 = vmatmul.bf16.gmra.mxu0 %v1055
        %v4077 = vpop.f32.mrf.mxu0
        %v4078 = vadd.f32 %v3989, %v4077
        %v4079 = vpop.f32.mrf.mxu0
        %v4080 = vadd.f32 %v3991, %v4079
        %4081 = vmatmul.bf16.gmra.mxu0 %v1062
        %v4082 = vpop.f32.mrf.mxu0
        %v4083 = vadd.f32 %v3994, %v4082
        %v4084 = vpop.f32.mrf.mxu0
        %v4085 = vadd.f32 %v3996, %v4084
        %4086 = vmatmul.bf16.gmra.mxu0 %v1069
        %v4087 = vpop.f32.mrf.mxu0
        %v4088 = vadd.f32 %v3999, %v4087
        %v4089 = vpop.f32.mrf.mxu0
        %v4090 = vadd.f32 %v4001, %v4089
        %4091 = vmatmul.bf16.gmra.mxu0 %v1076
        %v4092 = vpop.f32.mrf.mxu0
        %v4093 = vadd.f32 %v4004, %v4092
        %v4094 = vpop.f32.mrf.mxu0
        %v4095 = vadd.f32 %v4006, %v4094
        %4096 = vmatmul.bf16.gmra.mxu0 %v1083
        %v4097 = vpop.f32.mrf.mxu0
        %v4098 = vadd.f32 %v4009, %v4097
        %v4099 = vpop.f32.mrf.mxu0
        %v4100 = vadd.f32 %v4011, %v4099
        %4101 = vmatmul.bf16.gmra.mxu0 %v1090
        %v4102 = vpop.f32.mrf.mxu0
        %v4103 = vadd.f32 %v4014, %v4102
        %v4104 = vpop.f32.mrf.mxu0
        %v4105 = vadd.f32 %v4016, %v4104
        %4106 = vdwg.mxu0
        %4107 = vmatpush.bf16.msra.mxu0 0
        %4108 = vmatpush.bf16.msra.mxu0 0
        %4109 = vmatpush.bf16.msra.mxu0 0
        %4110 = vmatpush.bf16.msra.mxu0 0
        %4111 = vmatpush.bf16.msra.mxu0 0
        %4112 = vmatpush.bf16.msra.mxu0 0
        %4113 = vmatpush.bf16.msra.mxu0 0
        %4114 = vmatpush.bf16.msra.mxu0 %v2080
        %4115 = vmatmul.bf16.gmra.mxu0 %v2280
        %v4116 = vpop.f32.mrf.mxu0
        %v4117 = vadd.f32 %v4028, %v4116
        %v4118 = vpop.f32.mrf.mxu0
        %v4119 = vadd.f32 %v4030, %v4118
        %4120 = vmatmul.bf16.gmra.mxu0 %v2283
        %v4121 = vpop.f32.mrf.mxu0
        %v4122 = vadd.f32 %v4033, %v4121
        %v4123 = vpop.f32.mrf.mxu0
        %v4124 = vadd.f32 %v4035, %v4123
        %4125 = vmatmul.bf16.gmra.mxu0 %v2286
        %v4126 = vpop.f32.mrf.mxu0
        %v4127 = vadd.f32 %v4038, %v4126
        %v4128 = vpop.f32.mrf.mxu0
        %v4129 = vadd.f32 %v4040, %v4128
        %4130 = vmatmul.bf16.gmra.mxu0 %v2289
        %v4131 = vpop.f32.mrf.mxu0
        %v4132 = vadd.f32 %v4043, %v4131
        %v4133 = vpop.f32.mrf.mxu0
        %v4134 = vadd.f32 %v4045, %v4133
        %4135 = vmatmul.bf16.gmra.mxu0 %v2292
        %v4136 = vpop.f32.mrf.mxu0
        %v4137 = vadd.f32 %v4048, %v4136
        %v4138 = vpop.f32.mrf.mxu0
        %v4139 = vadd.f32 %v4050, %v4138
        %4140 = vmatmul.bf16.gmra.mxu0 %v2295
        %v4141 = vpop.f32.mrf.mxu0
        %v4142 = vadd.f32 %v4053, %v4141
        %v4143 = vpop.f32.mrf.mxu0
        %v4144 = vadd.f32 %v4055, %v4143
        %4145 = vmatmul.bf16.gmra.mxu0 %v2298
        %v4146 = vpop.f32.mrf.mxu0
        %v4147 = vadd.f32 %v4058, %v4146
        %v4148 = vpop.f32.mrf.mxu0
        %v4149 = vadd.f32 %v4060, %v4148
        %4150 = vmatmul.bf16.gmra.mxu0 %v2301
        %v4151 = vpop.f32.mrf.mxu0
        %v4152 = vadd.f32 %v4063, %v4151
        %v4153 = vpop.f32.mrf.mxu0
        %v4154 = vadd.f32 %v4065, %v4153
        %4155 = vmatmul.bf16.gmra.mxu0 %v2304
        %v4156 = vpop.f32.mrf.mxu0
        %v4157 = vadd.f32 %v4068, %v4156
        %v4158 = vpop.f32.mrf.mxu0
        %v4159 = vadd.f32 %v4070, %v4158
        %4160 = vmatmul.bf16.gmra.mxu0 %v2307
        %v4161 = vpop.f32.mrf.mxu0
        %v4162 = vadd.f32 %v4073, %v4161
        %v4163 = vpop.f32.mrf.mxu0
        %v4164 = vadd.f32 %v4075, %v4163
        %4165 = vmatmul.bf16.gmra.mxu0 %v2310
        %v4166 = vpop.f32.mrf.mxu0
        %v4167 = vadd.f32 %v4078, %v4166
        %v4168 = vpop.f32.mrf.mxu0
        %v4169 = vadd.f32 %v4080, %v4168
        %4170 = vmatmul.bf16.gmra.mxu0 %v2313
        %v4171 = vpop.f32.mrf.mxu0
        %v4172 = vadd.f32 %v4083, %v4171
        %v4173 = vpop.f32.mrf.mxu0
        %v4174 = vadd.f32 %v4085, %v4173
        %4175 = vmatmul.bf16.gmra.mxu0 %v2316
        %v4176 = vpop.f32.mrf.mxu0
        %v4177 = vadd.f32 %v4088, %v4176
        %v4178 = vpop.f32.mrf.mxu0
        %v4179 = vadd.f32 %v4090, %v4178
        %4180 = vmatmul.bf16.gmra.mxu0 %v2319
        %v4181 = vpop.f32.mrf.mxu0
        %v4182 = vadd.f32 %v4093, %v4181
        %v4183 = vpop.f32.mrf.mxu0
        %v4184 = vadd.f32 %v4095, %v4183
        %4185 = vmatmul.bf16.gmra.mxu0 %v2322
        %v4186 = vpop.f32.mrf.mxu0
        %v4187 = vadd.f32 %v4098, %v4186
        %v4188 = vpop.f32.mrf.mxu0
        %v4189 = vadd.f32 %v4100, %v4188
        %4190 = vmatmul.bf16.gmra.mxu0 %v2325
        %v4191 = vpop.f32.mrf.mxu0
        %v4192 = vadd.f32 %v4103, %v4191
        %v4193 = vpop.f32.mrf.mxu0
        %v4194 = vadd.f32 %v4105, %v4193
        %4195 = vdwg.mxu0
        %4196 = vmatpush.bf16.msra.mxu0 %v1917
        %4197 = vmatpush.bf16.msra.mxu0 %v1913
        %4198 = vmatpush.bf16.msra.mxu0 %v1909
        %4199 = vmatpush.bf16.msra.mxu0 %v1905
        %4200 = vmatpush.bf16.msra.mxu0 %v1901
        %4201 = vmatpush.bf16.msra.mxu0 %v1897
        %4202 = vmatpush.bf16.msra.mxu0 %v1893
        %4203 = vmatpush.bf16.msra.mxu0 %v1889
        %4204 = vmatmul.bf16.gmra.mxu0 %v980
        %v4205 = vpop.f32.mrf.mxu0
        %v4206 = vadd.f32 %v1293, %v4205
        %v4207 = vpop.f32.mrf.mxu0
        %v4208 = vadd.f32 %v1293, %v4207
        %4209 = vmatmul.bf16.gmra.mxu0 %v987
        %v4210 = vpop.f32.mrf.mxu0
        %v4211 = vadd.f32 %v1293, %v4210
        %v4212 = vpop.f32.mrf.mxu0
        %v4213 = vadd.f32 %v1293, %v4212
        %4214 = vmatmul.bf16.gmra.mxu0 %v994
        %v4215 = vpop.f32.mrf.mxu0
        %v4216 = vadd.f32 %v1293, %v4215
        %v4217 = vpop.f32.mrf.mxu0
        %v4218 = vadd.f32 %v1293, %v4217
        %4219 = vmatmul.bf16.gmra.mxu0 %v1001
        %v4220 = vpop.f32.mrf.mxu0
        %v4221 = vadd.f32 %v1293, %v4220
        %v4222 = vpop.f32.mrf.mxu0
        %v4223 = vadd.f32 %v1293, %v4222
        %4224 = vmatmul.bf16.gmra.mxu0 %v1008
        %v4225 = vpop.f32.mrf.mxu0
        %v4226 = vadd.f32 %v1293, %v4225
        %v4227 = vpop.f32.mrf.mxu0
        %v4228 = vadd.f32 %v1293, %v4227
        %4229 = vmatmul.bf16.gmra.mxu0 %v1015
        %v4230 = vpop.f32.mrf.mxu0
        %v4231 = vadd.f32 %v1293, %v4230
        %v4232 = vpop.f32.mrf.mxu0
        %v4233 = vadd.f32 %v1293, %v4232
        %4234 = vmatmul.bf16.gmra.mxu0 %v1022
        %v4235 = vpop.f32.mrf.mxu0
        %v4236 = vadd.f32 %v1293, %v4235
        %v4237 = vpop.f32.mrf.mxu0
        %v4238 = vadd.f32 %v1293, %v4237
        %4239 = vmatmul.bf16.gmra.mxu0 %v1029
        %v4240 = vpop.f32.mrf.mxu0
        %v4241 = vadd.f32 %v1293, %v4240
        %v4242 = vpop.f32.mrf.mxu0
        %v4243 = vadd.f32 %v1293, %v4242
        %4244 = vmatmul.bf16.gmra.mxu0 %v1036
        %v4245 = vpop.f32.mrf.mxu0
        %v4246 = vadd.f32 %v1293, %v4245
        %v4247 = vpop.f32.mrf.mxu0
        %v4248 = vadd.f32 %v1293, %v4247
        %4249 = vmatmul.bf16.gmra.mxu0 %v1043
        %v4250 = vpop.f32.mrf.mxu0
        %v4251 = vadd.f32 %v1293, %v4250
        %v4252 = vpop.f32.mrf.mxu0
        %v4253 = vadd.f32 %v1293, %v4252
        %4254 = vmatmul.bf16.gmra.mxu0 %v1050
        %v4255 = vpop.f32.mrf.mxu0
        %v4256 = vadd.f32 %v1293, %v4255
        %v4257 = vpop.f32.mrf.mxu0
        %v4258 = vadd.f32 %v1293, %v4257
        %4259 = vmatmul.bf16.gmra.mxu0 %v1057
        %v4260 = vpop.f32.mrf.mxu0
        %v4261 = vadd.f32 %v1293, %v4260
        %v4262 = vpop.f32.mrf.mxu0
        %v4263 = vadd.f32 %v1293, %v4262
        %4264 = vmatmul.bf16.gmra.mxu0 %v1064
        %v4265 = vpop.f32.mrf.mxu0
        %v4266 = vadd.f32 %v1293, %v4265
        %v4267 = vpop.f32.mrf.mxu0
        %v4268 = vadd.f32 %v1293, %v4267
        %4269 = vmatmul.bf16.gmra.mxu0 %v1071
        %v4270 = vpop.f32.mrf.mxu0
        %v4271 = vadd.f32 %v1293, %v4270
        %v4272 = vpop.f32.mrf.mxu0
        %v4273 = vadd.f32 %v1293, %v4272
        %4274 = vmatmul.bf16.gmra.mxu0 %v1078
        %v4275 = vpop.f32.mrf.mxu0
        %v4276 = vadd.f32 %v1293, %v4275
        %v4277 = vpop.f32.mrf.mxu0
        %v4278 = vadd.f32 %v1293, %v4277
        %4279 = vmatmul.bf16.gmra.mxu0 %v1085
        %v4280 = vpop.f32.mrf.mxu0
        %v4281 = vadd.f32 %v1293, %v4280
        %v4282 = vpop.f32.mrf.mxu0
        %v4283 = vadd.f32 %v1293, %v4282
        %4284 = vdwg.mxu0
        %4285 = vmatpush.bf16.msra.mxu0 %v1949
        %4286 = vmatpush.bf16.msra.mxu0 %v1945
        %4287 = vmatpush.bf16.msra.mxu0 %v1941
        %4288 = vmatpush.bf16.msra.mxu0 %v1937
        %4289 = vmatpush.bf16.msra.mxu0 %v1933
        %4290 = vmatpush.bf16.msra.mxu0 %v1929
        %4291 = vmatpush.bf16.msra.mxu0 %v1925
        %4292 = vmatpush.bf16.msra.mxu0 %v1921
        %4293 = vmatmul.bf16.gmra.mxu0 %v981
        %v4294 = vpop.f32.mrf.mxu0
        %v4295 = vadd.f32 %v4206, %v4294
        %v4296 = vpop.f32.mrf.mxu0
        %v4297 = vadd.f32 %v4208, %v4296
        %4298 = vmatmul.bf16.gmra.mxu0 %v988
        %v4299 = vpop.f32.mrf.mxu0
        %v4300 = vadd.f32 %v4211, %v4299
        %v4301 = vpop.f32.mrf.mxu0
        %v4302 = vadd.f32 %v4213, %v4301
        %4303 = vmatmul.bf16.gmra.mxu0 %v995
        %v4304 = vpop.f32.mrf.mxu0
        %v4305 = vadd.f32 %v4216, %v4304
        %v4306 = vpop.f32.mrf.mxu0
        %v4307 = vadd.f32 %v4218, %v4306
        %4308 = vmatmul.bf16.gmra.mxu0 %v1002
        %v4309 = vpop.f32.mrf.mxu0
        %v4310 = vadd.f32 %v4221, %v4309
        %v4311 = vpop.f32.mrf.mxu0
        %v4312 = vadd.f32 %v4223, %v4311
        %4313 = vmatmul.bf16.gmra.mxu0 %v1009
        %v4314 = vpop.f32.mrf.mxu0
        %v4315 = vadd.f32 %v4226, %v4314
        %v4316 = vpop.f32.mrf.mxu0
        %v4317 = vadd.f32 %v4228, %v4316
        %4318 = vmatmul.bf16.gmra.mxu0 %v1016
        %v4319 = vpop.f32.mrf.mxu0
        %v4320 = vadd.f32 %v4231, %v4319
        %v4321 = vpop.f32.mrf.mxu0
        %v4322 = vadd.f32 %v4233, %v4321
        %4323 = vmatmul.bf16.gmra.mxu0 %v1023
        %v4324 = vpop.f32.mrf.mxu0
        %v4325 = vadd.f32 %v4236, %v4324
        %v4326 = vpop.f32.mrf.mxu0
        %v4327 = vadd.f32 %v4238, %v4326
        %4328 = vmatmul.bf16.gmra.mxu0 %v1030
        %v4329 = vpop.f32.mrf.mxu0
        %v4330 = vadd.f32 %v4241, %v4329
        %v4331 = vpop.f32.mrf.mxu0
        %v4332 = vadd.f32 %v4243, %v4331
        %4333 = vmatmul.bf16.gmra.mxu0 %v1037
        %v4334 = vpop.f32.mrf.mxu0
        %v4335 = vadd.f32 %v4246, %v4334
        %v4336 = vpop.f32.mrf.mxu0
        %v4337 = vadd.f32 %v4248, %v4336
        %4338 = vmatmul.bf16.gmra.mxu0 %v1044
        %v4339 = vpop.f32.mrf.mxu0
        %v4340 = vadd.f32 %v4251, %v4339
        %v4341 = vpop.f32.mrf.mxu0
        %v4342 = vadd.f32 %v4253, %v4341
        %4343 = vmatmul.bf16.gmra.mxu0 %v1051
        %v4344 = vpop.f32.mrf.mxu0
        %v4345 = vadd.f32 %v4256, %v4344
        %v4346 = vpop.f32.mrf.mxu0
        %v4347 = vadd.f32 %v4258, %v4346
        %4348 = vmatmul.bf16.gmra.mxu0 %v1058
        %v4349 = vpop.f32.mrf.mxu0
        %v4350 = vadd.f32 %v4261, %v4349
        %v4351 = vpop.f32.mrf.mxu0
        %v4352 = vadd.f32 %v4263, %v4351
        %4353 = vmatmul.bf16.gmra.mxu0 %v1065
        %v4354 = vpop.f32.mrf.mxu0
        %v4355 = vadd.f32 %v4266, %v4354
        %v4356 = vpop.f32.mrf.mxu0
        %v4357 = vadd.f32 %v4268, %v4356
        %4358 = vmatmul.bf16.gmra.mxu0 %v1072
        %v4359 = vpop.f32.mrf.mxu0
        %v4360 = vadd.f32 %v4271, %v4359
        %v4361 = vpop.f32.mrf.mxu0
        %v4362 = vadd.f32 %v4273, %v4361
        %4363 = vmatmul.bf16.gmra.mxu0 %v1079
        %v4364 = vpop.f32.mrf.mxu0
        %v4365 = vadd.f32 %v4276, %v4364
        %v4366 = vpop.f32.mrf.mxu0
        %v4367 = vadd.f32 %v4278, %v4366
        %4368 = vmatmul.bf16.gmra.mxu0 %v1086
        %v4369 = vpop.f32.mrf.mxu0
        %v4370 = vadd.f32 %v4281, %v4369
        %v4371 = vpop.f32.mrf.mxu0
        %v4372 = vadd.f32 %v4283, %v4371
        %4373 = vdwg.mxu0
        %4374 = vmatpush.bf16.msra.mxu0 %v1981
        %4375 = vmatpush.bf16.msra.mxu0 %v1977
        %4376 = vmatpush.bf16.msra.mxu0 %v1973
        %4377 = vmatpush.bf16.msra.mxu0 %v1969
        %4378 = vmatpush.bf16.msra.mxu0 %v1965
        %4379 = vmatpush.bf16.msra.mxu0 %v1961
        %4380 = vmatpush.bf16.msra.mxu0 %v1957
        %4381 = vmatpush.bf16.msra.mxu0 %v1953
        %4382 = vmatmul.bf16.gmra.mxu0 %v982
        %v4383 = vpop.f32.mrf.mxu0
        %v4384 = vadd.f32 %v4295, %v4383
        %v4385 = vpop.f32.mrf.mxu0
        %v4386 = vadd.f32 %v4297, %v4385
        %4387 = vmatmul.bf16.gmra.mxu0 %v989
        %v4388 = vpop.f32.mrf.mxu0
        %v4389 = vadd.f32 %v4300, %v4388
        %v4390 = vpop.f32.mrf.mxu0
        %v4391 = vadd.f32 %v4302, %v4390
        %4392 = vmatmul.bf16.gmra.mxu0 %v996
        %v4393 = vpop.f32.mrf.mxu0
        %v4394 = vadd.f32 %v4305, %v4393
        %v4395 = vpop.f32.mrf.mxu0
        %v4396 = vadd.f32 %v4307, %v4395
        %4397 = vmatmul.bf16.gmra.mxu0 %v1003
        %v4398 = vpop.f32.mrf.mxu0
        %v4399 = vadd.f32 %v4310, %v4398
        %v4400 = vpop.f32.mrf.mxu0
        %v4401 = vadd.f32 %v4312, %v4400
        %4402 = vmatmul.bf16.gmra.mxu0 %v1010
        %v4403 = vpop.f32.mrf.mxu0
        %v4404 = vadd.f32 %v4315, %v4403
        %v4405 = vpop.f32.mrf.mxu0
        %v4406 = vadd.f32 %v4317, %v4405
        %4407 = vmatmul.bf16.gmra.mxu0 %v1017
        %v4408 = vpop.f32.mrf.mxu0
        %v4409 = vadd.f32 %v4320, %v4408
        %v4410 = vpop.f32.mrf.mxu0
        %v4411 = vadd.f32 %v4322, %v4410
        %4412 = vmatmul.bf16.gmra.mxu0 %v1024
        %v4413 = vpop.f32.mrf.mxu0
        %v4414 = vadd.f32 %v4325, %v4413
        %v4415 = vpop.f32.mrf.mxu0
        %v4416 = vadd.f32 %v4327, %v4415
        %4417 = vmatmul.bf16.gmra.mxu0 %v1031
        %v4418 = vpop.f32.mrf.mxu0
        %v4419 = vadd.f32 %v4330, %v4418
        %v4420 = vpop.f32.mrf.mxu0
        %v4421 = vadd.f32 %v4332, %v4420
        %4422 = vmatmul.bf16.gmra.mxu0 %v1038
        %v4423 = vpop.f32.mrf.mxu0
        %v4424 = vadd.f32 %v4335, %v4423
        %v4425 = vpop.f32.mrf.mxu0
        %v4426 = vadd.f32 %v4337, %v4425
        %4427 = vmatmul.bf16.gmra.mxu0 %v1045
        %v4428 = vpop.f32.mrf.mxu0
        %v4429 = vadd.f32 %v4340, %v4428
        %v4430 = vpop.f32.mrf.mxu0
        %v4431 = vadd.f32 %v4342, %v4430
        %4432 = vmatmul.bf16.gmra.mxu0 %v1052
        %v4433 = vpop.f32.mrf.mxu0
        %v4434 = vadd.f32 %v4345, %v4433
        %v4435 = vpop.f32.mrf.mxu0
        %v4436 = vadd.f32 %v4347, %v4435
        %4437 = vmatmul.bf16.gmra.mxu0 %v1059
        %v4438 = vpop.f32.mrf.mxu0
        %v4439 = vadd.f32 %v4350, %v4438
        %v4440 = vpop.f32.mrf.mxu0
        %v4441 = vadd.f32 %v4352, %v4440
        %4442 = vmatmul.bf16.gmra.mxu0 %v1066
        %v4443 = vpop.f32.mrf.mxu0
        %v4444 = vadd.f32 %v4355, %v4443
        %v4445 = vpop.f32.mrf.mxu0
        %v4446 = vadd.f32 %v4357, %v4445
        %4447 = vmatmul.bf16.gmra.mxu0 %v1073
        %v4448 = vpop.f32.mrf.mxu0
        %v4449 = vadd.f32 %v4360, %v4448
        %v4450 = vpop.f32.mrf.mxu0
        %v4451 = vadd.f32 %v4362, %v4450
        %4452 = vmatmul.bf16.gmra.mxu0 %v1080
        %v4453 = vpop.f32.mrf.mxu0
        %v4454 = vadd.f32 %v4365, %v4453
        %v4455 = vpop.f32.mrf.mxu0
        %v4456 = vadd.f32 %v4367, %v4455
        %4457 = vmatmul.bf16.gmra.mxu0 %v1087
        %v4458 = vpop.f32.mrf.mxu0
        %v4459 = vadd.f32 %v4370, %v4458
        %v4460 = vpop.f32.mrf.mxu0
        %v4461 = vadd.f32 %v4372, %v4460
        %4462 = vdwg.mxu0
        %4463 = vmatpush.bf16.msra.mxu0 %v2013
        %4464 = vmatpush.bf16.msra.mxu0 %v2009
        %4465 = vmatpush.bf16.msra.mxu0 %v2005
        %4466 = vmatpush.bf16.msra.mxu0 %v2001
        %4467 = vmatpush.bf16.msra.mxu0 %v1997
        %4468 = vmatpush.bf16.msra.mxu0 %v1993
        %4469 = vmatpush.bf16.msra.mxu0 %v1989
        %4470 = vmatpush.bf16.msra.mxu0 %v1985
        %4471 = vmatmul.bf16.gmra.mxu0 %v983
        %v4472 = vpop.f32.mrf.mxu0
        %v4473 = vadd.f32 %v4384, %v4472
        %v4474 = vpop.f32.mrf.mxu0
        %v4475 = vadd.f32 %v4386, %v4474
        %4476 = vmatmul.bf16.gmra.mxu0 %v990
        %v4477 = vpop.f32.mrf.mxu0
        %v4478 = vadd.f32 %v4389, %v4477
        %v4479 = vpop.f32.mrf.mxu0
        %v4480 = vadd.f32 %v4391, %v4479
        %4481 = vmatmul.bf16.gmra.mxu0 %v997
        %v4482 = vpop.f32.mrf.mxu0
        %v4483 = vadd.f32 %v4394, %v4482
        %v4484 = vpop.f32.mrf.mxu0
        %v4485 = vadd.f32 %v4396, %v4484
        %4486 = vmatmul.bf16.gmra.mxu0 %v1004
        %v4487 = vpop.f32.mrf.mxu0
        %v4488 = vadd.f32 %v4399, %v4487
        %v4489 = vpop.f32.mrf.mxu0
        %v4490 = vadd.f32 %v4401, %v4489
        %4491 = vmatmul.bf16.gmra.mxu0 %v1011
        %v4492 = vpop.f32.mrf.mxu0
        %v4493 = vadd.f32 %v4404, %v4492
        %v4494 = vpop.f32.mrf.mxu0
        %v4495 = vadd.f32 %v4406, %v4494
        %4496 = vmatmul.bf16.gmra.mxu0 %v1018
        %v4497 = vpop.f32.mrf.mxu0
        %v4498 = vadd.f32 %v4409, %v4497
        %v4499 = vpop.f32.mrf.mxu0
        %v4500 = vadd.f32 %v4411, %v4499
        %4501 = vmatmul.bf16.gmra.mxu0 %v1025
        %v4502 = vpop.f32.mrf.mxu0
        %v4503 = vadd.f32 %v4414, %v4502
        %v4504 = vpop.f32.mrf.mxu0
        %v4505 = vadd.f32 %v4416, %v4504
        %4506 = vmatmul.bf16.gmra.mxu0 %v1032
        %v4507 = vpop.f32.mrf.mxu0
        %v4508 = vadd.f32 %v4419, %v4507
        %v4509 = vpop.f32.mrf.mxu0
        %v4510 = vadd.f32 %v4421, %v4509
        %4511 = vmatmul.bf16.gmra.mxu0 %v1039
        %v4512 = vpop.f32.mrf.mxu0
        %v4513 = vadd.f32 %v4424, %v4512
        %v4514 = vpop.f32.mrf.mxu0
        %v4515 = vadd.f32 %v4426, %v4514
        %4516 = vmatmul.bf16.gmra.mxu0 %v1046
        %v4517 = vpop.f32.mrf.mxu0
        %v4518 = vadd.f32 %v4429, %v4517
        %v4519 = vpop.f32.mrf.mxu0
        %v4520 = vadd.f32 %v4431, %v4519
        %4521 = vmatmul.bf16.gmra.mxu0 %v1053
        %v4522 = vpop.f32.mrf.mxu0
        %v4523 = vadd.f32 %v4434, %v4522
        %v4524 = vpop.f32.mrf.mxu0
        %v4525 = vadd.f32 %v4436, %v4524
        %4526 = vmatmul.bf16.gmra.mxu0 %v1060
        %v4527 = vpop.f32.mrf.mxu0
        %v4528 = vadd.f32 %v4439, %v4527
        %v4529 = vpop.f32.mrf.mxu0
        %v4530 = vadd.f32 %v4441, %v4529
        %4531 = vmatmul.bf16.gmra.mxu0 %v1067
        %v4532 = vpop.f32.mrf.mxu0
        %v4533 = vadd.f32 %v4444, %v4532
        %v4534 = vpop.f32.mrf.mxu0
        %v4535 = vadd.f32 %v4446, %v4534
        %4536 = vmatmul.bf16.gmra.mxu0 %v1074
        %v4537 = vpop.f32.mrf.mxu0
        %v4538 = vadd.f32 %v4449, %v4537
        %v4539 = vpop.f32.mrf.mxu0
        %v4540 = vadd.f32 %v4451, %v4539
        %4541 = vmatmul.bf16.gmra.mxu0 %v1081
        %v4542 = vpop.f32.mrf.mxu0
        %v4543 = vadd.f32 %v4454, %v4542
        %v4544 = vpop.f32.mrf.mxu0
        %v4545 = vadd.f32 %v4456, %v4544
        %4546 = vmatmul.bf16.gmra.mxu0 %v1088
        %v4547 = vpop.f32.mrf.mxu0
        %v4548 = vadd.f32 %v4459, %v4547
        %v4549 = vpop.f32.mrf.mxu0
        %v4550 = vadd.f32 %v4461, %v4549
        %4551 = vdwg.mxu0
        %4552 = vmatpush.bf16.msra.mxu0 %v2045
        %4553 = vmatpush.bf16.msra.mxu0 %v2041
        %4554 = vmatpush.bf16.msra.mxu0 %v2037
        %4555 = vmatpush.bf16.msra.mxu0 %v2033
        %4556 = vmatpush.bf16.msra.mxu0 %v2029
        %4557 = vmatpush.bf16.msra.mxu0 %v2025
        %4558 = vmatpush.bf16.msra.mxu0 %v2021
        %4559 = vmatpush.bf16.msra.mxu0 %v2017
        %4560 = vmatmul.bf16.gmra.mxu0 %v984
        %v4561 = vpop.f32.mrf.mxu0
        %v4562 = vadd.f32 %v4473, %v4561
        %v4563 = vpop.f32.mrf.mxu0
        %v4564 = vadd.f32 %v4475, %v4563
        %4565 = vmatmul.bf16.gmra.mxu0 %v991
        %v4566 = vpop.f32.mrf.mxu0
        %v4567 = vadd.f32 %v4478, %v4566
        %v4568 = vpop.f32.mrf.mxu0
        %v4569 = vadd.f32 %v4480, %v4568
        %4570 = vmatmul.bf16.gmra.mxu0 %v998
        %v4571 = vpop.f32.mrf.mxu0
        %v4572 = vadd.f32 %v4483, %v4571
        %v4573 = vpop.f32.mrf.mxu0
        %v4574 = vadd.f32 %v4485, %v4573
        %4575 = vmatmul.bf16.gmra.mxu0 %v1005
        %v4576 = vpop.f32.mrf.mxu0
        %v4577 = vadd.f32 %v4488, %v4576
        %v4578 = vpop.f32.mrf.mxu0
        %v4579 = vadd.f32 %v4490, %v4578
        %4580 = vmatmul.bf16.gmra.mxu0 %v1012
        %v4581 = vpop.f32.mrf.mxu0
        %v4582 = vadd.f32 %v4493, %v4581
        %v4583 = vpop.f32.mrf.mxu0
        %v4584 = vadd.f32 %v4495, %v4583
        %4585 = vmatmul.bf16.gmra.mxu0 %v1019
        %v4586 = vpop.f32.mrf.mxu0
        %v4587 = vadd.f32 %v4498, %v4586
        %v4588 = vpop.f32.mrf.mxu0
        %v4589 = vadd.f32 %v4500, %v4588
        %4590 = vmatmul.bf16.gmra.mxu0 %v1026
        %v4591 = vpop.f32.mrf.mxu0
        %v4592 = vadd.f32 %v4503, %v4591
        %v4593 = vpop.f32.mrf.mxu0
        %v4594 = vadd.f32 %v4505, %v4593
        %4595 = vmatmul.bf16.gmra.mxu0 %v1033
        %v4596 = vpop.f32.mrf.mxu0
        %v4597 = vadd.f32 %v4508, %v4596
        %v4598 = vpop.f32.mrf.mxu0
        %v4599 = vadd.f32 %v4510, %v4598
        %4600 = vmatmul.bf16.gmra.mxu0 %v1040
        %v4601 = vpop.f32.mrf.mxu0
        %v4602 = vadd.f32 %v4513, %v4601
        %v4603 = vpop.f32.mrf.mxu0
        %v4604 = vadd.f32 %v4515, %v4603
        %4605 = vmatmul.bf16.gmra.mxu0 %v1047
        %v4606 = vpop.f32.mrf.mxu0
        %v4607 = vadd.f32 %v4518, %v4606
        %v4608 = vpop.f32.mrf.mxu0
        %v4609 = vadd.f32 %v4520, %v4608
        %4610 = vmatmul.bf16.gmra.mxu0 %v1054
        %v4611 = vpop.f32.mrf.mxu0
        %v4612 = vadd.f32 %v4523, %v4611
        %v4613 = vpop.f32.mrf.mxu0
        %v4614 = vadd.f32 %v4525, %v4613
        %4615 = vmatmul.bf16.gmra.mxu0 %v1061
        %v4616 = vpop.f32.mrf.mxu0
        %v4617 = vadd.f32 %v4528, %v4616
        %v4618 = vpop.f32.mrf.mxu0
        %v4619 = vadd.f32 %v4530, %v4618
        %4620 = vmatmul.bf16.gmra.mxu0 %v1068
        %v4621 = vpop.f32.mrf.mxu0
        %v4622 = vadd.f32 %v4533, %v4621
        %v4623 = vpop.f32.mrf.mxu0
        %v4624 = vadd.f32 %v4535, %v4623
        %4625 = vmatmul.bf16.gmra.mxu0 %v1075
        %v4626 = vpop.f32.mrf.mxu0
        %v4627 = vadd.f32 %v4538, %v4626
        %v4628 = vpop.f32.mrf.mxu0
        %v4629 = vadd.f32 %v4540, %v4628
        %4630 = vmatmul.bf16.gmra.mxu0 %v1082
        %v4631 = vpop.f32.mrf.mxu0
        %v4632 = vadd.f32 %v4543, %v4631
        %v4633 = vpop.f32.mrf.mxu0
        %v4634 = vadd.f32 %v4545, %v4633
        %4635 = vmatmul.bf16.gmra.mxu0 %v1089
        %v4636 = vpop.f32.mrf.mxu0
        %v4637 = vadd.f32 %v4548, %v4636
        %v4638 = vpop.f32.mrf.mxu0
        %v4639 = vadd.f32 %v4550, %v4638
        %4640 = vdwg.mxu0
        %4641 = vmatpush.bf16.msra.mxu0 %v2077
        %4642 = vmatpush.bf16.msra.mxu0 %v2073
        %4643 = vmatpush.bf16.msra.mxu0 %v2069
        %4644 = vmatpush.bf16.msra.mxu0 %v2065
        %4645 = vmatpush.bf16.msra.mxu0 %v2061
        %4646 = vmatpush.bf16.msra.mxu0 %v2057
        %4647 = vmatpush.bf16.msra.mxu0 %v2053
        %4648 = vmatpush.bf16.msra.mxu0 %v2049
        %4649 = vmatmul.bf16.gmra.mxu0 %v985
        %v4650 = vpop.f32.mrf.mxu0
        %v4651 = vadd.f32 %v4562, %v4650
        %v4652 = vpop.f32.mrf.mxu0
        %v4653 = vadd.f32 %v4564, %v4652
        %4654 = vmatmul.bf16.gmra.mxu0 %v992
        %v4655 = vpop.f32.mrf.mxu0
        %v4656 = vadd.f32 %v4567, %v4655
        %v4657 = vpop.f32.mrf.mxu0
        %v4658 = vadd.f32 %v4569, %v4657
        %4659 = vmatmul.bf16.gmra.mxu0 %v999
        %v4660 = vpop.f32.mrf.mxu0
        %v4661 = vadd.f32 %v4572, %v4660
        %v4662 = vpop.f32.mrf.mxu0
        %v4663 = vadd.f32 %v4574, %v4662
        %4664 = vmatmul.bf16.gmra.mxu0 %v1006
        %v4665 = vpop.f32.mrf.mxu0
        %v4666 = vadd.f32 %v4577, %v4665
        %v4667 = vpop.f32.mrf.mxu0
        %v4668 = vadd.f32 %v4579, %v4667
        %4669 = vmatmul.bf16.gmra.mxu0 %v1013
        %v4670 = vpop.f32.mrf.mxu0
        %v4671 = vadd.f32 %v4582, %v4670
        %v4672 = vpop.f32.mrf.mxu0
        %v4673 = vadd.f32 %v4584, %v4672
        %4674 = vmatmul.bf16.gmra.mxu0 %v1020
        %v4675 = vpop.f32.mrf.mxu0
        %v4676 = vadd.f32 %v4587, %v4675
        %v4677 = vpop.f32.mrf.mxu0
        %v4678 = vadd.f32 %v4589, %v4677
        %4679 = vmatmul.bf16.gmra.mxu0 %v1027
        %v4680 = vpop.f32.mrf.mxu0
        %v4681 = vadd.f32 %v4592, %v4680
        %v4682 = vpop.f32.mrf.mxu0
        %v4683 = vadd.f32 %v4594, %v4682
        %4684 = vmatmul.bf16.gmra.mxu0 %v1034
        %v4685 = vpop.f32.mrf.mxu0
        %v4686 = vadd.f32 %v4597, %v4685
        %v4687 = vpop.f32.mrf.mxu0
        %v4688 = vadd.f32 %v4599, %v4687
        %4689 = vmatmul.bf16.gmra.mxu0 %v1041
        %v4690 = vpop.f32.mrf.mxu0
        %v4691 = vadd.f32 %v4602, %v4690
        %v4692 = vpop.f32.mrf.mxu0
        %v4693 = vadd.f32 %v4604, %v4692
        %4694 = vmatmul.bf16.gmra.mxu0 %v1048
        %v4695 = vpop.f32.mrf.mxu0
        %v4696 = vadd.f32 %v4607, %v4695
        %v4697 = vpop.f32.mrf.mxu0
        %v4698 = vadd.f32 %v4609, %v4697
        %4699 = vmatmul.bf16.gmra.mxu0 %v1055
        %v4700 = vpop.f32.mrf.mxu0
        %v4701 = vadd.f32 %v4612, %v4700
        %v4702 = vpop.f32.mrf.mxu0
        %v4703 = vadd.f32 %v4614, %v4702
        %4704 = vmatmul.bf16.gmra.mxu0 %v1062
        %v4705 = vpop.f32.mrf.mxu0
        %v4706 = vadd.f32 %v4617, %v4705
        %v4707 = vpop.f32.mrf.mxu0
        %v4708 = vadd.f32 %v4619, %v4707
        %4709 = vmatmul.bf16.gmra.mxu0 %v1069
        %v4710 = vpop.f32.mrf.mxu0
        %v4711 = vadd.f32 %v4622, %v4710
        %v4712 = vpop.f32.mrf.mxu0
        %v4713 = vadd.f32 %v4624, %v4712
        %4714 = vmatmul.bf16.gmra.mxu0 %v1076
        %v4715 = vpop.f32.mrf.mxu0
        %v4716 = vadd.f32 %v4627, %v4715
        %v4717 = vpop.f32.mrf.mxu0
        %v4718 = vadd.f32 %v4629, %v4717
        %4719 = vmatmul.bf16.gmra.mxu0 %v1083
        %v4720 = vpop.f32.mrf.mxu0
        %v4721 = vadd.f32 %v4632, %v4720
        %v4722 = vpop.f32.mrf.mxu0
        %v4723 = vadd.f32 %v4634, %v4722
        %4724 = vmatmul.bf16.gmra.mxu0 %v1090
        %v4725 = vpop.f32.mrf.mxu0
        %v4726 = vadd.f32 %v4637, %v4725
        %v4727 = vpop.f32.mrf.mxu0
        %v4728 = vadd.f32 %v4639, %v4727
        %4729 = vdwg.mxu0
        %4730 = vmatpush.bf16.msra.mxu0 0
        %4731 = vmatpush.bf16.msra.mxu0 0
        %4732 = vmatpush.bf16.msra.mxu0 0
        %4733 = vmatpush.bf16.msra.mxu0 0
        %4734 = vmatpush.bf16.msra.mxu0 0
        %4735 = vmatpush.bf16.msra.mxu0 0
        %4736 = vmatpush.bf16.msra.mxu0 0
        %4737 = vmatpush.bf16.msra.mxu0 %v2081
        %4738 = vmatmul.bf16.gmra.mxu0 %v2280
        %v4739 = vpop.f32.mrf.mxu0
        %v4740 = vadd.f32 %v4651, %v4739
        %v4741 = vpop.f32.mrf.mxu0
        %v4742 = vadd.f32 %v4653, %v4741
        %4743 = vmatmul.bf16.gmra.mxu0 %v2283
        %v4744 = vpop.f32.mrf.mxu0
        %v4745 = vadd.f32 %v4656, %v4744
        %v4746 = vpop.f32.mrf.mxu0
        %v4747 = vadd.f32 %v4658, %v4746
        %4748 = vmatmul.bf16.gmra.mxu0 %v2286
        %v4749 = vpop.f32.mrf.mxu0
        %v4750 = vadd.f32 %v4661, %v4749
        %v4751 = vpop.f32.mrf.mxu0
        %v4752 = vadd.f32 %v4663, %v4751
        %4753 = vmatmul.bf16.gmra.mxu0 %v2289
        %v4754 = vpop.f32.mrf.mxu0
        %v4755 = vadd.f32 %v4666, %v4754
        %v4756 = vpop.f32.mrf.mxu0
        %v4757 = vadd.f32 %v4668, %v4756
        %4758 = vmatmul.bf16.gmra.mxu0 %v2292
        %v4759 = vpop.f32.mrf.mxu0
        %v4760 = vadd.f32 %v4671, %v4759
        %v4761 = vpop.f32.mrf.mxu0
        %v4762 = vadd.f32 %v4673, %v4761
        %4763 = vmatmul.bf16.gmra.mxu0 %v2295
        %v4764 = vpop.f32.mrf.mxu0
        %v4765 = vadd.f32 %v4676, %v4764
        %v4766 = vpop.f32.mrf.mxu0
        %v4767 = vadd.f32 %v4678, %v4766
        %4768 = vmatmul.bf16.gmra.mxu0 %v2298
        %v4769 = vpop.f32.mrf.mxu0
        %v4770 = vadd.f32 %v4681, %v4769
        %v4771 = vpop.f32.mrf.mxu0
        %v4772 = vadd.f32 %v4683, %v4771
        %4773 = vmatmul.bf16.gmra.mxu0 %v2301
        %v4774 = vpop.f32.mrf.mxu0
        %v4775 = vadd.f32 %v4686, %v4774
        %v4776 = vpop.f32.mrf.mxu0
        %v4777 = vadd.f32 %v4688, %v4776
        %4778 = vmatmul.bf16.gmra.mxu0 %v2304
        %v4779 = vpop.f32.mrf.mxu0
        %v4780 = vadd.f32 %v4691, %v4779
        %v4781 = vpop.f32.mrf.mxu0
        %v4782 = vadd.f32 %v4693, %v4781
        %4783 = vmatmul.bf16.gmra.mxu0 %v2307
        %v4784 = vpop.f32.mrf.mxu0
        %v4785 = vadd.f32 %v4696, %v4784
        %v4786 = vpop.f32.mrf.mxu0
        %v4787 = vadd.f32 %v4698, %v4786
        %4788 = vmatmul.bf16.gmra.mxu0 %v2310
        %v4789 = vpop.f32.mrf.mxu0
        %v4790 = vadd.f32 %v4701, %v4789
        %v4791 = vpop.f32.mrf.mxu0
        %v4792 = vadd.f32 %v4703, %v4791
        %4793 = vmatmul.bf16.gmra.mxu0 %v2313
        %v4794 = vpop.f32.mrf.mxu0
        %v4795 = vadd.f32 %v4706, %v4794
        %v4796 = vpop.f32.mrf.mxu0
        %v4797 = vadd.f32 %v4708, %v4796
        %4798 = vmatmul.bf16.gmra.mxu0 %v2316
        %v4799 = vpop.f32.mrf.mxu0
        %v4800 = vadd.f32 %v4711, %v4799
        %v4801 = vpop.f32.mrf.mxu0
        %v4802 = vadd.f32 %v4713, %v4801
        %4803 = vmatmul.bf16.gmra.mxu0 %v2319
        %v4804 = vpop.f32.mrf.mxu0
        %v4805 = vadd.f32 %v4716, %v4804
        %v4806 = vpop.f32.mrf.mxu0
        %v4807 = vadd.f32 %v4718, %v4806
        %4808 = vmatmul.bf16.gmra.mxu0 %v2322
        %v4809 = vpop.f32.mrf.mxu0
        %v4810 = vadd.f32 %v4721, %v4809
        %v4811 = vpop.f32.mrf.mxu0
        %v4812 = vadd.f32 %v4723, %v4811
        %4813 = vmatmul.bf16.gmra.mxu0 %v2325
        %v4814 = vpop.f32.mrf.mxu0
        %v4815 = vadd.f32 %v4726, %v4814
        %v4816 = vpop.f32.mrf.mxu0
        %v4817 = vadd.f32 %v4728, %v4816
        %4818 = vdwg.mxu0
        %vm4819 = vcmp.gt.f32.partialorder %v2871, 0.0
        %vm4820 = vcmp.gt.f32.partialorder %v3494, 0.0
        %vm4821 = vcmp.gt.f32.partialorder %v4117, 0.0
        %vm4822 = vcmp.gt.f32.partialorder %v4740, 0.0
        %vm4823 = vcmp.gt.f32.partialorder %v2873, 0.0
        %vm4824 = vcmp.gt.f32.partialorder %v3496, 0.0
        %vm4825 = vcmp.gt.f32.partialorder %v4119, 0.0
        %vm4826 = vcmp.gt.f32.partialorder %v4742, 0.0
        %vm4827 = vcmp.gt.f32.partialorder %v2876, 0.0
        %vm4828 = vcmp.gt.f32.partialorder %v3499, 0.0
        %vm4829 = vcmp.gt.f32.partialorder %v4122, 0.0
        %vm4830 = vcmp.gt.f32.partialorder %v4745, 0.0
        %vm4831 = vcmp.gt.f32.partialorder %v2878, 0.0
        %vm4832 = vcmp.gt.f32.partialorder %v3501, 0.0
        %vm4833 = vcmp.gt.f32.partialorder %v4124, 0.0
        %vm4834 = vcmp.gt.f32.partialorder %v4747, 0.0
        %vm4835 = vcmp.gt.f32.partialorder %v2881, 0.0
        %vm4836 = vcmp.gt.f32.partialorder %v3504, 0.0
        %vm4837 = vcmp.gt.f32.partialorder %v4127, 0.0
        %vm4838 = vcmp.gt.f32.partialorder %v4750, 0.0
        %vm4839 = vcmp.gt.f32.partialorder %v2883, 0.0
        %vm4840 = vcmp.gt.f32.partialorder %v3506, 0.0
        %vm4841 = vcmp.gt.f32.partialorder %v4129, 0.0
        %vm4842 = vcmp.gt.f32.partialorder %v4752, 0.0
        %vm4843 = vcmp.gt.f32.partialorder %v2886, 0.0
        %vm4844 = vcmp.gt.f32.partialorder %v3509, 0.0
        %vm4845 = vcmp.gt.f32.partialorder %v4132, 0.0
        %vm4846 = vcmp.gt.f32.partialorder %v4755, 0.0
        %vm4847 = vcmp.gt.f32.partialorder %v2888, 0.0
        %vm4848 = vcmp.gt.f32.partialorder %v3511, 0.0
        %vm4849 = vcmp.gt.f32.partialorder %v4134, 0.0
        %vm4850 = vcmp.gt.f32.partialorder %v4757, 0.0
        %vm4851 = vcmp.gt.f32.partialorder %v2891, 0.0
        %vm4852 = vcmp.gt.f32.partialorder %v3514, 0.0
        %vm4853 = vcmp.gt.f32.partialorder %v4137, 0.0
        %vm4854 = vcmp.gt.f32.partialorder %v4760, 0.0
        %vm4855 = vcmp.gt.f32.partialorder %v2893, 0.0
        %vm4856 = vcmp.gt.f32.partialorder %v3516, 0.0
        %vm4857 = vcmp.gt.f32.partialorder %v4139, 0.0
        %vm4858 = vcmp.gt.f32.partialorder %v4762, 0.0
        %vm4859 = vcmp.gt.f32.partialorder %v2896, 0.0
        %vm4860 = vcmp.gt.f32.partialorder %v3519, 0.0
        %vm4861 = vcmp.gt.f32.partialorder %v4142, 0.0
        %vm4862 = vcmp.gt.f32.partialorder %v4765, 0.0
        %vm4863 = vcmp.gt.f32.partialorder %v2898, 0.0
        %vm4864 = vcmp.gt.f32.partialorder %v3521, 0.0
        %vm4865 = vcmp.gt.f32.partialorder %v4144, 0.0
        %vm4866 = vcmp.gt.f32.partialorder %v4767, 0.0
        %vm4867 = vcmp.gt.f32.partialorder %v2901, 0.0
        %vm4868 = vcmp.gt.f32.partialorder %v3524, 0.0
        %vm4869 = vcmp.gt.f32.partialorder %v4147, 0.0
        %vm4870 = vcmp.gt.f32.partialorder %v4770, 0.0
        %vm4871 = vcmp.gt.f32.partialorder %v2903, 0.0
        %vm4872 = vcmp.gt.f32.partialorder %v3526, 0.0
        %vm4873 = vcmp.gt.f32.partialorder %v4149, 0.0
        %vm4874 = vcmp.gt.f32.partialorder %v4772, 0.0
        %vm4875 = vcmp.gt.f32.partialorder %v2906, 0.0
        %vm4876 = vcmp.gt.f32.partialorder %v3529, 0.0
        %vm4877 = vcmp.gt.f32.partialorder %v4152, 0.0
        %vm4878 = vcmp.gt.f32.partialorder %v4775, 0.0
        %vm4879 = vcmp.gt.f32.partialorder %v2908, 0.0
        %vm4880 = vcmp.gt.f32.partialorder %v3531, 0.0
        %vm4881 = vcmp.gt.f32.partialorder %v4154, 0.0
        %vm4882 = vcmp.gt.f32.partialorder %v4777, 0.0
        %vm4883 = vcmp.gt.f32.partialorder %v2911, 0.0
        %vm4884 = vcmp.gt.f32.partialorder %v3534, 0.0
        %vm4885 = vcmp.gt.f32.partialorder %v4157, 0.0
        %vm4886 = vcmp.gt.f32.partialorder %v4780, 0.0
        %vm4887 = vcmp.gt.f32.partialorder %v2913, 0.0
        %vm4888 = vcmp.gt.f32.partialorder %v3536, 0.0
        %vm4889 = vcmp.gt.f32.partialorder %v4159, 0.0
        %vm4890 = vcmp.gt.f32.partialorder %v4782, 0.0
        %vm4891 = vcmp.gt.f32.partialorder %v2916, 0.0
        %vm4892 = vcmp.gt.f32.partialorder %v3539, 0.0
        %vm4893 = vcmp.gt.f32.partialorder %v4162, 0.0
        %vm4894 = vcmp.gt.f32.partialorder %v4785, 0.0
        %vm4895 = vcmp.gt.f32.partialorder %v2918, 0.0
        %vm4896 = vcmp.gt.f32.partialorder %v3541, 0.0
        %vm4897 = vcmp.gt.f32.partialorder %v4164, 0.0
        %vm4898 = vcmp.gt.f32.partialorder %v4787, 0.0
        %vm4899 = vcmp.gt.f32.partialorder %v2921, 0.0
        %vm4900 = vcmp.gt.f32.partialorder %v3544, 0.0
        %vm4901 = vcmp.gt.f32.partialorder %v4167, 0.0
        %vm4902 = vcmp.gt.f32.partialorder %v4790, 0.0
        %vm4903 = vcmp.gt.f32.partialorder %v2923, 0.0
        %vm4904 = vcmp.gt.f32.partialorder %v3546, 0.0
        %vm4905 = vcmp.gt.f32.partialorder %v4169, 0.0
        %vm4906 = vcmp.gt.f32.partialorder %v4792, 0.0
        %vm4907 = vcmp.gt.f32.partialorder %v2926, 0.0
        %vm4908 = vcmp.gt.f32.partialorder %v3549, 0.0
        %vm4909 = vcmp.gt.f32.partialorder %v4172, 0.0
        %vm4910 = vcmp.gt.f32.partialorder %v4795, 0.0
        %vm4911 = vcmp.gt.f32.partialorder %v2928, 0.0
        %vm4912 = vcmp.gt.f32.partialorder %v3551, 0.0
        %vm4913 = vcmp.gt.f32.partialorder %v4174, 0.0
        %vm4914 = vcmp.gt.f32.partialorder %v4797, 0.0
        %vm4915 = vcmp.gt.f32.partialorder %v2931, 0.0
        %vm4916 = vcmp.gt.f32.partialorder %v3554, 0.0
        %vm4917 = vcmp.gt.f32.partialorder %v4177, 0.0
        %vm4918 = vcmp.gt.f32.partialorder %v4800, 0.0
        %vm4919 = vcmp.gt.f32.partialorder %v2933, 0.0
        %vm4920 = vcmp.gt.f32.partialorder %v3556, 0.0
        %vm4921 = vcmp.gt.f32.partialorder %v4179, 0.0
        %vm4922 = vcmp.gt.f32.partialorder %v4802, 0.0
        %vm4923 = vcmp.gt.f32.partialorder %v2936, 0.0
        %vm4924 = vcmp.gt.f32.partialorder %v3559, 0.0
        %vm4925 = vcmp.gt.f32.partialorder %v4182, 0.0
        %vm4926 = vcmp.gt.f32.partialorder %v4805, 0.0
        %vm4927 = vcmp.gt.f32.partialorder %v2938, 0.0
        %vm4928 = vcmp.gt.f32.partialorder %v3561, 0.0
        %vm4929 = vcmp.gt.f32.partialorder %v4184, 0.0
        %vm4930 = vcmp.gt.f32.partialorder %v4807, 0.0
        %vm4931 = vcmp.gt.f32.partialorder %v2941, 0.0
        %vm4932 = vcmp.gt.f32.partialorder %v3564, 0.0
        %vm4933 = vcmp.gt.f32.partialorder %v4187, 0.0
        %vm4934 = vcmp.gt.f32.partialorder %v4810, 0.0
        %vm4935 = vcmp.gt.f32.partialorder %v2943, 0.0
        %vm4936 = vcmp.gt.f32.partialorder %v3566, 0.0
        %vm4937 = vcmp.gt.f32.partialorder %v4189, 0.0
        %vm4938 = vcmp.gt.f32.partialorder %v4812, 0.0
        %vm4939 = vcmp.gt.f32.partialorder %v2946, 0.0
        %vm4940 = vcmp.gt.f32.partialorder %v3569, 0.0
        %vm4941 = vcmp.gt.f32.partialorder %v4192, 0.0
        %vm4942 = vcmp.gt.f32.partialorder %v4815, 0.0
        %vm4943 = vcmp.gt.f32.partialorder %v2948, 0.0
        %vm4944 = vcmp.gt.f32.partialorder %v3571, 0.0
        %vm4945 = vcmp.gt.f32.partialorder %v4194, 0.0
        %vm4946 = vcmp.gt.f32.partialorder %v4817, 0.0
        %v4947 = vmul.f32 %v2871, 0.2
        %v4948 = vmul.f32 %v3494, 0.2
        %v4949 = vmul.f32 %v4117, 0.2
        %v4950 = vmul.f32 %v4740, 0.2
        %v4951 = vmul.f32 %v2873, 0.2
        %v4952 = vmul.f32 %v3496, 0.2
        %v4953 = vmul.f32 %v4119, 0.2
        %v4954 = vmul.f32 %v4742, 0.2
        %v4955 = vmul.f32 %v2876, 0.2
        %v4956 = vmul.f32 %v3499, 0.2
        %v4957 = vmul.f32 %v4122, 0.2
        %v4958 = vmul.f32 %v4745, 0.2
        %v4959 = vmul.f32 %v2878, 0.2
        %v4960 = vmul.f32 %v3501, 0.2
        %v4961 = vmul.f32 %v4124, 0.2
        %v4962 = vmul.f32 %v4747, 0.2
        %v4963 = vmul.f32 %v2881, 0.2
        %v4964 = vmul.f32 %v3504, 0.2
        %v4965 = vmul.f32 %v4127, 0.2
        %v4966 = vmul.f32 %v4750, 0.2
        %v4967 = vmul.f32 %v2883, 0.2
        %v4968 = vmul.f32 %v3506, 0.2
        %v4969 = vmul.f32 %v4129, 0.2
        %v4970 = vmul.f32 %v4752, 0.2
        %v4971 = vmul.f32 %v2886, 0.2
        %v4972 = vmul.f32 %v3509, 0.2
        %v4973 = vmul.f32 %v4132, 0.2
        %v4974 = vmul.f32 %v4755, 0.2
        %v4975 = vmul.f32 %v2888, 0.2
        %v4976 = vmul.f32 %v3511, 0.2
        %v4977 = vmul.f32 %v4134, 0.2
        %v4978 = vmul.f32 %v4757, 0.2
        %v4979 = vmul.f32 %v2891, 0.2
        %v4980 = vmul.f32 %v3514, 0.2
        %v4981 = vmul.f32 %v4137, 0.2
        %v4982 = vmul.f32 %v4760, 0.2
        %v4983 = vmul.f32 %v2893, 0.2
        %v4984 = vmul.f32 %v3516, 0.2
        %v4985 = vmul.f32 %v4139, 0.2
        %v4986 = vmul.f32 %v4762, 0.2
        %v4987 = vmul.f32 %v2896, 0.2
        %v4988 = vmul.f32 %v3519, 0.2
        %v4989 = vmul.f32 %v4142, 0.2
        %v4990 = vmul.f32 %v4765, 0.2
        %v4991 = vmul.f32 %v2898, 0.2
        %v4992 = vmul.f32 %v3521, 0.2
        %v4993 = vmul.f32 %v4144, 0.2
        %v4994 = vmul.f32 %v4767, 0.2
        %v4995 = vmul.f32 %v2901, 0.2
        %v4996 = vmul.f32 %v3524, 0.2
        %v4997 = vmul.f32 %v4147, 0.2
        %v4998 = vmul.f32 %v4770, 0.2
        %v4999 = vmul.f32 %v2903, 0.2
        %v5000 = vmul.f32 %v3526, 0.2
        %v5001 = vmul.f32 %v4149, 0.2
        %v5002 = vmul.f32 %v4772, 0.2
        %v5003 = vmul.f32 %v2906, 0.2
        %v5004 = vmul.f32 %v3529, 0.2
        %v5005 = vmul.f32 %v4152, 0.2
        %v5006 = vmul.f32 %v4775, 0.2
        %v5007 = vmul.f32 %v2908, 0.2
        %v5008 = vmul.f32 %v3531, 0.2
        %v5009 = vmul.f32 %v4154, 0.2
        %v5010 = vmul.f32 %v4777, 0.2
        %v5011 = vmul.f32 %v2911, 0.2
        %v5012 = vmul.f32 %v3534, 0.2
        %v5013 = vmul.f32 %v4157, 0.2
        %v5014 = vmul.f32 %v4780, 0.2
        %v5015 = vmul.f32 %v2913, 0.2
        %v5016 = vmul.f32 %v3536, 0.2
        %v5017 = vmul.f32 %v4159, 0.2
        %v5018 = vmul.f32 %v4782, 0.2
        %v5019 = vmul.f32 %v2916, 0.2
        %v5020 = vmul.f32 %v3539, 0.2
        %v5021 = vmul.f32 %v4162, 0.2
        %v5022 = vmul.f32 %v4785, 0.2
        %v5023 = vmul.f32 %v2918, 0.2
        %v5024 = vmul.f32 %v3541, 0.2
        %v5025 = vmul.f32 %v4164, 0.2
        %v5026 = vmul.f32 %v4787, 0.2
        %v5027 = vmul.f32 %v2921, 0.2
        %v5028 = vmul.f32 %v3544, 0.2
        %v5029 = vmul.f32 %v4167, 0.2
        %v5030 = vmul.f32 %v4790, 0.2
        %v5031 = vmul.f32 %v2923, 0.2
        %v5032 = vmul.f32 %v3546, 0.2
        %v5033 = vmul.f32 %v4169, 0.2
        %v5034 = vmul.f32 %v4792, 0.2
        %v5035 = vmul.f32 %v2926, 0.2
        %v5036 = vmul.f32 %v3549, 0.2
        %v5037 = vmul.f32 %v4172, 0.2
        %v5038 = vmul.f32 %v4795, 0.2
        %v5039 = vmul.f32 %v2928, 0.2
        %v5040 = vmul.f32 %v3551, 0.2
        %v5041 = vmul.f32 %v4174, 0.2
        %v5042 = vmul.f32 %v4797, 0.2
        %v5043 = vmul.f32 %v2931, 0.2
        %v5044 = vmul.f32 %v3554, 0.2
        %v5045 = vmul.f32 %v4177, 0.2
        %v5046 = vmul.f32 %v4800, 0.2
        %v5047 = vmul.f32 %v2933, 0.2
        %v5048 = vmul.f32 %v3556, 0.2
        %v5049 = vmul.f32 %v4179, 0.2
        %v5050 = vmul.f32 %v4802, 0.2
        %v5051 = vmul.f32 %v2936, 0.2
        %v5052 = vmul.f32 %v3559, 0.2
        %v5053 = vmul.f32 %v4182, 0.2
        %v5054 = vmul.f32 %v4805, 0.2
        %v5055 = vmul.f32 %v2938, 0.2
        %v5056 = vmul.f32 %v3561, 0.2
        %v5057 = vmul.f32 %v4184, 0.2
        %v5058 = vmul.f32 %v4807, 0.2
        %v5059 = vmul.f32 %v2941, 0.2
        %v5060 = vmul.f32 %v3564, 0.2
        %v5061 = vmul.f32 %v4187, 0.2
        %v5062 = vmul.f32 %v4810, 0.2
        %v5063 = vmul.f32 %v2943, 0.2
        %v5064 = vmul.f32 %v3566, 0.2
        %v5065 = vmul.f32 %v4189, 0.2
        %v5066 = vmul.f32 %v4812, 0.2
        %v5067 = vmul.f32 %v2946, 0.2
        %v5068 = vmul.f32 %v3569, 0.2
        %v5069 = vmul.f32 %v4192, 0.2
        %v5070 = vmul.f32 %v4815, 0.2
        %v5071 = vmul.f32 %v2948, 0.2
        %v5072 = vmul.f32 %v3571, 0.2
        %v5073 = vmul.f32 %v4194, 0.2
        %v5074 = vmul.f32 %v4817, 0.2
        %v5075 = vsel %vm4819, %v2871, %v4947
        %v5076 = vsel %vm4820, %v3494, %v4948
        %v5077 = vsel %vm4821, %v4117, %v4949
        %v5078 = vsel %vm4822, %v4740, %v4950
        %v5079 = vsel %vm4823, %v2873, %v4951
        %v5080 = vsel %vm4824, %v3496, %v4952
        %v5081 = vsel %vm4825, %v4119, %v4953
        %v5082 = vsel %vm4826, %v4742, %v4954
        %v5083 = vsel %vm4827, %v2876, %v4955
        %v5084 = vsel %vm4828, %v3499, %v4956
        %v5085 = vsel %vm4829, %v4122, %v4957
        %v5086 = vsel %vm4830, %v4745, %v4958
        %v5087 = vsel %vm4831, %v2878, %v4959
        %v5088 = vsel %vm4832, %v3501, %v4960
        %v5089 = vsel %vm4833, %v4124, %v4961
        %v5090 = vsel %vm4834, %v4747, %v4962
        %v5091 = vsel %vm4835, %v2881, %v4963
        %v5092 = vsel %vm4836, %v3504, %v4964
        %v5093 = vsel %vm4837, %v4127, %v4965
        %v5094 = vsel %vm4838, %v4750, %v4966
        %v5095 = vsel %vm4839, %v2883, %v4967
        %v5096 = vsel %vm4840, %v3506, %v4968
        %v5097 = vsel %vm4841, %v4129, %v4969
        %v5098 = vsel %vm4842, %v4752, %v4970
        %v5099 = vsel %vm4843, %v2886, %v4971
        %v5100 = vsel %vm4844, %v3509, %v4972
        %v5101 = vsel %vm4845, %v4132, %v4973
        %v5102 = vsel %vm4846, %v4755, %v4974
        %v5103 = vsel %vm4847, %v2888, %v4975
        %v5104 = vsel %vm4848, %v3511, %v4976
        %v5105 = vsel %vm4849, %v4134, %v4977
        %v5106 = vsel %vm4850, %v4757, %v4978
        %v5107 = vsel %vm4851, %v2891, %v4979
        %v5108 = vsel %vm4852, %v3514, %v4980
        %v5109 = vsel %vm4853, %v4137, %v4981
        %v5110 = vsel %vm4854, %v4760, %v4982
        %v5111 = vsel %vm4855, %v2893, %v4983
        %v5112 = vsel %vm4856, %v3516, %v4984
        %v5113 = vsel %vm4857, %v4139, %v4985
        %v5114 = vsel %vm4858, %v4762, %v4986
        %v5115 = vsel %vm4859, %v2896, %v4987
        %v5116 = vsel %vm4860, %v3519, %v4988
        %v5117 = vsel %vm4861, %v4142, %v4989
        %v5118 = vsel %vm4862, %v4765, %v4990
        %v5119 = vsel %vm4863, %v2898, %v4991
        %v5120 = vsel %vm4864, %v3521, %v4992
        %v5121 = vsel %vm4865, %v4144, %v4993
        %v5122 = vsel %vm4866, %v4767, %v4994
        %v5123 = vsel %vm4867, %v2901, %v4995
        %v5124 = vsel %vm4868, %v3524, %v4996
        %v5125 = vsel %vm4869, %v4147, %v4997
        %v5126 = vsel %vm4870, %v4770, %v4998
        %v5127 = vsel %vm4871, %v2903, %v4999
        %v5128 = vsel %vm4872, %v3526, %v5000
        %v5129 = vsel %vm4873, %v4149, %v5001
        %v5130 = vsel %vm4874, %v4772, %v5002
        %v5131 = vsel %vm4875, %v2906, %v5003
        %v5132 = vsel %vm4876, %v3529, %v5004
        %v5133 = vsel %vm4877, %v4152, %v5005
        %v5134 = vsel %vm4878, %v4775, %v5006
        %v5135 = vsel %vm4879, %v2908, %v5007
        %v5136 = vsel %vm4880, %v3531, %v5008
        %v5137 = vsel %vm4881, %v4154, %v5009
        %v5138 = vsel %vm4882, %v4777, %v5010
        %v5139 = vsel %vm4883, %v2911, %v5011
        %v5140 = vsel %vm4884, %v3534, %v5012
        %v5141 = vsel %vm4885, %v4157, %v5013
        %v5142 = vsel %vm4886, %v4780, %v5014
        %v5143 = vsel %vm4887, %v2913, %v5015
        %v5144 = vsel %vm4888, %v3536, %v5016
        %v5145 = vsel %vm4889, %v4159, %v5017
        %v5146 = vsel %vm4890, %v4782, %v5018
        %v5147 = vsel %vm4891, %v2916, %v5019
        %v5148 = vsel %vm4892, %v3539, %v5020
        %v5149 = vsel %vm4893, %v4162, %v5021
        %v5150 = vsel %vm4894, %v4785, %v5022
        %v5151 = vsel %vm4895, %v2918, %v5023
        %v5152 = vsel %vm4896, %v3541, %v5024
        %v5153 = vsel %vm4897, %v4164, %v5025
        %v5154 = vsel %vm4898, %v4787, %v5026
        %v5155 = vsel %vm4899, %v2921, %v5027
        %v5156 = vsel %vm4900, %v3544, %v5028
        %v5157 = vsel %vm4901, %v4167, %v5029
        %v5158 = vsel %vm4902, %v4790, %v5030
        %v5159 = vsel %vm4903, %v2923, %v5031
        %v5160 = vsel %vm4904, %v3546, %v5032
        %v5161 = vsel %vm4905, %v4169, %v5033
        %v5162 = vsel %vm4906, %v4792, %v5034
        %v5163 = vsel %vm4907, %v2926, %v5035
        %v5164 = vsel %vm4908, %v3549, %v5036
        %v5165 = vsel %vm4909, %v4172, %v5037
        %v5166 = vsel %vm4910, %v4795, %v5038
        %v5167 = vsel %vm4911, %v2928, %v5039
        %v5168 = vsel %vm4912, %v3551, %v5040
        %v5169 = vsel %vm4913, %v4174, %v5041
        %v5170 = vsel %vm4914, %v4797, %v5042
        %v5171 = vsel %vm4915, %v2931, %v5043
        %v5172 = vsel %vm4916, %v3554, %v5044
        %v5173 = vsel %vm4917, %v4177, %v5045
        %v5174 = vsel %vm4918, %v4800, %v5046
        %v5175 = vsel %vm4919, %v2933, %v5047
        %v5176 = vsel %vm4920, %v3556, %v5048
        %v5177 = vsel %vm4921, %v4179, %v5049
        %v5178 = vsel %vm4922, %v4802, %v5050
        %v5179 = vsel %vm4923, %v2936, %v5051
        %v5180 = vsel %vm4924, %v3559, %v5052
        %v5181 = vsel %vm4925, %v4182, %v5053
        %v5182 = vsel %vm4926, %v4805, %v5054
        %v5183 = vsel %vm4927, %v2938, %v5055
        %v5184 = vsel %vm4928, %v3561, %v5056
        %v5185 = vsel %vm4929, %v4184, %v5057
        %v5186 = vsel %vm4930, %v4807, %v5058
        %v5187 = vsel %vm4931, %v2941, %v5059
        %v5188 = vsel %vm4932, %v3564, %v5060
        %v5189 = vsel %vm4933, %v4187, %v5061
        %v5190 = vsel %vm4934, %v4810, %v5062
        %v5191 = vsel %vm4935, %v2943, %v5063
        %v5192 = vsel %vm4936, %v3566, %v5064
        %v5193 = vsel %vm4937, %v4189, %v5065
        %v5194 = vsel %vm4938, %v4812, %v5066
        %v5195 = vsel %vm4939, %v2946, %v5067
        %v5196 = vsel %vm4940, %v3569, %v5068
        %v5197 = vsel %vm4941, %v4192, %v5069
        %v5198 = vsel %vm4942, %v4815, %v5070
        %v5199 = vsel %vm4943, %v2948, %v5071
        %v5200 = vsel %vm4944, %v3571, %v5072
        %v5201 = vsel %vm4945, %v4194, %v5073
        %v5202 = vsel %vm4946, %v4817, %v5074
        %v5203 = vld [vmem:[#allocation9] sm:$0xff]
        %v5204 = vld [vmem:[#allocation9 + $0x8] sm:$0xff]
        %v5205 = vld [vmem:[#allocation9 + $0x10] sm:$0xff]
        %v5206 = vld [vmem:[#allocation9 + $0x18] sm:$0xff]
        %v5207 = vld [vmem:[#allocation9 + $0x20] sm:$0xff]
        %v5208 = vld [vmem:[#allocation9 + $0x28] sm:$0xff]
        %v5209 = vld [vmem:[#allocation9 + $0x30] sm:$0xff]
        %v5210 = vld [vmem:[#allocation9 + $0x38] sm:$0xff]
        %v5211 = vld [vmem:[#allocation9 + $0x40] sm:$0xff]
        %v5212 = vld [vmem:[#allocation9 + $0x48] sm:$0xff]
        %v5213 = vld [vmem:[#allocation9 + $0x50] sm:$0xff]
        %v5214 = vld [vmem:[#allocation9 + $0x58] sm:$0xff]
        %v5215 = vld [vmem:[#allocation9 + $0x60] sm:$0xff]
        %v5216 = vld [vmem:[#allocation9 + $0x68] sm:$0xff]
        %v5217 = vld [vmem:[#allocation9 + $0x70] sm:$0xff]
        %v5218 = vld [vmem:[#allocation9 + $0x78] sm:$0xff]
        %v5219 = vld [vmem:[#allocation9 + $0x80] sm:$0xff]
        %v5220 = vld [vmem:[#allocation9 + $0x88] sm:$0xff]
        %v5221 = vld [vmem:[#allocation9 + $0x90] sm:$0xff]
        %v5222 = vld [vmem:[#allocation9 + $0x98] sm:$0xff]
        %v5223 = vld [vmem:[#allocation9 + $0xa0] sm:$0xff]
        %v5224 = vld [vmem:[#allocation9 + $0xa8] sm:$0xff]
        %v5225 = vld [vmem:[#allocation9 + $0xb0] sm:$0xff]
        %v5226 = vld [vmem:[#allocation9 + $0xb8] sm:$0xff]
        %v5227 = vld [vmem:[#allocation9 + $0xc0] sm:$0xff]
        %v5228 = vld [vmem:[#allocation9 + $0xc8] sm:$0xff]
        %v5229 = vld [vmem:[#allocation9 + $0xd0] sm:$0xff]
        %v5230 = vld [vmem:[#allocation9 + $0xd8] sm:$0xff]
        %v5231 = vld [vmem:[#allocation9 + $0xe0] sm:$0xff]
        %v5232 = vld [vmem:[#allocation9 + $0xe8] sm:$0xff]
        %v5233 = vld [vmem:[#allocation9 + $0xf0] sm:$0xff]
        %v5234 = vld [vmem:[#allocation9 + $0xf8] sm:$0xff]
        %v5235 = vld [vmem:[#allocation9 + $0x100] sm:$0xff]
        %v5236 = vld [vmem:[#allocation9 + $0x108] sm:$0xff]
        %v5237 = vld [vmem:[#allocation9 + $0x110] sm:$0xff]
        %v5238 = vld [vmem:[#allocation9 + $0x118] sm:$0xff]
        %v5239 = vld [vmem:[#allocation9 + $0x120] sm:$0xff]
        %v5240 = vld [vmem:[#allocation9 + $0x128] sm:$0xff]
        %v5241 = vld [vmem:[#allocation9 + $0x130] sm:$0xff]
        %v5242 = vld [vmem:[#allocation9 + $0x138] sm:$0xff]
        %v5243 = vld [vmem:[#allocation9 + $0x140] sm:$0xff]
        %v5244 = vld [vmem:[#allocation9 + $0x148] sm:$0xff]
        %v5245 = vld [vmem:[#allocation9 + $0x150] sm:$0xff]
        %v5246 = vld [vmem:[#allocation9 + $0x158] sm:$0xff]
        %v5247 = vld [vmem:[#allocation9 + $0x160] sm:$0xff]
        %v5248 = vld [vmem:[#allocation9 + $0x168] sm:$0xff]
        %v5249 = vld [vmem:[#allocation9 + $0x170] sm:$0xff]
        %v5250 = vld [vmem:[#allocation9 + $0x178] sm:$0xff]
        %v5251 = vld [vmem:[#allocation9 + $0x180] sm:$0xff]
        %v5252 = vld [vmem:[#allocation9 + $0x188] sm:$0xff]
        %v5253 = vld [vmem:[#allocation9 + $0x190] sm:$0xff]
        %v5254 = vld [vmem:[#allocation9 + $0x198] sm:$0xff]
        %v5255 = vld [vmem:[#allocation9 + $0x1a0] sm:$0xff]
        %v5256 = vld [vmem:[#allocation9 + $0x1a8] sm:$0xff]
        %v5257 = vld [vmem:[#allocation9 + $0x1b0] sm:$0xff]
        %v5258 = vld [vmem:[#allocation9 + $0x1b8] sm:$0xff]
        %v5259 = vld [vmem:[#allocation9 + $0x1c0] sm:$0xff]
        %v5260 = vld [vmem:[#allocation9 + $0x1c8] sm:$0xff]
        %v5261 = vld [vmem:[#allocation9 + $0x1d0] sm:$0xff]
        %v5262 = vld [vmem:[#allocation9 + $0x1d8] sm:$0xff]
        %v5263 = vld [vmem:[#allocation9 + $0x1e0] sm:$0xff]
        %v5264 = vld [vmem:[#allocation9 + $0x1e8] sm:$0xff]
        %v5265 = vld [vmem:[#allocation9 + $0x1f0] sm:$0xff]
        %v5266 = vld [vmem:[#allocation9 + $0x1f8] sm:$0xff]
        %v5267 = vpack.c.bf16 %v5079, %v5075
        %v5268 = vpack.c.bf16 %v5080, %v5076
        %v5269 = vpack.c.bf16 %v5081, %v5077
        %v5270 = vpack.c.bf16 %v5082, %v5078
        %v5271 = vpack.c.bf16 %v5087, %v5083
        %v5272 = vpack.c.bf16 %v5088, %v5084
        %v5273 = vpack.c.bf16 %v5089, %v5085
        %v5274 = vpack.c.bf16 %v5090, %v5086
        %v5275 = vpack.c.bf16 %v5095, %v5091
        %v5276 = vpack.c.bf16 %v5096, %v5092
        %v5277 = vpack.c.bf16 %v5097, %v5093
        %v5278 = vpack.c.bf16 %v5098, %v5094
        %v5279 = vpack.c.bf16 %v5103, %v5099
        %v5280 = vpack.c.bf16 %v5104, %v5100
        %v5281 = vpack.c.bf16 %v5105, %v5101
        %v5282 = vpack.c.bf16 %v5106, %v5102
        %v5283 = vpack.c.bf16 %v5111, %v5107
        %v5284 = vpack.c.bf16 %v5112, %v5108
        %v5285 = vpack.c.bf16 %v5113, %v5109
        %v5286 = vpack.c.bf16 %v5114, %v5110
        %v5287 = vpack.c.bf16 %v5119, %v5115
        %v5288 = vpack.c.bf16 %v5120, %v5116
        %v5289 = vpack.c.bf16 %v5121, %v5117
        %v5290 = vpack.c.bf16 %v5122, %v5118
        %v5291 = vpack.c.bf16 %v5127, %v5123
        %v5292 = vpack.c.bf16 %v5128, %v5124
        %v5293 = vpack.c.bf16 %v5129, %v5125
        %v5294 = vpack.c.bf16 %v5130, %v5126
        %v5295 = vpack.c.bf16 %v5135, %v5131
        %v5296 = vpack.c.bf16 %v5136, %v5132
        %v5297 = vpack.c.bf16 %v5137, %v5133
        %v5298 = vpack.c.bf16 %v5138, %v5134
        %v5299 = vpack.c.bf16 %v5143, %v5139
        %v5300 = vpack.c.bf16 %v5144, %v5140
        %v5301 = vpack.c.bf16 %v5145, %v5141
        %v5302 = vpack.c.bf16 %v5146, %v5142
        %v5303 = vpack.c.bf16 %v5151, %v5147
        %v5304 = vpack.c.bf16 %v5152, %v5148
        %v5305 = vpack.c.bf16 %v5153, %v5149
        %v5306 = vpack.c.bf16 %v5154, %v5150
        %v5307 = vpack.c.bf16 %v5159, %v5155
        %v5308 = vpack.c.bf16 %v5160, %v5156
        %v5309 = vpack.c.bf16 %v5161, %v5157
        %v5310 = vpack.c.bf16 %v5162, %v5158
        %v5311 = vpack.c.bf16 %v5167, %v5163
        %v5312 = vpack.c.bf16 %v5168, %v5164
        %v5313 = vpack.c.bf16 %v5169, %v5165
        %v5314 = vpack.c.bf16 %v5170, %v5166
        %v5315 = vpack.c.bf16 %v5175, %v5171
        %v5316 = vpack.c.bf16 %v5176, %v5172
        %v5317 = vpack.c.bf16 %v5177, %v5173
        %v5318 = vpack.c.bf16 %v5178, %v5174
        %v5319 = vpack.c.bf16 %v5183, %v5179
        %v5320 = vpack.c.bf16 %v5184, %v5180
        %v5321 = vpack.c.bf16 %v5185, %v5181
        %v5322 = vpack.c.bf16 %v5186, %v5182
        %v5323 = vpack.c.bf16 %v5191, %v5187
        %v5324 = vpack.c.bf16 %v5192, %v5188
        %v5325 = vpack.c.bf16 %v5193, %v5189
        %v5326 = vpack.c.bf16 %v5194, %v5190
        %v5327 = vpack.c.bf16 %v5199, %v5195
        %v5328 = vpack.c.bf16 %v5200, %v5196
        %v5329 = vpack.c.bf16 %v5201, %v5197
        %v5330 = vpack.c.bf16 %v5202, %v5198
        %v5331 = vld [vmem:[%s4] sm:$0xff]
        %v5332 = vld [vmem:[%s4 + $0x8] sm:$0xff]
        %v5333 = vld [vmem:[%s4 + $0x10] sm:$0xff]
        %v5334 = vld [vmem:[%s4 + $0x18] sm:$0xff]
        %v5335 = vld [vmem:[%s4 + $0x20] sm:$0xff]
        %v5336 = vld [vmem:[%s4 + $0x28] sm:$0xff]
        %v5337 = vld [vmem:[%s4 + $0x30] sm:$0xff]
        %v5338 = vld [vmem:[%s4 + $0x38] sm:$0xff]
        %v5339 = vld [vmem:[%s4 + $0x40] sm:$0xff]
        %v5340 = vld [vmem:[%s4 + $0x48] sm:$0xff]
        %v5341 = vld [vmem:[%s4 + $0x50] sm:$0xff]
        %v5342 = vld [vmem:[%s4 + $0x58] sm:$0xff]
        %v5343 = vld [vmem:[%s4 + $0x60] sm:$0xff]
        %v5344 = vld [vmem:[%s4 + $0x68] sm:$0xff]
        %v5345 = vld [vmem:[%s4 + $0x70] sm:$0xff]
        %v5346 = vld [vmem:[%s4 + $0x78] sm:$0xff]
        %v5347 = vld [vmem:[%s4 + $0x80] sm:$0xff]
        %v5348 = vld [vmem:[%s4 + $0x88] sm:$0xff]
        %v5349 = vld [vmem:[%s4 + $0x90] sm:$0xff]
        %v5350 = vld [vmem:[%s4 + $0x98] sm:$0xff]
        %v5351 = vld [vmem:[%s4 + $0xa0] sm:$0xff]
        %v5352 = vld [vmem:[%s4 + $0xa8] sm:$0xff]
        %v5353 = vld [vmem:[%s4 + $0xb0] sm:$0xff]
        %v5354 = vld [vmem:[%s4 + $0xb8] sm:$0xff]
        %v5355 = vld [vmem:[%s4 + $0xc0] sm:$0xff]
        %v5356 = vld [vmem:[%s4 + $0xc8] sm:$0xff]
        %v5357 = vld [vmem:[%s4 + $0xd0] sm:$0xff]
        %v5358 = vld [vmem:[%s4 + $0xd8] sm:$0xff]
        %v5359 = vld [vmem:[%s4 + $0xe0] sm:$0xff]
        %v5360 = vld [vmem:[%s4 + $0xe8] sm:$0xff]
        %v5361 = vld [vmem:[%s4 + $0xf0] sm:$0xff]
        %v5362 = vld [vmem:[%s4 + $0xf8] sm:$0xff]
        %5364 = vset.pattern.permute.xlu0 0
        %5365 = vperm.xlu0 %5364, %v5331
        %v5366 = vpop.permute.xlu0 %5365
        %5369 = vset.pattern.permute.xlu0 0
        %5370 = vperm.xlu0 %5369, %v5332
        %v5371 = vpop.permute.xlu0 %5370
        %5374 = vset.pattern.permute.xlu0 0
        %5375 = vperm.xlu0 %5374, %v5333
        %v5376 = vpop.permute.xlu0 %5375
        %5379 = vset.pattern.permute.xlu0 0
        %5380 = vperm.xlu0 %5379, %v5334
        %v5381 = vpop.permute.xlu0 %5380
        %5384 = vset.pattern.permute.xlu0 0
        %5385 = vperm.xlu0 %5384, %v5335
        %v5386 = vpop.permute.xlu0 %5385
        %5389 = vset.pattern.permute.xlu0 0
        %5390 = vperm.xlu0 %5389, %v5336
        %v5391 = vpop.permute.xlu0 %5390
        %5394 = vset.pattern.permute.xlu0 0
        %5395 = vperm.xlu0 %5394, %v5337
        %v5396 = vpop.permute.xlu0 %5395
        %5399 = vset.pattern.permute.xlu0 0
        %5400 = vperm.xlu0 %5399, %v5338
        %v5401 = vpop.permute.xlu0 %5400
        %5404 = vset.pattern.permute.xlu0 0
        %5405 = vperm.xlu0 %5404, %v5339
        %v5406 = vpop.permute.xlu0 %5405
        %5409 = vset.pattern.permute.xlu0 0
        %5410 = vperm.xlu0 %5409, %v5340
        %v5411 = vpop.permute.xlu0 %5410
        %5414 = vset.pattern.permute.xlu0 0
        %5415 = vperm.xlu0 %5414, %v5341
        %v5416 = vpop.permute.xlu0 %5415
        %5419 = vset.pattern.permute.xlu0 0
        %5420 = vperm.xlu0 %5419, %v5342
        %v5421 = vpop.permute.xlu0 %5420
        %5424 = vset.pattern.permute.xlu0 0
        %5425 = vperm.xlu0 %5424, %v5343
        %v5426 = vpop.permute.xlu0 %5425
        %5429 = vset.pattern.permute.xlu0 0
        %5430 = vperm.xlu0 %5429, %v5344
        %v5431 = vpop.permute.xlu0 %5430
        %5434 = vset.pattern.permute.xlu0 0
        %5435 = vperm.xlu0 %5434, %v5345
        %v5436 = vpop.permute.xlu0 %5435
        %5439 = vset.pattern.permute.xlu0 0
        %5440 = vperm.xlu0 %5439, %v5346
        %v5441 = vpop.permute.xlu0 %5440
        %5444 = vset.pattern.permute.xlu0 0
        %5445 = vperm.xlu0 %5444, %v5347
        %v5446 = vpop.permute.xlu0 %5445
        %5449 = vset.pattern.permute.xlu0 0
        %5450 = vperm.xlu0 %5449, %v5348
        %v5451 = vpop.permute.xlu0 %5450
        %5454 = vset.pattern.permute.xlu0 0
        %5455 = vperm.xlu0 %5454, %v5349
        %v5456 = vpop.permute.xlu0 %5455
        %5459 = vset.pattern.permute.xlu0 0
        %5460 = vperm.xlu0 %5459, %v5350
        %v5461 = vpop.permute.xlu0 %5460
        %5464 = vset.pattern.permute.xlu0 0
        %5465 = vperm.xlu0 %5464, %v5351
        %v5466 = vpop.permute.xlu0 %5465
        %5469 = vset.pattern.permute.xlu0 0
        %5470 = vperm.xlu0 %5469, %v5352
        %v5471 = vpop.permute.xlu0 %5470
        %5474 = vset.pattern.permute.xlu0 0
        %5475 = vperm.xlu0 %5474, %v5353
        %v5476 = vpop.permute.xlu0 %5475
        %5479 = vset.pattern.permute.xlu0 0
        %5480 = vperm.xlu0 %5479, %v5354
        %v5481 = vpop.permute.xlu0 %5480
        %5484 = vset.pattern.permute.xlu0 0
        %5485 = vperm.xlu0 %5484, %v5355
        %v5486 = vpop.permute.xlu0 %5485
        %5489 = vset.pattern.permute.xlu0 0
        %5490 = vperm.xlu0 %5489, %v5356
        %v5491 = vpop.permute.xlu0 %5490
        %5494 = vset.pattern.permute.xlu0 0
        %5495 = vperm.xlu0 %5494, %v5357
        %v5496 = vpop.permute.xlu0 %5495
        %5499 = vset.pattern.permute.xlu0 0
        %5500 = vperm.xlu0 %5499, %v5358
        %v5501 = vpop.permute.xlu0 %5500
        %5504 = vset.pattern.permute.xlu0 0
        %5505 = vperm.xlu0 %5504, %v5359
        %v5506 = vpop.permute.xlu0 %5505
        %5509 = vset.pattern.permute.xlu0 0
        %5510 = vperm.xlu0 %5509, %v5360
        %v5511 = vpop.permute.xlu0 %5510
        %5514 = vset.pattern.permute.xlu0 0
        %5515 = vperm.xlu0 %5514, %v5361
        %v5516 = vpop.permute.xlu0 %5515
        %5519 = vset.pattern.permute.xlu0 0
        %5520 = vperm.xlu0 %5519, %v5362
        %v5521 = vpop.permute.xlu0 %5520
        %v5587 = vunpack.c.l.b16 %v5203
        %v5588 = vunpack.c.h.b16 %v5203
        %v5589 = vunpack.c.l.b16 %v5204
        %v5590 = vunpack.c.h.b16 %v5204
        %v5591 = vunpack.c.l.b16 %v5205
        %v5592 = vunpack.c.h.b16 %v5205
        %v5593 = vunpack.c.l.b16 %v5206
        %v5594 = vunpack.c.h.b16 %v5206
        %v5595 = vunpack.c.l.b16 %v5207
        %v5596 = vunpack.c.h.b16 %v5207
        %v5597 = vunpack.c.l.b16 %v5208
        %v5598 = vunpack.c.h.b16 %v5208
        %v5599 = vunpack.c.l.b16 %v5209
        %v5600 = vunpack.c.h.b16 %v5209
        %v5601 = vunpack.c.l.b16 %v5210
        %v5602 = vunpack.c.h.b16 %v5210
        %v5603 = vunpack.c.l.b16 %v5211
        %v5604 = vunpack.c.h.b16 %v5211
        %v5605 = vunpack.c.l.b16 %v5212
        %v5606 = vunpack.c.h.b16 %v5212
        %v5607 = vunpack.c.l.b16 %v5213
        %v5608 = vunpack.c.h.b16 %v5213
        %v5609 = vunpack.c.l.b16 %v5214
        %v5610 = vunpack.c.h.b16 %v5214
        %v5611 = vunpack.c.l.b16 %v5215
        %v5612 = vunpack.c.h.b16 %v5215
        %v5613 = vunpack.c.l.b16 %v5216
        %v5614 = vunpack.c.h.b16 %v5216
        %v5615 = vunpack.c.l.b16 %v5217
        %v5616 = vunpack.c.h.b16 %v5217
        %v5617 = vunpack.c.l.b16 %v5218
        %v5618 = vunpack.c.h.b16 %v5218
        %v5619 = vunpack.c.l.b16 %v5219
        %v5620 = vunpack.c.h.b16 %v5219
        %v5621 = vunpack.c.l.b16 %v5220
        %v5622 = vunpack.c.h.b16 %v5220
        %v5623 = vunpack.c.l.b16 %v5221
        %v5624 = vunpack.c.h.b16 %v5221
        %v5625 = vunpack.c.l.b16 %v5222
        %v5626 = vunpack.c.h.b16 %v5222
        %v5627 = vunpack.c.l.b16 %v5223
        %v5628 = vunpack.c.h.b16 %v5223
        %v5629 = vunpack.c.l.b16 %v5224
        %v5630 = vunpack.c.h.b16 %v5224
        %v5631 = vunpack.c.l.b16 %v5225
        %v5632 = vunpack.c.h.b16 %v5225
        %v5633 = vunpack.c.l.b16 %v5226
        %v5634 = vunpack.c.h.b16 %v5226
        %v5635 = vunpack.c.l.b16 %v5227
        %v5636 = vunpack.c.h.b16 %v5227
        %v5637 = vunpack.c.l.b16 %v5228
        %v5638 = vunpack.c.h.b16 %v5228
        %v5639 = vunpack.c.l.b16 %v5229
        %v5640 = vunpack.c.h.b16 %v5229
        %v5641 = vunpack.c.l.b16 %v5230
        %v5642 = vunpack.c.h.b16 %v5230
        %v5643 = vunpack.c.l.b16 %v5231
        %v5644 = vunpack.c.h.b16 %v5231
        %v5645 = vunpack.c.l.b16 %v5232
        %v5646 = vunpack.c.h.b16 %v5232
        %v5647 = vunpack.c.l.b16 %v5233
        %v5648 = vunpack.c.h.b16 %v5233
        %v5649 = vunpack.c.l.b16 %v5234
        %v5650 = vunpack.c.h.b16 %v5234
        %v5651 = vunpack.c.l.b16 %v5235
        %v5652 = vunpack.c.h.b16 %v5235
        %v5653 = vunpack.c.l.b16 %v5236
        %v5654 = vunpack.c.h.b16 %v5236
        %v5655 = vunpack.c.l.b16 %v5237
        %v5656 = vunpack.c.h.b16 %v5237
        %v5657 = vunpack.c.l.b16 %v5238
        %v5658 = vunpack.c.h.b16 %v5238
        %v5659 = vunpack.c.l.b16 %v5239
        %v5660 = vunpack.c.h.b16 %v5239
        %v5661 = vunpack.c.l.b16 %v5240
        %v5662 = vunpack.c.h.b16 %v5240
        %v5663 = vunpack.c.l.b16 %v5241
        %v5664 = vunpack.c.h.b16 %v5241
        %v5665 = vunpack.c.l.b16 %v5242
        %v5666 = vunpack.c.h.b16 %v5242
        %v5667 = vunpack.c.l.b16 %v5243
        %v5668 = vunpack.c.h.b16 %v5243
        %v5669 = vunpack.c.l.b16 %v5244
        %v5670 = vunpack.c.h.b16 %v5244
        %v5671 = vunpack.c.l.b16 %v5245
        %v5672 = vunpack.c.h.b16 %v5245
        %v5673 = vunpack.c.l.b16 %v5246
        %v5674 = vunpack.c.h.b16 %v5246
        %v5675 = vunpack.c.l.b16 %v5247
        %v5676 = vunpack.c.h.b16 %v5247
        %v5677 = vunpack.c.l.b16 %v5248
        %v5678 = vunpack.c.h.b16 %v5248
        %v5679 = vunpack.c.l.b16 %v5249
        %v5680 = vunpack.c.h.b16 %v5249
        %v5681 = vunpack.c.l.b16 %v5250
        %v5682 = vunpack.c.h.b16 %v5250
        %v5683 = vunpack.c.l.b16 %v5251
        %v5684 = vunpack.c.h.b16 %v5251
        %v5685 = vunpack.c.l.b16 %v5252
        %v5686 = vunpack.c.h.b16 %v5252
        %v5687 = vunpack.c.l.b16 %v5253
        %v5688 = vunpack.c.h.b16 %v5253
        %v5689 = vunpack.c.l.b16 %v5254
        %v5690 = vunpack.c.h.b16 %v5254
        %v5691 = vunpack.c.l.b16 %v5255
        %v5692 = vunpack.c.h.b16 %v5255
        %v5693 = vunpack.c.l.b16 %v5256
        %v5694 = vunpack.c.h.b16 %v5256
        %v5695 = vunpack.c.l.b16 %v5257
        %v5696 = vunpack.c.h.b16 %v5257
        %v5697 = vunpack.c.l.b16 %v5258
        %v5698 = vunpack.c.h.b16 %v5258
        %v5699 = vunpack.c.l.b16 %v5259
        %v5700 = vunpack.c.h.b16 %v5259
        %v5701 = vunpack.c.l.b16 %v5260
        %v5702 = vunpack.c.h.b16 %v5260
        %v5703 = vunpack.c.l.b16 %v5261
        %v5704 = vunpack.c.h.b16 %v5261
        %v5705 = vunpack.c.l.b16 %v5262
        %v5706 = vunpack.c.h.b16 %v5262
        %v5707 = vunpack.c.l.b16 %v5263
        %v5708 = vunpack.c.h.b16 %v5263
        %v5709 = vunpack.c.l.b16 %v5264
        %v5710 = vunpack.c.h.b16 %v5264
        %v5711 = vunpack.c.l.b16 %v5265
        %v5712 = vunpack.c.h.b16 %v5265
        %v5713 = vunpack.c.l.b16 %v5266
        %v5714 = vunpack.c.h.b16 %v5266
        %v5715 = vpack.c.b16 %v5591, %v5587
        %v5716 = vpack.c.b16 %v5592, %v5588
        %v5717 = vpack.c.b16 %v5593, %v5589
        %v5718 = vpack.c.b16 %v5594, %v5590
        %v5719 = vpack.c.b16 %v5599, %v5595
        %v5720 = vpack.c.b16 %v5600, %v5596
        %v5721 = vpack.c.b16 %v5601, %v5597
        %v5722 = vpack.c.b16 %v5602, %v5598
        %v5723 = vpack.c.b16 %v5607, %v5603
        %v5724 = vpack.c.b16 %v5608, %v5604
        %v5725 = vpack.c.b16 %v5609, %v5605
        %v5726 = vpack.c.b16 %v5610, %v5606
        %v5727 = vpack.c.b16 %v5615, %v5611
        %v5728 = vpack.c.b16 %v5616, %v5612
        %v5729 = vpack.c.b16 %v5617, %v5613
        %v5730 = vpack.c.b16 %v5618, %v5614
        %v5731 = vpack.c.b16 %v5623, %v5619
        %v5732 = vpack.c.b16 %v5624, %v5620
        %v5733 = vpack.c.b16 %v5625, %v5621
        %v5734 = vpack.c.b16 %v5626, %v5622
        %v5735 = vpack.c.b16 %v5631, %v5627
        %v5736 = vpack.c.b16 %v5632, %v5628
        %v5737 = vpack.c.b16 %v5633, %v5629
        %v5738 = vpack.c.b16 %v5634, %v5630
        %v5739 = vpack.c.b16 %v5639, %v5635
        %v5740 = vpack.c.b16 %v5640, %v5636
        %v5741 = vpack.c.b16 %v5641, %v5637
        %v5742 = vpack.c.b16 %v5642, %v5638
        %v5743 = vpack.c.b16 %v5647, %v5643
        %v5744 = vpack.c.b16 %v5648, %v5644
        %v5745 = vpack.c.b16 %v5649, %v5645
        %v5746 = vpack.c.b16 %v5650, %v5646
        %v5747 = vpack.c.b16 %v5655, %v5651
        %v5748 = vpack.c.b16 %v5656, %v5652
        %v5749 = vpack.c.b16 %v5657, %v5653
        %v5750 = vpack.c.b16 %v5658, %v5654
        %v5751 = vpack.c.b16 %v5663, %v5659
        %v5752 = vpack.c.b16 %v5664, %v5660
        %v5753 = vpack.c.b16 %v5665, %v5661
        %v5754 = vpack.c.b16 %v5666, %v5662
        %v5755 = vpack.c.b16 %v5671, %v5667
        %v5756 = vpack.c.b16 %v5672, %v5668
        %v5757 = vpack.c.b16 %v5673, %v5669
        %v5758 = vpack.c.b16 %v5674, %v5670
        %v5759 = vpack.c.b16 %v5679, %v5675
        %v5760 = vpack.c.b16 %v5680, %v5676
        %v5761 = vpack.c.b16 %v5681, %v5677
        %v5762 = vpack.c.b16 %v5682, %v5678
        %v5763 = vpack.c.b16 %v5687, %v5683
        %v5764 = vpack.c.b16 %v5688, %v5684
        %v5765 = vpack.c.b16 %v5689, %v5685
        %v5766 = vpack.c.b16 %v5690, %v5686
        %v5767 = vpack.c.b16 %v5695, %v5691
        %v5768 = vpack.c.b16 %v5696, %v5692
        %v5769 = vpack.c.b16 %v5697, %v5693
        %v5770 = vpack.c.b16 %v5698, %v5694
        %v5771 = vpack.c.b16 %v5703, %v5699
        %v5772 = vpack.c.b16 %v5704, %v5700
        %v5773 = vpack.c.b16 %v5705, %v5701
        %v5774 = vpack.c.b16 %v5706, %v5702
        %v5775 = vpack.c.b16 %v5711, %v5707
        %v5776 = vpack.c.b16 %v5712, %v5708
        %v5777 = vpack.c.b16 %v5713, %v5709
        %v5778 = vpack.c.b16 %v5714, %v5710
        %5843 = vmatpush.bf16.xpose.msra.mxu0 %v5295
        %5844 = vmatpush.bf16.xpose.msra.mxu0 %v5291
        %5845 = vmatpush.bf16.xpose.msra.mxu0 %v5287
        %5846 = vmatpush.bf16.xpose.msra.mxu0 %v5283
        %5847 = vmatpush.bf16.xpose.msra.mxu0 %v5279
        %5848 = vmatpush.bf16.xpose.msra.mxu0 %v5275
        %5849 = vmatpush.bf16.xpose.msra.mxu0 %v5271
        %5850 = vmatpush.bf16.xpose.msra.mxu0 %v5267
        %5851 = vmatmul.bf16.gmra.mxu0 %v5715
        %v5852 = vpop.f32.mrf.mxu0
        %v5853 = vadd.f32 %v5366, %v5852
        %v5854 = vpop.f32.mrf.mxu0
        %v5855 = vadd.f32 %v5371, %v5854
        %5856 = vmatmul.bf16.gmra.mxu0 %v5719
        %v5857 = vpop.f32.mrf.mxu0
        %v5858 = vadd.f32 %v5376, %v5857
        %v5859 = vpop.f32.mrf.mxu0
        %v5860 = vadd.f32 %v5381, %v5859
        %5861 = vmatmul.bf16.gmra.mxu0 %v5723
        %v5862 = vpop.f32.mrf.mxu0
        %v5863 = vadd.f32 %v5386, %v5862
        %v5864 = vpop.f32.mrf.mxu0
        %v5865 = vadd.f32 %v5391, %v5864
        %5866 = vmatmul.bf16.gmra.mxu0 %v5727
        %v5867 = vpop.f32.mrf.mxu0
        %v5868 = vadd.f32 %v5396, %v5867
        %v5869 = vpop.f32.mrf.mxu0
        %v5870 = vadd.f32 %v5401, %v5869
        %5871 = vmatmul.bf16.gmra.mxu0 %v5731
        %v5872 = vpop.f32.mrf.mxu0
        %v5873 = vadd.f32 %v5406, %v5872
        %v5874 = vpop.f32.mrf.mxu0
        %v5875 = vadd.f32 %v5411, %v5874
        %5876 = vmatmul.bf16.gmra.mxu0 %v5735
        %v5877 = vpop.f32.mrf.mxu0
        %v5878 = vadd.f32 %v5416, %v5877
        %v5879 = vpop.f32.mrf.mxu0
        %v5880 = vadd.f32 %v5421, %v5879
        %5881 = vmatmul.bf16.gmra.mxu0 %v5739
        %v5882 = vpop.f32.mrf.mxu0
        %v5883 = vadd.f32 %v5426, %v5882
        %v5884 = vpop.f32.mrf.mxu0
        %v5885 = vadd.f32 %v5431, %v5884
        %5886 = vmatmul.bf16.gmra.mxu0 %v5743
        %v5887 = vpop.f32.mrf.mxu0
        %v5888 = vadd.f32 %v5436, %v5887
        %v5889 = vpop.f32.mrf.mxu0
        %v5890 = vadd.f32 %v5441, %v5889
        %5891 = vmatmul.bf16.gmra.mxu0 %v5747
        %v5892 = vpop.f32.mrf.mxu0
        %v5893 = vadd.f32 %v5446, %v5892
        %v5894 = vpop.f32.mrf.mxu0
        %v5895 = vadd.f32 %v5451, %v5894
        %5896 = vmatmul.bf16.gmra.mxu0 %v5751
        %v5897 = vpop.f32.mrf.mxu0
        %v5898 = vadd.f32 %v5456, %v5897
        %v5899 = vpop.f32.mrf.mxu0
        %v5900 = vadd.f32 %v5461, %v5899
        %5901 = vmatmul.bf16.gmra.mxu0 %v5755
        %v5902 = vpop.f32.mrf.mxu0
        %v5903 = vadd.f32 %v5466, %v5902
        %v5904 = vpop.f32.mrf.mxu0
        %v5905 = vadd.f32 %v5471, %v5904
        %5906 = vmatmul.bf16.gmra.mxu0 %v5759
        %v5907 = vpop.f32.mrf.mxu0
        %v5908 = vadd.f32 %v5476, %v5907
        %v5909 = vpop.f32.mrf.mxu0
        %v5910 = vadd.f32 %v5481, %v5909
        %5911 = vmatmul.bf16.gmra.mxu0 %v5763
        %v5912 = vpop.f32.mrf.mxu0
        %v5913 = vadd.f32 %v5486, %v5912
        %v5914 = vpop.f32.mrf.mxu0
        %v5915 = vadd.f32 %v5491, %v5914
        %5916 = vmatmul.bf16.gmra.mxu0 %v5767
        %v5917 = vpop.f32.mrf.mxu0
        %v5918 = vadd.f32 %v5496, %v5917
        %v5919 = vpop.f32.mrf.mxu0
        %v5920 = vadd.f32 %v5501, %v5919
        %5921 = vmatmul.bf16.gmra.mxu0 %v5771
        %v5922 = vpop.f32.mrf.mxu0
        %v5923 = vadd.f32 %v5506, %v5922
        %v5924 = vpop.f32.mrf.mxu0
        %v5925 = vadd.f32 %v5511, %v5924
        %5926 = vmatmul.bf16.gmra.mxu0 %v5775
        %v5927 = vpop.f32.mrf.mxu0
        %v5928 = vadd.f32 %v5516, %v5927
        %v5929 = vpop.f32.mrf.mxu0
        %v5930 = vadd.f32 %v5521, %v5929
        %5931 = vdwg.mxu0
        %5932 = vmatpush.bf16.xpose.msra.mxu0 %v5296
        %5933 = vmatpush.bf16.xpose.msra.mxu0 %v5292
        %5934 = vmatpush.bf16.xpose.msra.mxu0 %v5288
        %5935 = vmatpush.bf16.xpose.msra.mxu0 %v5284
        %5936 = vmatpush.bf16.xpose.msra.mxu0 %v5280
        %5937 = vmatpush.bf16.xpose.msra.mxu0 %v5276
        %5938 = vmatpush.bf16.xpose.msra.mxu0 %v5272
        %5939 = vmatpush.bf16.xpose.msra.mxu0 %v5268
        %5940 = vmatmul.bf16.gmra.mxu0 %v5716
        %v5941 = vpop.f32.mrf.mxu0
        %v5942 = vadd.f32 %v5853, %v5941
        %v5943 = vpop.f32.mrf.mxu0
        %v5944 = vadd.f32 %v5855, %v5943
        %5945 = vmatmul.bf16.gmra.mxu0 %v5720
        %v5946 = vpop.f32.mrf.mxu0
        %v5947 = vadd.f32 %v5858, %v5946
        %v5948 = vpop.f32.mrf.mxu0
        %v5949 = vadd.f32 %v5860, %v5948
        %5950 = vmatmul.bf16.gmra.mxu0 %v5724
        %v5951 = vpop.f32.mrf.mxu0
        %v5952 = vadd.f32 %v5863, %v5951
        %v5953 = vpop.f32.mrf.mxu0
        %v5954 = vadd.f32 %v5865, %v5953
        %5955 = vmatmul.bf16.gmra.mxu0 %v5728
        %v5956 = vpop.f32.mrf.mxu0
        %v5957 = vadd.f32 %v5868, %v5956
        %v5958 = vpop.f32.mrf.mxu0
        %v5959 = vadd.f32 %v5870, %v5958
        %5960 = vmatmul.bf16.gmra.mxu0 %v5732
        %v5961 = vpop.f32.mrf.mxu0
        %v5962 = vadd.f32 %v5873, %v5961
        %v5963 = vpop.f32.mrf.mxu0
        %v5964 = vadd.f32 %v5875, %v5963
        %5965 = vmatmul.bf16.gmra.mxu0 %v5736
        %v5966 = vpop.f32.mrf.mxu0
        %v5967 = vadd.f32 %v5878, %v5966
        %v5968 = vpop.f32.mrf.mxu0
        %v5969 = vadd.f32 %v5880, %v5968
        %5970 = vmatmul.bf16.gmra.mxu0 %v5740
        %v5971 = vpop.f32.mrf.mxu0
        %v5972 = vadd.f32 %v5883, %v5971
        %v5973 = vpop.f32.mrf.mxu0
        %v5974 = vadd.f32 %v5885, %v5973
        %5975 = vmatmul.bf16.gmra.mxu0 %v5744
        %v5976 = vpop.f32.mrf.mxu0
        %v5977 = vadd.f32 %v5888, %v5976
        %v5978 = vpop.f32.mrf.mxu0
        %v5979 = vadd.f32 %v5890, %v5978
        %5980 = vmatmul.bf16.gmra.mxu0 %v5748
        %v5981 = vpop.f32.mrf.mxu0
        %v5982 = vadd.f32 %v5893, %v5981
        %v5983 = vpop.f32.mrf.mxu0
        %v5984 = vadd.f32 %v5895, %v5983
        %5985 = vmatmul.bf16.gmra.mxu0 %v5752
        %v5986 = vpop.f32.mrf.mxu0
        %v5987 = vadd.f32 %v5898, %v5986
        %v5988 = vpop.f32.mrf.mxu0
        %v5989 = vadd.f32 %v5900, %v5988
        %5990 = vmatmul.bf16.gmra.mxu0 %v5756
        %v5991 = vpop.f32.mrf.mxu0
        %v5992 = vadd.f32 %v5903, %v5991
        %v5993 = vpop.f32.mrf.mxu0
        %v5994 = vadd.f32 %v5905, %v5993
        %5995 = vmatmul.bf16.gmra.mxu0 %v5760
        %v5996 = vpop.f32.mrf.mxu0
        %v5997 = vadd.f32 %v5908, %v5996
        %v5998 = vpop.f32.mrf.mxu0
        %v5999 = vadd.f32 %v5910, %v5998
        %6000 = vmatmul.bf16.gmra.mxu0 %v5764
        %v6001 = vpop.f32.mrf.mxu0
        %v6002 = vadd.f32 %v5913, %v6001
        %v6003 = vpop.f32.mrf.mxu0
        %v6004 = vadd.f32 %v5915, %v6003
        %6005 = vmatmul.bf16.gmra.mxu0 %v5768
        %v6006 = vpop.f32.mrf.mxu0
        %v6007 = vadd.f32 %v5918, %v6006
        %v6008 = vpop.f32.mrf.mxu0
        %v6009 = vadd.f32 %v5920, %v6008
        %6010 = vmatmul.bf16.gmra.mxu0 %v5772
        %v6011 = vpop.f32.mrf.mxu0
        %v6012 = vadd.f32 %v5923, %v6011
        %v6013 = vpop.f32.mrf.mxu0
        %v6014 = vadd.f32 %v5925, %v6013
        %6015 = vmatmul.bf16.gmra.mxu0 %v5776
        %v6016 = vpop.f32.mrf.mxu0
        %v6017 = vadd.f32 %v5928, %v6016
        %v6018 = vpop.f32.mrf.mxu0
        %v6019 = vadd.f32 %v5930, %v6018
        %6020 = vdwg.mxu0
        %6021 = vmatpush.bf16.xpose.msra.mxu0 %v5297
        %6022 = vmatpush.bf16.xpose.msra.mxu0 %v5293
        %6023 = vmatpush.bf16.xpose.msra.mxu0 %v5289
        %6024 = vmatpush.bf16.xpose.msra.mxu0 %v5285
        %6025 = vmatpush.bf16.xpose.msra.mxu0 %v5281
        %6026 = vmatpush.bf16.xpose.msra.mxu0 %v5277
        %6027 = vmatpush.bf16.xpose.msra.mxu0 %v5273
        %6028 = vmatpush.bf16.xpose.msra.mxu0 %v5269
        %6029 = vmatmul.bf16.gmra.mxu0 %v5717
        %v6030 = vpop.f32.mrf.mxu0
        %v6031 = vadd.f32 %v5942, %v6030
        %v6032 = vpop.f32.mrf.mxu0
        %v6033 = vadd.f32 %v5944, %v6032
        %6034 = vmatmul.bf16.gmra.mxu0 %v5721
        %v6035 = vpop.f32.mrf.mxu0
        %v6036 = vadd.f32 %v5947, %v6035
        %v6037 = vpop.f32.mrf.mxu0
        %v6038 = vadd.f32 %v5949, %v6037
        %6039 = vmatmul.bf16.gmra.mxu0 %v5725
        %v6040 = vpop.f32.mrf.mxu0
        %v6041 = vadd.f32 %v5952, %v6040
        %v6042 = vpop.f32.mrf.mxu0
        %v6043 = vadd.f32 %v5954, %v6042
        %6044 = vmatmul.bf16.gmra.mxu0 %v5729
        %v6045 = vpop.f32.mrf.mxu0
        %v6046 = vadd.f32 %v5957, %v6045
        %v6047 = vpop.f32.mrf.mxu0
        %v6048 = vadd.f32 %v5959, %v6047
        %6049 = vmatmul.bf16.gmra.mxu0 %v5733
        %v6050 = vpop.f32.mrf.mxu0
        %v6051 = vadd.f32 %v5962, %v6050
        %v6052 = vpop.f32.mrf.mxu0
        %v6053 = vadd.f32 %v5964, %v6052
        %6054 = vmatmul.bf16.gmra.mxu0 %v5737
        %v6055 = vpop.f32.mrf.mxu0
        %v6056 = vadd.f32 %v5967, %v6055
        %v6057 = vpop.f32.mrf.mxu0
        %v6058 = vadd.f32 %v5969, %v6057
        %6059 = vmatmul.bf16.gmra.mxu0 %v5741
        %v6060 = vpop.f32.mrf.mxu0
        %v6061 = vadd.f32 %v5972, %v6060
        %v6062 = vpop.f32.mrf.mxu0
        %v6063 = vadd.f32 %v5974, %v6062
        %6064 = vmatmul.bf16.gmra.mxu0 %v5745
        %v6065 = vpop.f32.mrf.mxu0
        %v6066 = vadd.f32 %v5977, %v6065
        %v6067 = vpop.f32.mrf.mxu0
        %v6068 = vadd.f32 %v5979, %v6067
        %6069 = vmatmul.bf16.gmra.mxu0 %v5749
        %v6070 = vpop.f32.mrf.mxu0
        %v6071 = vadd.f32 %v5982, %v6070
        %v6072 = vpop.f32.mrf.mxu0
        %v6073 = vadd.f32 %v5984, %v6072
        %6074 = vmatmul.bf16.gmra.mxu0 %v5753
        %v6075 = vpop.f32.mrf.mxu0
        %v6076 = vadd.f32 %v5987, %v6075
        %v6077 = vpop.f32.mrf.mxu0
        %v6078 = vadd.f32 %v5989, %v6077
        %6079 = vmatmul.bf16.gmra.mxu0 %v5757
        %v6080 = vpop.f32.mrf.mxu0
        %v6081 = vadd.f32 %v5992, %v6080
        %v6082 = vpop.f32.mrf.mxu0
        %v6083 = vadd.f32 %v5994, %v6082
        %6084 = vmatmul.bf16.gmra.mxu0 %v5761
        %v6085 = vpop.f32.mrf.mxu0
        %v6086 = vadd.f32 %v5997, %v6085
        %v6087 = vpop.f32.mrf.mxu0
        %v6088 = vadd.f32 %v5999, %v6087
        %6089 = vmatmul.bf16.gmra.mxu0 %v5765
        %v6090 = vpop.f32.mrf.mxu0
        %v6091 = vadd.f32 %v6002, %v6090
        %v6092 = vpop.f32.mrf.mxu0
        %v6093 = vadd.f32 %v6004, %v6092
        %6094 = vmatmul.bf16.gmra.mxu0 %v5769
        %v6095 = vpop.f32.mrf.mxu0
        %v6096 = vadd.f32 %v6007, %v6095
        %v6097 = vpop.f32.mrf.mxu0
        %v6098 = vadd.f32 %v6009, %v6097
        %6099 = vmatmul.bf16.gmra.mxu0 %v5773
        %v6100 = vpop.f32.mrf.mxu0
        %v6101 = vadd.f32 %v6012, %v6100
        %v6102 = vpop.f32.mrf.mxu0
        %v6103 = vadd.f32 %v6014, %v6102
        %6104 = vmatmul.bf16.gmra.mxu0 %v5777
        %v6105 = vpop.f32.mrf.mxu0
        %v6106 = vadd.f32 %v6017, %v6105
        %v6107 = vpop.f32.mrf.mxu0
        %v6108 = vadd.f32 %v6019, %v6107
        %6109 = vdwg.mxu0
        %6110 = vmatpush.bf16.xpose.msra.mxu0 %v5298
        %6111 = vmatpush.bf16.xpose.msra.mxu0 %v5294
        %6112 = vmatpush.bf16.xpose.msra.mxu0 %v5290
        %6113 = vmatpush.bf16.xpose.msra.mxu0 %v5286
        %6114 = vmatpush.bf16.xpose.msra.mxu0 %v5282
        %6115 = vmatpush.bf16.xpose.msra.mxu0 %v5278
        %6116 = vmatpush.bf16.xpose.msra.mxu0 %v5274
        %6117 = vmatpush.bf16.xpose.msra.mxu0 %v5270
        %6118 = vmatmul.bf16.gmra.mxu0 %v5718
        %v6119 = vpop.f32.mrf.mxu0
        %v6120 = vadd.f32 %v6031, %v6119
        %v6121 = vpop.f32.mrf.mxu0
        %v6122 = vadd.f32 %v6033, %v6121
        %6123 = vmatmul.bf16.gmra.mxu0 %v5722
        %v6124 = vpop.f32.mrf.mxu0
        %v6125 = vadd.f32 %v6036, %v6124
        %v6126 = vpop.f32.mrf.mxu0
        %v6127 = vadd.f32 %v6038, %v6126
        %6128 = vmatmul.bf16.gmra.mxu0 %v5726
        %v6129 = vpop.f32.mrf.mxu0
        %v6130 = vadd.f32 %v6041, %v6129
        %v6131 = vpop.f32.mrf.mxu0
        %v6132 = vadd.f32 %v6043, %v6131
        %6133 = vmatmul.bf16.gmra.mxu0 %v5730
        %v6134 = vpop.f32.mrf.mxu0
        %v6135 = vadd.f32 %v6046, %v6134
        %v6136 = vpop.f32.mrf.mxu0
        %v6137 = vadd.f32 %v6048, %v6136
        %6138 = vmatmul.bf16.gmra.mxu0 %v5734
        %v6139 = vpop.f32.mrf.mxu0
        %v6140 = vadd.f32 %v6051, %v6139
        %v6141 = vpop.f32.mrf.mxu0
        %v6142 = vadd.f32 %v6053, %v6141
        %6143 = vmatmul.bf16.gmra.mxu0 %v5738
        %v6144 = vpop.f32.mrf.mxu0
        %v6145 = vadd.f32 %v6056, %v6144
        %v6146 = vpop.f32.mrf.mxu0
        %v6147 = vadd.f32 %v6058, %v6146
        %6148 = vmatmul.bf16.gmra.mxu0 %v5742
        %v6149 = vpop.f32.mrf.mxu0
        %v6150 = vadd.f32 %v6061, %v6149
        %v6151 = vpop.f32.mrf.mxu0
        %v6152 = vadd.f32 %v6063, %v6151
        %6153 = vmatmul.bf16.gmra.mxu0 %v5746
        %v6154 = vpop.f32.mrf.mxu0
        %v6155 = vadd.f32 %v6066, %v6154
        %v6156 = vpop.f32.mrf.mxu0
        %v6157 = vadd.f32 %v6068, %v6156
        %6158 = vmatmul.bf16.gmra.mxu0 %v5750
        %v6159 = vpop.f32.mrf.mxu0
        %v6160 = vadd.f32 %v6071, %v6159
        %v6161 = vpop.f32.mrf.mxu0
        %v6162 = vadd.f32 %v6073, %v6161
        %6163 = vmatmul.bf16.gmra.mxu0 %v5754
        %v6164 = vpop.f32.mrf.mxu0
        %v6165 = vadd.f32 %v6076, %v6164
        %v6166 = vpop.f32.mrf.mxu0
        %v6167 = vadd.f32 %v6078, %v6166
        %6168 = vmatmul.bf16.gmra.mxu0 %v5758
        %v6169 = vpop.f32.mrf.mxu0
        %v6170 = vadd.f32 %v6081, %v6169
        %v6171 = vpop.f32.mrf.mxu0
        %v6172 = vadd.f32 %v6083, %v6171
        %6173 = vmatmul.bf16.gmra.mxu0 %v5762
        %v6174 = vpop.f32.mrf.mxu0
        %v6175 = vadd.f32 %v6086, %v6174
        %v6176 = vpop.f32.mrf.mxu0
        %v6177 = vadd.f32 %v6088, %v6176
        %6178 = vmatmul.bf16.gmra.mxu0 %v5766
        %v6179 = vpop.f32.mrf.mxu0
        %v6180 = vadd.f32 %v6091, %v6179
        %v6181 = vpop.f32.mrf.mxu0
        %v6182 = vadd.f32 %v6093, %v6181
        %6183 = vmatmul.bf16.gmra.mxu0 %v5770
        %v6184 = vpop.f32.mrf.mxu0
        %v6185 = vadd.f32 %v6096, %v6184
        %v6186 = vpop.f32.mrf.mxu0
        %v6187 = vadd.f32 %v6098, %v6186
        %6188 = vmatmul.bf16.gmra.mxu0 %v5774
        %v6189 = vpop.f32.mrf.mxu0
        %v6190 = vadd.f32 %v6101, %v6189
        %v6191 = vpop.f32.mrf.mxu0
        %v6192 = vadd.f32 %v6103, %v6191
        %6193 = vmatmul.bf16.gmra.mxu0 %v5778
        %v6194 = vpop.f32.mrf.mxu0
        %v6195 = vadd.f32 %v6106, %v6194
        %v6196 = vpop.f32.mrf.mxu0
        %v6197 = vadd.f32 %v6108, %v6196
        %6198 = vdwg.mxu0
        %6199 = vmatpush.bf16.xpose.msra.mxu0 %v5327
        %6200 = vmatpush.bf16.xpose.msra.mxu0 %v5323
        %6201 = vmatpush.bf16.xpose.msra.mxu0 %v5319
        %6202 = vmatpush.bf16.xpose.msra.mxu0 %v5315
        %6203 = vmatpush.bf16.xpose.msra.mxu0 %v5311
        %6204 = vmatpush.bf16.xpose.msra.mxu0 %v5307
        %6205 = vmatpush.bf16.xpose.msra.mxu0 %v5303
        %6206 = vmatpush.bf16.xpose.msra.mxu0 %v5299
        %6207 = vmatmul.bf16.gmra.mxu0 %v5715
        %v6208 = vpop.f32.mrf.mxu0
        %v6209 = vadd.f32 %v5366, %v6208
        %v6210 = vpop.f32.mrf.mxu0
        %v6211 = vadd.f32 %v5371, %v6210
        %6212 = vmatmul.bf16.gmra.mxu0 %v5719
        %v6213 = vpop.f32.mrf.mxu0
        %v6214 = vadd.f32 %v5376, %v6213
        %v6215 = vpop.f32.mrf.mxu0
        %v6216 = vadd.f32 %v5381, %v6215
        %6217 = vmatmul.bf16.gmra.mxu0 %v5723
        %v6218 = vpop.f32.mrf.mxu0
        %v6219 = vadd.f32 %v5386, %v6218
        %v6220 = vpop.f32.mrf.mxu0
        %v6221 = vadd.f32 %v5391, %v6220
        %6222 = vmatmul.bf16.gmra.mxu0 %v5727
        %v6223 = vpop.f32.mrf.mxu0
        %v6224 = vadd.f32 %v5396, %v6223
        %v6225 = vpop.f32.mrf.mxu0
        %v6226 = vadd.f32 %v5401, %v6225
        %6227 = vmatmul.bf16.gmra.mxu0 %v5731
        %v6228 = vpop.f32.mrf.mxu0
        %v6229 = vadd.f32 %v5406, %v6228
        %v6230 = vpop.f32.mrf.mxu0
        %v6231 = vadd.f32 %v5411, %v6230
        %6232 = vmatmul.bf16.gmra.mxu0 %v5735
        %v6233 = vpop.f32.mrf.mxu0
        %v6234 = vadd.f32 %v5416, %v6233
        %v6235 = vpop.f32.mrf.mxu0
        %v6236 = vadd.f32 %v5421, %v6235
        %6237 = vmatmul.bf16.gmra.mxu0 %v5739
        %v6238 = vpop.f32.mrf.mxu0
        %v6239 = vadd.f32 %v5426, %v6238
        %v6240 = vpop.f32.mrf.mxu0
        %v6241 = vadd.f32 %v5431, %v6240
        %6242 = vmatmul.bf16.gmra.mxu0 %v5743
        %v6243 = vpop.f32.mrf.mxu0
        %v6244 = vadd.f32 %v5436, %v6243
        %v6245 = vpop.f32.mrf.mxu0
        %v6246 = vadd.f32 %v5441, %v6245
        %6247 = vmatmul.bf16.gmra.mxu0 %v5747
        %v6248 = vpop.f32.mrf.mxu0
        %v6249 = vadd.f32 %v5446, %v6248
        %v6250 = vpop.f32.mrf.mxu0
        %v6251 = vadd.f32 %v5451, %v6250
        %6252 = vmatmul.bf16.gmra.mxu0 %v5751
        %v6253 = vpop.f32.mrf.mxu0
        %v6254 = vadd.f32 %v5456, %v6253
        %v6255 = vpop.f32.mrf.mxu0
        %v6256 = vadd.f32 %v5461, %v6255
        %6257 = vmatmul.bf16.gmra.mxu0 %v5755
        %v6258 = vpop.f32.mrf.mxu0
        %v6259 = vadd.f32 %v5466, %v6258
        %v6260 = vpop.f32.mrf.mxu0
        %v6261 = vadd.f32 %v5471, %v6260
        %6262 = vmatmul.bf16.gmra.mxu0 %v5759
        %v6263 = vpop.f32.mrf.mxu0
        %v6264 = vadd.f32 %v5476, %v6263
        %v6265 = vpop.f32.mrf.mxu0
        %v6266 = vadd.f32 %v5481, %v6265
        %6267 = vmatmul.bf16.gmra.mxu0 %v5763
        %v6268 = vpop.f32.mrf.mxu0
        %v6269 = vadd.f32 %v5486, %v6268
        %v6270 = vpop.f32.mrf.mxu0
        %v6271 = vadd.f32 %v5491, %v6270
        %6272 = vmatmul.bf16.gmra.mxu0 %v5767
        %v6273 = vpop.f32.mrf.mxu0
        %v6274 = vadd.f32 %v5496, %v6273
        %v6275 = vpop.f32.mrf.mxu0
        %v6276 = vadd.f32 %v5501, %v6275
        %6277 = vmatmul.bf16.gmra.mxu0 %v5771
        %v6278 = vpop.f32.mrf.mxu0
        %v6279 = vadd.f32 %v5506, %v6278
        %v6280 = vpop.f32.mrf.mxu0
        %v6281 = vadd.f32 %v5511, %v6280
        %6282 = vmatmul.bf16.gmra.mxu0 %v5775
        %v6283 = vpop.f32.mrf.mxu0
        %v6284 = vadd.f32 %v5516, %v6283
        %v6285 = vpop.f32.mrf.mxu0
        %v6286 = vadd.f32 %v5521, %v6285
        %6287 = vdwg.mxu0
        %6288 = vmatpush.bf16.xpose.msra.mxu0 %v5328
        %6289 = vmatpush.bf16.xpose.msra.mxu0 %v5324
        %6290 = vmatpush.bf16.xpose.msra.mxu0 %v5320
        %6291 = vmatpush.bf16.xpose.msra.mxu0 %v5316
        %6292 = vmatpush.bf16.xpose.msra.mxu0 %v5312
        %6293 = vmatpush.bf16.xpose.msra.mxu0 %v5308
        %6294 = vmatpush.bf16.xpose.msra.mxu0 %v5304
        %6295 = vmatpush.bf16.xpose.msra.mxu0 %v5300
        %6296 = vmatmul.bf16.gmra.mxu0 %v5716
        %v6297 = vpop.f32.mrf.mxu0
        %v6298 = vadd.f32 %v6209, %v6297
        %v6299 = vpop.f32.mrf.mxu0
        %v6300 = vadd.f32 %v6211, %v6299
        %6301 = vmatmul.bf16.gmra.mxu0 %v5720
        %v6302 = vpop.f32.mrf.mxu0
        %v6303 = vadd.f32 %v6214, %v6302
        %v6304 = vpop.f32.mrf.mxu0
        %v6305 = vadd.f32 %v6216, %v6304
        %6306 = vmatmul.bf16.gmra.mxu0 %v5724
        %v6307 = vpop.f32.mrf.mxu0
        %v6308 = vadd.f32 %v6219, %v6307
        %v6309 = vpop.f32.mrf.mxu0
        %v6310 = vadd.f32 %v6221, %v6309
        %6311 = vmatmul.bf16.gmra.mxu0 %v5728
        %v6312 = vpop.f32.mrf.mxu0
        %v6313 = vadd.f32 %v6224, %v6312
        %v6314 = vpop.f32.mrf.mxu0
        %v6315 = vadd.f32 %v6226, %v6314
        %6316 = vmatmul.bf16.gmra.mxu0 %v5732
        %v6317 = vpop.f32.mrf.mxu0
        %v6318 = vadd.f32 %v6229, %v6317
        %v6319 = vpop.f32.mrf.mxu0
        %v6320 = vadd.f32 %v6231, %v6319
        %6321 = vmatmul.bf16.gmra.mxu0 %v5736
        %v6322 = vpop.f32.mrf.mxu0
        %v6323 = vadd.f32 %v6234, %v6322
        %v6324 = vpop.f32.mrf.mxu0
        %v6325 = vadd.f32 %v6236, %v6324
        %6326 = vmatmul.bf16.gmra.mxu0 %v5740
        %v6327 = vpop.f32.mrf.mxu0
        %v6328 = vadd.f32 %v6239, %v6327
        %v6329 = vpop.f32.mrf.mxu0
        %v6330 = vadd.f32 %v6241, %v6329
        %6331 = vmatmul.bf16.gmra.mxu0 %v5744
        %v6332 = vpop.f32.mrf.mxu0
        %v6333 = vadd.f32 %v6244, %v6332
        %v6334 = vpop.f32.mrf.mxu0
        %v6335 = vadd.f32 %v6246, %v6334
        %6336 = vmatmul.bf16.gmra.mxu0 %v5748
        %v6337 = vpop.f32.mrf.mxu0
        %v6338 = vadd.f32 %v6249, %v6337
        %v6339 = vpop.f32.mrf.mxu0
        %v6340 = vadd.f32 %v6251, %v6339
        %6341 = vmatmul.bf16.gmra.mxu0 %v5752
        %v6342 = vpop.f32.mrf.mxu0
        %v6343 = vadd.f32 %v6254, %v6342
        %v6344 = vpop.f32.mrf.mxu0
        %v6345 = vadd.f32 %v6256, %v6344
        %6346 = vmatmul.bf16.gmra.mxu0 %v5756
        %v6347 = vpop.f32.mrf.mxu0
        %v6348 = vadd.f32 %v6259, %v6347
        %v6349 = vpop.f32.mrf.mxu0
        %v6350 = vadd.f32 %v6261, %v6349
        %6351 = vmatmul.bf16.gmra.mxu0 %v5760
        %v6352 = vpop.f32.mrf.mxu0
        %v6353 = vadd.f32 %v6264, %v6352
        %v6354 = vpop.f32.mrf.mxu0
        %v6355 = vadd.f32 %v6266, %v6354
        %6356 = vmatmul.bf16.gmra.mxu0 %v5764
        %v6357 = vpop.f32.mrf.mxu0
        %v6358 = vadd.f32 %v6269, %v6357
        %v6359 = vpop.f32.mrf.mxu0
        %v6360 = vadd.f32 %v6271, %v6359
        %6361 = vmatmul.bf16.gmra.mxu0 %v5768
        %v6362 = vpop.f32.mrf.mxu0
        %v6363 = vadd.f32 %v6274, %v6362
        %v6364 = vpop.f32.mrf.mxu0
        %v6365 = vadd.f32 %v6276, %v6364
        %6366 = vmatmul.bf16.gmra.mxu0 %v5772
        %v6367 = vpop.f32.mrf.mxu0
        %v6368 = vadd.f32 %v6279, %v6367
        %v6369 = vpop.f32.mrf.mxu0
        %v6370 = vadd.f32 %v6281, %v6369
        %6371 = vmatmul.bf16.gmra.mxu0 %v5776
        %v6372 = vpop.f32.mrf.mxu0
        %v6373 = vadd.f32 %v6284, %v6372
        %v6374 = vpop.f32.mrf.mxu0
        %v6375 = vadd.f32 %v6286, %v6374
        %6376 = vdwg.mxu0
        %6377 = vmatpush.bf16.xpose.msra.mxu0 %v5329
        %6378 = vmatpush.bf16.xpose.msra.mxu0 %v5325
        %6379 = vmatpush.bf16.xpose.msra.mxu0 %v5321
        %6380 = vmatpush.bf16.xpose.msra.mxu0 %v5317
        %6381 = vmatpush.bf16.xpose.msra.mxu0 %v5313
        %6382 = vmatpush.bf16.xpose.msra.mxu0 %v5309
        %6383 = vmatpush.bf16.xpose.msra.mxu0 %v5305
        %6384 = vmatpush.bf16.xpose.msra.mxu0 %v5301
        %6385 = vmatmul.bf16.gmra.mxu0 %v5717
        %v6386 = vpop.f32.mrf.mxu0
        %v6387 = vadd.f32 %v6298, %v6386
        %v6388 = vpop.f32.mrf.mxu0
        %v6389 = vadd.f32 %v6300, %v6388
        %6390 = vmatmul.bf16.gmra.mxu0 %v5721
        %v6391 = vpop.f32.mrf.mxu0
        %v6392 = vadd.f32 %v6303, %v6391
        %v6393 = vpop.f32.mrf.mxu0
        %v6394 = vadd.f32 %v6305, %v6393
        %6395 = vmatmul.bf16.gmra.mxu0 %v5725
        %v6396 = vpop.f32.mrf.mxu0
        %v6397 = vadd.f32 %v6308, %v6396
        %v6398 = vpop.f32.mrf.mxu0
        %v6399 = vadd.f32 %v6310, %v6398
        %6400 = vmatmul.bf16.gmra.mxu0 %v5729
        %v6401 = vpop.f32.mrf.mxu0
        %v6402 = vadd.f32 %v6313, %v6401
        %v6403 = vpop.f32.mrf.mxu0
        %v6404 = vadd.f32 %v6315, %v6403
        %6405 = vmatmul.bf16.gmra.mxu0 %v5733
        %v6406 = vpop.f32.mrf.mxu0
        %v6407 = vadd.f32 %v6318, %v6406
        %v6408 = vpop.f32.mrf.mxu0
        %v6409 = vadd.f32 %v6320, %v6408
        %6410 = vmatmul.bf16.gmra.mxu0 %v5737
        %v6411 = vpop.f32.mrf.mxu0
        %v6412 = vadd.f32 %v6323, %v6411
        %v6413 = vpop.f32.mrf.mxu0
        %v6414 = vadd.f32 %v6325, %v6413
        %6415 = vmatmul.bf16.gmra.mxu0 %v5741
        %v6416 = vpop.f32.mrf.mxu0
        %v6417 = vadd.f32 %v6328, %v6416
        %v6418 = vpop.f32.mrf.mxu0
        %v6419 = vadd.f32 %v6330, %v6418
        %6420 = vmatmul.bf16.gmra.mxu0 %v5745
        %v6421 = vpop.f32.mrf.mxu0
        %v6422 = vadd.f32 %v6333, %v6421
        %v6423 = vpop.f32.mrf.mxu0
        %v6424 = vadd.f32 %v6335, %v6423
        %6425 = vmatmul.bf16.gmra.mxu0 %v5749
        %v6426 = vpop.f32.mrf.mxu0
        %v6427 = vadd.f32 %v6338, %v6426
        %v6428 = vpop.f32.mrf.mxu0
        %v6429 = vadd.f32 %v6340, %v6428
        %6430 = vmatmul.bf16.gmra.mxu0 %v5753
        %v6431 = vpop.f32.mrf.mxu0
        %v6432 = vadd.f32 %v6343, %v6431
        %v6433 = vpop.f32.mrf.mxu0
        %v6434 = vadd.f32 %v6345, %v6433
        %6435 = vmatmul.bf16.gmra.mxu0 %v5757
        %v6436 = vpop.f32.mrf.mxu0
        %v6437 = vadd.f32 %v6348, %v6436
        %v6438 = vpop.f32.mrf.mxu0
        %v6439 = vadd.f32 %v6350, %v6438
        %6440 = vmatmul.bf16.gmra.mxu0 %v5761
        %v6441 = vpop.f32.mrf.mxu0
        %v6442 = vadd.f32 %v6353, %v6441
        %v6443 = vpop.f32.mrf.mxu0
        %v6444 = vadd.f32 %v6355, %v6443
        %6445 = vmatmul.bf16.gmra.mxu0 %v5765
        %v6446 = vpop.f32.mrf.mxu0
        %v6447 = vadd.f32 %v6358, %v6446
        %v6448 = vpop.f32.mrf.mxu0
        %v6449 = vadd.f32 %v6360, %v6448
        %6450 = vmatmul.bf16.gmra.mxu0 %v5769
        %v6451 = vpop.f32.mrf.mxu0
        %v6452 = vadd.f32 %v6363, %v6451
        %v6453 = vpop.f32.mrf.mxu0
        %v6454 = vadd.f32 %v6365, %v6453
        %6455 = vmatmul.bf16.gmra.mxu0 %v5773
        %v6456 = vpop.f32.mrf.mxu0
        %v6457 = vadd.f32 %v6368, %v6456
        %v6458 = vpop.f32.mrf.mxu0
        %v6459 = vadd.f32 %v6370, %v6458
        %6460 = vmatmul.bf16.gmra.mxu0 %v5777
        %v6461 = vpop.f32.mrf.mxu0
        %v6462 = vadd.f32 %v6373, %v6461
        %v6463 = vpop.f32.mrf.mxu0
        %v6464 = vadd.f32 %v6375, %v6463
        %6465 = vdwg.mxu0
        %6466 = vmatpush.bf16.xpose.msra.mxu0 %v5330
        %6467 = vmatpush.bf16.xpose.msra.mxu0 %v5326
        %6468 = vmatpush.bf16.xpose.msra.mxu0 %v5322
        %6469 = vmatpush.bf16.xpose.msra.mxu0 %v5318
        %6470 = vmatpush.bf16.xpose.msra.mxu0 %v5314
        %6471 = vmatpush.bf16.xpose.msra.mxu0 %v5310
        %6472 = vmatpush.bf16.xpose.msra.mxu0 %v5306
        %6473 = vmatpush.bf16.xpose.msra.mxu0 %v5302
        %6474 = vmatmul.bf16.gmra.mxu0 %v5718
        %v6475 = vpop.f32.mrf.mxu0
        %v6476 = vadd.f32 %v6387, %v6475
        %v6477 = vpop.f32.mrf.mxu0
        %v6478 = vadd.f32 %v6389, %v6477
        %6479 = vmatmul.bf16.gmra.mxu0 %v5722
        %v6480 = vpop.f32.mrf.mxu0
        %v6481 = vadd.f32 %v6392, %v6480
        %v6482 = vpop.f32.mrf.mxu0
        %v6483 = vadd.f32 %v6394, %v6482
        %6484 = vmatmul.bf16.gmra.mxu0 %v5726
        %v6485 = vpop.f32.mrf.mxu0
        %v6486 = vadd.f32 %v6397, %v6485
        %v6487 = vpop.f32.mrf.mxu0
        %v6488 = vadd.f32 %v6399, %v6487
        %6489 = vmatmul.bf16.gmra.mxu0 %v5730
        %v6490 = vpop.f32.mrf.mxu0
        %v6491 = vadd.f32 %v6402, %v6490
        %v6492 = vpop.f32.mrf.mxu0
        %v6493 = vadd.f32 %v6404, %v6492
        %6494 = vmatmul.bf16.gmra.mxu0 %v5734
        %v6495 = vpop.f32.mrf.mxu0
        %v6496 = vadd.f32 %v6407, %v6495
        %v6497 = vpop.f32.mrf.mxu0
        %v6498 = vadd.f32 %v6409, %v6497
        %6499 = vmatmul.bf16.gmra.mxu0 %v5738
        %v6500 = vpop.f32.mrf.mxu0
        %v6501 = vadd.f32 %v6412, %v6500
        %v6502 = vpop.f32.mrf.mxu0
        %v6503 = vadd.f32 %v6414, %v6502
        %6504 = vmatmul.bf16.gmra.mxu0 %v5742
        %v6505 = vpop.f32.mrf.mxu0
        %v6506 = vadd.f32 %v6417, %v6505
        %v6507 = vpop.f32.mrf.mxu0
        %v6508 = vadd.f32 %v6419, %v6507
        %6509 = vmatmul.bf16.gmra.mxu0 %v5746
        %v6510 = vpop.f32.mrf.mxu0
        %v6511 = vadd.f32 %v6422, %v6510
        %v6512 = vpop.f32.mrf.mxu0
        %v6513 = vadd.f32 %v6424, %v6512
        %6514 = vmatmul.bf16.gmra.mxu0 %v5750
        %v6515 = vpop.f32.mrf.mxu0
        %v6516 = vadd.f32 %v6427, %v6515
        %v6517 = vpop.f32.mrf.mxu0
        %v6518 = vadd.f32 %v6429, %v6517
        %6519 = vmatmul.bf16.gmra.mxu0 %v5754
        %v6520 = vpop.f32.mrf.mxu0
        %v6521 = vadd.f32 %v6432, %v6520
        %v6522 = vpop.f32.mrf.mxu0
        %v6523 = vadd.f32 %v6434, %v6522
        %6524 = vmatmul.bf16.gmra.mxu0 %v5758
        %v6525 = vpop.f32.mrf.mxu0
        %v6526 = vadd.f32 %v6437, %v6525
        %v6527 = vpop.f32.mrf.mxu0
        %v6528 = vadd.f32 %v6439, %v6527
        %6529 = vmatmul.bf16.gmra.mxu0 %v5762
        %v6530 = vpop.f32.mrf.mxu0
        %v6531 = vadd.f32 %v6442, %v6530
        %v6532 = vpop.f32.mrf.mxu0
        %v6533 = vadd.f32 %v6444, %v6532
        %6534 = vmatmul.bf16.gmra.mxu0 %v5766
        %v6535 = vpop.f32.mrf.mxu0
        %v6536 = vadd.f32 %v6447, %v6535
        %v6537 = vpop.f32.mrf.mxu0
        %v6538 = vadd.f32 %v6449, %v6537
        %6539 = vmatmul.bf16.gmra.mxu0 %v5770
        %v6540 = vpop.f32.mrf.mxu0
        %v6541 = vadd.f32 %v6452, %v6540
        %v6542 = vpop.f32.mrf.mxu0
        %v6543 = vadd.f32 %v6454, %v6542
        %6544 = vmatmul.bf16.gmra.mxu0 %v5774
        %v6545 = vpop.f32.mrf.mxu0
        %v6546 = vadd.f32 %v6457, %v6545
        %v6547 = vpop.f32.mrf.mxu0
        %v6548 = vadd.f32 %v6459, %v6547
        %6549 = vmatmul.bf16.gmra.mxu0 %v5778
        %v6550 = vpop.f32.mrf.mxu0
        %v6551 = vadd.f32 %v6462, %v6550
        %v6552 = vpop.f32.mrf.mxu0
        %v6553 = vadd.f32 %v6464, %v6552
        %6554 = vdwg.mxu0
        %vm6555 = vcmp.gt.f32.partialorder %v6120, 0.0
        %vm6556 = vcmp.gt.f32.partialorder %v6476, 0.0
        %vm6557 = vcmp.gt.f32.partialorder %v6122, 0.0
        %vm6558 = vcmp.gt.f32.partialorder %v6478, 0.0
        %vm6559 = vcmp.gt.f32.partialorder %v6125, 0.0
        %vm6560 = vcmp.gt.f32.partialorder %v6481, 0.0
        %vm6561 = vcmp.gt.f32.partialorder %v6127, 0.0
        %vm6562 = vcmp.gt.f32.partialorder %v6483, 0.0
        %vm6563 = vcmp.gt.f32.partialorder %v6130, 0.0
        %vm6564 = vcmp.gt.f32.partialorder %v6486, 0.0
        %vm6565 = vcmp.gt.f32.partialorder %v6132, 0.0
        %vm6566 = vcmp.gt.f32.partialorder %v6488, 0.0
        %vm6567 = vcmp.gt.f32.partialorder %v6135, 0.0
        %vm6568 = vcmp.gt.f32.partialorder %v6491, 0.0
        %vm6569 = vcmp.gt.f32.partialorder %v6137, 0.0
        %vm6570 = vcmp.gt.f32.partialorder %v6493, 0.0
        %vm6571 = vcmp.gt.f32.partialorder %v6140, 0.0
        %vm6572 = vcmp.gt.f32.partialorder %v6496, 0.0
        %vm6573 = vcmp.gt.f32.partialorder %v6142, 0.0
        %vm6574 = vcmp.gt.f32.partialorder %v6498, 0.0
        %vm6575 = vcmp.gt.f32.partialorder %v6145, 0.0
        %vm6576 = vcmp.gt.f32.partialorder %v6501, 0.0
        %vm6577 = vcmp.gt.f32.partialorder %v6147, 0.0
        %vm6578 = vcmp.gt.f32.partialorder %v6503, 0.0
        %vm6579 = vcmp.gt.f32.partialorder %v6150, 0.0
        %vm6580 = vcmp.gt.f32.partialorder %v6506, 0.0
        %vm6581 = vcmp.gt.f32.partialorder %v6152, 0.0
        %vm6582 = vcmp.gt.f32.partialorder %v6508, 0.0
        %vm6583 = vcmp.gt.f32.partialorder %v6155, 0.0
        %vm6584 = vcmp.gt.f32.partialorder %v6511, 0.0
        %vm6585 = vcmp.gt.f32.partialorder %v6157, 0.0
        %vm6586 = vcmp.gt.f32.partialorder %v6513, 0.0
        %vm6587 = vcmp.gt.f32.partialorder %v6160, 0.0
        %vm6588 = vcmp.gt.f32.partialorder %v6516, 0.0
        %vm6589 = vcmp.gt.f32.partialorder %v6162, 0.0
        %vm6590 = vcmp.gt.f32.partialorder %v6518, 0.0
        %vm6591 = vcmp.gt.f32.partialorder %v6165, 0.0
        %vm6592 = vcmp.gt.f32.partialorder %v6521, 0.0
        %vm6593 = vcmp.gt.f32.partialorder %v6167, 0.0
        %vm6594 = vcmp.gt.f32.partialorder %v6523, 0.0
        %vm6595 = vcmp.gt.f32.partialorder %v6170, 0.0
        %vm6596 = vcmp.gt.f32.partialorder %v6526, 0.0
        %vm6597 = vcmp.gt.f32.partialorder %v6172, 0.0
        %vm6598 = vcmp.gt.f32.partialorder %v6528, 0.0
        %vm6599 = vcmp.gt.f32.partialorder %v6175, 0.0
        %vm6600 = vcmp.gt.f32.partialorder %v6531, 0.0
        %vm6601 = vcmp.gt.f32.partialorder %v6177, 0.0
        %vm6602 = vcmp.gt.f32.partialorder %v6533, 0.0
        %vm6603 = vcmp.gt.f32.partialorder %v6180, 0.0
        %vm6604 = vcmp.gt.f32.partialorder %v6536, 0.0
        %vm6605 = vcmp.gt.f32.partialorder %v6182, 0.0
        %vm6606 = vcmp.gt.f32.partialorder %v6538, 0.0
        %vm6607 = vcmp.gt.f32.partialorder %v6185, 0.0
        %vm6608 = vcmp.gt.f32.partialorder %v6541, 0.0
        %vm6609 = vcmp.gt.f32.partialorder %v6187, 0.0
        %vm6610 = vcmp.gt.f32.partialorder %v6543, 0.0
        %vm6611 = vcmp.gt.f32.partialorder %v6190, 0.0
        %vm6612 = vcmp.gt.f32.partialorder %v6546, 0.0
        %vm6613 = vcmp.gt.f32.partialorder %v6192, 0.0
        %vm6614 = vcmp.gt.f32.partialorder %v6548, 0.0
        %vm6615 = vcmp.gt.f32.partialorder %v6195, 0.0
        %vm6616 = vcmp.gt.f32.partialorder %v6551, 0.0
        %vm6617 = vcmp.gt.f32.partialorder %v6197, 0.0
        %vm6618 = vcmp.gt.f32.partialorder %v6553, 0.0
        %v6619 = vmul.f32 %v6120, 0.2
        %v6620 = vmul.f32 %v6476, 0.2
        %v6621 = vmul.f32 %v6122, 0.2
        %v6622 = vmul.f32 %v6478, 0.2
        %v6623 = vmul.f32 %v6125, 0.2
        %v6624 = vmul.f32 %v6481, 0.2
        %v6625 = vmul.f32 %v6127, 0.2
        %v6626 = vmul.f32 %v6483, 0.2
        %v6627 = vmul.f32 %v6130, 0.2
        %v6628 = vmul.f32 %v6486, 0.2
        %v6629 = vmul.f32 %v6132, 0.2
        %v6630 = vmul.f32 %v6488, 0.2
        %v6631 = vmul.f32 %v6135, 0.2
        %v6632 = vmul.f32 %v6491, 0.2
        %v6633 = vmul.f32 %v6137, 0.2
        %v6634 = vmul.f32 %v6493, 0.2
        %v6635 = vmul.f32 %v6140, 0.2
        %v6636 = vmul.f32 %v6496, 0.2
        %v6637 = vmul.f32 %v6142, 0.2
        %v6638 = vmul.f32 %v6498, 0.2
        %v6639 = vmul.f32 %v6145, 0.2
        %v6640 = vmul.f32 %v6501, 0.2
        %v6641 = vmul.f32 %v6147, 0.2
        %v6642 = vmul.f32 %v6503, 0.2
        %v6643 = vmul.f32 %v6150, 0.2
        %v6644 = vmul.f32 %v6506, 0.2
        %v6645 = vmul.f32 %v6152, 0.2
        %v6646 = vmul.f32 %v6508, 0.2
        %v6647 = vmul.f32 %v6155, 0.2
        %v6648 = vmul.f32 %v6511, 0.2
        %v6649 = vmul.f32 %v6157, 0.2
        %v6650 = vmul.f32 %v6513, 0.2
        %v6651 = vmul.f32 %v6160, 0.2
        %v6652 = vmul.f32 %v6516, 0.2
        %v6653 = vmul.f32 %v6162, 0.2
        %v6654 = vmul.f32 %v6518, 0.2
        %v6655 = vmul.f32 %v6165, 0.2
        %v6656 = vmul.f32 %v6521, 0.2
        %v6657 = vmul.f32 %v6167, 0.2
        %v6658 = vmul.f32 %v6523, 0.2
        %v6659 = vmul.f32 %v6170, 0.2
        %v6660 = vmul.f32 %v6526, 0.2
        %v6661 = vmul.f32 %v6172, 0.2
        %v6662 = vmul.f32 %v6528, 0.2
        %v6663 = vmul.f32 %v6175, 0.2
        %v6664 = vmul.f32 %v6531, 0.2
        %v6665 = vmul.f32 %v6177, 0.2
        %v6666 = vmul.f32 %v6533, 0.2
        %v6667 = vmul.f32 %v6180, 0.2
        %v6668 = vmul.f32 %v6536, 0.2
        %v6669 = vmul.f32 %v6182, 0.2
        %v6670 = vmul.f32 %v6538, 0.2
        %v6671 = vmul.f32 %v6185, 0.2
        %v6672 = vmul.f32 %v6541, 0.2
        %v6673 = vmul.f32 %v6187, 0.2
        %v6674 = vmul.f32 %v6543, 0.2
        %v6675 = vmul.f32 %v6190, 0.2
        %v6676 = vmul.f32 %v6546, 0.2
        %v6677 = vmul.f32 %v6192, 0.2
        %v6678 = vmul.f32 %v6548, 0.2
        %v6679 = vmul.f32 %v6195, 0.2
        %v6680 = vmul.f32 %v6551, 0.2
        %v6681 = vmul.f32 %v6197, 0.2
        %v6682 = vmul.f32 %v6553, 0.2
        %v6683 = vsel %vm6555, %v6120, %v6619
        %v6684 = vsel %vm6556, %v6476, %v6620
        %v6685 = vsel %vm6557, %v6122, %v6621
        %v6686 = vsel %vm6558, %v6478, %v6622
        %v6687 = vsel %vm6559, %v6125, %v6623
        %v6688 = vsel %vm6560, %v6481, %v6624
        %v6689 = vsel %vm6561, %v6127, %v6625
        %v6690 = vsel %vm6562, %v6483, %v6626
        %v6691 = vsel %vm6563, %v6130, %v6627
        %v6692 = vsel %vm6564, %v6486, %v6628
        %v6693 = vsel %vm6565, %v6132, %v6629
        %v6694 = vsel %vm6566, %v6488, %v6630
        %v6695 = vsel %vm6567, %v6135, %v6631
        %v6696 = vsel %vm6568, %v6491, %v6632
        %v6697 = vsel %vm6569, %v6137, %v6633
        %v6698 = vsel %vm6570, %v6493, %v6634
        %v6699 = vsel %vm6571, %v6140, %v6635
        %v6700 = vsel %vm6572, %v6496, %v6636
        %v6701 = vsel %vm6573, %v6142, %v6637
        %v6702 = vsel %vm6574, %v6498, %v6638
        %v6703 = vsel %vm6575, %v6145, %v6639
        %v6704 = vsel %vm6576, %v6501, %v6640
        %v6705 = vsel %vm6577, %v6147, %v6641
        %v6706 = vsel %vm6578, %v6503, %v6642
        %v6707 = vsel %vm6579, %v6150, %v6643
        %v6708 = vsel %vm6580, %v6506, %v6644
        %v6709 = vsel %vm6581, %v6152, %v6645
        %v6710 = vsel %vm6582, %v6508, %v6646
        %v6711 = vsel %vm6583, %v6155, %v6647
        %v6712 = vsel %vm6584, %v6511, %v6648
        %v6713 = vsel %vm6585, %v6157, %v6649
        %v6714 = vsel %vm6586, %v6513, %v6650
        %v6715 = vsel %vm6587, %v6160, %v6651
        %v6716 = vsel %vm6588, %v6516, %v6652
        %v6717 = vsel %vm6589, %v6162, %v6653
        %v6718 = vsel %vm6590, %v6518, %v6654
        %v6719 = vsel %vm6591, %v6165, %v6655
        %v6720 = vsel %vm6592, %v6521, %v6656
        %v6721 = vsel %vm6593, %v6167, %v6657
        %v6722 = vsel %vm6594, %v6523, %v6658
        %v6723 = vsel %vm6595, %v6170, %v6659
        %v6724 = vsel %vm6596, %v6526, %v6660
        %v6725 = vsel %vm6597, %v6172, %v6661
        %v6726 = vsel %vm6598, %v6528, %v6662
        %v6727 = vsel %vm6599, %v6175, %v6663
        %v6728 = vsel %vm6600, %v6531, %v6664
        %v6729 = vsel %vm6601, %v6177, %v6665
        %v6730 = vsel %vm6602, %v6533, %v6666
        %v6731 = vsel %vm6603, %v6180, %v6667
        %v6732 = vsel %vm6604, %v6536, %v6668
        %v6733 = vsel %vm6605, %v6182, %v6669
        %v6734 = vsel %vm6606, %v6538, %v6670
        %v6735 = vsel %vm6607, %v6185, %v6671
        %v6736 = vsel %vm6608, %v6541, %v6672
        %v6737 = vsel %vm6609, %v6187, %v6673
        %v6738 = vsel %vm6610, %v6543, %v6674
        %v6739 = vsel %vm6611, %v6190, %v6675
        %v6740 = vsel %vm6612, %v6546, %v6676
        %v6741 = vsel %vm6613, %v6192, %v6677
        %v6742 = vsel %vm6614, %v6548, %v6678
        %v6743 = vsel %vm6615, %v6195, %v6679
        %v6744 = vsel %vm6616, %v6551, %v6680
        %v6745 = vsel %vm6617, %v6197, %v6681
        %v6746 = vsel %vm6618, %v6553, %v6682
        %v6747 = vld [vmem:[%s5] sm:$0xff]
        %v6748 = vld [vmem:[%s5 + $0x8] sm:$0xff]
        %v6749 = vld [vmem:[%s5 + $0x10] sm:$0xff]
        %v6750 = vld [vmem:[%s5 + $0x18] sm:$0xff]
        %v6751 = vld [vmem:[%s5 + $0x20] sm:$0xff]
        %v6752 = vld [vmem:[%s5 + $0x28] sm:$0xff]
        %v6753 = vld [vmem:[%s5 + $0x30] sm:$0xff]
        %v6754 = vld [vmem:[%s5 + $0x38] sm:$0xff]
        %v6755 = vld [vmem:[%s5 + $0x40] sm:$0xff]
        %v6756 = vld [vmem:[%s5 + $0x48] sm:$0xff]
        %v6757 = vld [vmem:[%s5 + $0x50] sm:$0xff]
        %v6758 = vld [vmem:[%s5 + $0x58] sm:$0xff]
        %v6759 = vld [vmem:[%s5 + $0x60] sm:$0xff]
        %v6760 = vld [vmem:[%s5 + $0x68] sm:$0xff]
        %v6761 = vld [vmem:[%s5 + $0x70] sm:$0xff]
        %v6762 = vld [vmem:[%s5 + $0x78] sm:$0xff]
        %v6763 = vld [vmem:[%s5 + $0x80] sm:$0xff]
        %v6764 = vld [vmem:[%s5 + $0x88] sm:$0xff]
        %v6765 = vld [vmem:[%s5 + $0x90] sm:$0xff]
        %v6766 = vld [vmem:[%s5 + $0x98] sm:$0xff]
        %v6767 = vld [vmem:[%s5 + $0xa0] sm:$0xff]
        %v6768 = vld [vmem:[%s5 + $0xa8] sm:$0xff]
        %v6769 = vld [vmem:[%s5 + $0xb0] sm:$0xff]
        %v6770 = vld [vmem:[%s5 + $0xb8] sm:$0xff]
        %v6771 = vld [vmem:[%s5 + $0xc0] sm:$0xff]
        %v6772 = vld [vmem:[%s5 + $0xc8] sm:$0xff]
        %v6773 = vld [vmem:[%s5 + $0xd0] sm:$0xff]
        %v6774 = vld [vmem:[%s5 + $0xd8] sm:$0xff]
        %v6775 = vld [vmem:[%s5 + $0xe0] sm:$0xff]
        %v6776 = vld [vmem:[%s5 + $0xe8] sm:$0xff]
        %v6777 = vld [vmem:[%s5 + $0xf0] sm:$0xff]
        %v6778 = vld [vmem:[%s5 + $0xf8] sm:$0xff]
        %6780 = vset.pattern.permute.xlu0 0
        %6781 = vperm.xlu0 %6780, %v6747
        %v6782 = vpop.permute.xlu0 %6781
        %6785 = vset.pattern.permute.xlu0 0
        %6786 = vperm.xlu0 %6785, %v6748
        %v6787 = vpop.permute.xlu0 %6786
        %6790 = vset.pattern.permute.xlu0 0
        %6791 = vperm.xlu0 %6790, %v6749
        %v6792 = vpop.permute.xlu0 %6791
        %6795 = vset.pattern.permute.xlu0 0
        %6796 = vperm.xlu0 %6795, %v6750
        %v6797 = vpop.permute.xlu0 %6796
        %6800 = vset.pattern.permute.xlu0 0
        %6801 = vperm.xlu0 %6800, %v6751
        %v6802 = vpop.permute.xlu0 %6801
        %6805 = vset.pattern.permute.xlu0 0
        %6806 = vperm.xlu0 %6805, %v6752
        %v6807 = vpop.permute.xlu0 %6806
        %6810 = vset.pattern.permute.xlu0 0
        %6811 = vperm.xlu0 %6810, %v6753
        %v6812 = vpop.permute.xlu0 %6811
        %6815 = vset.pattern.permute.xlu0 0
        %6816 = vperm.xlu0 %6815, %v6754
        %v6817 = vpop.permute.xlu0 %6816
        %6820 = vset.pattern.permute.xlu0 0
        %6821 = vperm.xlu0 %6820, %v6755
        %v6822 = vpop.permute.xlu0 %6821
        %6825 = vset.pattern.permute.xlu0 0
        %6826 = vperm.xlu0 %6825, %v6756
        %v6827 = vpop.permute.xlu0 %6826
        %6830 = vset.pattern.permute.xlu0 0
        %6831 = vperm.xlu0 %6830, %v6757
        %v6832 = vpop.permute.xlu0 %6831
        %6835 = vset.pattern.permute.xlu0 0
        %6836 = vperm.xlu0 %6835, %v6758
        %v6837 = vpop.permute.xlu0 %6836
        %6840 = vset.pattern.permute.xlu0 0
        %6841 = vperm.xlu0 %6840, %v6759
        %v6842 = vpop.permute.xlu0 %6841
        %6845 = vset.pattern.permute.xlu0 0
        %6846 = vperm.xlu0 %6845, %v6760
        %v6847 = vpop.permute.xlu0 %6846
        %6850 = vset.pattern.permute.xlu0 0
        %6851 = vperm.xlu0 %6850, %v6761
        %v6852 = vpop.permute.xlu0 %6851
        %6855 = vset.pattern.permute.xlu0 0
        %6856 = vperm.xlu0 %6855, %v6762
        %v6857 = vpop.permute.xlu0 %6856
        %6860 = vset.pattern.permute.xlu0 0
        %6861 = vperm.xlu0 %6860, %v6763
        %v6862 = vpop.permute.xlu0 %6861
        %6865 = vset.pattern.permute.xlu0 0
        %6866 = vperm.xlu0 %6865, %v6764
        %v6867 = vpop.permute.xlu0 %6866
        %6870 = vset.pattern.permute.xlu0 0
        %6871 = vperm.xlu0 %6870, %v6765
        %v6872 = vpop.permute.xlu0 %6871
        %6875 = vset.pattern.permute.xlu0 0
        %6876 = vperm.xlu0 %6875, %v6766
        %v6877 = vpop.permute.xlu0 %6876
        %6880 = vset.pattern.permute.xlu0 0
        %6881 = vperm.xlu0 %6880, %v6767
        %v6882 = vpop.permute.xlu0 %6881
        %6885 = vset.pattern.permute.xlu0 0
        %6886 = vperm.xlu0 %6885, %v6768
        %v6887 = vpop.permute.xlu0 %6886
        %6890 = vset.pattern.permute.xlu0 0
        %6891 = vperm.xlu0 %6890, %v6769
        %v6892 = vpop.permute.xlu0 %6891
        %6895 = vset.pattern.permute.xlu0 0
        %6896 = vperm.xlu0 %6895, %v6770
        %v6897 = vpop.permute.xlu0 %6896
        %6900 = vset.pattern.permute.xlu0 0
        %6901 = vperm.xlu0 %6900, %v6771
        %v6902 = vpop.permute.xlu0 %6901
        %6905 = vset.pattern.permute.xlu0 0
        %6906 = vperm.xlu0 %6905, %v6772
        %v6907 = vpop.permute.xlu0 %6906
        %6910 = vset.pattern.permute.xlu0 0
        %6911 = vperm.xlu0 %6910, %v6773
        %v6912 = vpop.permute.xlu0 %6911
        %6915 = vset.pattern.permute.xlu0 0
        %6916 = vperm.xlu0 %6915, %v6774
        %v6917 = vpop.permute.xlu0 %6916
        %6920 = vset.pattern.permute.xlu0 0
        %6921 = vperm.xlu0 %6920, %v6775
        %v6922 = vpop.permute.xlu0 %6921
        %6925 = vset.pattern.permute.xlu0 0
        %6926 = vperm.xlu0 %6925, %v6776
        %v6927 = vpop.permute.xlu0 %6926
        %6930 = vset.pattern.permute.xlu0 0
        %6931 = vperm.xlu0 %6930, %v6777
        %v6932 = vpop.permute.xlu0 %6931
        %6935 = vset.pattern.permute.xlu0 0
        %6936 = vperm.xlu0 %6935, %v6778
        %v6937 = vpop.permute.xlu0 %6936
        %v6939 = vmul.f32 %v6683, %v6782
        %v6940 = vmul.f32 %v6684, %v6782
        %v6941 = vmul.f32 %v6685, %v6787
        %v6942 = vmul.f32 %v6686, %v6787
        %v6943 = vmul.f32 %v6687, %v6792
        %v6944 = vmul.f32 %v6688, %v6792
        %v6945 = vmul.f32 %v6689, %v6797
        %v6946 = vmul.f32 %v6690, %v6797
        %v6947 = vmul.f32 %v6691, %v6802
        %v6948 = vmul.f32 %v6692, %v6802
        %v6949 = vmul.f32 %v6693, %v6807
        %v6950 = vmul.f32 %v6694, %v6807
        %v6951 = vmul.f32 %v6695, %v6812
        %v6952 = vmul.f32 %v6696, %v6812
        %v6953 = vmul.f32 %v6697, %v6817
        %v6954 = vmul.f32 %v6698, %v6817
        %v6955 = vmul.f32 %v6699, %v6822
        %v6956 = vmul.f32 %v6700, %v6822
        %v6957 = vmul.f32 %v6701, %v6827
        %v6958 = vmul.f32 %v6702, %v6827
        %v6959 = vmul.f32 %v6703, %v6832
        %v6960 = vmul.f32 %v6704, %v6832
        %v6961 = vmul.f32 %v6705, %v6837
        %v6962 = vmul.f32 %v6706, %v6837
        %v6963 = vmul.f32 %v6707, %v6842
        %v6964 = vmul.f32 %v6708, %v6842
        %v6965 = vmul.f32 %v6709, %v6847
        %v6966 = vmul.f32 %v6710, %v6847
        %v6967 = vmul.f32 %v6711, %v6852
        %v6968 = vmul.f32 %v6712, %v6852
        %v6969 = vmul.f32 %v6713, %v6857
        %v6970 = vmul.f32 %v6714, %v6857
        %v6971 = vmul.f32 %v6715, %v6862
        %v6972 = vmul.f32 %v6716, %v6862
        %v6973 = vmul.f32 %v6717, %v6867
        %v6974 = vmul.f32 %v6718, %v6867
        %v6975 = vmul.f32 %v6719, %v6872
        %v6976 = vmul.f32 %v6720, %v6872
        %v6977 = vmul.f32 %v6721, %v6877
        %v6978 = vmul.f32 %v6722, %v6877
        %v6979 = vmul.f32 %v6723, %v6882
        %v6980 = vmul.f32 %v6724, %v6882
        %v6981 = vmul.f32 %v6725, %v6887
        %v6982 = vmul.f32 %v6726, %v6887
        %v6983 = vmul.f32 %v6727, %v6892
        %v6984 = vmul.f32 %v6728, %v6892
        %v6985 = vmul.f32 %v6729, %v6897
        %v6986 = vmul.f32 %v6730, %v6897
        %v6987 = vmul.f32 %v6731, %v6902
        %v6988 = vmul.f32 %v6732, %v6902
        %v6989 = vmul.f32 %v6733, %v6907
        %v6990 = vmul.f32 %v6734, %v6907
        %v6991 = vmul.f32 %v6735, %v6912
        %v6992 = vmul.f32 %v6736, %v6912
        %v6993 = vmul.f32 %v6737, %v6917
        %v6994 = vmul.f32 %v6738, %v6917
        %v6995 = vmul.f32 %v6739, %v6922
        %v6996 = vmul.f32 %v6740, %v6922
        %v6997 = vmul.f32 %v6741, %v6927
        %v6998 = vmul.f32 %v6742, %v6927
        %v6999 = vmul.f32 %v6743, %v6932
        %v7000 = vmul.f32 %v6744, %v6932
        %v7001 = vmul.f32 %v6745, %v6937
        %v7002 = vmul.f32 %v6746, %v6937
        %v7003 = vadd.f32 %v6939, %v6941
        %v7004 = vadd.f32 %v7003, %v6943
        %v7005 = vadd.f32 %v7004, %v6945
        %v7006 = vadd.f32 %v7005, %v6947
        %v7007 = vadd.f32 %v7006, %v6949
        %v7008 = vadd.f32 %v7007, %v6951
        %v7009 = vadd.f32 %v7008, %v6953
        %v7010 = vadd.f32 %v7009, %v6955
        %v7011 = vadd.f32 %v7010, %v6957
        %v7012 = vadd.f32 %v7011, %v6959
        %v7013 = vadd.f32 %v7012, %v6961
        %v7014 = vadd.f32 %v7013, %v6963
        %v7015 = vadd.f32 %v7014, %v6965
        %v7016 = vadd.f32 %v7015, %v6967
        %v7017 = vadd.f32 %v7016, %v6969
        %v7018 = vadd.f32 %v7017, %v6971
        %v7019 = vadd.f32 %v7018, %v6973
        %v7020 = vadd.f32 %v7019, %v6975
        %v7021 = vadd.f32 %v7020, %v6977
        %v7022 = vadd.f32 %v7021, %v6979
        %v7023 = vadd.f32 %v7022, %v6981
        %v7024 = vadd.f32 %v7023, %v6983
        %v7025 = vadd.f32 %v7024, %v6985
        %v7026 = vadd.f32 %v7025, %v6987
        %v7027 = vadd.f32 %v7026, %v6989
        %v7028 = vadd.f32 %v7027, %v6991
        %v7029 = vadd.f32 %v7028, %v6993
        %v7030 = vadd.f32 %v7029, %v6995
        %v7031 = vadd.f32 %v7030, %v6997
        %v7032 = vadd.f32 %v7031, %v6999
        %v7033 = vadd.f32 %v7032, %v7001
        %v7034 = vrot.slane %v7033, 4
        %v7035 = vadd.f32 %v7033, %v7034
        %v7036 = vrot.slane %v7035, 2
        %v7037 = vadd.f32 %v7035, %v7036
        %v7038 = vrot.slane %v7037, 1
        %v7039 = vadd.f32 %v7037, %v7038
        %v7040 = vadd.f32 %v6940, %v6942
        %v7041 = vadd.f32 %v7040, %v6944
        %v7042 = vadd.f32 %v7041, %v6946
        %v7043 = vadd.f32 %v7042, %v6948
        %v7044 = vadd.f32 %v7043, %v6950
        %v7045 = vadd.f32 %v7044, %v6952
        %v7046 = vadd.f32 %v7045, %v6954
        %v7047 = vadd.f32 %v7046, %v6956
        %v7048 = vadd.f32 %v7047, %v6958
        %v7049 = vadd.f32 %v7048, %v6960
        %v7050 = vadd.f32 %v7049, %v6962
        %v7051 = vadd.f32 %v7050, %v6964
        %v7052 = vadd.f32 %v7051, %v6966
        %v7053 = vadd.f32 %v7052, %v6968
        %v7054 = vadd.f32 %v7053, %v6970
        %v7055 = vadd.f32 %v7054, %v6972
        %v7056 = vadd.f32 %v7055, %v6974
        %v7057 = vadd.f32 %v7056, %v6976
        %v7058 = vadd.f32 %v7057, %v6978
        %v7059 = vadd.f32 %v7058, %v6980
        %v7060 = vadd.f32 %v7059, %v6982
        %v7061 = vadd.f32 %v7060, %v6984
        %v7062 = vadd.f32 %v7061, %v6986
        %v7063 = vadd.f32 %v7062, %v6988
        %v7064 = vadd.f32 %v7063, %v6990
        %v7065 = vadd.f32 %v7064, %v6992
        %v7066 = vadd.f32 %v7065, %v6994
        %v7067 = vadd.f32 %v7066, %v6996
        %v7068 = vadd.f32 %v7067, %v6998
        %v7069 = vadd.f32 %v7068, %v7000
        %v7070 = vadd.f32 %v7069, %v7002
        %v7071 = vrot.slane %v7070, 4
        %v7072 = vadd.f32 %v7070, %v7071
        %v7073 = vrot.slane %v7072, 2
        %v7074 = vadd.f32 %v7072, %v7073
        %v7075 = vrot.slane %v7074, 1
        %v7076 = vadd.f32 %v7074, %v7075
        %v7077 = vld [vmem:[#allocation2] sm:$0x1]
        %7079 = vset.pattern.permute.xlu0 0
        %7080 = vperm.xlu0 %7079, %v7077
        %v7081 = vpop.permute.xlu0 %7080
        %v7083 = vperm.slane %v7081, 0
        %v7084 = vadd.f32 %v7039, %v7083
        %v7085 = vadd.f32 %v7076, %v7083
        %v7086 = vxor.u32 %v7084, 2147483648
        %v7087 = vxor.u32 %v7085, 2147483648
        %v7088 = vmul.f32 %v7086, 1.442695
        %v7089 = vpow.pop %v7088
        %v7090 = vmul.f32 %v7087, 1.442695
        %v7091 = vpow.pop %v7090
        %v7092 = vadd.f32 %v7089, 1.0
        %v7093 = vadd.f32 %v7091, 1.0
        %v7094 = vrcp.pop %v7092
        %v7095 = vmul.f32 %v7092, %v7094
        %v7096 = vsub.f32 1.0, %v7095
        %v7097 = vmul.f32 %v7094, %v7096
        %v7098 = vadd.f32 %v7094, %v7097
        %vm7099 = vweird.f32 %v7092
        %vm7100 = vweird.f32 %v7094
        %vm7101 = vmor %vm7099, %vm7100
        %v7102 = vsel %vm7101, %v7094, %v7098
        %v7103 = vand.u32 2147483647, %v7092
        %vm7104 = vcmp.eq.f32.partialorder %v7103, 8.507059e+37
        %v7105 = vand.u32 %v7092, 2147483648
        %v7106 = vor.u32 1.1754944e-38, %v7105
        %v7107 = vsel %vm7104, %v7106, %v7102
        %v7108 = vmul.f32 1.0, %v7107
        %v7109 = vrcp.pop %v7093
        %v7110 = vmul.f32 %v7093, %v7109
        %v7111 = vsub.f32 1.0, %v7110
        %v7112 = vmul.f32 %v7109, %v7111
        %v7113 = vadd.f32 %v7109, %v7112
        %vm7114 = vweird.f32 %v7093
        %vm7115 = vweird.f32 %v7109
        %vm7116 = vmor %vm7114, %vm7115
        %v7117 = vsel %vm7116, %v7109, %v7113
        %v7118 = vand.u32 2147483647, %v7093
        %vm7119 = vcmp.eq.f32.partialorder %v7118, 8.507059e+37
        %v7120 = vand.u32 %v7093, 2147483648
        %v7121 = vor.u32 1.1754944e-38, %v7120
        %v7122 = vsel %vm7119, %v7121, %v7117
        %v7123 = vmul.f32 1.0, %v7122
        %v7126 = vrot.slane %v7123, 7
        %vm7127 = vcmask 1040384
        %v7128 = vsel %vm7127, %v7108, %v7126
        %v7130 = vlaneseq
        %vm7131 = vcmp.ge.s32.totalorder %v7130, 0
        %vm7132 = vcmp.lt.s32.totalorder %v7130, 256
        %vm7133 = vmand %vm7131, %vm7132
        %7134 = vst.msk [vmem:[%s357] sm:$0x3] %vm7133, %v7128
        %s7135 = sand.u32 %s188, 1
        %s7136 = scalar_lea.sflag [#allocation5], %s7135
        %s7137 = sand.u32 %s188, 1
        %s7138 = smul.addr %s7137, 2
        %s7139 = scalar_lea.vmem [#allocation11], %s7138
        // Predicated region
        $region65: #{discriminator_forward.1} parent=47 // pred_check
          %p7140 = pneg %p198
        $region66: #{discriminator_forward.1} parent=47 // pred_check_branch
          %7142 = sbr.rel (%p7140) target = $region68
        $region67: #{discriminator_forward.1} parent=47 // pred_region
          %s7143 = smul.u32 2, %s28
          %s7144 = ssub.s32 3, %s7143
          %p7145 = scmp.lt.s32.totalorder %s7144, 2
          %s7146 = scalar_select %p7145, %s7144, 2
          %s7147 = ssub.s32 2, %s7146
          %s7148 = sshll.u32 %s7147, 4
          %7149 = vsyncadd %s7136, %s7148
          %p7150 = scmp.ne.s32.totalorder 0, %s7146
          %s7151 = scalar_lea.hbm %s7, %s7143
          %s7152 = sshll.u32 %s7146, 4
          %s7153 = sshll.u32 %s7139, 4
          %s7154 = int_to_ptr.vmem [resolvable:$true] %s7153
          %s7155 = sshll.u32 %s7151, 4
          %s7156 = int_to_ptr.hbm [resolvable:$true] %s7155
          %7158 = dma.vmem_to_hbm [thread:$0]  (%p7150), %s7154, %s7152, %s7156, %s7136
        $region68: #{discriminator_forward.1} parent=47 // pred_fallthru
          _
      $region48: #{discriminator_forward.1} parent=5 // pred_fallthru
        _
      %p7159 = scmp.le.s32.totalorder 2, %s23
      // Predicated region
      $region69: #{discriminator_forward.1} parent=5 // pred_check
        %p7160 = pneg %p7159
      $region70: #{discriminator_forward.1} parent=5 // pred_check_branch
        %7162 = sbr.rel (%p7160) target = $region72
      $region71: #{discriminator_forward.1} parent=5 // pred_region
        %s7163 = ssub.s32 %s23, 2
        // Predicated region
        $region73: #{discriminator_forward.1} parent=71 // pred_check
          %p7164 = pneg %p204
        $region74: #{discriminator_forward.1} parent=71 // pred_check_branch
          %7166 = sbr.rel (%p7164) target = $region76
        $region75: #{discriminator_forward.1} parent=71 // pred_region
          %s7167 = sand.u32 %s189, 1
          %s7168 = scalar_lea.sflag [#allocation5], %s7167
          %s7169 = sand.u32 %s189, 1
          %s7170 = smul.addr %s7169, 2
          %s7171 = scalar_lea.vmem [#allocation11], %s7170
          %7173 = dma.done %s7168, 32
        $region76: #{discriminator_forward.1} parent=71 // pred_fallthru
          _
      $region72: #{discriminator_forward.1} parent=5 // pred_fallthru
        _
    $region6: #{discriminator_forward.1} parent=1 // loop_footer
      %s27 = sadd.s32 1, %s23
    $region7: #{discriminator_forward.1} parent=1 // loop_footer_branch
      %22 = sbr.rel target = $region3
    $region8: #{discriminator_forward.1} parent=1 // loop_exit
      _
    %7174 = vsyncpa [#allocation4], 1
    %s7175 = scalar_lea.sflag [#allocation4], 1
    %7176 = vsyncpa %s7175, 1
    %7177 = vsyncpa [#allocation7], 1
    %7178 = vsyncpa [#allocation10], 1
    %7179 = vsyncpa [#allocation5], 1
    %s7180 = scalar_lea.sflag [#allocation5], 1
    %7181 = vsyncpa %s7180, 1

</llo_original>
